<compile_context>
chip_gen: v6e
topology: v6e:2x2x1
jax: 0.10.0
libtpu: 0.0.40
codegen_flags: <defaults>
</compile_context>

<pallas_src>
import functools
import math

import jax
import jax.numpy as jnp
from jax import lax
from jax.experimental import pallas as pl
from jax.experimental.pallas import tpu as pltpu

HIDDEN = 32   # hidden channels of both nets
TDIM   = 32   # sinusoidal time-embedding width
C_LAT  = 4    # latent channels (source / noisy_latents / model_pred)
C_POSE = 4    # pose-conditioning channels


# ----------------------------------------------------------------------------
# Fused Pallas kernel: ref_net(2 blocks) + unet(2 blocks + out conv)
# ----------------------------------------------------------------------------
def _fused_united_kernel(src_ref, noi_ref, pose_ref, bt_ref,
                         wr1_ref, wr2_ref, wu1_ref, wu2_ref, wuoT_ref, buo_ref,
                         out_ref, pad_ref, ref2_ref, *, H, W, margin):
    # src_ref/noi_ref/pose_ref: (1, P+2M, C)  flattened NHWC, zero halo rows
    # bt_ref  : (1, 4, HIDDEN)  fused bias + per-sample time-emb [r1,r2,u1,u2]
    # w*_ref  : (9*Cin, Cout)   tap-concat conv weights, bf16
    # wuoT_ref: (C_LAT, 9*HIDDEN)  output conv weight, pre-transposed, bf16
    # buo_ref : (C_LAT, 1)      output-conv bias
    # out_ref : (1, C_LAT, P)   lane-dense prediction (reshapes to NCHW)
    # pad_ref : (P+2M, HIDDEN)  VMEM scratch for halo-padded hidden activations
    # ref2_ref: (P, HIDDEN)     VMEM scratch holding r2 until its injection
    P = H * W
    M = margin
    f32 = jnp.float32

    # Column-validity masks for the +/-1 horizontal taps, shape (P, 1).
    col = lax.broadcasted_iota(jnp.int32, (P, 1), 0) % W
    ok_l = col >= 1           # column j-1 exists
    ok_r = col <= W - 2       # column j+1 exists

    def silu(v):
        return v * jax.nn.sigmoid(v)

    def tap_slab(load, cin):
        """Build the (P, 9*cin) bf16 tap-concat slab of the 3x3 neighbourhood.

        load(off) returns the flat input shifted by `off` positions; the zero
        halo (M >= W+1 rows each side) supplies zeros when a vertical shift
        runs off the image, the masks zero the left/right wrap columns.
        Column order is (kh, kw, cin), matching weight.reshape(9*cin, cout)."""
        taps = []
        for dh in (-1, 0, 1):
            for dw in (-1, 0, 1):
                t = load(dh * W + dw)                   # (P, cin) f32
                if dw == -1:
                    t = jnp.where(ok_l, t, 0.0)
                elif dw == 1:
                    t = jnp.where(ok_r, t, 0.0)
                taps.append(t)
        return jnp.concatenate(taps, axis=-1).astype(jnp.bfloat16)

    def conv(load, cin, w_ref):
        return jnp.dot(tap_slab(load, cin), w_ref[...],
                       preferred_element_type=f32)      # (P, Cout) f32

    def load_src(off):
        return src_ref[0, pl.ds(M + off, P), :]

    def load_cat(off):                                  # cat(noisy, pose) tap
        return jnp.concatenate(
            [noi_ref[0, pl.ds(M + off, P), :],
             pose_ref[0, pl.ds(M + off, P), :]], axis=-1)

    def load_pad(off):
        return pad_ref[pl.ds(M + off, P), :]

    # Zero ONLY the halo rows of the scratch (interior rows are always fully
    # rewritten by the pad stores below before they are read; the stores below
    # never touch the halo rows -- keep that invariant).
    nh = pad_ref.shape[1]
    pad_ref[pl.ds(0, M), :] = jnp.zeros((M, nh), pad_ref.dtype)
    pad_ref[pl.ds(M + P, M), :] = jnp.zeros((M, nh), pad_ref.dtype)

    bt = bt_ref[0]                                      # (4, HIDDEN) f32

    # ---------------- ref_net ----------------
    r1 = silu(conv(load_src, C_LAT, wr1_ref) + bt[0:1, :])
    pad_ref[pl.ds(M, P), :] = r1                        # r1 -> VMEM (dies in regs)

    r2 = silu(conv(load_pad, HIDDEN, wr2_ref) + bt[1:2, :])
    ref2_ref[...] = r2                                  # r2 -> VMEM (dies in regs)

    # ---------------- unet (reference-feature injection) ----------------
    h1 = silu(conv(load_cat, C_LAT + C_POSE, wu1_ref) + bt[2:3, :]
              + pad_ref[pl.ds(M, P), :])                # + r1 (reloaded)
    pad_ref[pl.ds(M, P), :] = h1

    h2 = silu(conv(load_pad, HIDDEN, wu2_ref) + bt[3:4, :]
              + ref2_ref[...])                          # + r2 (reloaded)
    pad_ref[pl.ds(M, P), :] = h2

    # Output conv, produced already transposed -> lane-dense (C_LAT, P) store.
    slab = tap_slab(load_pad, HIDDEN)                   # (P, 9*HIDDEN) bf16
    pred_t = lax.dot_general(wuoT_ref[...], slab,
                             dimension_numbers=(((1,), (1,)), ((), ())),
                             preferred_element_type=f32)    # (C_LAT, P)
    out_ref[0] = (pred_t + buo_ref[...]).astype(out_ref.dtype)


# ----------------------------------------------------------------------------
# Parameters / time embedding (tiny, plain JAX glue)
# ----------------------------------------------------------------------------
def timestep_embedding(t, dim):
    half = dim // 2
    freqs = jnp.exp(-math.log(10000.0) *
                    jnp.arange(half, dtype=jnp.float32) / half)
    args = t.astype(jnp.float32)[:, None] * freqs[None, :]
    return jnp.concatenate([jnp.cos(args), jnp.sin(args)], axis=-1)


def init_params(key):
    def nrm(k, shape, scale=0.05):
        return scale * jax.random.normal(k, shape, jnp.float32)

    ks = jax.random.split(key, 12)
    p = {}
    # shared time MLP
    p["t_w"] = nrm(ks[0], (TDIM, HIDDEN)); p["t_b"] = jnp.zeros((HIDDEN,))
    # ref_net: two conv blocks
    p["r1_w"] = nrm(ks[1], (3, 3, C_LAT, HIDDEN)); p["r1_b"] = jnp.zeros((1, HIDDEN))
    p["r1_tw"] = nrm(ks[2], (HIDDEN, HIDDEN));     p["r1_tb"] = jnp.zeros((HIDDEN,))
    p["r2_w"] = nrm(ks[3], (3, 3, HIDDEN, HIDDEN)); p["r2_b"] = jnp.zeros((1, HIDDEN))
    p["r2_tw"] = nrm(ks[4], (HIDDEN, HIDDEN));      p["r2_tb"] = jnp.zeros((HIDDEN,))
    # unet: two conv blocks (with ref injection) + output conv
    p["u1_w"] = nrm(ks[5], (3, 3, C_LAT + C_POSE, HIDDEN)); p["u1_b"] = jnp.zeros((1, HIDDEN))
    p["u1_tw"] = nrm(ks[6], (HIDDEN, HIDDEN));              p["u1_tb"] = jnp.zeros((HIDDEN,))
    p["u2_w"] = nrm(ks[7], (3, 3, HIDDEN, HIDDEN)); p["u2_b"] = jnp.zeros((1, HIDDEN))
    p["u2_tw"] = nrm(ks[8], (HIDDEN, HIDDEN));      p["u2_tb"] = jnp.zeros((HIDDEN,))
    p["uo_w"] = nrm(ks[9], (3, 3, HIDDEN, C_LAT)); p["uo_b"] = jnp.zeros((1, C_LAT))
    return p


# ----------------------------------------------------------------------------
# Forward pass (PyTorch-facing: NCHW in / NCHW out), one pallas_call
# ----------------------------------------------------------------------------
def united_model_forward(p, source, t, noisy_latents, target_pose):
    B, _, H, W = source.shape
    P = H * W
    C_IN_U = C_LAT + C_POSE
    assert W >= 2 and H >= 2, "edge-mask scheme requires H, W >= 2"
    margin = ((W + 1 + 7) // 8) * 8          # zero halo rows, multiple of 8
    assert margin >= W + 1
    PPAD = P + 2 * margin

    # NCHW -> flattened NHWC with zero halo rows; noisy/pose stay separate
    # (the channel concat happens inside the kernel while building the slab).
    def flat_pad(x):
        xf = jnp.transpose(x, (0, 2, 3, 1)).reshape(B, P, x.shape[1])
        return jnp.pad(xf, ((0, 0), (margin, margin), (0, 0))).astype(jnp.float32)

    src_pad = flat_pad(source)
    noi_pad = flat_pad(noisy_latents)
    pose_pad = flat_pad(target_pose)

    # Tiny time-MLP in plain JAX; bias + per-sample time-emb folded into one
    # (B, 4, HIDDEN) operand so the kernel does a single broadcast add / block.
    temb = timestep_embedding(t, TDIM) @ p["t_w"] + p["t_b"]
    temb = temb * jax.nn.sigmoid(temb)                            # SiLU
    bt = jnp.stack([
        temb @ p["r1_tw"] + p["r1_tb"] + p["r1_b"][0],
        temb @ p["r2_tw"] + p["r2_tb"] + p["r2_b"][0],
        temb @ p["u1_tw"] + p["u1_tb"] + p["u1_b"][0],
        temb @ p["u2_tw"] + p["u2_tb"] + p["u2_b"][0],
    ], axis=1).astype(jnp.float32)                                # (B, 4, HIDDEN)

    # Conv weights in tap-concat (9*Cin, Cout) layout, bf16 MXU operands.
    bf16 = jnp.bfloat16
    wr1 = p["r1_w"].reshape(9 * C_LAT, HIDDEN).astype(bf16)
    wr2 = p["r2_w"].reshape(9 * HIDDEN, HIDDEN).astype(bf16)
    wu1 = p["u1_w"].reshape(9 * C_IN_U, HIDDEN).astype(bf16)
    wu2 = p["u2_w"].reshape(9 * HIDDEN, HIDDEN).astype(bf16)
    wuoT = p["uo_w"].reshape(9 * HIDDEN, C_LAT).T.astype(bf16)    # (C_LAT, 288)
    buo = p["uo_b"].reshape(C_LAT, 1).astype(jnp.float32)

    macs = 9 * P * (C_LAT * HIDDEN + HIDDEN * HIDDEN + C_IN_U * HIDDEN
                    + HIDDEN * HIDDEN + HIDDEN * C_LAT)
    bytes_in = (4 * (src_pad.size + noi_pad.size + pose_pad.size + bt.size + buo.size)
                + 2 * (wr1.size + wr2.size + wu1.size + wu2.size + wuoT.size))
    bytes_out = 4 * B * P * C_LAT

    kernel = functools.partial(_fused_united_kernel, H=H, W=W, margin=margin)
    pred_cp = pl.pallas_call(
        kernel,
        out_shape=jax.ShapeDtypeStruct((B, C_LAT, P), jnp.float32),
        grid=(B,),
        in_specs=[
            pl.BlockSpec((1, PPAD, C_LAT), lambda b: (b, 0, 0)),
            pl.BlockSpec((1, PPAD, C_LAT), lambda b: (b, 0, 0)),
            pl.BlockSpec((1, PPAD, C_POSE), lambda b: (b, 0, 0)),
            pl.BlockSpec((1, 4, HIDDEN), lambda b: (b, 0, 0)),
            pl.BlockSpec((9 * C_LAT, HIDDEN), lambda b: (0, 0)),
            pl.BlockSpec((9 * HIDDEN, HIDDEN), lambda b: (0, 0)),
            pl.BlockSpec((9 * C_IN_U, HIDDEN), lambda b: (0, 0)),
            pl.BlockSpec((9 * HIDDEN, HIDDEN), lambda b: (0, 0)),
            pl.BlockSpec((C_LAT, 9 * HIDDEN), lambda b: (0, 0)),
            pl.BlockSpec((C_LAT, 1), lambda b: (0, 0)),
        ],
        out_specs=pl.BlockSpec((1, C_LAT, P), lambda b: (b, 0, 0)),
        scratch_shapes=[pltpu.VMEM((PPAD, HIDDEN), jnp.float32),
                        pltpu.VMEM((P, HIDDEN), jnp.float32)],
        compiler_params=pltpu.CompilerParams(
            dimension_semantics=("parallel",),
            vmem_limit_bytes=32 * 1024 * 1024),
        cost_estimate=pl.CostEstimate(
            flops=2 * B * macs,
            transcendentals=4 * B * P * HIDDEN,
            bytes_accessed=bytes_in + bytes_out),
    )(src_pad, noi_pad, pose_pad, bt, wr1, wr2, wu1, wu2, wuoT, buo)

    # (B, C_LAT, P) is already channel-major: reshape straight to NCHW.
    return pred_cp.reshape(B, C_LAT, H, W)


# ----------------------------------------------------------------------------
# Plain-JAX reference of the same forward (for a numerical check)
# ----------------------------------------------------------------------------
def united_model_reference(p, source, t, noisy_latents, target_pose):
    def conv3x3(x, w, b):
        B, H, W, _ = x.shape
        xp = jnp.pad(x, ((0, 0), (1, 1), (1, 1), (0, 0)))
        out = jnp.zeros((B, H, W, w.shape[-1]), jnp.float32)
        for kh in range(3):
            for kw in range(3):
                out = out + jnp.einsum('bhwc,co->bhwo',
                                       xp[:, kh:kh + H, kw:kw + W, :],
                                       w[kh, kw])
        return out + b

    silu = lambda v: v * jax.nn.sigmoid(v)
    src = jnp.transpose(source, (0, 2, 3, 1))
    x = jnp.transpose(jnp.concatenate([noisy_latents, target_pose], axis=1),
                      (0, 2, 3, 1))
    temb = timestep_embedding(t, TDIM) @ p["t_w"] + p["t_b"]
    temb = silu(temb)

    def tproj(tw, tb):
        return (temb @ tw + tb)[:, None, None, :]

    r1 = silu(conv3x3(src, p["r1_w"], p["r1_b"]) + tproj(p["r1_tw"], p["r1_tb"]))
    r2 = silu(conv3x3(r1, p["r2_w"], p["r2_b"]) + tproj(p["r2_tw"], p["r2_tb"]))
    h1 = silu(conv3x3(x, p["u1_w"], p["u1_b"]) + tproj(p["u1_tw"], p["u1_tb"]) + r1)
    h2 = silu(conv3x3(h1, p["u2_w"], p["u2_b"]) + tproj(p["u2_tw"], p["u2_tb"]) + r2)
    pred = conv3x3(h2, p["uo_w"], p["uo_b"])
    return jnp.transpose(pred, (0, 3, 1, 2))


if __name__ == "__main__":
    key = jax.random.PRNGKey(0)
    kp, k1, k2, k3, k4 = jax.random.split(key, 5)
    params = init_params(kp)

    B, H, W = 2, 16, 16
    source = jax.random.normal(k1, (B, C_LAT, H, W), jnp.float32)
    noisy_latents = jax.random.normal(k2, (B, C_LAT, H, W), jnp.float32)
    target_pose = jax.random.normal(k3, (B, C_POSE, H, W), jnp.float32)
    t = jax.random.randint(k4, (B,), 0, 1000)

    model_pred = jax.jit(united_model_forward)(
        params, source, t, noisy_latents, target_pose)
    model_pred = jax.block_until_ready(model_pred)

    assert model_pred.shape == (B, C_LAT, H, W), model_pred.shape
    assert bool(jnp.all(jnp.isfinite(model_pred)))

    # Numerical check against the plain-JAX reference (kernel uses bf16 MXU
    # operands with f32 accumulation; keep the tolerance relative).
    ref = jax.jit(united_model_reference)(
        params, source, t, noisy_latents, target_pose)
    ref = jax.block_until_ready(ref)
    err = float(jnp.max(jnp.abs(model_pred - ref)))
    scale = float(jnp.max(jnp.abs(ref))) + 1e-6
    assert err / scale < 5e-2, (err, scale)

    print("KERNEL_OK")
</pallas_src>

<mosaic_0001>
module attributes {stable_mosaic.version = 11 : i64} {
  func.func @_fused_united_kernel(%arg0: i32, %arg1: memref<1x304x4xf32, #tpu.memory_space<vmem>>, %arg2: memref<1x304x4xf32, #tpu.memory_space<vmem>>, %arg3: memref<1x304x4xf32, #tpu.memory_space<vmem>>, %arg4: memref<1x4x32xf32, #tpu.memory_space<vmem>>, %arg5: memref<36x32xbf16, #tpu.memory_space<vmem>>, %arg6: memref<288x32xbf16, #tpu.memory_space<vmem>>, %arg7: memref<72x32xbf16, #tpu.memory_space<vmem>>, %arg8: memref<288x32xbf16, #tpu.memory_space<vmem>>, %arg9: memref<4x288xbf16, #tpu.memory_space<vmem>>, %arg10: memref<4x1xf32, #tpu.memory_space<vmem>>, %arg11: memref<1x4x256xf32, #tpu.memory_space<vmem>>, %arg12: memref<304x32xf32, #tpu.memory_space<vmem>>, %arg13: memref<256x32xf32, #tpu.memory_space<vmem>>) attributes {dimension_semantics = [#tpu.dimension_semantics<parallel>], iteration_bounds = array<i64: 2>, scalar_prefetch = 0 : i64, scratch_operands = 2 : i64, tpu.core_type = #tpu.core_type<tc>, window_params = [{transform_indices = @transform_0, window_bounds = array<i64: 1, 304, 4>}, {transform_indices = @transform_1, window_bounds = array<i64: 1, 304, 4>}, {transform_indices = @transform_2, window_bounds = array<i64: 1, 304, 4>}, {transform_indices = @transform_3, window_bounds = array<i64: 1, 4, 32>}, {pipeline_mode = #tpu.pipeline_mode<synchronous>, transform_indices = @transform_4, window_bounds = array<i64: 36, 32>}, {pipeline_mode = #tpu.pipeline_mode<synchronous>, transform_indices = @transform_5, window_bounds = array<i64: 288, 32>}, {pipeline_mode = #tpu.pipeline_mode<synchronous>, transform_indices = @transform_6, window_bounds = array<i64: 72, 32>}, {pipeline_mode = #tpu.pipeline_mode<synchronous>, transform_indices = @transform_7, window_bounds = array<i64: 288, 32>}, {pipeline_mode = #tpu.pipeline_mode<synchronous>, transform_indices = @transform_8, window_bounds = array<i64: 4, 288>}, {pipeline_mode = #tpu.pipeline_mode<synchronous>, transform_indices = @transform_9, window_bounds = array<i64: 4, 1>}, {transform_indices = @transform_10, window_bounds = array<i64: 1, 4, 256>}]} {
    %0 = tpu.iota {dimensions = array<i32: 0>} : vector<256x1xi32>
    %c16_i32 = arith.constant 16 : i32
    %c0_i32 = arith.constant 0 : i32
    %1 = arith.cmpi eq, %c16_i32, %c0_i32 : i32
    %c1_i32 = arith.constant 1 : i32
    %2 = arith.select %1, %c1_i32, %c16_i32 : i32
    %3 = vector.broadcast %2 : i32 to vector<256x1xi32>
    %4 = arith.remsi %0, %3 : vector<256x1xi32>
    %c0_i32_0 = arith.constant 0 : i32
    %5 = vector.broadcast %c0_i32_0 : i32 to vector<256x1xi32>
    %6 = arith.cmpi ne, %4, %5 : vector<256x1xi32>
    %c0_i32_1 = arith.constant 0 : i32
    %7 = vector.broadcast %c0_i32_1 : i32 to vector<256x1xi32>
    %8 = arith.cmpi slt, %4, %7 : vector<256x1xi32>
    %c0_i32_2 = arith.constant 0 : i32
    %9 = arith.cmpi slt, %2, %c0_i32_2 : i32
    %10 = vector.broadcast %9 : i1 to vector<256x1xi1>
    %11 = vector.broadcast %10 : vector<256x1xi1> to vector<256x1xi1>
    %12 = arith.xori %8, %11 : vector<256x1xi1>
    %13 = arith.andi %12, %6 : vector<256x1xi1>
    %14 = vector.broadcast %2 : i32 to vector<256x1xi32>
    %15 = arith.addi %4, %14 : vector<256x1xi32>
    %16 = arith.select %13, %15, %4 : vector<256x1xi1>, vector<256x1xi32>
    %c1_i32_3 = arith.constant 1 : i32
    %17 = vector.broadcast %c1_i32_3 : i32 to vector<256x1xi32>
    %18 = arith.cmpi sge, %16, %17 : vector<256x1xi32>
    %c14_i32 = arith.constant 14 : i32
    %19 = vector.broadcast %c14_i32 : i32 to vector<256x1xi32>
    %20 = arith.cmpi sle, %16, %19 : vector<256x1xi32>
    %cst = arith.constant 0.000000e+00 : f32
    %21 = vector.broadcast %cst : f32 to vector<24x32xf32>
    %c0 = arith.constant 0 : index
    %c0_4 = arith.constant 0 : index
    %22 = vector.load %arg12[%c0, %c0_4] : memref<304x32xf32, #tpu.memory_space<vmem>>, vector<24x32xf32>
    tpu.vector_store %arg12[%c0, %c0_4], %21 {strides = array<i32>} : memref<304x32xf32, #tpu.memory_space<vmem>>, vector<24x32xf32>,
    %cst_5 = arith.constant 0.000000e+00 : f32
    %23 = vector.broadcast %cst_5 : f32 to vector<24x32xf32>
    %c280 = arith.constant 280 : index
    %c0_6 = arith.constant 0 : index
    %24 = vector.load %arg12[%c280, %c0_6] : memref<304x32xf32, #tpu.memory_space<vmem>>, vector<24x32xf32>
    tpu.vector_store %arg12[%c280, %c0_6], %23 {strides = array<i32>} : memref<304x32xf32, #tpu.memory_space<vmem>>, vector<24x32xf32>,
    %c0_7 = arith.constant 0 : index
    %c0_8 = arith.constant 0 : index
    %c0_9 = arith.constant 0 : index
    %25 = vector.load %arg4[%c0_7, %c0_8, %c0_9] : memref<1x4x32xf32, #tpu.memory_space<vmem>>, vector<1x4x32xf32>
    %26 = vector.shape_cast %25 : vector<1x4x32xf32> to vector<4x32xf32>
    %c0_10 = arith.constant 0 : index
    %c7 = arith.constant 7 : index
    %c0_11 = arith.constant 0 : index
    %27 = vector.load %arg1[%c0_10, %c7, %c0_11] : memref<1x304x4xf32, #tpu.memory_space<vmem>>, vector<1x256x4xf32>
    %28 = vector.shape_cast %27 : vector<1x256x4xf32> to vector<256x4xf32>
    %cst_12 = arith.constant 0.000000e+00 : f32
    %29 = vector.shape_cast %18 : vector<256x1xi1> to vector<256x1xi1>
    %30 = vector.broadcast %29 : vector<256x1xi1> to vector<256x4xi1>
    %31 = vector.broadcast %cst_12 : f32 to vector<256x4xf32>
    %32 = arith.select %30, %28, %31 : vector<256x4xi1>, vector<256x4xf32>
    %c0_13 = arith.constant 0 : index
    %c8 = arith.constant 8 : index
    %c0_14 = arith.constant 0 : index
    %33 = vector.load %arg1[%c0_13, %c8, %c0_14] : memref<1x304x4xf32, #tpu.memory_space<vmem>>, vector<1x256x4xf32>
    %34 = vector.shape_cast %33 : vector<1x256x4xf32> to vector<256x4xf32>
    %c0_15 = arith.constant 0 : index
    %c9 = arith.constant 9 : index
    %c0_16 = arith.constant 0 : index
    %35 = vector.load %arg1[%c0_15, %c9, %c0_16] : memref<1x304x4xf32, #tpu.memory_space<vmem>>, vector<1x256x4xf32>
    %36 = vector.shape_cast %35 : vector<1x256x4xf32> to vector<256x4xf32>
    %cst_17 = arith.constant 0.000000e+00 : f32
    %37 = vector.shape_cast %20 : vector<256x1xi1> to vector<256x1xi1>
    %38 = vector.broadcast %37 : vector<256x1xi1> to vector<256x4xi1>
    %39 = vector.broadcast %cst_17 : f32 to vector<256x4xf32>
    %40 = arith.select %38, %36, %39 : vector<256x4xi1>, vector<256x4xf32>
    %c0_18 = arith.constant 0 : index
    %c23 = arith.constant 23 : index
    %c0_19 = arith.constant 0 : index
    %41 = vector.load %arg1[%c0_18, %c23, %c0_19] : memref<1x304x4xf32, #tpu.memory_space<vmem>>, vector<1x256x4xf32>
    %42 = vector.shape_cast %41 : vector<1x256x4xf32> to vector<256x4xf32>
    %cst_20 = arith.constant 0.000000e+00 : f32
    %43 = vector.shape_cast %18 : vector<256x1xi1> to vector<256x1xi1>
    %44 = vector.broadcast %43 : vector<256x1xi1> to vector<256x4xi1>
    %45 = vector.broadcast %cst_20 : f32 to vector<256x4xf32>
    %46 = arith.select %44, %42, %45 : vector<256x4xi1>, vector<256x4xf32>
    %c0_21 = arith.constant 0 : index
    %c24 = arith.constant 24 : index
    %c0_22 = arith.constant 0 : index
    %47 = vector.load %arg1[%c0_21, %c24, %c0_22] : memref<1x304x4xf32, #tpu.memory_space<vmem>>, vector<1x256x4xf32>
    %48 = vector.shape_cast %47 : vector<1x256x4xf32> to vector<256x4xf32>
    %c0_23 = arith.constant 0 : index
    %c25 = arith.constant 25 : index
    %c0_24 = arith.constant 0 : index
    %49 = vector.load %arg1[%c0_23, %c25, %c0_24] : memref<1x304x4xf32, #tpu.memory_space<vmem>>, vector<1x256x4xf32>
    %50 = vector.shape_cast %49 : vector<1x256x4xf32> to vector<256x4xf32>
    %cst_25 = arith.constant 0.000000e+00 : f32
    %51 = vector.shape_cast %20 : vector<256x1xi1> to vector<256x1xi1>
    %52 = vector.broadcast %51 : vector<256x1xi1> to vector<256x4xi1>
    %53 = vector.broadcast %cst_25 : f32 to vector<256x4xf32>
    %54 = arith.select %52, %50, %53 : vector<256x4xi1>, vector<256x4xf32>
    %c0_26 = arith.constant 0 : index
    %c39 = arith.constant 39 : index
    %c0_27 = arith.constant 0 : index
    %55 = vector.load %arg1[%c0_26, %c39, %c0_27] : memref<1x304x4xf32, #tpu.memory_space<vmem>>, vector<1x256x4xf32>
    %56 = vector.shape_cast %55 : vector<1x256x4xf32> to vector<256x4xf32>
    %cst_28 = arith.constant 0.000000e+00 : f32
    %57 = vector.shape_cast %18 : vector<256x1xi1> to vector<256x1xi1>
    %58 = vector.broadcast %57 : vector<256x1xi1> to vector<256x4xi1>
    %59 = vector.broadcast %cst_28 : f32 to vector<256x4xf32>
    %60 = arith.select %58, %56, %59 : vector<256x4xi1>, vector<256x4xf32>
    %c0_29 = arith.constant 0 : index
    %c40 = arith.constant 40 : index
    %c0_30 = arith.constant 0 : index
    %61 = vector.load %arg1[%c0_29, %c40, %c0_30] : memref<1x304x4xf32, #tpu.memory_space<vmem>>, vector<1x256x4xf32>
    %62 = vector.shape_cast %61 : vector<1x256x4xf32> to vector<256x4xf32>
    %c0_31 = arith.constant 0 : index
    %c41 = arith.constant 41 : index
    %c0_32 = arith.constant 0 : index
    %63 = vector.load %arg1[%c0_31, %c41, %c0_32] : memref<1x304x4xf32, #tpu.memory_space<vmem>>, vector<1x256x4xf32>
    %64 = vector.shape_cast %63 : vector<1x256x4xf32> to vector<256x4xf32>
    %cst_33 = arith.constant 0.000000e+00 : f32
    %65 = vector.shape_cast %20 : vector<256x1xi1> to vector<256x1xi1>
    %66 = vector.broadcast %65 : vector<256x1xi1> to vector<256x4xi1>
    %67 = vector.broadcast %cst_33 : f32 to vector<256x4xf32>
    %68 = arith.select %66, %64, %67 : vector<256x4xi1>, vector<256x4xf32>
    %69 = tpu.concatenate %32, %34, %40, %46, %48, %54, %60, %62, %68 in 1 : vector<256x4xf32>, vector<256x4xf32>, vector<256x4xf32>, vector<256x4xf32>, vector<256x4xf32>, vector<256x4xf32>, vector<256x4xf32>, vector<256x4xf32>, vector<256x4xf32> -> vector<256x36xf32>
    %70 = arith.truncf %69 : vector<256x36xf32> to vector<256x36xbf16>
    %c0_34 = arith.constant 0 : index
    %c0_35 = arith.constant 0 : index
    %71 = vector.load %arg5[%c0_34, %c0_35] : memref<36x32xbf16, #tpu.memory_space<vmem>>, vector<36x32xbf16>
    %cst_36 = arith.constant dense<0.000000e+00> : vector<256x32xf32>
    %72 = tpu.matmul %70, %71, %cst_36 {dimension_numbers = #tpu.dot_dimension_numbers<[1], [0], [0], [1], [0, 0, 1, 1], [], []>} : vector<256x36xbf16>, vector<36x32xbf16>, vector<256x32xf32> -> vector<256x32xf32>
    %73 = vector.extract_strided_slice %26 {offsets = [0, 0], sizes = [1, 32], strides = [1, 1]} : vector<4x32xf32> to vector<1x32xf32>
    %74 = vector.broadcast %73 : vector<1x32xf32> to vector<256x32xf32>
    %75 = arith.addf %72, %74 : vector<256x32xf32>
    %76 = arith.negf %75 : vector<256x32xf32>
    %77 = math.exp %76 : vector<256x32xf32>
    %cst_37 = arith.constant 1.000000e+00 : f32
    %78 = vector.broadcast %cst_37 : f32 to vector<256x32xf32>
    %79 = arith.addf %78, %77 : vector<256x32xf32>
    %80 = arith.divf %78, %79 : vector<256x32xf32>
    %81 = arith.mulf %75, %80 : vector<256x32xf32>
    %c24_38 = arith.constant 24 : index
    %c0_39 = arith.constant 0 : index
    %82 = vector.load %arg12[%c24_38, %c0_39] : memref<304x32xf32, #tpu.memory_space<vmem>>, vector<256x32xf32>
    tpu.vector_store %arg12[%c24_38, %c0_39], %81 {strides = array<i32>} : memref<304x32xf32, #tpu.memory_space<vmem>>, vector<256x32xf32>,
    %c7_40 = arith.constant 7 : index
    %c0_41 = arith.constant 0 : index
    %83 = vector.load %arg12[%c7_40, %c0_41] : memref<304x32xf32, #tpu.memory_space<vmem>>, vector<256x32xf32>
    %cst_42 = arith.constant 0.000000e+00 : f32
    %84 = vector.shape_cast %18 : vector<256x1xi1> to vector<256x1xi1>
    %85 = vector.broadcast %84 : vector<256x1xi1> to vector<256x32xi1>
    %86 = vector.broadcast %cst_42 : f32 to vector<256x32xf32>
    %87 = arith.select %85, %83, %86 : vector<256x32xi1>, vector<256x32xf32>
    %c8_43 = arith.constant 8 : index
    %c0_44 = arith.constant 0 : index
    %88 = vector.load %arg12[%c8_43, %c0_44] : memref<304x32xf32, #tpu.memory_space<vmem>>, vector<256x32xf32>
    %c9_45 = arith.constant 9 : index
    %c0_46 = arith.constant 0 : index
    %89 = vector.load %arg12[%c9_45, %c0_46] : memref<304x32xf32, #tpu.memory_space<vmem>>, vector<256x32xf32>
    %cst_47 = arith.constant 0.000000e+00 : f32
    %90 = vector.shape_cast %20 : vector<256x1xi1> to vector<256x1xi1>
    %91 = vector.broadcast %90 : vector<256x1xi1> to vector<256x32xi1>
    %92 = vector.broadcast %cst_47 : f32 to vector<256x32xf32>
    %93 = arith.select %91, %89, %92 : vector<256x32xi1>, vector<256x32xf32>
    %c23_48 = arith.constant 23 : index
    %c0_49 = arith.constant 0 : index
    %94 = vector.load %arg12[%c23_48, %c0_49] : memref<304x32xf32, #tpu.memory_space<vmem>>, vector<256x32xf32>
    %cst_50 = arith.constant 0.000000e+00 : f32
    %95 = vector.shape_cast %18 : vector<256x1xi1> to vector<256x1xi1>
    %96 = vector.broadcast %95 : vector<256x1xi1> to vector<256x32xi1>
    %97 = vector.broadcast %cst_50 : f32 to vector<256x32xf32>
    %98 = arith.select %96, %94, %97 : vector<256x32xi1>, vector<256x32xf32>
    %c24_51 = arith.constant 24 : index
    %c0_52 = arith.constant 0 : index
    %99 = vector.load %arg12[%c24_51, %c0_52] : memref<304x32xf32, #tpu.memory_space<vmem>>, vector<256x32xf32>
    %c25_53 = arith.constant 25 : index
    %c0_54 = arith.constant 0 : index
    %100 = vector.load %arg12[%c25_53, %c0_54] : memref<304x32xf32, #tpu.memory_space<vmem>>, vector<256x32xf32>
    %cst_55 = arith.constant 0.000000e+00 : f32
    %101 = vector.shape_cast %20 : vector<256x1xi1> to vector<256x1xi1>
    %102 = vector.broadcast %101 : vector<256x1xi1> to vector<256x32xi1>
    %103 = vector.broadcast %cst_55 : f32 to vector<256x32xf32>
    %104 = arith.select %102, %100, %103 : vector<256x32xi1>, vector<256x32xf32>
    %c39_56 = arith.constant 39 : index
    %c0_57 = arith.constant 0 : index
    %105 = vector.load %arg12[%c39_56, %c0_57] : memref<304x32xf32, #tpu.memory_space<vmem>>, vector<256x32xf32>
    %cst_58 = arith.constant 0.000000e+00 : f32
    %106 = vector.shape_cast %18 : vector<256x1xi1> to vector<256x1xi1>
    %107 = vector.broadcast %106 : vector<256x1xi1> to vector<256x32xi1>
    %108 = vector.broadcast %cst_58 : f32 to vector<256x32xf32>
    %109 = arith.select %107, %105, %108 : vector<256x32xi1>, vector<256x32xf32>
    %c40_59 = arith.constant 40 : index
    %c0_60 = arith.constant 0 : index
    %110 = vector.load %arg12[%c40_59, %c0_60] : memref<304x32xf32, #tpu.memory_space<vmem>>, vector<256x32xf32>
    %c41_61 = arith.constant 41 : index
    %c0_62 = arith.constant 0 : index
    %111 = vector.load %arg12[%c41_61, %c0_62] : memref<304x32xf32, #tpu.memory_space<vmem>>, vector<256x32xf32>
    %cst_63 = arith.constant 0.000000e+00 : f32
    %112 = vector.shape_cast %20 : vector<256x1xi1> to vector<256x1xi1>
    %113 = vector.broadcast %112 : vector<256x1xi1> to vector<256x32xi1>
    %114 = vector.broadcast %cst_63 : f32 to vector<256x32xf32>
    %115 = arith.select %113, %111, %114 : vector<256x32xi1>, vector<256x32xf32>
    %116 = tpu.concatenate %87, %88, %93, %98, %99, %104, %109, %110, %115 in 1 : vector<256x32xf32>, vector<256x32xf32>, vector<256x32xf32>, vector<256x32xf32>, vector<256x32xf32>, vector<256x32xf32>, vector<256x32xf32>, vector<256x32xf32>, vector<256x32xf32> -> vector<256x288xf32>
    %117 = arith.truncf %116 : vector<256x288xf32> to vector<256x288xbf16>
    %c0_64 = arith.constant 0 : index
    %c0_65 = arith.constant 0 : index
    %118 = vector.load %arg6[%c0_64, %c0_65] : memref<288x32xbf16, #tpu.memory_space<vmem>>, vector<288x32xbf16>
    %cst_66 = arith.constant dense<0.000000e+00> : vector<256x32xf32>
    %119 = tpu.matmul %117, %118, %cst_66 {dimension_numbers = #tpu.dot_dimension_numbers<[1], [0], [0], [1], [0, 0, 1, 1], [], []>} : vector<256x288xbf16>, vector<288x32xbf16>, vector<256x32xf32> -> vector<256x32xf32>
    %120 = vector.extract_strided_slice %26 {offsets = [1, 0], sizes = [1, 32], strides = [1, 1]} : vector<4x32xf32> to vector<1x32xf32>
    %121 = vector.broadcast %120 : vector<1x32xf32> to vector<256x32xf32>
    %122 = arith.addf %119, %121 : vector<256x32xf32>
    %123 = arith.negf %122 : vector<256x32xf32>
    %124 = math.exp %123 : vector<256x32xf32>
    %cst_67 = arith.constant 1.000000e+00 : f32
    %125 = vector.broadcast %cst_67 : f32 to vector<256x32xf32>
    %126 = arith.addf %125, %124 : vector<256x32xf32>
    %127 = arith.divf %125, %126 : vector<256x32xf32>
    %128 = arith.mulf %122, %127 : vector<256x32xf32>
    %c0_68 = arith.constant 0 : index
    %c0_69 = arith.constant 0 : index
    %129 = vector.load %arg13[%c0_68, %c0_69] : memref<256x32xf32, #tpu.memory_space<vmem>>, vector<256x32xf32>
    tpu.vector_store %arg13[%c0_68, %c0_69], %128 {strides = array<i32>} : memref<256x32xf32, #tpu.memory_space<vmem>>, vector<256x32xf32>,
    %c0_70 = arith.constant 0 : index
    %c7_71 = arith.constant 7 : index
    %c0_72 = arith.constant 0 : index
    %130 = vector.load %arg2[%c0_70, %c7_71, %c0_72] : memref<1x304x4xf32, #tpu.memory_space<vmem>>, vector<1x256x4xf32>
    %131 = vector.shape_cast %130 : vector<1x256x4xf32> to vector<256x4xf32>
    %c0_73 = arith.constant 0 : index
    %c7_74 = arith.constant 7 : index
    %c0_75 = arith.constant 0 : index
    %132 = vector.load %arg3[%c0_73, %c7_74, %c0_75] : memref<1x304x4xf32, #tpu.memory_space<vmem>>, vector<1x256x4xf32>
    %133 = vector.shape_cast %132 : vector<1x256x4xf32> to vector<256x4xf32>
    %134 = tpu.concatenate %131, %133 in 1 : vector<256x4xf32>, vector<256x4xf32> -> vector<256x8xf32>
    %cst_76 = arith.constant 0.000000e+00 : f32
    %135 = vector.shape_cast %18 : vector<256x1xi1> to vector<256x1xi1>
    %136 = vector.broadcast %135 : vector<256x1xi1> to vector<256x8xi1>
    %137 = vector.broadcast %cst_76 : f32 to vector<256x8xf32>
    %138 = arith.select %136, %134, %137 : vector<256x8xi1>, vector<256x8xf32>
    %c0_77 = arith.constant 0 : index
    %c8_78 = arith.constant 8 : index
    %c0_79 = arith.constant 0 : index
    %139 = vector.load %arg2[%c0_77, %c8_78, %c0_79] : memref<1x304x4xf32, #tpu.memory_space<vmem>>, vector<1x256x4xf32>
    %140 = vector.shape_cast %139 : vector<1x256x4xf32> to vector<256x4xf32>
    %c0_80 = arith.constant 0 : index
    %c8_81 = arith.constant 8 : index
    %c0_82 = arith.constant 0 : index
    %141 = vector.load %arg3[%c0_80, %c8_81, %c0_82] : memref<1x304x4xf32, #tpu.memory_space<vmem>>, vector<1x256x4xf32>
    %142 = vector.shape_cast %141 : vector<1x256x4xf32> to vector<256x4xf32>
    %143 = tpu.concatenate %140, %142 in 1 : vector<256x4xf32>, vector<256x4xf32> -> vector<256x8xf32>
    %c0_83 = arith.constant 0 : index
    %c9_84 = arith.constant 9 : index
    %c0_85 = arith.constant 0 : index
    %144 = vector.load %arg2[%c0_83, %c9_84, %c0_85] : memref<1x304x4xf32, #tpu.memory_space<vmem>>, vector<1x256x4xf32>
    %145 = vector.shape_cast %144 : vector<1x256x4xf32> to vector<256x4xf32>
    %c0_86 = arith.constant 0 : index
    %c9_87 = arith.constant 9 : index
    %c0_88 = arith.constant 0 : index
    %146 = vector.load %arg3[%c0_86, %c9_87, %c0_88] : memref<1x304x4xf32, #tpu.memory_space<vmem>>, vector<1x256x4xf32>
    %147 = vector.shape_cast %146 : vector<1x256x4xf32> to vector<256x4xf32>
    %148 = tpu.concatenate %145, %147 in 1 : vector<256x4xf32>, vector<256x4xf32> -> vector<256x8xf32>
    %cst_89 = arith.constant 0.000000e+00 : f32
    %149 = vector.shape_cast %20 : vector<256x1xi1> to vector<256x1xi1>
    %150 = vector.broadcast %149 : vector<256x1xi1> to vector<256x8xi1>
    %151 = vector.broadcast %cst_89 : f32 to vector<256x8xf32>
    %152 = arith.select %150, %148, %151 : vector<256x8xi1>, vector<256x8xf32>
    %c0_90 = arith.constant 0 : index
    %c23_91 = arith.constant 23 : index
    %c0_92 = arith.constant 0 : index
    %153 = vector.load %arg2[%c0_90, %c23_91, %c0_92] : memref<1x304x4xf32, #tpu.memory_space<vmem>>, vector<1x256x4xf32>
    %154 = vector.shape_cast %153 : vector<1x256x4xf32> to vector<256x4xf32>
    %c0_93 = arith.constant 0 : index
    %c23_94 = arith.constant 23 : index
    %c0_95 = arith.constant 0 : index
    %155 = vector.load %arg3[%c0_93, %c23_94, %c0_95] : memref<1x304x4xf32, #tpu.memory_space<vmem>>, vector<1x256x4xf32>
    %156 = vector.shape_cast %155 : vector<1x256x4xf32> to vector<256x4xf32>
    %157 = tpu.concatenate %154, %156 in 1 : vector<256x4xf32>, vector<256x4xf32> -> vector<256x8xf32>
    %cst_96 = arith.constant 0.000000e+00 : f32
    %158 = vector.shape_cast %18 : vector<256x1xi1> to vector<256x1xi1>
    %159 = vector.broadcast %158 : vector<256x1xi1> to vector<256x8xi1>
    %160 = vector.broadcast %cst_96 : f32 to vector<256x8xf32>
    %161 = arith.select %159, %157, %160 : vector<256x8xi1>, vector<256x8xf32>
    %c0_97 = arith.constant 0 : index
    %c24_98 = arith.constant 24 : index
    %c0_99 = arith.constant 0 : index
    %162 = vector.load %arg2[%c0_97, %c24_98, %c0_99] : memref<1x304x4xf32, #tpu.memory_space<vmem>>, vector<1x256x4xf32>
    %163 = vector.shape_cast %162 : vector<1x256x4xf32> to vector<256x4xf32>
    %c0_100 = arith.constant 0 : index
    %c24_101 = arith.constant 24 : index
    %c0_102 = arith.constant 0 : index
    %164 = vector.load %arg3[%c0_100, %c24_101, %c0_102] : memref<1x304x4xf32, #tpu.memory_space<vmem>>, vector<1x256x4xf32>
    %165 = vector.shape_cast %164 : vector<1x256x4xf32> to vector<256x4xf32>
    %166 = tpu.concatenate %163, %165 in 1 : vector<256x4xf32>, vector<256x4xf32> -> vector<256x8xf32>
    %c0_103 = arith.constant 0 : index
    %c25_104 = arith.constant 25 : index
    %c0_105 = arith.constant 0 : index
    %167 = vector.load %arg2[%c0_103, %c25_104, %c0_105] : memref<1x304x4xf32, #tpu.memory_space<vmem>>, vector<1x256x4xf32>
    %168 = vector.shape_cast %167 : vector<1x256x4xf32> to vector<256x4xf32>
    %c0_106 = arith.constant 0 : index
    %c25_107 = arith.constant 25 : index
    %c0_108 = arith.constant 0 : index
    %169 = vector.load %arg3[%c0_106, %c25_107, %c0_108] : memref<1x304x4xf32, #tpu.memory_space<vmem>>, vector<1x256x4xf32>
    %170 = vector.shape_cast %169 : vector<1x256x4xf32> to vector<256x4xf32>
    %171 = tpu.concatenate %168, %170 in 1 : vector<256x4xf32>, vector<256x4xf32> -> vector<256x8xf32>
    %cst_109 = arith.constant 0.000000e+00 : f32
    %172 = vector.shape_cast %20 : vector<256x1xi1> to vector<256x1xi1>
    %173 = vector.broadcast %172 : vector<256x1xi1> to vector<256x8xi1>
    %174 = vector.broadcast %cst_109 : f32 to vector<256x8xf32>
    %175 = arith.select %173, %171, %174 : vector<256x8xi1>, vector<256x8xf32>
    %c0_110 = arith.constant 0 : index
    %c39_111 = arith.constant 39 : index
    %c0_112 = arith.constant 0 : index
    %176 = vector.load %arg2[%c0_110, %c39_111, %c0_112] : memref<1x304x4xf32, #tpu.memory_space<vmem>>, vector<1x256x4xf32>
    %177 = vector.shape_cast %176 : vector<1x256x4xf32> to vector<256x4xf32>
    %c0_113 = arith.constant 0 : index
    %c39_114 = arith.constant 39 : index
    %c0_115 = arith.constant 0 : index
    %178 = vector.load %arg3[%c0_113, %c39_114, %c0_115] : memref<1x304x4xf32, #tpu.memory_space<vmem>>, vector<1x256x4xf32>
    %179 = vector.shape_cast %178 : vector<1x256x4xf32> to vector<256x4xf32>
    %180 = tpu.concatenate %177, %179 in 1 : vector<256x4xf32>, vector<256x4xf32> -> vector<256x8xf32>
    %cst_116 = arith.constant 0.000000e+00 : f32
    %181 = vector.shape_cast %18 : vector<256x1xi1> to vector<256x1xi1>
    %182 = vector.broadcast %181 : vector<256x1xi1> to vector<256x8xi1>
    %183 = vector.broadcast %cst_116 : f32 to vector<256x8xf32>
    %184 = arith.select %182, %180, %183 : vector<256x8xi1>, vector<256x8xf32>
    %c0_117 = arith.constant 0 : index
    %c40_118 = arith.constant 40 : index
    %c0_119 = arith.constant 0 : index
    %185 = vector.load %arg2[%c0_117, %c40_118, %c0_119] : memref<1x304x4xf32, #tpu.memory_space<vmem>>, vector<1x256x4xf32>
    %186 = vector.shape_cast %185 : vector<1x256x4xf32> to vector<256x4xf32>
    %c0_120 = arith.constant 0 : index
    %c40_121 = arith.constant 40 : index
    %c0_122 = arith.constant 0 : index
    %187 = vector.load %arg3[%c0_120, %c40_121, %c0_122] : memref<1x304x4xf32, #tpu.memory_space<vmem>>, vector<1x256x4xf32>
    %188 = vector.shape_cast %187 : vector<1x256x4xf32> to vector<256x4xf32>
    %189 = tpu.concatenate %186, %188 in 1 : vector<256x4xf32>, vector<256x4xf32> -> vector<256x8xf32>
    %c0_123 = arith.constant 0 : index
    %c41_124 = arith.constant 41 : index
    %c0_125 = arith.constant 0 : index
    %190 = vector.load %arg2[%c0_123, %c41_124, %c0_125] : memref<1x304x4xf32, #tpu.memory_space<vmem>>, vector<1x256x4xf32>
    %191 = vector.shape_cast %190 : vector<1x256x4xf32> to vector<256x4xf32>
    %c0_126 = arith.constant 0 : index
    %c41_127 = arith.constant 41 : index
    %c0_128 = arith.constant 0 : index
    %192 = vector.load %arg3[%c0_126, %c41_127, %c0_128] : memref<1x304x4xf32, #tpu.memory_space<vmem>>, vector<1x256x4xf32>
    %193 = vector.shape_cast %192 : vector<1x256x4xf32> to vector<256x4xf32>
    %194 = tpu.concatenate %191, %193 in 1 : vector<256x4xf32>, vector<256x4xf32> -> vector<256x8xf32>
    %cst_129 = arith.constant 0.000000e+00 : f32
    %195 = vector.shape_cast %20 : vector<256x1xi1> to vector<256x1xi1>
    %196 = vector.broadcast %195 : vector<256x1xi1> to vector<256x8xi1>
    %197 = vector.broadcast %cst_129 : f32 to vector<256x8xf32>
    %198 = arith.select %196, %194, %197 : vector<256x8xi1>, vector<256x8xf32>
    %199 = tpu.concatenate %138, %143, %152, %161, %166, %175, %184, %189, %198 in 1 : vector<256x8xf32>, vector<256x8xf32>, vector<256x8xf32>, vector<256x8xf32>, vector<256x8xf32>, vector<256x8xf32>, vector<256x8xf32>, vector<256x8xf32>, vector<256x8xf32> -> vector<256x72xf32>
    %200 = arith.truncf %199 : vector<256x72xf32> to vector<256x72xbf16>
    %c0_130 = arith.constant 0 : index
    %c0_131 = arith.constant 0 : index
    %201 = vector.load %arg7[%c0_130, %c0_131] : memref<72x32xbf16, #tpu.memory_space<vmem>>, vector<72x32xbf16>
    %cst_132 = arith.constant dense<0.000000e+00> : vector<256x32xf32>
    %202 = tpu.matmul %200, %201, %cst_132 {dimension_numbers = #tpu.dot_dimension_numbers<[1], [0], [0], [1], [0, 0, 1, 1], [], []>} : vector<256x72xbf16>, vector<72x32xbf16>, vector<256x32xf32> -> vector<256x32xf32>
    %203 = vector.extract_strided_slice %26 {offsets = [2, 0], sizes = [1, 32], strides = [1, 1]} : vector<4x32xf32> to vector<1x32xf32>
    %204 = vector.broadcast %203 : vector<1x32xf32> to vector<256x32xf32>
    %205 = arith.addf %202, %204 : vector<256x32xf32>
    %c24_133 = arith.constant 24 : index
    %c0_134 = arith.constant 0 : index
    %206 = vector.load %arg12[%c24_133, %c0_134] : memref<304x32xf32, #tpu.memory_space<vmem>>, vector<256x32xf32>
    %207 = arith.addf %205, %206 : vector<256x32xf32>
    %208 = arith.negf %207 : vector<256x32xf32>
    %209 = math.exp %208 : vector<256x32xf32>
    %cst_135 = arith.constant 1.000000e+00 : f32
    %210 = vector.broadcast %cst_135 : f32 to vector<256x32xf32>
    %211 = arith.addf %210, %209 : vector<256x32xf32>
    %212 = arith.divf %210, %211 : vector<256x32xf32>
    %213 = arith.mulf %207, %212 : vector<256x32xf32>
    %c24_136 = arith.constant 24 : index
    %c0_137 = arith.constant 0 : index
    %214 = vector.load %arg12[%c24_136, %c0_137] : memref<304x32xf32, #tpu.memory_space<vmem>>, vector<256x32xf32>
    tpu.vector_store %arg12[%c24_136, %c0_137], %213 {strides = array<i32>} : memref<304x32xf32, #tpu.memory_space<vmem>>, vector<256x32xf32>,
    %c7_138 = arith.constant 7 : index
    %c0_139 = arith.constant 0 : index
    %215 = vector.load %arg12[%c7_138, %c0_139] : memref<304x32xf32, #tpu.memory_space<vmem>>, vector<256x32xf32>
    %cst_140 = arith.constant 0.000000e+00 : f32
    %216 = vector.shape_cast %18 : vector<256x1xi1> to vector<256x1xi1>
    %217 = vector.broadcast %216 : vector<256x1xi1> to vector<256x32xi1>
    %218 = vector.broadcast %cst_140 : f32 to vector<256x32xf32>
    %219 = arith.select %217, %215, %218 : vector<256x32xi1>, vector<256x32xf32>
    %c8_141 = arith.constant 8 : index
    %c0_142 = arith.constant 0 : index
    %220 = vector.load %arg12[%c8_141, %c0_142] : memref<304x32xf32, #tpu.memory_space<vmem>>, vector<256x32xf32>
    %c9_143 = arith.constant 9 : index
    %c0_144 = arith.constant 0 : index
    %221 = vector.load %arg12[%c9_143, %c0_144] : memref<304x32xf32, #tpu.memory_space<vmem>>, vector<256x32xf32>
    %cst_145 = arith.constant 0.000000e+00 : f32
    %222 = vector.shape_cast %20 : vector<256x1xi1> to vector<256x1xi1>
    %223 = vector.broadcast %222 : vector<256x1xi1> to vector<256x32xi1>
    %224 = vector.broadcast %cst_145 : f32 to vector<256x32xf32>
    %225 = arith.select %223, %221, %224 : vector<256x32xi1>, vector<256x32xf32>
    %c23_146 = arith.constant 23 : index
    %c0_147 = arith.constant 0 : index
    %226 = vector.load %arg12[%c23_146, %c0_147] : memref<304x32xf32, #tpu.memory_space<vmem>>, vector<256x32xf32>
    %cst_148 = arith.constant 0.000000e+00 : f32
    %227 = vector.shape_cast %18 : vector<256x1xi1> to vector<256x1xi1>
    %228 = vector.broadcast %227 : vector<256x1xi1> to vector<256x32xi1>
    %229 = vector.broadcast %cst_148 : f32 to vector<256x32xf32>
    %230 = arith.select %228, %226, %229 : vector<256x32xi1>, vector<256x32xf32>
    %c24_149 = arith.constant 24 : index
    %c0_150 = arith.constant 0 : index
    %231 = vector.load %arg12[%c24_149, %c0_150] : memref<304x32xf32, #tpu.memory_space<vmem>>, vector<256x32xf32>
    %c25_151 = arith.constant 25 : index
    %c0_152 = arith.constant 0 : index
    %232 = vector.load %arg12[%c25_151, %c0_152] : memref<304x32xf32, #tpu.memory_space<vmem>>, vector<256x32xf32>
    %cst_153 = arith.constant 0.000000e+00 : f32
    %233 = vector.shape_cast %20 : vector<256x1xi1> to vector<256x1xi1>
    %234 = vector.broadcast %233 : vector<256x1xi1> to vector<256x32xi1>
    %235 = vector.broadcast %cst_153 : f32 to vector<256x32xf32>
    %236 = arith.select %234, %232, %235 : vector<256x32xi1>, vector<256x32xf32>
    %c39_154 = arith.constant 39 : index
    %c0_155 = arith.constant 0 : index
    %237 = vector.load %arg12[%c39_154, %c0_155] : memref<304x32xf32, #tpu.memory_space<vmem>>, vector<256x32xf32>
    %cst_156 = arith.constant 0.000000e+00 : f32
    %238 = vector.shape_cast %18 : vector<256x1xi1> to vector<256x1xi1>
    %239 = vector.broadcast %238 : vector<256x1xi1> to vector<256x32xi1>
    %240 = vector.broadcast %cst_156 : f32 to vector<256x32xf32>
    %241 = arith.select %239, %237, %240 : vector<256x32xi1>, vector<256x32xf32>
    %c40_157 = arith.constant 40 : index
    %c0_158 = arith.constant 0 : index
    %242 = vector.load %arg12[%c40_157, %c0_158] : memref<304x32xf32, #tpu.memory_space<vmem>>, vector<256x32xf32>
    %c41_159 = arith.constant 41 : index
    %c0_160 = arith.constant 0 : index
    %243 = vector.load %arg12[%c41_159, %c0_160] : memref<304x32xf32, #tpu.memory_space<vmem>>, vector<256x32xf32>
    %cst_161 = arith.constant 0.000000e+00 : f32
    %244 = vector.shape_cast %20 : vector<256x1xi1> to vector<256x1xi1>
    %245 = vector.broadcast %244 : vector<256x1xi1> to vector<256x32xi1>
    %246 = vector.broadcast %cst_161 : f32 to vector<256x32xf32>
    %247 = arith.select %245, %243, %246 : vector<256x32xi1>, vector<256x32xf32>
    %248 = tpu.concatenate %219, %220, %225, %230, %231, %236, %241, %242, %247 in 1 : vector<256x32xf32>, vector<256x32xf32>, vector<256x32xf32>, vector<256x32xf32>, vector<256x32xf32>, vector<256x32xf32>, vector<256x32xf32>, vector<256x32xf32>, vector<256x32xf32> -> vector<256x288xf32>
    %249 = arith.truncf %248 : vector<256x288xf32> to vector<256x288xbf16>
    %c0_162 = arith.constant 0 : index
    %c0_163 = arith.constant 0 : index
    %250 = vector.load %arg8[%c0_162, %c0_163] : memref<288x32xbf16, #tpu.memory_space<vmem>>, vector<288x32xbf16>
    %cst_164 = arith.constant dense<0.000000e+00> : vector<256x32xf32>
    %251 = tpu.matmul %249, %250, %cst_164 {dimension_numbers = #tpu.dot_dimension_numbers<[1], [0], [0], [1], [0, 0, 1, 1], [], []>} : vector<256x288xbf16>, vector<288x32xbf16>, vector<256x32xf32> -> vector<256x32xf32>
    %252 = vector.extract_strided_slice %26 {offsets = [3, 0], sizes = [1, 32], strides = [1, 1]} : vector<4x32xf32> to vector<1x32xf32>
    %253 = vector.broadcast %252 : vector<1x32xf32> to vector<256x32xf32>
    %254 = arith.addf %251, %253 : vector<256x32xf32>
    %c0_165 = arith.constant 0 : index
    %c0_166 = arith.constant 0 : index
    %255 = vector.load %arg13[%c0_165, %c0_166] : memref<256x32xf32, #tpu.memory_space<vmem>>, vector<256x32xf32>
    %256 = arith.addf %254, %255 : vector<256x32xf32>
    %257 = arith.negf %256 : vector<256x32xf32>
    %258 = math.exp %257 : vector<256x32xf32>
    %cst_167 = arith.constant 1.000000e+00 : f32
    %259 = vector.broadcast %cst_167 : f32 to vector<256x32xf32>
    %260 = arith.addf %259, %258 : vector<256x32xf32>
    %261 = arith.divf %259, %260 : vector<256x32xf32>
    %262 = arith.mulf %256, %261 : vector<256x32xf32>
    %c24_168 = arith.constant 24 : index
    %c0_169 = arith.constant 0 : index
    %263 = vector.load %arg12[%c24_168, %c0_169] : memref<304x32xf32, #tpu.memory_space<vmem>>, vector<256x32xf32>
    tpu.vector_store %arg12[%c24_168, %c0_169], %262 {strides = array<i32>} : memref<304x32xf32, #tpu.memory_space<vmem>>, vector<256x32xf32>,
    %c7_170 = arith.constant 7 : index
    %c0_171 = arith.constant 0 : index
    %264 = vector.load %arg12[%c7_170, %c0_171] : memref<304x32xf32, #tpu.memory_space<vmem>>, vector<256x32xf32>
    %cst_172 = arith.constant 0.000000e+00 : f32
    %265 = vector.shape_cast %18 : vector<256x1xi1> to vector<256x1xi1>
    %266 = vector.broadcast %265 : vector<256x1xi1> to vector<256x32xi1>
    %267 = vector.broadcast %cst_172 : f32 to vector<256x32xf32>
    %268 = arith.select %266, %264, %267 : vector<256x32xi1>, vector<256x32xf32>
    %c8_173 = arith.constant 8 : index
    %c0_174 = arith.constant 0 : index
    %269 = vector.load %arg12[%c8_173, %c0_174] : memref<304x32xf32, #tpu.memory_space<vmem>>, vector<256x32xf32>
    %c9_175 = arith.constant 9 : index
    %c0_176 = arith.constant 0 : index
    %270 = vector.load %arg12[%c9_175, %c0_176] : memref<304x32xf32, #tpu.memory_space<vmem>>, vector<256x32xf32>
    %cst_177 = arith.constant 0.000000e+00 : f32
    %271 = vector.shape_cast %20 : vector<256x1xi1> to vector<256x1xi1>
    %272 = vector.broadcast %271 : vector<256x1xi1> to vector<256x32xi1>
    %273 = vector.broadcast %cst_177 : f32 to vector<256x32xf32>
    %274 = arith.select %272, %270, %273 : vector<256x32xi1>, vector<256x32xf32>
    %c23_178 = arith.constant 23 : index
    %c0_179 = arith.constant 0 : index
    %275 = vector.load %arg12[%c23_178, %c0_179] : memref<304x32xf32, #tpu.memory_space<vmem>>, vector<256x32xf32>
    %cst_180 = arith.constant 0.000000e+00 : f32
    %276 = vector.shape_cast %18 : vector<256x1xi1> to vector<256x1xi1>
    %277 = vector.broadcast %276 : vector<256x1xi1> to vector<256x32xi1>
    %278 = vector.broadcast %cst_180 : f32 to vector<256x32xf32>
    %279 = arith.select %277, %275, %278 : vector<256x32xi1>, vector<256x32xf32>
    %c24_181 = arith.constant 24 : index
    %c0_182 = arith.constant 0 : index
    %280 = vector.load %arg12[%c24_181, %c0_182] : memref<304x32xf32, #tpu.memory_space<vmem>>, vector<256x32xf32>
    %c25_183 = arith.constant 25 : index
    %c0_184 = arith.constant 0 : index
    %281 = vector.load %arg12[%c25_183, %c0_184] : memref<304x32xf32, #tpu.memory_space<vmem>>, vector<256x32xf32>
    %cst_185 = arith.constant 0.000000e+00 : f32
    %282 = vector.shape_cast %20 : vector<256x1xi1> to vector<256x1xi1>
    %283 = vector.broadcast %282 : vector<256x1xi1> to vector<256x32xi1>
    %284 = vector.broadcast %cst_185 : f32 to vector<256x32xf32>
    %285 = arith.select %283, %281, %284 : vector<256x32xi1>, vector<256x32xf32>
    %c39_186 = arith.constant 39 : index
    %c0_187 = arith.constant 0 : index
    %286 = vector.load %arg12[%c39_186, %c0_187] : memref<304x32xf32, #tpu.memory_space<vmem>>, vector<256x32xf32>
    %cst_188 = arith.constant 0.000000e+00 : f32
    %287 = vector.shape_cast %18 : vector<256x1xi1> to vector<256x1xi1>
    %288 = vector.broadcast %287 : vector<256x1xi1> to vector<256x32xi1>
    %289 = vector.broadcast %cst_188 : f32 to vector<256x32xf32>
    %290 = arith.select %288, %286, %289 : vector<256x32xi1>, vector<256x32xf32>
    %c40_189 = arith.constant 40 : index
    %c0_190 = arith.constant 0 : index
    %291 = vector.load %arg12[%c40_189, %c0_190] : memref<304x32xf32, #tpu.memory_space<vmem>>, vector<256x32xf32>
    %c41_191 = arith.constant 41 : index
    %c0_192 = arith.constant 0 : index
    %292 = vector.load %arg12[%c41_191, %c0_192] : memref<304x32xf32, #tpu.memory_space<vmem>>, vector<256x32xf32>
    %cst_193 = arith.constant 0.000000e+00 : f32
    %293 = vector.shape_cast %20 : vector<256x1xi1> to vector<256x1xi1>
    %294 = vector.broadcast %293 : vector<256x1xi1> to vector<256x32xi1>
    %295 = vector.broadcast %cst_193 : f32 to vector<256x32xf32>
    %296 = arith.select %294, %292, %295 : vector<256x32xi1>, vector<256x32xf32>
    %297 = tpu.concatenate %268, %269, %274, %279, %280, %285, %290, %291, %296 in 1 : vector<256x32xf32>, vector<256x32xf32>, vector<256x32xf32>, vector<256x32xf32>, vector<256x32xf32>, vector<256x32xf32>, vector<256x32xf32>, vector<256x32xf32>, vector<256x32xf32> -> vector<256x288xf32>
    %298 = arith.truncf %297 : vector<256x288xf32> to vector<256x288xbf16>
    %c0_194 = arith.constant 0 : index
    %c0_195 = arith.constant 0 : index
    %299 = vector.load %arg9[%c0_194, %c0_195] : memref<4x288xbf16, #tpu.memory_space<vmem>>, vector<4x288xbf16>
    %cst_196 = arith.constant dense<0.000000e+00> : vector<4x256xf32>
    %300 = tpu.matmul %299, %298, %cst_196 {dimension_numbers = #tpu.dot_dimension_numbers<[1], [1], [0], [0], [0, 0, 1, 0], [], []>} : vector<4x288xbf16>, vector<256x288xbf16>, vector<4x256xf32> -> vector<4x256xf32>
    %c0_197 = arith.constant 0 : index
    %c0_198 = arith.constant 0 : index
    %301 = vector.load %arg10[%c0_197, %c0_198] : memref<4x1xf32, #tpu.memory_space<vmem>>, vector<4x1xf32>
    %302 = vector.broadcast %301 : vector<4x1xf32> to vector<4x256xf32>
    %303 = arith.addf %300, %302 : vector<4x256xf32>
    %c0_199 = arith.constant 0 : index
    %c0_200 = arith.constant 0 : index
    %c0_201 = arith.constant 0 : index
    %304 = vector.load %arg11[%c0_199, %c0_200, %c0_201] : memref<1x4x256xf32, #tpu.memory_space<vmem>>, vector<1x4x256xf32>
    %305 = vector.shape_cast %304 : vector<1x4x256xf32> to vector<4x256xf32>
    %306 = vector.shape_cast %303 : vector<4x256xf32> to vector<1x4x256xf32>
    tpu.vector_store %arg11[%c0_199, %c0_200, %c0_201], %306 {strides = array<i32>} : memref<1x4x256xf32, #tpu.memory_space<vmem>>, vector<1x4x256xf32>,
    return
  }
  func.func @transform_0(%arg0: i32) -> (i32, i32, i32) {
    %c0_i32 = arith.constant 0 : i32
    %c0_i32_0 = arith.constant 0 : i32
    %c0_i32_1 = arith.constant 0 : i32
    return %arg0, %c0_i32, %c0_i32_0 : i32, i32, i32
  }
  func.func @transform_1(%arg0: i32) -> (i32, i32, i32) {
    %c0_i32 = arith.constant 0 : i32
    %c0_i32_0 = arith.constant 0 : i32
    %c0_i32_1 = arith.constant 0 : i32
    return %arg0, %c0_i32, %c0_i32_0 : i32, i32, i32
  }
  func.func @transform_2(%arg0: i32) -> (i32, i32, i32) {
    %c0_i32 = arith.constant 0 : i32
    %c0_i32_0 = arith.constant 0 : i32
    %c0_i32_1 = arith.constant 0 : i32
    return %arg0, %c0_i32, %c0_i32_0 : i32, i32, i32
  }
  func.func @transform_3(%arg0: i32) -> (i32, i32, i32) {
    %c0_i32 = arith.constant 0 : i32
    %c0_i32_0 = arith.constant 0 : i32
    %c0_i32_1 = arith.constant 0 : i32
    return %arg0, %c0_i32, %c0_i32_0 : i32, i32, i32
  }
  func.func @transform_4(%arg0: i32) -> (i32, i32) {
    %c0_i32 = arith.constant 0 : i32
    %c0_i32_0 = arith.constant 0 : i32
    %c0_i32_1 = arith.constant 0 : i32
    return %c0_i32, %c0_i32_0 : i32, i32
  }
  func.func @transform_5(%arg0: i32) -> (i32, i32) {
    %c0_i32 = arith.constant 0 : i32
    %c0_i32_0 = arith.constant 0 : i32
    %c0_i32_1 = arith.constant 0 : i32
    return %c0_i32, %c0_i32_0 : i32, i32
  }
  func.func @transform_6(%arg0: i32) -> (i32, i32) {
    %c0_i32 = arith.constant 0 : i32
    %c0_i32_0 = arith.constant 0 : i32
    %c0_i32_1 = arith.constant 0 : i32
    return %c0_i32, %c0_i32_0 : i32, i32
  }
  func.func @transform_7(%arg0: i32) -> (i32, i32) {
    %c0_i32 = arith.constant 0 : i32
    %c0_i32_0 = arith.constant 0 : i32
    %c0_i32_1 = arith.constant 0 : i32
    return %c0_i32, %c0_i32_0 : i32, i32
  }
  func.func @transform_8(%arg0: i32) -> (i32, i32) {
    %c0_i32 = arith.constant 0 : i32
    %c0_i32_0 = arith.constant 0 : i32
    %c0_i32_1 = arith.constant 0 : i32
    return %c0_i32, %c0_i32_0 : i32, i32
  }
  func.func @transform_9(%arg0: i32) -> (i32, i32) {
    %c0_i32 = arith.constant 0 : i32
    %c0_i32_0 = arith.constant 0 : i32
    %c0_i32_1 = arith.constant 0 : i32
    return %c0_i32, %c0_i32_0 : i32, i32
  }
  func.func @transform_10(%arg0: i32) -> (i32, i32, i32) {
    %c0_i32 = arith.constant 0 : i32
    %c0_i32_0 = arith.constant 0 : i32
    %c0_i32_1 = arith.constant 0 : i32
    return %arg0, %c0_i32, %c0_i32_0 : i32, i32, i32
  }
}

</mosaic_0001>

<llo_original>
// kernel: united_model_forward.1
$region0: #{united_model_forward.1}
  #allocation0 [shape = 'u32[]', space=smem, size = 0x4, offset = 0x4, fixed_abs, tag = 'smem constant byte address 0x4 - core index']
  #allocation1 [shape = 'u32[144,128]{1,0:T(1,128)}', space=vmem, size = 0x12000, scoped, tag = 'internal scratch']
  #allocation2 [shape = 'f32[304,32]{1,0:T(8,128)}', space=vmem, size = 0x26000, scoped, tag = 'scratch operand']
  #allocation3 [shape = 'f32[256,32]{1,0:T(8,128)}', space=vmem, size = 0x20000, scoped, tag = 'scratch operand']
  %s0 = inlined_call_operand.vmem [shape: f32[2,304,4], index: 0, kind: input, shape index: {}]
  %s1 = inlined_call_operand.vmem [shape: f32[2,304,4], index: 1, kind: input, shape index: {}]
  %s2 = inlined_call_operand.vmem [shape: f32[2,304,4], index: 2, kind: input, shape index: {}]
  %s3 = inlined_call_operand.vmem [shape: f32[2,4,32], index: 3, kind: input, shape index: {}]
  %s4 = inlined_call_operand.vmem [shape: bf16[36,32], index: 4, kind: input, shape index: {}]
  %s5 = inlined_call_operand.vmem [shape: bf16[288,32], index: 5, kind: input, shape index: {}]
  %s6 = inlined_call_operand.vmem [shape: bf16[72,32], index: 6, kind: input, shape index: {}]
  %s7 = inlined_call_operand.vmem [shape: bf16[288,32], index: 7, kind: input, shape index: {}]
  %s8 = inlined_call_operand.vmem [shape: bf16[4,288], index: 8, kind: input, shape index: {}]
  %s9 = inlined_call_operand.vmem [shape: f32[4,1], index: 9, kind: input, shape index: {}]
  %s10 = inlined_call_operand.vmem [shape: f32[2,4,256], index: 10, kind: output, shape index: {}]
  %s11 = sld [smem:[#allocation0]]
  $region73: #{united_model_forward.1} parent=0
    _
  %s13 = ssub.s32 1, %s11
  %s14 = scalar_select 0, %s13, %s11
  loop: start=0, step=1, limit=4
  $region2: #{united_model_forward.1} parent=0 // loop_pre_header
    _
  $region3: #{united_model_forward.1} parent=0 // loop_header
    %s16 = sphi 0, %s20
    %p17 = scmp.ge.s32.totalorder %s16, 4
    %s26 = sphi 0, %s28
    %s29 = sphi 0, %s26
    %s30 = sphi 0, %s29
    %s46 = sphi 0, %s30
    %s52 = sphi 0, %s54
    %s55 = sphi 0, %s52
    %s56 = sphi 0, %s55
    %s72 = sphi 0, %s56
    %s78 = sphi 0, %s80
    %s81 = sphi 0, %s78
    %s82 = sphi 0, %s81
    %s98 = sphi 0, %s82
    %s104 = sphi 0, %s106
    %s107 = sphi 0, %s104
    %s108 = sphi 0, %s107
    %s124 = sphi 0, %s108
    %s128 = sphi 0, %s128
    %s130 = sphi 0, %s128
    %s131 = sphi 0, %s130
    %s145 = sphi 0, %s131
    %s149 = sphi 0, %s149
    %s151 = sphi 0, %s149
    %s152 = sphi 0, %s151
    %s166 = sphi 0, %s152
    %s170 = sphi 0, %s170
    %s172 = sphi 0, %s170
    %s173 = sphi 0, %s172
    %s187 = sphi 0, %s173
    %s191 = sphi 0, %s191
    %s193 = sphi 0, %s191
    %s194 = sphi 0, %s193
    %s208 = sphi 0, %s194
    %s212 = sphi 0, %s212
    %s214 = sphi 0, %s212
    %s215 = sphi 0, %s214
    %s229 = sphi 0, %s215
    %s233 = sphi 0, %s233
    %s235 = sphi 0, %s233
    %s236 = sphi 0, %s235
    %s250 = sphi 0, %s236
    %s256 = sphi 0, %s258
    %s259 = sphi 0, %s256
    %s260 = sphi 0, %s259
    %s276 = sphi 0, %s260
  $region4: #{united_model_forward.1} parent=0 // loop_header_branch
    %19 = sbr.rel (%p17) target = $region8
  $region5: #{united_model_forward.1} parent=0 // loop_body
    %s21 = ssub.s32 %s16, 1
    %s22 = ssub.s32 %s16, 2
    %s23 = sadd.s32 %s16, 1
    %s24 = ssub.s32 %s16, %s23
    %p25 = scmp.eq.s32.totalorder %s24, 0
    %s27 = sadd.s32 %s26, 1
    %s28 = scalar_select %p25, %s26, %s27
    %p31 = pneg %p25
    %p32 = scmp.eq.s32.totalorder %s16, 1
    %p33 = por %p31, %p32
    %p34 = scmp.ne.s32.totalorder %s26, %s29
    %p35 = scmp.eq.s32.totalorder %s16, 0
    %p36 = por %p34, %p35
    %p37 = scmp.ne.s32.totalorder %s26, %s29
    %p38 = scmp.eq.s32.totalorder %s21, 1
    %p39 = por %p37, %p38
    %p40 = scmp.ne.s32.totalorder %s29, %s30
    %p41 = scmp.eq.s32.totalorder %s21, 0
    %p42 = por %p40, %p41
    %p43 = scmp.ne.s32.totalorder %s29, %s30
    %p44 = scmp.eq.s32.totalorder %s22, 1
    %p45 = por %p43, %p44
    %p47 = scmp.ne.s32.totalorder %s30, %s46
    %p48 = scmp.eq.s32.totalorder %s22, 0
    %p49 = por %p47, %p48
    %s50 = ssub.s32 %s16, %s23
    %p51 = scmp.eq.s32.totalorder %s50, 0
    %s53 = sadd.s32 %s52, 1
    %s54 = scalar_select %p51, %s52, %s53
    %p57 = pneg %p51
    %p58 = scmp.eq.s32.totalorder %s16, 1
    %p59 = por %p57, %p58
    %p60 = scmp.ne.s32.totalorder %s52, %s55
    %p61 = scmp.eq.s32.totalorder %s16, 0
    %p62 = por %p60, %p61
    %p63 = scmp.ne.s32.totalorder %s52, %s55
    %p64 = scmp.eq.s32.totalorder %s21, 1
    %p65 = por %p63, %p64
    %p66 = scmp.ne.s32.totalorder %s55, %s56
    %p67 = scmp.eq.s32.totalorder %s21, 0
    %p68 = por %p66, %p67
    %p69 = scmp.ne.s32.totalorder %s55, %s56
    %p70 = scmp.eq.s32.totalorder %s22, 1
    %p71 = por %p69, %p70
    %p73 = scmp.ne.s32.totalorder %s56, %s72
    %p74 = scmp.eq.s32.totalorder %s22, 0
    %p75 = por %p73, %p74
    %s76 = ssub.s32 %s16, %s23
    %p77 = scmp.eq.s32.totalorder %s76, 0
    %s79 = sadd.s32 %s78, 1
    %s80 = scalar_select %p77, %s78, %s79
    %p83 = pneg %p77
    %p84 = scmp.eq.s32.totalorder %s16, 1
    %p85 = por %p83, %p84
    %p86 = scmp.ne.s32.totalorder %s78, %s81
    %p87 = scmp.eq.s32.totalorder %s16, 0
    %p88 = por %p86, %p87
    %p89 = scmp.ne.s32.totalorder %s78, %s81
    %p90 = scmp.eq.s32.totalorder %s21, 1
    %p91 = por %p89, %p90
    %p92 = scmp.ne.s32.totalorder %s81, %s82
    %p93 = scmp.eq.s32.totalorder %s21, 0
    %p94 = por %p92, %p93
    %p95 = scmp.ne.s32.totalorder %s81, %s82
    %p96 = scmp.eq.s32.totalorder %s22, 1
    %p97 = por %p95, %p96
    %p99 = scmp.ne.s32.totalorder %s82, %s98
    %p100 = scmp.eq.s32.totalorder %s22, 0
    %p101 = por %p99, %p100
    %s102 = ssub.s32 %s16, %s23
    %p103 = scmp.eq.s32.totalorder %s102, 0
    %s105 = sadd.s32 %s104, 1
    %s106 = scalar_select %p103, %s104, %s105
    %p109 = pneg %p103
    %p110 = scmp.eq.s32.totalorder %s16, 1
    %p111 = por %p109, %p110
    %p112 = scmp.ne.s32.totalorder %s104, %s107
    %p113 = scmp.eq.s32.totalorder %s16, 0
    %p114 = por %p112, %p113
    %p115 = scmp.ne.s32.totalorder %s104, %s107
    %p116 = scmp.eq.s32.totalorder %s21, 1
    %p117 = por %p115, %p116
    %p118 = scmp.ne.s32.totalorder %s107, %s108
    %p119 = scmp.eq.s32.totalorder %s21, 0
    %p120 = por %p118, %p119
    %p121 = scmp.ne.s32.totalorder %s107, %s108
    %p122 = scmp.eq.s32.totalorder %s22, 1
    %p123 = por %p121, %p122
    %p125 = scmp.ne.s32.totalorder %s108, %s124
    %p126 = scmp.eq.s32.totalorder %s22, 0
    %p127 = por %p125, %p126
    %s129 = sadd.s32 %s128, 1
    %p132 = scmp.eq.s32.totalorder %s16, 1
    %p133 = scmp.ne.s32.totalorder %s128, %s130
    %p134 = scmp.eq.s32.totalorder %s16, 0
    %p135 = por %p133, %p134
    %p136 = scmp.ne.s32.totalorder %s128, %s130
    %p137 = scmp.eq.s32.totalorder %s21, 1
    %p138 = por %p136, %p137
    %p139 = scmp.ne.s32.totalorder %s130, %s131
    %p140 = scmp.eq.s32.totalorder %s21, 0
    %p141 = por %p139, %p140
    %p142 = scmp.ne.s32.totalorder %s130, %s131
    %p143 = scmp.eq.s32.totalorder %s22, 1
    %p144 = por %p142, %p143
    %p146 = scmp.ne.s32.totalorder %s131, %s145
    %p147 = scmp.eq.s32.totalorder %s22, 0
    %p148 = por %p146, %p147
    %s150 = sadd.s32 %s149, 1
    %p153 = scmp.eq.s32.totalorder %s16, 1
    %p154 = scmp.ne.s32.totalorder %s149, %s151
    %p155 = scmp.eq.s32.totalorder %s16, 0
    %p156 = por %p154, %p155
    %p157 = scmp.ne.s32.totalorder %s149, %s151
    %p158 = scmp.eq.s32.totalorder %s21, 1
    %p159 = por %p157, %p158
    %p160 = scmp.ne.s32.totalorder %s151, %s152
    %p161 = scmp.eq.s32.totalorder %s21, 0
    %p162 = por %p160, %p161
    %p163 = scmp.ne.s32.totalorder %s151, %s152
    %p164 = scmp.eq.s32.totalorder %s22, 1
    %p165 = por %p163, %p164
    %p167 = scmp.ne.s32.totalorder %s152, %s166
    %p168 = scmp.eq.s32.totalorder %s22, 0
    %p169 = por %p167, %p168
    %s171 = sadd.s32 %s170, 1
    %p174 = scmp.eq.s32.totalorder %s16, 1
    %p175 = scmp.ne.s32.totalorder %s170, %s172
    %p176 = scmp.eq.s32.totalorder %s16, 0
    %p177 = por %p175, %p176
    %p178 = scmp.ne.s32.totalorder %s170, %s172
    %p179 = scmp.eq.s32.totalorder %s21, 1
    %p180 = por %p178, %p179
    %p181 = scmp.ne.s32.totalorder %s172, %s173
    %p182 = scmp.eq.s32.totalorder %s21, 0
    %p183 = por %p181, %p182
    %p184 = scmp.ne.s32.totalorder %s172, %s173
    %p185 = scmp.eq.s32.totalorder %s22, 1
    %p186 = por %p184, %p185
    %p188 = scmp.ne.s32.totalorder %s173, %s187
    %p189 = scmp.eq.s32.totalorder %s22, 0
    %p190 = por %p188, %p189
    %s192 = sadd.s32 %s191, 1
    %p195 = scmp.eq.s32.totalorder %s16, 1
    %p196 = scmp.ne.s32.totalorder %s191, %s193
    %p197 = scmp.eq.s32.totalorder %s16, 0
    %p198 = por %p196, %p197
    %p199 = scmp.ne.s32.totalorder %s191, %s193
    %p200 = scmp.eq.s32.totalorder %s21, 1
    %p201 = por %p199, %p200
    %p202 = scmp.ne.s32.totalorder %s193, %s194
    %p203 = scmp.eq.s32.totalorder %s21, 0
    %p204 = por %p202, %p203
    %p205 = scmp.ne.s32.totalorder %s193, %s194
    %p206 = scmp.eq.s32.totalorder %s22, 1
    %p207 = por %p205, %p206
    %p209 = scmp.ne.s32.totalorder %s194, %s208
    %p210 = scmp.eq.s32.totalorder %s22, 0
    %p211 = por %p209, %p210
    %s213 = sadd.s32 %s212, 1
    %p216 = scmp.eq.s32.totalorder %s16, 1
    %p217 = scmp.ne.s32.totalorder %s212, %s214
    %p218 = scmp.eq.s32.totalorder %s16, 0
    %p219 = por %p217, %p218
    %p220 = scmp.ne.s32.totalorder %s212, %s214
    %p221 = scmp.eq.s32.totalorder %s21, 1
    %p222 = por %p220, %p221
    %p223 = scmp.ne.s32.totalorder %s214, %s215
    %p224 = scmp.eq.s32.totalorder %s21, 0
    %p225 = por %p223, %p224
    %p226 = scmp.ne.s32.totalorder %s214, %s215
    %p227 = scmp.eq.s32.totalorder %s22, 1
    %p228 = por %p226, %p227
    %p230 = scmp.ne.s32.totalorder %s215, %s229
    %p231 = scmp.eq.s32.totalorder %s22, 0
    %p232 = por %p230, %p231
    %s234 = sadd.s32 %s233, 1
    %p237 = scmp.eq.s32.totalorder %s16, 1
    %p238 = scmp.ne.s32.totalorder %s233, %s235
    %p239 = scmp.eq.s32.totalorder %s16, 0
    %p240 = por %p238, %p239
    %p241 = scmp.ne.s32.totalorder %s233, %s235
    %p242 = scmp.eq.s32.totalorder %s21, 1
    %p243 = por %p241, %p242
    %p244 = scmp.ne.s32.totalorder %s235, %s236
    %p245 = scmp.eq.s32.totalorder %s21, 0
    %p246 = por %p244, %p245
    %p247 = scmp.ne.s32.totalorder %s235, %s236
    %p248 = scmp.eq.s32.totalorder %s22, 1
    %p249 = por %p247, %p248
    %p251 = scmp.ne.s32.totalorder %s236, %s250
    %p252 = scmp.eq.s32.totalorder %s22, 0
    %p253 = por %p251, %p252
    %s254 = ssub.s32 %s16, %s23
    %p255 = scmp.eq.s32.totalorder %s254, 0
    %s257 = sadd.s32 %s256, 1
    %s258 = scalar_select %p255, %s256, %s257
    %p261 = pneg %p255
    %p262 = scmp.eq.s32.totalorder %s16, 1
    %p263 = por %p261, %p262
    %p264 = scmp.ne.s32.totalorder %s256, %s259
    %p265 = scmp.eq.s32.totalorder %s16, 0
    %p266 = por %p264, %p265
    %p267 = scmp.ne.s32.totalorder %s256, %s259
    %p268 = scmp.eq.s32.totalorder %s21, 1
    %p269 = por %p267, %p268
    %p270 = scmp.ne.s32.totalorder %s259, %s260
    %p271 = scmp.eq.s32.totalorder %s21, 0
    %p272 = por %p270, %p271
    %p273 = scmp.ne.s32.totalorder %s259, %s260
    %p274 = scmp.eq.s32.totalorder %s22, 1
    %p275 = por %p273, %p274
    %p277 = scmp.ne.s32.totalorder %s260, %s276
    %p278 = scmp.eq.s32.totalorder %s22, 0
    %p279 = por %p277, %p278
    %p280 = scmp.le.s32.totalorder 1, %s16
    %p281 = scmp.lt.s32.totalorder %s16, 3
    %p282 = pnand %p280, %p281
    %p283 = pneg %p282
    // Predicated region
    $region9: #{united_model_forward.1} parent=5 // pred_check
      _
    $region10: #{united_model_forward.1} parent=5 // pred_check_branch
      %285 = sbr.rel (%p282) target = $region12
    $region11: #{united_model_forward.1} parent=5 // pred_region
      %s286 = ssub.s32 %s16, 1
      // Predicated region
      $region13: #{united_model_forward.1} parent=11 // pred_check
        %p287 = pneg %p141
      $region14: #{united_model_forward.1} parent=11 // pred_check_branch
        %289 = sbr.rel (%p287) target = $region16
      $region15: #{united_model_forward.1} parent=11 // pred_region
        _
      $region16: #{united_model_forward.1} parent=11 // pred_fallthru
        _
      // Predicated region
      $region17: #{united_model_forward.1} parent=11 // pred_check
        %p290 = pneg %p162
      $region18: #{united_model_forward.1} parent=11 // pred_check_branch
        %292 = sbr.rel (%p290) target = $region20
      $region19: #{united_model_forward.1} parent=11 // pred_region
        _
      $region20: #{united_model_forward.1} parent=11 // pred_fallthru
        _
      // Predicated region
      $region21: #{united_model_forward.1} parent=11 // pred_check
        %p293 = pneg %p183
      $region22: #{united_model_forward.1} parent=11 // pred_check_branch
        %295 = sbr.rel (%p293) target = $region24
      $region23: #{united_model_forward.1} parent=11 // pred_region
        _
      $region24: #{united_model_forward.1} parent=11 // pred_fallthru
        _
      // Predicated region
      $region25: #{united_model_forward.1} parent=11 // pred_check
        %p296 = pneg %p204
      $region26: #{united_model_forward.1} parent=11 // pred_check_branch
        %298 = sbr.rel (%p296) target = $region28
      $region27: #{united_model_forward.1} parent=11 // pred_region
        _
      $region28: #{united_model_forward.1} parent=11 // pred_fallthru
        _
      // Predicated region
      $region29: #{united_model_forward.1} parent=11 // pred_check
        %p299 = pneg %p225
      $region30: #{united_model_forward.1} parent=11 // pred_check_branch
        %301 = sbr.rel (%p299) target = $region32
      $region31: #{united_model_forward.1} parent=11 // pred_region
        _
      $region32: #{united_model_forward.1} parent=11 // pred_fallthru
        _
      // Predicated region
      $region33: #{united_model_forward.1} parent=11 // pred_check
        %p302 = pneg %p246
      $region34: #{united_model_forward.1} parent=11 // pred_check_branch
        %304 = sbr.rel (%p302) target = $region36
      $region35: #{united_model_forward.1} parent=11 // pred_region
        _
      $region36: #{united_model_forward.1} parent=11 // pred_fallthru
        _
    $region12: #{united_model_forward.1} parent=5 // pred_fallthru
      _
    %p305 = scmp.lt.s32.totalorder %s16, 2
    // Predicated region
    $region37: #{united_model_forward.1} parent=5 // pred_check
      %p306 = pneg %p305
    $region38: #{united_model_forward.1} parent=5 // pred_check_branch
      %308 = sbr.rel (%p306) target = $region40
    $region39: #{united_model_forward.1} parent=5 // pred_region
      // Predicated region
      $region41: #{united_model_forward.1} parent=39 // pred_check
        %p309 = pneg %p36
      $region42: #{united_model_forward.1} parent=39 // pred_check_branch
        %311 = sbr.rel (%p309) target = $region44
      $region43: #{united_model_forward.1} parent=39 // pred_region
        %p312 = scmp.lt.s32.totalorder %s16, 1
        %s313 = scalar_select %p312, %s16, 1
        %s314 = smul.addr %s313, 38
        %s315 = smul.addr %s314, 8
        %s316 = scalar_lea.vmem %s0, %s315
      $region44: #{united_model_forward.1} parent=39 // pred_fallthru
        _
      // Predicated region
      $region45: #{united_model_forward.1} parent=39 // pred_check
        %p317 = pneg %p62
      $region46: #{united_model_forward.1} parent=39 // pred_check_branch
        %319 = sbr.rel (%p317) target = $region48
      $region47: #{united_model_forward.1} parent=39 // pred_region
        %p320 = scmp.lt.s32.totalorder %s16, 1
        %s321 = scalar_select %p320, %s16, 1
        %s322 = smul.addr %s321, 38
        %s323 = smul.addr %s322, 8
        %s324 = scalar_lea.vmem %s1, %s323
      $region48: #{united_model_forward.1} parent=39 // pred_fallthru
        _
      // Predicated region
      $region49: #{united_model_forward.1} parent=39 // pred_check
        %p325 = pneg %p88
      $region50: #{united_model_forward.1} parent=39 // pred_check_branch
        %327 = sbr.rel (%p325) target = $region52
      $region51: #{united_model_forward.1} parent=39 // pred_region
        %p328 = scmp.lt.s32.totalorder %s16, 1
        %s329 = scalar_select %p328, %s16, 1
        %s330 = smul.addr %s329, 38
        %s331 = smul.addr %s330, 8
        %s332 = scalar_lea.vmem %s2, %s331
      $region52: #{united_model_forward.1} parent=39 // pred_fallthru
        _
      // Predicated region
      $region53: #{united_model_forward.1} parent=39 // pred_check
        %p333 = pneg %p114
      $region54: #{united_model_forward.1} parent=39 // pred_check_branch
        %335 = sbr.rel (%p333) target = $region56
      $region55: #{united_model_forward.1} parent=39 // pred_region
        %p336 = scmp.lt.s32.totalorder %s16, 1
        %s337 = scalar_select %p336, %s16, 1
        %s338 = smul.addr %s337, 4
        %s339 = scalar_lea.vmem %s3, %s338
      $region56: #{united_model_forward.1} parent=39 // pred_fallthru
        _
    $region40: #{united_model_forward.1} parent=5 // pred_fallthru
      _
    %p340 = scmp.le.s32.totalorder 1, %s16
    %p341 = scmp.lt.s32.totalorder %s16, 3
    %p342 = pnand %p340, %p341
    %p343 = pneg %p342
    // Predicated region
    $region57: #{united_model_forward.1} parent=5 // pred_check
      _
    $region58: #{united_model_forward.1} parent=5 // pred_check_branch
      %345 = sbr.rel (%p342) target = $region60
    $region59: #{united_model_forward.1} parent=5 // pred_region
      %s346 = ssub.s32 %s16, 1
      %p347 = scmp.lt.s32.totalorder %s21, 1
      %s348 = scalar_select %p347, %s21, 1
      %s349 = smul.addr %s348, 38
      %s350 = smul.addr %s349, 8
      %s351 = scalar_lea.vmem %s0, %s350
      %p352 = pneg %p42
      %p353 = pneg %p39
      %p354 = scmp.lt.s32.totalorder %s21, 1
      %s355 = scalar_select %p354, %s21, 1
      %s356 = smul.addr %s355, 38
      %s357 = smul.addr %s356, 8
      %s358 = scalar_lea.vmem %s1, %s357
      %p359 = pneg %p68
      %p360 = pneg %p65
      %p361 = scmp.lt.s32.totalorder %s21, 1
      %s362 = scalar_select %p361, %s21, 1
      %s363 = smul.addr %s362, 38
      %s364 = smul.addr %s363, 8
      %s365 = scalar_lea.vmem %s2, %s364
      %p366 = pneg %p94
      %p367 = pneg %p91
      %p368 = scmp.lt.s32.totalorder %s21, 1
      %s369 = scalar_select %p368, %s21, 1
      %s370 = smul.addr %s369, 4
      %s371 = scalar_lea.vmem %s3, %s370
      %p372 = pneg %p120
      %p373 = pneg %p117
      %p374 = pneg %p141
      %p375 = pneg %p138
      %p376 = pneg %p162
      %p377 = pneg %p159
      %p378 = pneg %p183
      %p379 = pneg %p180
      %p380 = pneg %p204
      %p381 = pneg %p201
      %p382 = pneg %p225
      %p383 = pneg %p222
      %p384 = pneg %p246
      %p385 = pneg %p243
      %p386 = pneg %p272
      %p387 = pneg %p269
      %p388 = scmp.lt.s32.totalorder %s21, 1
      %s389 = scalar_select %p388, %s21, 1
      %s390 = smul.addr %s389, 2
      %s391 = smul.addr %s390, 4
      %s392 = scalar_lea.vmem %s10, %s391
      %p393 = scmp.lt.s32.totalorder %s21, 1
      %s394 = scalar_select %p393, %s21, 1
      %s395 = smul.addr %s394, 38
      %s396 = smul.addr %s395, 8
      %s397 = scalar_lea.vmem %s0, %s396
      %p398 = scmp.lt.s32.totalorder %s21, 1
      %s399 = scalar_select %p398, %s21, 1
      %s400 = smul.addr %s399, 38
      %s401 = smul.addr %s400, 8
      %s402 = scalar_lea.vmem %s1, %s401
      %p403 = scmp.lt.s32.totalorder %s21, 1
      %s404 = scalar_select %p403, %s21, 1
      %s405 = smul.addr %s404, 38
      %s406 = smul.addr %s405, 8
      %s407 = scalar_lea.vmem %s2, %s406
      %p408 = scmp.lt.s32.totalorder %s21, 1
      %s409 = scalar_select %p408, %s21, 1
      %s410 = smul.addr %s409, 4
      %s411 = scalar_lea.vmem %s3, %s410
      %p412 = scmp.lt.s32.totalorder %s21, 1
      %s413 = scalar_select %p412, %s21, 1
      %s414 = smul.addr %s413, 2
      %s415 = smul.addr %s414, 4
      %s416 = scalar_lea.vmem %s10, %s415
      %v418 = vlaneseq
      %v419 = vshrl.u32 %v418, 7
      %v420 = vadd.s32 %v419, 8
      %v421 = vadd.s32 %v419, 16
      %v422 = vadd.s32 %v419, 24
      %v423 = vadd.s32 %v419, 32
      %v424 = vadd.s32 %v419, 40
      %v425 = vadd.s32 %v419, 48
      %v426 = vadd.s32 %v419, 56
      %v427 = vadd.s32 %v419, 64
      %v428 = vadd.s32 %v419, 72
      %v429 = vadd.s32 %v419, 80
      %v430 = vadd.s32 %v419, 88
      %v431 = vadd.s32 %v419, 96
      %v432 = vadd.s32 %v419, 104
      %v433 = vadd.s32 %v419, 112
      %v434 = vadd.s32 %v419, 120
      %v435 = vadd.s32 %v419, 128
      %v436 = vadd.s32 %v419, 136
      %v437 = vadd.s32 %v419, 144
      %v438 = vadd.s32 %v419, 152
      %v439 = vadd.s32 %v419, 160
      %v440 = vadd.s32 %v419, 168
      %v441 = vadd.s32 %v419, 176
      %v442 = vadd.s32 %v419, 184
      %v443 = vadd.s32 %v419, 192
      %v444 = vadd.s32 %v419, 200
      %v445 = vadd.s32 %v419, 208
      %v446 = vadd.s32 %v419, 216
      %v447 = vadd.s32 %v419, 224
      %v448 = vadd.s32 %v419, 232
      %v449 = vadd.s32 %v419, 240
      %v450 = vadd.s32 %v419, 248
      %vm451 = vcmp.lt.s32.totalorder %v419, 0
      %v452 = vsub.s32 0, %v419
      %v453 = vsel %vm451, %v452, %v419
      %v454 = vshrl.u32 %v453, 4
      %v455 = vand.u32 %v453, 15
      %v456 = vsub.s32 0, %v455
      %v457 = vsel %vm451, %v456, %v455
      %vm458 = vcmp.lt.s32.totalorder %v420, 0
      %v459 = vsub.s32 0, %v420
      %v460 = vsel %vm458, %v459, %v420
      %v461 = vshrl.u32 %v460, 4
      %v462 = vand.u32 %v460, 15
      %v463 = vsub.s32 0, %v462
      %v464 = vsel %vm458, %v463, %v462
      %vm465 = vcmp.lt.s32.totalorder %v421, 0
      %v466 = vsub.s32 0, %v421
      %v467 = vsel %vm465, %v466, %v421
      %v468 = vshrl.u32 %v467, 4
      %v469 = vand.u32 %v467, 15
      %v470 = vsub.s32 0, %v469
      %v471 = vsel %vm465, %v470, %v469
      %vm472 = vcmp.lt.s32.totalorder %v422, 0
      %v473 = vsub.s32 0, %v422
      %v474 = vsel %vm472, %v473, %v422
      %v475 = vshrl.u32 %v474, 4
      %v476 = vand.u32 %v474, 15
      %v477 = vsub.s32 0, %v476
      %v478 = vsel %vm472, %v477, %v476
      %vm479 = vcmp.lt.s32.totalorder %v423, 0
      %v480 = vsub.s32 0, %v423
      %v481 = vsel %vm479, %v480, %v423
      %v482 = vshrl.u32 %v481, 4
      %v483 = vand.u32 %v481, 15
      %v484 = vsub.s32 0, %v483
      %v485 = vsel %vm479, %v484, %v483
      %vm486 = vcmp.lt.s32.totalorder %v424, 0
      %v487 = vsub.s32 0, %v424
      %v488 = vsel %vm486, %v487, %v424
      %v489 = vshrl.u32 %v488, 4
      %v490 = vand.u32 %v488, 15
      %v491 = vsub.s32 0, %v490
      %v492 = vsel %vm486, %v491, %v490
      %vm493 = vcmp.lt.s32.totalorder %v425, 0
      %v494 = vsub.s32 0, %v425
      %v495 = vsel %vm493, %v494, %v425
      %v496 = vshrl.u32 %v495, 4
      %v497 = vand.u32 %v495, 15
      %v498 = vsub.s32 0, %v497
      %v499 = vsel %vm493, %v498, %v497
      %vm500 = vcmp.lt.s32.totalorder %v426, 0
      %v501 = vsub.s32 0, %v426
      %v502 = vsel %vm500, %v501, %v426
      %v503 = vshrl.u32 %v502, 4
      %v504 = vand.u32 %v502, 15
      %v505 = vsub.s32 0, %v504
      %v506 = vsel %vm500, %v505, %v504
      %vm507 = vcmp.lt.s32.totalorder %v427, 0
      %v508 = vsub.s32 0, %v427
      %v509 = vsel %vm507, %v508, %v427
      %v510 = vshrl.u32 %v509, 4
      %v511 = vand.u32 %v509, 15
      %v512 = vsub.s32 0, %v511
      %v513 = vsel %vm507, %v512, %v511
      %vm514 = vcmp.lt.s32.totalorder %v428, 0
      %v515 = vsub.s32 0, %v428
      %v516 = vsel %vm514, %v515, %v428
      %v517 = vshrl.u32 %v516, 4
      %v518 = vand.u32 %v516, 15
      %v519 = vsub.s32 0, %v518
      %v520 = vsel %vm514, %v519, %v518
      %vm521 = vcmp.lt.s32.totalorder %v429, 0
      %v522 = vsub.s32 0, %v429
      %v523 = vsel %vm521, %v522, %v429
      %v524 = vshrl.u32 %v523, 4
      %v525 = vand.u32 %v523, 15
      %v526 = vsub.s32 0, %v525
      %v527 = vsel %vm521, %v526, %v525
      %vm528 = vcmp.lt.s32.totalorder %v430, 0
      %v529 = vsub.s32 0, %v430
      %v530 = vsel %vm528, %v529, %v430
      %v531 = vshrl.u32 %v530, 4
      %v532 = vand.u32 %v530, 15
      %v533 = vsub.s32 0, %v532
      %v534 = vsel %vm528, %v533, %v532
      %vm535 = vcmp.lt.s32.totalorder %v431, 0
      %v536 = vsub.s32 0, %v431
      %v537 = vsel %vm535, %v536, %v431
      %v538 = vshrl.u32 %v537, 4
      %v539 = vand.u32 %v537, 15
      %v540 = vsub.s32 0, %v539
      %v541 = vsel %vm535, %v540, %v539
      %vm542 = vcmp.lt.s32.totalorder %v432, 0
      %v543 = vsub.s32 0, %v432
      %v544 = vsel %vm542, %v543, %v432
      %v545 = vshrl.u32 %v544, 4
      %v546 = vand.u32 %v544, 15
      %v547 = vsub.s32 0, %v546
      %v548 = vsel %vm542, %v547, %v546
      %vm549 = vcmp.lt.s32.totalorder %v433, 0
      %v550 = vsub.s32 0, %v433
      %v551 = vsel %vm549, %v550, %v433
      %v552 = vshrl.u32 %v551, 4
      %v553 = vand.u32 %v551, 15
      %v554 = vsub.s32 0, %v553
      %v555 = vsel %vm549, %v554, %v553
      %vm556 = vcmp.lt.s32.totalorder %v434, 0
      %v557 = vsub.s32 0, %v434
      %v558 = vsel %vm556, %v557, %v434
      %v559 = vshrl.u32 %v558, 4
      %v560 = vand.u32 %v558, 15
      %v561 = vsub.s32 0, %v560
      %v562 = vsel %vm556, %v561, %v560
      %vm563 = vcmp.lt.s32.totalorder %v435, 0
      %v564 = vsub.s32 0, %v435
      %v565 = vsel %vm563, %v564, %v435
      %v566 = vshrl.u32 %v565, 4
      %v567 = vand.u32 %v565, 15
      %v568 = vsub.s32 0, %v567
      %v569 = vsel %vm563, %v568, %v567
      %vm570 = vcmp.lt.s32.totalorder %v436, 0
      %v571 = vsub.s32 0, %v436
      %v572 = vsel %vm570, %v571, %v436
      %v573 = vshrl.u32 %v572, 4
      %v574 = vand.u32 %v572, 15
      %v575 = vsub.s32 0, %v574
      %v576 = vsel %vm570, %v575, %v574
      %vm577 = vcmp.lt.s32.totalorder %v437, 0
      %v578 = vsub.s32 0, %v437
      %v579 = vsel %vm577, %v578, %v437
      %v580 = vshrl.u32 %v579, 4
      %v581 = vand.u32 %v579, 15
      %v582 = vsub.s32 0, %v581
      %v583 = vsel %vm577, %v582, %v581
      %vm584 = vcmp.lt.s32.totalorder %v438, 0
      %v585 = vsub.s32 0, %v438
      %v586 = vsel %vm584, %v585, %v438
      %v587 = vshrl.u32 %v586, 4
      %v588 = vand.u32 %v586, 15
      %v589 = vsub.s32 0, %v588
      %v590 = vsel %vm584, %v589, %v588
      %vm591 = vcmp.lt.s32.totalorder %v439, 0
      %v592 = vsub.s32 0, %v439
      %v593 = vsel %vm591, %v592, %v439
      %v594 = vshrl.u32 %v593, 4
      %v595 = vand.u32 %v593, 15
      %v596 = vsub.s32 0, %v595
      %v597 = vsel %vm591, %v596, %v595
      %vm598 = vcmp.lt.s32.totalorder %v440, 0
      %v599 = vsub.s32 0, %v440
      %v600 = vsel %vm598, %v599, %v440
      %v601 = vshrl.u32 %v600, 4
      %v602 = vand.u32 %v600, 15
      %v603 = vsub.s32 0, %v602
      %v604 = vsel %vm598, %v603, %v602
      %vm605 = vcmp.lt.s32.totalorder %v441, 0
      %v606 = vsub.s32 0, %v441
      %v607 = vsel %vm605, %v606, %v441
      %v608 = vshrl.u32 %v607, 4
      %v609 = vand.u32 %v607, 15
      %v610 = vsub.s32 0, %v609
      %v611 = vsel %vm605, %v610, %v609
      %vm612 = vcmp.lt.s32.totalorder %v442, 0
      %v613 = vsub.s32 0, %v442
      %v614 = vsel %vm612, %v613, %v442
      %v615 = vshrl.u32 %v614, 4
      %v616 = vand.u32 %v614, 15
      %v617 = vsub.s32 0, %v616
      %v618 = vsel %vm612, %v617, %v616
      %vm619 = vcmp.lt.s32.totalorder %v443, 0
      %v620 = vsub.s32 0, %v443
      %v621 = vsel %vm619, %v620, %v443
      %v622 = vshrl.u32 %v621, 4
      %v623 = vand.u32 %v621, 15
      %v624 = vsub.s32 0, %v623
      %v625 = vsel %vm619, %v624, %v623
      %vm626 = vcmp.lt.s32.totalorder %v444, 0
      %v627 = vsub.s32 0, %v444
      %v628 = vsel %vm626, %v627, %v444
      %v629 = vshrl.u32 %v628, 4
      %v630 = vand.u32 %v628, 15
      %v631 = vsub.s32 0, %v630
      %v632 = vsel %vm626, %v631, %v630
      %vm633 = vcmp.lt.s32.totalorder %v445, 0
      %v634 = vsub.s32 0, %v445
      %v635 = vsel %vm633, %v634, %v445
      %v636 = vshrl.u32 %v635, 4
      %v637 = vand.u32 %v635, 15
      %v638 = vsub.s32 0, %v637
      %v639 = vsel %vm633, %v638, %v637
      %vm640 = vcmp.lt.s32.totalorder %v446, 0
      %v641 = vsub.s32 0, %v446
      %v642 = vsel %vm640, %v641, %v446
      %v643 = vshrl.u32 %v642, 4
      %v644 = vand.u32 %v642, 15
      %v645 = vsub.s32 0, %v644
      %v646 = vsel %vm640, %v645, %v644
      %vm647 = vcmp.lt.s32.totalorder %v447, 0
      %v648 = vsub.s32 0, %v447
      %v649 = vsel %vm647, %v648, %v447
      %v650 = vshrl.u32 %v649, 4
      %v651 = vand.u32 %v649, 15
      %v652 = vsub.s32 0, %v651
      %v653 = vsel %vm647, %v652, %v651
      %vm654 = vcmp.lt.s32.totalorder %v448, 0
      %v655 = vsub.s32 0, %v448
      %v656 = vsel %vm654, %v655, %v448
      %v657 = vshrl.u32 %v656, 4
      %v658 = vand.u32 %v656, 15
      %v659 = vsub.s32 0, %v658
      %v660 = vsel %vm654, %v659, %v658
      %vm661 = vcmp.lt.s32.totalorder %v449, 0
      %v662 = vsub.s32 0, %v449
      %v663 = vsel %vm661, %v662, %v449
      %v664 = vshrl.u32 %v663, 4
      %v665 = vand.u32 %v663, 15
      %v666 = vsub.s32 0, %v665
      %v667 = vsel %vm661, %v666, %v665
      %vm668 = vcmp.lt.s32.totalorder %v450, 0
      %v669 = vsub.s32 0, %v450
      %v670 = vsel %vm668, %v669, %v450
      %v671 = vshrl.u32 %v670, 4
      %v672 = vand.u32 %v670, 15
      %v673 = vsub.s32 0, %v672
      %v674 = vsel %vm668, %v673, %v672
      %vm675 = vcmp.ne.s32.totalorder %v457, 0
      %vm676 = vcmp.ne.s32.totalorder %v464, 0
      %vm677 = vcmp.ne.s32.totalorder %v471, 0
      %vm678 = vcmp.ne.s32.totalorder %v478, 0
      %vm679 = vcmp.ne.s32.totalorder %v485, 0
      %vm680 = vcmp.ne.s32.totalorder %v492, 0
      %vm681 = vcmp.ne.s32.totalorder %v499, 0
      %vm682 = vcmp.ne.s32.totalorder %v506, 0
      %vm683 = vcmp.ne.s32.totalorder %v513, 0
      %vm684 = vcmp.ne.s32.totalorder %v520, 0
      %vm685 = vcmp.ne.s32.totalorder %v527, 0
      %vm686 = vcmp.ne.s32.totalorder %v534, 0
      %vm687 = vcmp.ne.s32.totalorder %v541, 0
      %vm688 = vcmp.ne.s32.totalorder %v548, 0
      %vm689 = vcmp.ne.s32.totalorder %v555, 0
      %vm690 = vcmp.ne.s32.totalorder %v562, 0
      %vm691 = vcmp.ne.s32.totalorder %v569, 0
      %vm692 = vcmp.ne.s32.totalorder %v576, 0
      %vm693 = vcmp.ne.s32.totalorder %v583, 0
      %vm694 = vcmp.ne.s32.totalorder %v590, 0
      %vm695 = vcmp.ne.s32.totalorder %v597, 0
      %vm696 = vcmp.ne.s32.totalorder %v604, 0
      %vm697 = vcmp.ne.s32.totalorder %v611, 0
      %vm698 = vcmp.ne.s32.totalorder %v618, 0
      %vm699 = vcmp.ne.s32.totalorder %v625, 0
      %vm700 = vcmp.ne.s32.totalorder %v632, 0
      %vm701 = vcmp.ne.s32.totalorder %v639, 0
      %vm702 = vcmp.ne.s32.totalorder %v646, 0
      %vm703 = vcmp.ne.s32.totalorder %v653, 0
      %vm704 = vcmp.ne.s32.totalorder %v660, 0
      %vm705 = vcmp.ne.s32.totalorder %v667, 0
      %vm706 = vcmp.ne.s32.totalorder %v674, 0
      %vm707 = vcmp.lt.s32.totalorder %v457, 0
      %vm708 = vcmp.lt.s32.totalorder %v464, 0
      %vm709 = vcmp.lt.s32.totalorder %v471, 0
      %vm710 = vcmp.lt.s32.totalorder %v478, 0
      %vm711 = vcmp.lt.s32.totalorder %v485, 0
      %vm712 = vcmp.lt.s32.totalorder %v492, 0
      %vm713 = vcmp.lt.s32.totalorder %v499, 0
      %vm714 = vcmp.lt.s32.totalorder %v506, 0
      %vm715 = vcmp.lt.s32.totalorder %v513, 0
      %vm716 = vcmp.lt.s32.totalorder %v520, 0
      %vm717 = vcmp.lt.s32.totalorder %v527, 0
      %vm718 = vcmp.lt.s32.totalorder %v534, 0
      %vm719 = vcmp.lt.s32.totalorder %v541, 0
      %vm720 = vcmp.lt.s32.totalorder %v548, 0
      %vm721 = vcmp.lt.s32.totalorder %v555, 0
      %vm722 = vcmp.lt.s32.totalorder %v562, 0
      %vm723 = vcmp.lt.s32.totalorder %v569, 0
      %vm724 = vcmp.lt.s32.totalorder %v576, 0
      %vm725 = vcmp.lt.s32.totalorder %v583, 0
      %vm726 = vcmp.lt.s32.totalorder %v590, 0
      %vm727 = vcmp.lt.s32.totalorder %v597, 0
      %vm728 = vcmp.lt.s32.totalorder %v604, 0
      %vm729 = vcmp.lt.s32.totalorder %v611, 0
      %vm730 = vcmp.lt.s32.totalorder %v618, 0
      %vm731 = vcmp.lt.s32.totalorder %v625, 0
      %vm732 = vcmp.lt.s32.totalorder %v632, 0
      %vm733 = vcmp.lt.s32.totalorder %v639, 0
      %vm734 = vcmp.lt.s32.totalorder %v646, 0
      %vm735 = vcmp.lt.s32.totalorder %v653, 0
      %vm736 = vcmp.lt.s32.totalorder %v660, 0
      %vm737 = vcmp.lt.s32.totalorder %v667, 0
      %vm738 = vcmp.lt.s32.totalorder %v674, 0
      %vm739 = vmand %vm707, %vm675
      %vm740 = vmand %vm708, %vm676
      %vm741 = vmand %vm709, %vm677
      %vm742 = vmand %vm710, %vm678
      %vm743 = vmand %vm711, %vm679
      %vm744 = vmand %vm712, %vm680
      %vm745 = vmand %vm713, %vm681
      %vm746 = vmand %vm714, %vm682
      %vm747 = vmand %vm715, %vm683
      %vm748 = vmand %vm716, %vm684
      %vm749 = vmand %vm717, %vm685
      %vm750 = vmand %vm718, %vm686
      %vm751 = vmand %vm719, %vm687
      %vm752 = vmand %vm720, %vm688
      %vm753 = vmand %vm721, %vm689
      %vm754 = vmand %vm722, %vm690
      %vm755 = vmand %vm723, %vm691
      %vm756 = vmand %vm724, %vm692
      %vm757 = vmand %vm725, %vm693
      %vm758 = vmand %vm726, %vm694
      %vm759 = vmand %vm727, %vm695
      %vm760 = vmand %vm728, %vm696
      %vm761 = vmand %vm729, %vm697
      %vm762 = vmand %vm730, %vm698
      %vm763 = vmand %vm731, %vm699
      %vm764 = vmand %vm732, %vm700
      %vm765 = vmand %vm733, %vm701
      %vm766 = vmand %vm734, %vm702
      %vm767 = vmand %vm735, %vm703
      %vm768 = vmand %vm736, %vm704
      %vm769 = vmand %vm737, %vm705
      %vm770 = vmand %vm738, %vm706
      %v771 = vadd.s32 %v457, 16
      %v772 = vadd.s32 %v464, 16
      %v773 = vadd.s32 %v471, 16
      %v774 = vadd.s32 %v478, 16
      %v775 = vadd.s32 %v485, 16
      %v776 = vadd.s32 %v492, 16
      %v777 = vadd.s32 %v499, 16
      %v778 = vadd.s32 %v506, 16
      %v779 = vadd.s32 %v513, 16
      %v780 = vadd.s32 %v520, 16
      %v781 = vadd.s32 %v527, 16
      %v782 = vadd.s32 %v534, 16
      %v783 = vadd.s32 %v541, 16
      %v784 = vadd.s32 %v548, 16
      %v785 = vadd.s32 %v555, 16
      %v786 = vadd.s32 %v562, 16
      %v787 = vadd.s32 %v569, 16
      %v788 = vadd.s32 %v576, 16
      %v789 = vadd.s32 %v583, 16
      %v790 = vadd.s32 %v590, 16
      %v791 = vadd.s32 %v597, 16
      %v792 = vadd.s32 %v604, 16
      %v793 = vadd.s32 %v611, 16
      %v794 = vadd.s32 %v618, 16
      %v795 = vadd.s32 %v625, 16
      %v796 = vadd.s32 %v632, 16
      %v797 = vadd.s32 %v639, 16
      %v798 = vadd.s32 %v646, 16
      %v799 = vadd.s32 %v653, 16
      %v800 = vadd.s32 %v660, 16
      %v801 = vadd.s32 %v667, 16
      %v802 = vadd.s32 %v674, 16
      %v803 = vsel %vm739, %v771, %v457
      %v804 = vsel %vm740, %v772, %v464
      %v805 = vsel %vm741, %v773, %v471
      %v806 = vsel %vm742, %v774, %v478
      %v807 = vsel %vm743, %v775, %v485
      %v808 = vsel %vm744, %v776, %v492
      %v809 = vsel %vm745, %v777, %v499
      %v810 = vsel %vm746, %v778, %v506
      %v811 = vsel %vm747, %v779, %v513
      %v812 = vsel %vm748, %v780, %v520
      %v813 = vsel %vm749, %v781, %v527
      %v814 = vsel %vm750, %v782, %v534
      %v815 = vsel %vm751, %v783, %v541
      %v816 = vsel %vm752, %v784, %v548
      %v817 = vsel %vm753, %v785, %v555
      %v818 = vsel %vm754, %v786, %v562
      %v819 = vsel %vm755, %v787, %v569
      %v820 = vsel %vm756, %v788, %v576
      %v821 = vsel %vm757, %v789, %v583
      %v822 = vsel %vm758, %v790, %v590
      %v823 = vsel %vm759, %v791, %v597
      %v824 = vsel %vm760, %v792, %v604
      %v825 = vsel %vm761, %v793, %v611
      %v826 = vsel %vm762, %v794, %v618
      %v827 = vsel %vm763, %v795, %v625
      %v828 = vsel %vm764, %v796, %v632
      %v829 = vsel %vm765, %v797, %v639
      %v830 = vsel %vm766, %v798, %v646
      %v831 = vsel %vm767, %v799, %v653
      %v832 = vsel %vm768, %v800, %v660
      %v833 = vsel %vm769, %v801, %v667
      %v834 = vsel %vm770, %v802, %v674
      %vm835 = vcmp.ge.s32.totalorder %v803, 1
      %vm836 = vcmp.ge.s32.totalorder %v804, 1
      %vm837 = vcmp.ge.s32.totalorder %v805, 1
      %vm838 = vcmp.ge.s32.totalorder %v806, 1
      %vm839 = vcmp.ge.s32.totalorder %v807, 1
      %vm840 = vcmp.ge.s32.totalorder %v808, 1
      %vm841 = vcmp.ge.s32.totalorder %v809, 1
      %vm842 = vcmp.ge.s32.totalorder %v810, 1
      %vm843 = vcmp.ge.s32.totalorder %v811, 1
      %vm844 = vcmp.ge.s32.totalorder %v812, 1
      %vm845 = vcmp.ge.s32.totalorder %v813, 1
      %vm846 = vcmp.ge.s32.totalorder %v814, 1
      %vm847 = vcmp.ge.s32.totalorder %v815, 1
      %vm848 = vcmp.ge.s32.totalorder %v816, 1
      %vm849 = vcmp.ge.s32.totalorder %v817, 1
      %vm850 = vcmp.ge.s32.totalorder %v818, 1
      %vm851 = vcmp.ge.s32.totalorder %v819, 1
      %vm852 = vcmp.ge.s32.totalorder %v820, 1
      %vm853 = vcmp.ge.s32.totalorder %v821, 1
      %vm854 = vcmp.ge.s32.totalorder %v822, 1
      %vm855 = vcmp.ge.s32.totalorder %v823, 1
      %vm856 = vcmp.ge.s32.totalorder %v824, 1
      %vm857 = vcmp.ge.s32.totalorder %v825, 1
      %vm858 = vcmp.ge.s32.totalorder %v826, 1
      %vm859 = vcmp.ge.s32.totalorder %v827, 1
      %vm860 = vcmp.ge.s32.totalorder %v828, 1
      %vm861 = vcmp.ge.s32.totalorder %v829, 1
      %vm862 = vcmp.ge.s32.totalorder %v830, 1
      %vm863 = vcmp.ge.s32.totalorder %v831, 1
      %vm864 = vcmp.ge.s32.totalorder %v832, 1
      %vm865 = vcmp.ge.s32.totalorder %v833, 1
      %vm866 = vcmp.ge.s32.totalorder %v834, 1
      %vm867 = vcmp.le.s32.totalorder %v803, 14
      %vm868 = vcmp.le.s32.totalorder %v804, 14
      %vm869 = vcmp.le.s32.totalorder %v805, 14
      %vm870 = vcmp.le.s32.totalorder %v806, 14
      %vm871 = vcmp.le.s32.totalorder %v807, 14
      %vm872 = vcmp.le.s32.totalorder %v808, 14
      %vm873 = vcmp.le.s32.totalorder %v809, 14
      %vm874 = vcmp.le.s32.totalorder %v810, 14
      %vm875 = vcmp.le.s32.totalorder %v811, 14
      %vm876 = vcmp.le.s32.totalorder %v812, 14
      %vm877 = vcmp.le.s32.totalorder %v813, 14
      %vm878 = vcmp.le.s32.totalorder %v814, 14
      %vm879 = vcmp.le.s32.totalorder %v815, 14
      %vm880 = vcmp.le.s32.totalorder %v816, 14
      %vm881 = vcmp.le.s32.totalorder %v817, 14
      %vm882 = vcmp.le.s32.totalorder %v818, 14
      %vm883 = vcmp.le.s32.totalorder %v819, 14
      %vm884 = vcmp.le.s32.totalorder %v820, 14
      %vm885 = vcmp.le.s32.totalorder %v821, 14
      %vm886 = vcmp.le.s32.totalorder %v822, 14
      %vm887 = vcmp.le.s32.totalorder %v823, 14
      %vm888 = vcmp.le.s32.totalorder %v824, 14
      %vm889 = vcmp.le.s32.totalorder %v825, 14
      %vm890 = vcmp.le.s32.totalorder %v826, 14
      %vm891 = vcmp.le.s32.totalorder %v827, 14
      %vm892 = vcmp.le.s32.totalorder %v828, 14
      %vm893 = vcmp.le.s32.totalorder %v829, 14
      %vm894 = vcmp.le.s32.totalorder %v830, 14
      %vm895 = vcmp.le.s32.totalorder %v831, 14
      %vm896 = vcmp.le.s32.totalorder %v832, 14
      %vm897 = vcmp.le.s32.totalorder %v833, 14
      %vm898 = vcmp.le.s32.totalorder %v834, 14
      %vm899 = vcmask 261120
      %900 = vst.msk [vmem:[#allocation2] sm:$0xff] %vm899, 0.0
      %901 = vst.msk [vmem:[#allocation2 + $0x8] sm:$0xff] %vm899, 0.0
      %902 = vst.msk [vmem:[#allocation2 + $0x10] sm:$0xff] %vm899, 0.0
      %903 = vst.msk [vmem:[#allocation2 + $0x118] sm:$0xff] %vm899, 0.0
      %904 = vst.msk [vmem:[#allocation2 + $0x120] sm:$0xff] %vm899, 0.0
      %905 = vst.msk [vmem:[#allocation2 + $0x128] sm:$0xff] %vm899, 0.0
      %v906 = vld [vmem:[%s411] sm:$0xf]
      %v907 = vld [vmem:[%s397 + $0x7] sm:$0xff]
      %v908 = vld [vmem:[%s397 + $0xf] sm:$0xff]
      %v909 = vld [vmem:[%s397 + $0x17] sm:$0xff]
      %v910 = vld [vmem:[%s397 + $0x1f] sm:$0xff]
      %v911 = vld [vmem:[%s397 + $0x27] sm:$0xff]
      %v912 = vld [vmem:[%s397 + $0x2f] sm:$0xff]
      %v913 = vld [vmem:[%s397 + $0x37] sm:$0xff]
      %v914 = vld [vmem:[%s397 + $0x3f] sm:$0xff]
      %v915 = vld [vmem:[%s397 + $0x47] sm:$0xff]
      %v916 = vld [vmem:[%s397 + $0x4f] sm:$0xff]
      %v917 = vld [vmem:[%s397 + $0x57] sm:$0xff]
      %v918 = vld [vmem:[%s397 + $0x5f] sm:$0xff]
      %v919 = vld [vmem:[%s397 + $0x67] sm:$0xff]
      %v920 = vld [vmem:[%s397 + $0x6f] sm:$0xff]
      %v921 = vld [vmem:[%s397 + $0x77] sm:$0xff]
      %v922 = vld [vmem:[%s397 + $0x7f] sm:$0xff]
      %v923 = vld [vmem:[%s397 + $0x87] sm:$0xff]
      %v924 = vld [vmem:[%s397 + $0x8f] sm:$0xff]
      %v925 = vld [vmem:[%s397 + $0x97] sm:$0xff]
      %v926 = vld [vmem:[%s397 + $0x9f] sm:$0xff]
      %v927 = vld [vmem:[%s397 + $0xa7] sm:$0xff]
      %v928 = vld [vmem:[%s397 + $0xaf] sm:$0xff]
      %v929 = vld [vmem:[%s397 + $0xb7] sm:$0xff]
      %v930 = vld [vmem:[%s397 + $0xbf] sm:$0xff]
      %v931 = vld [vmem:[%s397 + $0xc7] sm:$0xff]
      %v932 = vld [vmem:[%s397 + $0xcf] sm:$0xff]
      %v933 = vld [vmem:[%s397 + $0xd7] sm:$0xff]
      %v934 = vld [vmem:[%s397 + $0xdf] sm:$0xff]
      %v935 = vld [vmem:[%s397 + $0xe7] sm:$0xff]
      %v936 = vld [vmem:[%s397 + $0xef] sm:$0xff]
      %v937 = vld [vmem:[%s397 + $0xf7] sm:$0xff]
      %v938 = vld [vmem:[%s397 + $0xff] sm:$0xff]
      %v939 = vsel %vm835, 1, 0
      %v940 = vsel %vm836, 1, 0
      %v941 = vsel %vm837, 1, 0
      %v942 = vsel %vm838, 1, 0
      %v943 = vsel %vm839, 1, 0
      %v944 = vsel %vm840, 1, 0
      %v945 = vsel %vm841, 1, 0
      %v946 = vsel %vm842, 1, 0
      %v947 = vsel %vm843, 1, 0
      %v948 = vsel %vm844, 1, 0
      %v949 = vsel %vm845, 1, 0
      %v950 = vsel %vm846, 1, 0
      %v951 = vsel %vm847, 1, 0
      %v952 = vsel %vm848, 1, 0
      %v953 = vsel %vm849, 1, 0
      %v954 = vsel %vm850, 1, 0
      %v955 = vsel %vm851, 1, 0
      %v956 = vsel %vm852, 1, 0
      %v957 = vsel %vm853, 1, 0
      %v958 = vsel %vm854, 1, 0
      %v959 = vsel %vm855, 1, 0
      %v960 = vsel %vm856, 1, 0
      %v961 = vsel %vm857, 1, 0
      %v962 = vsel %vm858, 1, 0
      %v963 = vsel %vm859, 1, 0
      %v964 = vsel %vm860, 1, 0
      %v965 = vsel %vm861, 1, 0
      %v966 = vsel %vm862, 1, 0
      %v967 = vsel %vm863, 1, 0
      %v968 = vsel %vm864, 1, 0
      %v969 = vsel %vm865, 1, 0
      %v970 = vsel %vm866, 1, 0
      %vm971 = vcmp.eq.s32.totalorder %v939, 1
      %vm972 = vcmp.eq.s32.totalorder %v940, 1
      %vm973 = vcmp.eq.s32.totalorder %v941, 1
      %vm974 = vcmp.eq.s32.totalorder %v942, 1
      %vm975 = vcmp.eq.s32.totalorder %v943, 1
      %vm976 = vcmp.eq.s32.totalorder %v944, 1
      %vm977 = vcmp.eq.s32.totalorder %v945, 1
      %vm978 = vcmp.eq.s32.totalorder %v946, 1
      %vm979 = vcmp.eq.s32.totalorder %v947, 1
      %vm980 = vcmp.eq.s32.totalorder %v948, 1
      %vm981 = vcmp.eq.s32.totalorder %v949, 1
      %vm982 = vcmp.eq.s32.totalorder %v950, 1
      %vm983 = vcmp.eq.s32.totalorder %v951, 1
      %vm984 = vcmp.eq.s32.totalorder %v952, 1
      %vm985 = vcmp.eq.s32.totalorder %v953, 1
      %vm986 = vcmp.eq.s32.totalorder %v954, 1
      %vm987 = vcmp.eq.s32.totalorder %v955, 1
      %vm988 = vcmp.eq.s32.totalorder %v956, 1
      %vm989 = vcmp.eq.s32.totalorder %v957, 1
      %vm990 = vcmp.eq.s32.totalorder %v958, 1
      %vm991 = vcmp.eq.s32.totalorder %v959, 1
      %vm992 = vcmp.eq.s32.totalorder %v960, 1
      %vm993 = vcmp.eq.s32.totalorder %v961, 1
      %vm994 = vcmp.eq.s32.totalorder %v962, 1
      %vm995 = vcmp.eq.s32.totalorder %v963, 1
      %vm996 = vcmp.eq.s32.totalorder %v964, 1
      %vm997 = vcmp.eq.s32.totalorder %v965, 1
      %vm998 = vcmp.eq.s32.totalorder %v966, 1
      %vm999 = vcmp.eq.s32.totalorder %v967, 1
      %vm1000 = vcmp.eq.s32.totalorder %v968, 1
      %vm1001 = vcmp.eq.s32.totalorder %v969, 1
      %vm1002 = vcmp.eq.s32.totalorder %v970, 1
      %v1003 = vsel %vm971, %v907, 0.0
      %v1004 = vsel %vm972, %v908, 0.0
      %v1005 = vsel %vm973, %v909, 0.0
      %v1006 = vsel %vm974, %v910, 0.0
      %v1007 = vsel %vm975, %v911, 0.0
      %v1008 = vsel %vm976, %v912, 0.0
      %v1009 = vsel %vm977, %v913, 0.0
      %v1010 = vsel %vm978, %v914, 0.0
      %v1011 = vsel %vm979, %v915, 0.0
      %v1012 = vsel %vm980, %v916, 0.0
      %v1013 = vsel %vm981, %v917, 0.0
      %v1014 = vsel %vm982, %v918, 0.0
      %v1015 = vsel %vm983, %v919, 0.0
      %v1016 = vsel %vm984, %v920, 0.0
      %v1017 = vsel %vm985, %v921, 0.0
      %v1018 = vsel %vm986, %v922, 0.0
      %v1019 = vsel %vm987, %v923, 0.0
      %v1020 = vsel %vm988, %v924, 0.0
      %v1021 = vsel %vm989, %v925, 0.0
      %v1022 = vsel %vm990, %v926, 0.0
      %v1023 = vsel %vm991, %v927, 0.0
      %v1024 = vsel %vm992, %v928, 0.0
      %v1025 = vsel %vm993, %v929, 0.0
      %v1026 = vsel %vm994, %v930, 0.0
      %v1027 = vsel %vm995, %v931, 0.0
      %v1028 = vsel %vm996, %v932, 0.0
      %v1029 = vsel %vm997, %v933, 0.0
      %v1030 = vsel %vm998, %v934, 0.0
      %v1031 = vsel %vm999, %v935, 0.0
      %v1032 = vsel %vm1000, %v936, 0.0
      %v1033 = vsel %vm1001, %v937, 0.0
      %v1034 = vsel %vm1002, %v938, 0.0
      %v1035 = vld [vmem:[%s397 + $0x8] sm:$0xff]
      %v1036 = vld [vmem:[%s397 + $0x10] sm:$0xff]
      %v1037 = vld [vmem:[%s397 + $0x18] sm:$0xff]
      %v1038 = vld [vmem:[%s397 + $0x20] sm:$0xff]
      %v1039 = vld [vmem:[%s397 + $0x28] sm:$0xff]
      %v1040 = vld [vmem:[%s397 + $0x30] sm:$0xff]
      %v1041 = vld [vmem:[%s397 + $0x38] sm:$0xff]
      %v1042 = vld [vmem:[%s397 + $0x40] sm:$0xff]
      %v1043 = vld [vmem:[%s397 + $0x48] sm:$0xff]
      %v1044 = vld [vmem:[%s397 + $0x50] sm:$0xff]
      %v1045 = vld [vmem:[%s397 + $0x58] sm:$0xff]
      %v1046 = vld [vmem:[%s397 + $0x60] sm:$0xff]
      %v1047 = vld [vmem:[%s397 + $0x68] sm:$0xff]
      %v1048 = vld [vmem:[%s397 + $0x70] sm:$0xff]
      %v1049 = vld [vmem:[%s397 + $0x78] sm:$0xff]
      %v1050 = vld [vmem:[%s397 + $0x80] sm:$0xff]
      %v1051 = vld [vmem:[%s397 + $0x88] sm:$0xff]
      %v1052 = vld [vmem:[%s397 + $0x90] sm:$0xff]
      %v1053 = vld [vmem:[%s397 + $0x98] sm:$0xff]
      %v1054 = vld [vmem:[%s397 + $0xa0] sm:$0xff]
      %v1055 = vld [vmem:[%s397 + $0xa8] sm:$0xff]
      %v1056 = vld [vmem:[%s397 + $0xb0] sm:$0xff]
      %v1057 = vld [vmem:[%s397 + $0xb8] sm:$0xff]
      %v1058 = vld [vmem:[%s397 + $0xc0] sm:$0xff]
      %v1059 = vld [vmem:[%s397 + $0xc8] sm:$0xff]
      %v1060 = vld [vmem:[%s397 + $0xd0] sm:$0xff]
      %v1061 = vld [vmem:[%s397 + $0xd8] sm:$0xff]
      %v1062 = vld [vmem:[%s397 + $0xe0] sm:$0xff]
      %v1063 = vld [vmem:[%s397 + $0xe8] sm:$0xff]
      %v1064 = vld [vmem:[%s397 + $0xf0] sm:$0xff]
      %v1065 = vld [vmem:[%s397 + $0xf8] sm:$0xff]
      %v1066 = vld [vmem:[%s397 + $0x100] sm:$0xff]
      %v1067 = vld [vmem:[%s397 + $0x9] sm:$0xff]
      %v1068 = vld [vmem:[%s397 + $0x11] sm:$0xff]
      %v1069 = vld [vmem:[%s397 + $0x19] sm:$0xff]
      %v1070 = vld [vmem:[%s397 + $0x21] sm:$0xff]
      %v1071 = vld [vmem:[%s397 + $0x29] sm:$0xff]
      %v1072 = vld [vmem:[%s397 + $0x31] sm:$0xff]
      %v1073 = vld [vmem:[%s397 + $0x39] sm:$0xff]
      %v1074 = vld [vmem:[%s397 + $0x41] sm:$0xff]
      %v1075 = vld [vmem:[%s397 + $0x49] sm:$0xff]
      %v1076 = vld [vmem:[%s397 + $0x51] sm:$0xff]
      %v1077 = vld [vmem:[%s397 + $0x59] sm:$0xff]
      %v1078 = vld [vmem:[%s397 + $0x61] sm:$0xff]
      %v1079 = vld [vmem:[%s397 + $0x69] sm:$0xff]
      %v1080 = vld [vmem:[%s397 + $0x71] sm:$0xff]
      %v1081 = vld [vmem:[%s397 + $0x79] sm:$0xff]
      %v1082 = vld [vmem:[%s397 + $0x81] sm:$0xff]
      %v1083 = vld [vmem:[%s397 + $0x89] sm:$0xff]
      %v1084 = vld [vmem:[%s397 + $0x91] sm:$0xff]
      %v1085 = vld [vmem:[%s397 + $0x99] sm:$0xff]
      %v1086 = vld [vmem:[%s397 + $0xa1] sm:$0xff]
      %v1087 = vld [vmem:[%s397 + $0xa9] sm:$0xff]
      %v1088 = vld [vmem:[%s397 + $0xb1] sm:$0xff]
      %v1089 = vld [vmem:[%s397 + $0xb9] sm:$0xff]
      %v1090 = vld [vmem:[%s397 + $0xc1] sm:$0xff]
      %v1091 = vld [vmem:[%s397 + $0xc9] sm:$0xff]
      %v1092 = vld [vmem:[%s397 + $0xd1] sm:$0xff]
      %v1093 = vld [vmem:[%s397 + $0xd9] sm:$0xff]
      %v1094 = vld [vmem:[%s397 + $0xe1] sm:$0xff]
      %v1095 = vld [vmem:[%s397 + $0xe9] sm:$0xff]
      %v1096 = vld [vmem:[%s397 + $0xf1] sm:$0xff]
      %v1097 = vld [vmem:[%s397 + $0xf9] sm:$0xff]
      %v1098 = vld [vmem:[%s397 + $0x101] sm:$0xff]
      %v1099 = vsel %vm867, 1, 0
      %v1100 = vsel %vm868, 1, 0
      %v1101 = vsel %vm869, 1, 0
      %v1102 = vsel %vm870, 1, 0
      %v1103 = vsel %vm871, 1, 0
      %v1104 = vsel %vm872, 1, 0
      %v1105 = vsel %vm873, 1, 0
      %v1106 = vsel %vm874, 1, 0
      %v1107 = vsel %vm875, 1, 0
      %v1108 = vsel %vm876, 1, 0
      %v1109 = vsel %vm877, 1, 0
      %v1110 = vsel %vm878, 1, 0
      %v1111 = vsel %vm879, 1, 0
      %v1112 = vsel %vm880, 1, 0
      %v1113 = vsel %vm881, 1, 0
      %v1114 = vsel %vm882, 1, 0
      %v1115 = vsel %vm883, 1, 0
      %v1116 = vsel %vm884, 1, 0
      %v1117 = vsel %vm885, 1, 0
      %v1118 = vsel %vm886, 1, 0
      %v1119 = vsel %vm887, 1, 0
      %v1120 = vsel %vm888, 1, 0
      %v1121 = vsel %vm889, 1, 0
      %v1122 = vsel %vm890, 1, 0
      %v1123 = vsel %vm891, 1, 0
      %v1124 = vsel %vm892, 1, 0
      %v1125 = vsel %vm893, 1, 0
      %v1126 = vsel %vm894, 1, 0
      %v1127 = vsel %vm895, 1, 0
      %v1128 = vsel %vm896, 1, 0
      %v1129 = vsel %vm897, 1, 0
      %v1130 = vsel %vm898, 1, 0
      %vm1131 = vcmp.eq.s32.totalorder %v1099, 1
      %vm1132 = vcmp.eq.s32.totalorder %v1100, 1
      %vm1133 = vcmp.eq.s32.totalorder %v1101, 1
      %vm1134 = vcmp.eq.s32.totalorder %v1102, 1
      %vm1135 = vcmp.eq.s32.totalorder %v1103, 1
      %vm1136 = vcmp.eq.s32.totalorder %v1104, 1
      %vm1137 = vcmp.eq.s32.totalorder %v1105, 1
      %vm1138 = vcmp.eq.s32.totalorder %v1106, 1
      %vm1139 = vcmp.eq.s32.totalorder %v1107, 1
      %vm1140 = vcmp.eq.s32.totalorder %v1108, 1
      %vm1141 = vcmp.eq.s32.totalorder %v1109, 1
      %vm1142 = vcmp.eq.s32.totalorder %v1110, 1
      %vm1143 = vcmp.eq.s32.totalorder %v1111, 1
      %vm1144 = vcmp.eq.s32.totalorder %v1112, 1
      %vm1145 = vcmp.eq.s32.totalorder %v1113, 1
      %vm1146 = vcmp.eq.s32.totalorder %v1114, 1
      %vm1147 = vcmp.eq.s32.totalorder %v1115, 1
      %vm1148 = vcmp.eq.s32.totalorder %v1116, 1
      %vm1149 = vcmp.eq.s32.totalorder %v1117, 1
      %vm1150 = vcmp.eq.s32.totalorder %v1118, 1
      %vm1151 = vcmp.eq.s32.totalorder %v1119, 1
      %vm1152 = vcmp.eq.s32.totalorder %v1120, 1
      %vm1153 = vcmp.eq.s32.totalorder %v1121, 1
      %vm1154 = vcmp.eq.s32.totalorder %v1122, 1
      %vm1155 = vcmp.eq.s32.totalorder %v1123, 1
      %vm1156 = vcmp.eq.s32.totalorder %v1124, 1
      %vm1157 = vcmp.eq.s32.totalorder %v1125, 1
      %vm1158 = vcmp.eq.s32.totalorder %v1126, 1
      %vm1159 = vcmp.eq.s32.totalorder %v1127, 1
      %vm1160 = vcmp.eq.s32.totalorder %v1128, 1
      %vm1161 = vcmp.eq.s32.totalorder %v1129, 1
      %vm1162 = vcmp.eq.s32.totalorder %v1130, 1
      %v1163 = vsel %vm1131, %v1067, 0.0
      %v1164 = vsel %vm1132, %v1068, 0.0
      %v1165 = vsel %vm1133, %v1069, 0.0
      %v1166 = vsel %vm1134, %v1070, 0.0
      %v1167 = vsel %vm1135, %v1071, 0.0
      %v1168 = vsel %vm1136, %v1072, 0.0
      %v1169 = vsel %vm1137, %v1073, 0.0
      %v1170 = vsel %vm1138, %v1074, 0.0
      %v1171 = vsel %vm1139, %v1075, 0.0
      %v1172 = vsel %vm1140, %v1076, 0.0
      %v1173 = vsel %vm1141, %v1077, 0.0
      %v1174 = vsel %vm1142, %v1078, 0.0
      %v1175 = vsel %vm1143, %v1079, 0.0
      %v1176 = vsel %vm1144, %v1080, 0.0
      %v1177 = vsel %vm1145, %v1081, 0.0
      %v1178 = vsel %vm1146, %v1082, 0.0
      %v1179 = vsel %vm1147, %v1083, 0.0
      %v1180 = vsel %vm1148, %v1084, 0.0
      %v1181 = vsel %vm1149, %v1085, 0.0
      %v1182 = vsel %vm1150, %v1086, 0.0
      %v1183 = vsel %vm1151, %v1087, 0.0
      %v1184 = vsel %vm1152, %v1088, 0.0
      %v1185 = vsel %vm1153, %v1089, 0.0
      %v1186 = vsel %vm1154, %v1090, 0.0
      %v1187 = vsel %vm1155, %v1091, 0.0
      %v1188 = vsel %vm1156, %v1092, 0.0
      %v1189 = vsel %vm1157, %v1093, 0.0
      %v1190 = vsel %vm1158, %v1094, 0.0
      %v1191 = vsel %vm1159, %v1095, 0.0
      %v1192 = vsel %vm1160, %v1096, 0.0
      %v1193 = vsel %vm1161, %v1097, 0.0
      %v1194 = vsel %vm1162, %v1098, 0.0
      %v1195 = vld [vmem:[%s397 + $0x107] sm:$0xff]
      %v1196 = vld [vmem:[%s397 + $0x10f] sm:$0xff]
      %v1197 = vsel %vm971, %v909, 0.0
      %v1198 = vsel %vm972, %v910, 0.0
      %v1199 = vsel %vm973, %v911, 0.0
      %v1200 = vsel %vm974, %v912, 0.0
      %v1201 = vsel %vm975, %v913, 0.0
      %v1202 = vsel %vm976, %v914, 0.0
      %v1203 = vsel %vm977, %v915, 0.0
      %v1204 = vsel %vm978, %v916, 0.0
      %v1205 = vsel %vm979, %v917, 0.0
      %v1206 = vsel %vm980, %v918, 0.0
      %v1207 = vsel %vm981, %v919, 0.0
      %v1208 = vsel %vm982, %v920, 0.0
      %v1209 = vsel %vm983, %v921, 0.0
      %v1210 = vsel %vm984, %v922, 0.0
      %v1211 = vsel %vm985, %v923, 0.0
      %v1212 = vsel %vm986, %v924, 0.0
      %v1213 = vsel %vm987, %v925, 0.0
      %v1214 = vsel %vm988, %v926, 0.0
      %v1215 = vsel %vm989, %v927, 0.0
      %v1216 = vsel %vm990, %v928, 0.0
      %v1217 = vsel %vm991, %v929, 0.0
      %v1218 = vsel %vm992, %v930, 0.0
      %v1219 = vsel %vm993, %v931, 0.0
      %v1220 = vsel %vm994, %v932, 0.0
      %v1221 = vsel %vm995, %v933, 0.0
      %v1222 = vsel %vm996, %v934, 0.0
      %v1223 = vsel %vm997, %v935, 0.0
      %v1224 = vsel %vm998, %v936, 0.0
      %v1225 = vsel %vm999, %v937, 0.0
      %v1226 = vsel %vm1000, %v938, 0.0
      %v1227 = vsel %vm1001, %v1195, 0.0
      %v1228 = vsel %vm1002, %v1196, 0.0
      %v1229 = vld [vmem:[%s397 + $0x108] sm:$0xff]
      %v1230 = vld [vmem:[%s397 + $0x110] sm:$0xff]
      %v1231 = vld [vmem:[%s397 + $0x109] sm:$0xff]
      %v1232 = vld [vmem:[%s397 + $0x111] sm:$0xff]
      %v1233 = vsel %vm1131, %v1069, 0.0
      %v1234 = vsel %vm1132, %v1070, 0.0
      %v1235 = vsel %vm1133, %v1071, 0.0
      %v1236 = vsel %vm1134, %v1072, 0.0
      %v1237 = vsel %vm1135, %v1073, 0.0
      %v1238 = vsel %vm1136, %v1074, 0.0
      %v1239 = vsel %vm1137, %v1075, 0.0
      %v1240 = vsel %vm1138, %v1076, 0.0
      %v1241 = vsel %vm1139, %v1077, 0.0
      %v1242 = vsel %vm1140, %v1078, 0.0
      %v1243 = vsel %vm1141, %v1079, 0.0
      %v1244 = vsel %vm1142, %v1080, 0.0
      %v1245 = vsel %vm1143, %v1081, 0.0
      %v1246 = vsel %vm1144, %v1082, 0.0
      %v1247 = vsel %vm1145, %v1083, 0.0
      %v1248 = vsel %vm1146, %v1084, 0.0
      %v1249 = vsel %vm1147, %v1085, 0.0
      %v1250 = vsel %vm1148, %v1086, 0.0
      %v1251 = vsel %vm1149, %v1087, 0.0
      %v1252 = vsel %vm1150, %v1088, 0.0
      %v1253 = vsel %vm1151, %v1089, 0.0
      %v1254 = vsel %vm1152, %v1090, 0.0
      %v1255 = vsel %vm1153, %v1091, 0.0
      %v1256 = vsel %vm1154, %v1092, 0.0
      %v1257 = vsel %vm1155, %v1093, 0.0
      %v1258 = vsel %vm1156, %v1094, 0.0
      %v1259 = vsel %vm1157, %v1095, 0.0
      %v1260 = vsel %vm1158, %v1096, 0.0
      %v1261 = vsel %vm1159, %v1097, 0.0
      %v1262 = vsel %vm1160, %v1098, 0.0
      %v1263 = vsel %vm1161, %v1231, 0.0
      %v1264 = vsel %vm1162, %v1232, 0.0
      %v1265 = vld [vmem:[%s397 + $0x117] sm:$0xff]
      %v1266 = vld [vmem:[%s397 + $0x11f] sm:$0xff]
      %v1267 = vsel %vm971, %v911, 0.0
      %v1268 = vsel %vm972, %v912, 0.0
      %v1269 = vsel %vm973, %v913, 0.0
      %v1270 = vsel %vm974, %v914, 0.0
      %v1271 = vsel %vm975, %v915, 0.0
      %v1272 = vsel %vm976, %v916, 0.0
      %v1273 = vsel %vm977, %v917, 0.0
      %v1274 = vsel %vm978, %v918, 0.0
      %v1275 = vsel %vm979, %v919, 0.0
      %v1276 = vsel %vm980, %v920, 0.0
      %v1277 = vsel %vm981, %v921, 0.0
      %v1278 = vsel %vm982, %v922, 0.0
      %v1279 = vsel %vm983, %v923, 0.0
      %v1280 = vsel %vm984, %v924, 0.0
      %v1281 = vsel %vm985, %v925, 0.0
      %v1282 = vsel %vm986, %v926, 0.0
      %v1283 = vsel %vm987, %v927, 0.0
      %v1284 = vsel %vm988, %v928, 0.0
      %v1285 = vsel %vm989, %v929, 0.0
      %v1286 = vsel %vm990, %v930, 0.0
      %v1287 = vsel %vm991, %v931, 0.0
      %v1288 = vsel %vm992, %v932, 0.0
      %v1289 = vsel %vm993, %v933, 0.0
      %v1290 = vsel %vm994, %v934, 0.0
      %v1291 = vsel %vm995, %v935, 0.0
      %v1292 = vsel %vm996, %v936, 0.0
      %v1293 = vsel %vm997, %v937, 0.0
      %v1294 = vsel %vm998, %v938, 0.0
      %v1295 = vsel %vm999, %v1195, 0.0
      %v1296 = vsel %vm1000, %v1196, 0.0
      %v1297 = vsel %vm1001, %v1265, 0.0
      %v1298 = vsel %vm1002, %v1266, 0.0
      %v1299 = vld [vmem:[%s397 + $0x118] sm:$0xff]
      %v1300 = vld [vmem:[%s397 + $0x120] sm:$0xff]
      %v1301 = vld [vmem:[%s397 + $0x119] sm:$0xff]
      %v1302 = vld [vmem:[%s397 + $0x121] sm:$0xff]
      %v1303 = vsel %vm1131, %v1071, 0.0
      %v1304 = vsel %vm1132, %v1072, 0.0
      %v1305 = vsel %vm1133, %v1073, 0.0
      %v1306 = vsel %vm1134, %v1074, 0.0
      %v1307 = vsel %vm1135, %v1075, 0.0
      %v1308 = vsel %vm1136, %v1076, 0.0
      %v1309 = vsel %vm1137, %v1077, 0.0
      %v1310 = vsel %vm1138, %v1078, 0.0
      %v1311 = vsel %vm1139, %v1079, 0.0
      %v1312 = vsel %vm1140, %v1080, 0.0
      %v1313 = vsel %vm1141, %v1081, 0.0
      %v1314 = vsel %vm1142, %v1082, 0.0
      %v1315 = vsel %vm1143, %v1083, 0.0
      %v1316 = vsel %vm1144, %v1084, 0.0
      %v1317 = vsel %vm1145, %v1085, 0.0
      %v1318 = vsel %vm1146, %v1086, 0.0
      %v1319 = vsel %vm1147, %v1087, 0.0
      %v1320 = vsel %vm1148, %v1088, 0.0
      %v1321 = vsel %vm1149, %v1089, 0.0
      %v1322 = vsel %vm1150, %v1090, 0.0
      %v1323 = vsel %vm1151, %v1091, 0.0
      %v1324 = vsel %vm1152, %v1092, 0.0
      %v1325 = vsel %vm1153, %v1093, 0.0
      %v1326 = vsel %vm1154, %v1094, 0.0
      %v1327 = vsel %vm1155, %v1095, 0.0
      %v1328 = vsel %vm1156, %v1096, 0.0
      %v1329 = vsel %vm1157, %v1097, 0.0
      %v1330 = vsel %vm1158, %v1098, 0.0
      %v1331 = vsel %vm1159, %v1231, 0.0
      %v1332 = vsel %vm1160, %v1232, 0.0
      %v1333 = vsel %vm1161, %v1301, 0.0
      %v1334 = vsel %vm1162, %v1302, 0.0
      %1367 = vrot.lane.b32.xlu0 %v1035, 4
      %v1368 = vpop.permute.xlu0 %1367
      %1369 = vrot.lane.b32.xlu0 %v1036, 4
      %v1370 = vpop.permute.xlu0 %1369
      %1371 = vrot.lane.b32.xlu0 %v1037, 4
      %v1372 = vpop.permute.xlu0 %1371
      %1373 = vrot.lane.b32.xlu0 %v1038, 4
      %v1374 = vpop.permute.xlu0 %1373
      %1375 = vrot.lane.b32.xlu0 %v1039, 4
      %v1376 = vpop.permute.xlu0 %1375
      %1377 = vrot.lane.b32.xlu0 %v1040, 4
      %v1378 = vpop.permute.xlu0 %1377
      %1379 = vrot.lane.b32.xlu0 %v1041, 4
      %v1380 = vpop.permute.xlu0 %1379
      %1381 = vrot.lane.b32.xlu0 %v1042, 4
      %v1382 = vpop.permute.xlu0 %1381
      %1383 = vrot.lane.b32.xlu0 %v1043, 4
      %v1384 = vpop.permute.xlu0 %1383
      %1385 = vrot.lane.b32.xlu0 %v1044, 4
      %v1386 = vpop.permute.xlu0 %1385
      %1387 = vrot.lane.b32.xlu0 %v1045, 4
      %v1388 = vpop.permute.xlu0 %1387
      %1389 = vrot.lane.b32.xlu0 %v1046, 4
      %v1390 = vpop.permute.xlu0 %1389
      %1391 = vrot.lane.b32.xlu0 %v1047, 4
      %v1392 = vpop.permute.xlu0 %1391
      %1393 = vrot.lane.b32.xlu0 %v1048, 4
      %v1394 = vpop.permute.xlu0 %1393
      %1395 = vrot.lane.b32.xlu0 %v1049, 4
      %v1396 = vpop.permute.xlu0 %1395
      %1397 = vrot.lane.b32.xlu0 %v1050, 4
      %v1398 = vpop.permute.xlu0 %1397
      %1399 = vrot.lane.b32.xlu0 %v1051, 4
      %v1400 = vpop.permute.xlu0 %1399
      %1401 = vrot.lane.b32.xlu0 %v1052, 4
      %v1402 = vpop.permute.xlu0 %1401
      %1403 = vrot.lane.b32.xlu0 %v1053, 4
      %v1404 = vpop.permute.xlu0 %1403
      %1405 = vrot.lane.b32.xlu0 %v1054, 4
      %v1406 = vpop.permute.xlu0 %1405
      %1407 = vrot.lane.b32.xlu0 %v1055, 4
      %v1408 = vpop.permute.xlu0 %1407
      %1409 = vrot.lane.b32.xlu0 %v1056, 4
      %v1410 = vpop.permute.xlu0 %1409
      %1411 = vrot.lane.b32.xlu0 %v1057, 4
      %v1412 = vpop.permute.xlu0 %1411
      %1413 = vrot.lane.b32.xlu0 %v1058, 4
      %v1414 = vpop.permute.xlu0 %1413
      %1415 = vrot.lane.b32.xlu0 %v1059, 4
      %v1416 = vpop.permute.xlu0 %1415
      %1417 = vrot.lane.b32.xlu0 %v1060, 4
      %v1418 = vpop.permute.xlu0 %1417
      %1419 = vrot.lane.b32.xlu0 %v1061, 4
      %v1420 = vpop.permute.xlu0 %1419
      %1421 = vrot.lane.b32.xlu0 %v1062, 4
      %v1422 = vpop.permute.xlu0 %1421
      %1423 = vrot.lane.b32.xlu0 %v1063, 4
      %v1424 = vpop.permute.xlu0 %1423
      %1425 = vrot.lane.b32.xlu0 %v1064, 4
      %v1426 = vpop.permute.xlu0 %1425
      %1427 = vrot.lane.b32.xlu0 %v1065, 4
      %v1428 = vpop.permute.xlu0 %1427
      %1429 = vrot.lane.b32.xlu0 %v1066, 4
      %v1430 = vpop.permute.xlu0 %1429
      %1495 = vrot.lane.b32.xlu0 %v1163, 8
      %v1496 = vpop.permute.xlu0 %1495
      %1497 = vrot.lane.b32.xlu0 %v1164, 8
      %v1498 = vpop.permute.xlu0 %1497
      %1499 = vrot.lane.b32.xlu0 %v1165, 8
      %v1500 = vpop.permute.xlu0 %1499
      %1501 = vrot.lane.b32.xlu0 %v1166, 8
      %v1502 = vpop.permute.xlu0 %1501
      %1503 = vrot.lane.b32.xlu0 %v1167, 8
      %v1504 = vpop.permute.xlu0 %1503
      %1505 = vrot.lane.b32.xlu0 %v1168, 8
      %v1506 = vpop.permute.xlu0 %1505
      %1507 = vrot.lane.b32.xlu0 %v1169, 8
      %v1508 = vpop.permute.xlu0 %1507
      %1509 = vrot.lane.b32.xlu0 %v1170, 8
      %v1510 = vpop.permute.xlu0 %1509
      %1511 = vrot.lane.b32.xlu0 %v1171, 8
      %v1512 = vpop.permute.xlu0 %1511
      %1513 = vrot.lane.b32.xlu0 %v1172, 8
      %v1514 = vpop.permute.xlu0 %1513
      %1515 = vrot.lane.b32.xlu0 %v1173, 8
      %v1516 = vpop.permute.xlu0 %1515
      %1517 = vrot.lane.b32.xlu0 %v1174, 8
      %v1518 = vpop.permute.xlu0 %1517
      %1519 = vrot.lane.b32.xlu0 %v1175, 8
      %v1520 = vpop.permute.xlu0 %1519
      %1521 = vrot.lane.b32.xlu0 %v1176, 8
      %v1522 = vpop.permute.xlu0 %1521
      %1523 = vrot.lane.b32.xlu0 %v1177, 8
      %v1524 = vpop.permute.xlu0 %1523
      %1525 = vrot.lane.b32.xlu0 %v1178, 8
      %v1526 = vpop.permute.xlu0 %1525
      %1527 = vrot.lane.b32.xlu0 %v1179, 8
      %v1528 = vpop.permute.xlu0 %1527
      %1529 = vrot.lane.b32.xlu0 %v1180, 8
      %v1530 = vpop.permute.xlu0 %1529
      %1531 = vrot.lane.b32.xlu0 %v1181, 8
      %v1532 = vpop.permute.xlu0 %1531
      %1533 = vrot.lane.b32.xlu0 %v1182, 8
      %v1534 = vpop.permute.xlu0 %1533
      %1535 = vrot.lane.b32.xlu0 %v1183, 8
      %v1536 = vpop.permute.xlu0 %1535
      %1537 = vrot.lane.b32.xlu0 %v1184, 8
      %v1538 = vpop.permute.xlu0 %1537
      %1539 = vrot.lane.b32.xlu0 %v1185, 8
      %v1540 = vpop.permute.xlu0 %1539
      %1541 = vrot.lane.b32.xlu0 %v1186, 8
      %v1542 = vpop.permute.xlu0 %1541
      %1543 = vrot.lane.b32.xlu0 %v1187, 8
      %v1544 = vpop.permute.xlu0 %1543
      %1545 = vrot.lane.b32.xlu0 %v1188, 8
      %v1546 = vpop.permute.xlu0 %1545
      %1547 = vrot.lane.b32.xlu0 %v1189, 8
      %v1548 = vpop.permute.xlu0 %1547
      %1549 = vrot.lane.b32.xlu0 %v1190, 8
      %v1550 = vpop.permute.xlu0 %1549
      %1551 = vrot.lane.b32.xlu0 %v1191, 8
      %v1552 = vpop.permute.xlu0 %1551
      %1553 = vrot.lane.b32.xlu0 %v1192, 8
      %v1554 = vpop.permute.xlu0 %1553
      %1555 = vrot.lane.b32.xlu0 %v1193, 8
      %v1556 = vpop.permute.xlu0 %1555
      %1557 = vrot.lane.b32.xlu0 %v1194, 8
      %v1558 = vpop.permute.xlu0 %1557
      %1623 = vrot.lane.b32.xlu0 %v1197, 12
      %v1624 = vpop.permute.xlu0 %1623
      %1625 = vrot.lane.b32.xlu0 %v1198, 12
      %v1626 = vpop.permute.xlu0 %1625
      %1627 = vrot.lane.b32.xlu0 %v1199, 12
      %v1628 = vpop.permute.xlu0 %1627
      %1629 = vrot.lane.b32.xlu0 %v1200, 12
      %v1630 = vpop.permute.xlu0 %1629
      %1631 = vrot.lane.b32.xlu0 %v1201, 12
      %v1632 = vpop.permute.xlu0 %1631
      %1633 = vrot.lane.b32.xlu0 %v1202, 12
      %v1634 = vpop.permute.xlu0 %1633
      %1635 = vrot.lane.b32.xlu0 %v1203, 12
      %v1636 = vpop.permute.xlu0 %1635
      %1637 = vrot.lane.b32.xlu0 %v1204, 12
      %v1638 = vpop.permute.xlu0 %1637
      %1639 = vrot.lane.b32.xlu0 %v1205, 12
      %v1640 = vpop.permute.xlu0 %1639
      %1641 = vrot.lane.b32.xlu0 %v1206, 12
      %v1642 = vpop.permute.xlu0 %1641
      %1643 = vrot.lane.b32.xlu0 %v1207, 12
      %v1644 = vpop.permute.xlu0 %1643
      %1645 = vrot.lane.b32.xlu0 %v1208, 12
      %v1646 = vpop.permute.xlu0 %1645
      %1647 = vrot.lane.b32.xlu0 %v1209, 12
      %v1648 = vpop.permute.xlu0 %1647
      %1649 = vrot.lane.b32.xlu0 %v1210, 12
      %v1650 = vpop.permute.xlu0 %1649
      %1651 = vrot.lane.b32.xlu0 %v1211, 12
      %v1652 = vpop.permute.xlu0 %1651
      %1653 = vrot.lane.b32.xlu0 %v1212, 12
      %v1654 = vpop.permute.xlu0 %1653
      %1655 = vrot.lane.b32.xlu0 %v1213, 12
      %v1656 = vpop.permute.xlu0 %1655
      %1657 = vrot.lane.b32.xlu0 %v1214, 12
      %v1658 = vpop.permute.xlu0 %1657
      %1659 = vrot.lane.b32.xlu0 %v1215, 12
      %v1660 = vpop.permute.xlu0 %1659
      %1661 = vrot.lane.b32.xlu0 %v1216, 12
      %v1662 = vpop.permute.xlu0 %1661
      %1663 = vrot.lane.b32.xlu0 %v1217, 12
      %v1664 = vpop.permute.xlu0 %1663
      %1665 = vrot.lane.b32.xlu0 %v1218, 12
      %v1666 = vpop.permute.xlu0 %1665
      %1667 = vrot.lane.b32.xlu0 %v1219, 12
      %v1668 = vpop.permute.xlu0 %1667
      %1669 = vrot.lane.b32.xlu0 %v1220, 12
      %v1670 = vpop.permute.xlu0 %1669
      %1671 = vrot.lane.b32.xlu0 %v1221, 12
      %v1672 = vpop.permute.xlu0 %1671
      %1673 = vrot.lane.b32.xlu0 %v1222, 12
      %v1674 = vpop.permute.xlu0 %1673
      %1675 = vrot.lane.b32.xlu0 %v1223, 12
      %v1676 = vpop.permute.xlu0 %1675
      %1677 = vrot.lane.b32.xlu0 %v1224, 12
      %v1678 = vpop.permute.xlu0 %1677
      %1679 = vrot.lane.b32.xlu0 %v1225, 12
      %v1680 = vpop.permute.xlu0 %1679
      %1681 = vrot.lane.b32.xlu0 %v1226, 12
      %v1682 = vpop.permute.xlu0 %1681
      %1683 = vrot.lane.b32.xlu0 %v1227, 12
      %v1684 = vpop.permute.xlu0 %1683
      %1685 = vrot.lane.b32.xlu0 %v1228, 12
      %v1686 = vpop.permute.xlu0 %1685
      %1721 = vrot.lane.b32.xlu0 %v1037, 16
      %v1722 = vpop.permute.xlu0 %1721
      %1723 = vrot.lane.b32.xlu0 %v1038, 16
      %v1724 = vpop.permute.xlu0 %1723
      %1725 = vrot.lane.b32.xlu0 %v1039, 16
      %v1726 = vpop.permute.xlu0 %1725
      %1727 = vrot.lane.b32.xlu0 %v1040, 16
      %v1728 = vpop.permute.xlu0 %1727
      %1729 = vrot.lane.b32.xlu0 %v1041, 16
      %v1730 = vpop.permute.xlu0 %1729
      %1731 = vrot.lane.b32.xlu0 %v1042, 16
      %v1732 = vpop.permute.xlu0 %1731
      %1733 = vrot.lane.b32.xlu0 %v1043, 16
      %v1734 = vpop.permute.xlu0 %1733
      %1735 = vrot.lane.b32.xlu0 %v1044, 16
      %v1736 = vpop.permute.xlu0 %1735
      %1737 = vrot.lane.b32.xlu0 %v1045, 16
      %v1738 = vpop.permute.xlu0 %1737
      %1739 = vrot.lane.b32.xlu0 %v1046, 16
      %v1740 = vpop.permute.xlu0 %1739
      %1741 = vrot.lane.b32.xlu0 %v1047, 16
      %v1742 = vpop.permute.xlu0 %1741
      %1743 = vrot.lane.b32.xlu0 %v1048, 16
      %v1744 = vpop.permute.xlu0 %1743
      %1745 = vrot.lane.b32.xlu0 %v1049, 16
      %v1746 = vpop.permute.xlu0 %1745
      %1747 = vrot.lane.b32.xlu0 %v1050, 16
      %v1748 = vpop.permute.xlu0 %1747
      %1749 = vrot.lane.b32.xlu0 %v1051, 16
      %v1750 = vpop.permute.xlu0 %1749
      %1751 = vrot.lane.b32.xlu0 %v1052, 16
      %v1752 = vpop.permute.xlu0 %1751
      %1753 = vrot.lane.b32.xlu0 %v1053, 16
      %v1754 = vpop.permute.xlu0 %1753
      %1755 = vrot.lane.b32.xlu0 %v1054, 16
      %v1756 = vpop.permute.xlu0 %1755
      %1757 = vrot.lane.b32.xlu0 %v1055, 16
      %v1758 = vpop.permute.xlu0 %1757
      %1759 = vrot.lane.b32.xlu0 %v1056, 16
      %v1760 = vpop.permute.xlu0 %1759
      %1761 = vrot.lane.b32.xlu0 %v1057, 16
      %v1762 = vpop.permute.xlu0 %1761
      %1763 = vrot.lane.b32.xlu0 %v1058, 16
      %v1764 = vpop.permute.xlu0 %1763
      %1765 = vrot.lane.b32.xlu0 %v1059, 16
      %v1766 = vpop.permute.xlu0 %1765
      %1767 = vrot.lane.b32.xlu0 %v1060, 16
      %v1768 = vpop.permute.xlu0 %1767
      %1769 = vrot.lane.b32.xlu0 %v1061, 16
      %v1770 = vpop.permute.xlu0 %1769
      %1771 = vrot.lane.b32.xlu0 %v1062, 16
      %v1772 = vpop.permute.xlu0 %1771
      %1773 = vrot.lane.b32.xlu0 %v1063, 16
      %v1774 = vpop.permute.xlu0 %1773
      %1775 = vrot.lane.b32.xlu0 %v1064, 16
      %v1776 = vpop.permute.xlu0 %1775
      %1777 = vrot.lane.b32.xlu0 %v1065, 16
      %v1778 = vpop.permute.xlu0 %1777
      %1779 = vrot.lane.b32.xlu0 %v1066, 16
      %v1780 = vpop.permute.xlu0 %1779
      %1781 = vrot.lane.b32.xlu0 %v1229, 16
      %v1782 = vpop.permute.xlu0 %1781
      %1783 = vrot.lane.b32.xlu0 %v1230, 16
      %v1784 = vpop.permute.xlu0 %1783
      %1849 = vrot.lane.b32.xlu0 %v1233, 20
      %v1850 = vpop.permute.xlu0 %1849
      %1851 = vrot.lane.b32.xlu0 %v1234, 20
      %v1852 = vpop.permute.xlu0 %1851
      %1853 = vrot.lane.b32.xlu0 %v1235, 20
      %v1854 = vpop.permute.xlu0 %1853
      %1855 = vrot.lane.b32.xlu0 %v1236, 20
      %v1856 = vpop.permute.xlu0 %1855
      %1857 = vrot.lane.b32.xlu0 %v1237, 20
      %v1858 = vpop.permute.xlu0 %1857
      %1859 = vrot.lane.b32.xlu0 %v1238, 20
      %v1860 = vpop.permute.xlu0 %1859
      %1861 = vrot.lane.b32.xlu0 %v1239, 20
      %v1862 = vpop.permute.xlu0 %1861
      %1863 = vrot.lane.b32.xlu0 %v1240, 20
      %v1864 = vpop.permute.xlu0 %1863
      %1865 = vrot.lane.b32.xlu0 %v1241, 20
      %v1866 = vpop.permute.xlu0 %1865
      %1867 = vrot.lane.b32.xlu0 %v1242, 20
      %v1868 = vpop.permute.xlu0 %1867
      %1869 = vrot.lane.b32.xlu0 %v1243, 20
      %v1870 = vpop.permute.xlu0 %1869
      %1871 = vrot.lane.b32.xlu0 %v1244, 20
      %v1872 = vpop.permute.xlu0 %1871
      %1873 = vrot.lane.b32.xlu0 %v1245, 20
      %v1874 = vpop.permute.xlu0 %1873
      %1875 = vrot.lane.b32.xlu0 %v1246, 20
      %v1876 = vpop.permute.xlu0 %1875
      %1877 = vrot.lane.b32.xlu0 %v1247, 20
      %v1878 = vpop.permute.xlu0 %1877
      %1879 = vrot.lane.b32.xlu0 %v1248, 20
      %v1880 = vpop.permute.xlu0 %1879
      %1881 = vrot.lane.b32.xlu0 %v1249, 20
      %v1882 = vpop.permute.xlu0 %1881
      %1883 = vrot.lane.b32.xlu0 %v1250, 20
      %v1884 = vpop.permute.xlu0 %1883
      %1885 = vrot.lane.b32.xlu0 %v1251, 20
      %v1886 = vpop.permute.xlu0 %1885
      %1887 = vrot.lane.b32.xlu0 %v1252, 20
      %v1888 = vpop.permute.xlu0 %1887
      %1889 = vrot.lane.b32.xlu0 %v1253, 20
      %v1890 = vpop.permute.xlu0 %1889
      %1891 = vrot.lane.b32.xlu0 %v1254, 20
      %v1892 = vpop.permute.xlu0 %1891
      %1893 = vrot.lane.b32.xlu0 %v1255, 20
      %v1894 = vpop.permute.xlu0 %1893
      %1895 = vrot.lane.b32.xlu0 %v1256, 20
      %v1896 = vpop.permute.xlu0 %1895
      %1897 = vrot.lane.b32.xlu0 %v1257, 20
      %v1898 = vpop.permute.xlu0 %1897
      %1899 = vrot.lane.b32.xlu0 %v1258, 20
      %v1900 = vpop.permute.xlu0 %1899
      %1901 = vrot.lane.b32.xlu0 %v1259, 20
      %v1902 = vpop.permute.xlu0 %1901
      %1903 = vrot.lane.b32.xlu0 %v1260, 20
      %v1904 = vpop.permute.xlu0 %1903
      %1905 = vrot.lane.b32.xlu0 %v1261, 20
      %v1906 = vpop.permute.xlu0 %1905
      %1907 = vrot.lane.b32.xlu0 %v1262, 20
      %v1908 = vpop.permute.xlu0 %1907
      %1909 = vrot.lane.b32.xlu0 %v1263, 20
      %v1910 = vpop.permute.xlu0 %1909
      %1911 = vrot.lane.b32.xlu0 %v1264, 20
      %v1912 = vpop.permute.xlu0 %1911
      %1977 = vrot.lane.b32.xlu0 %v1267, 24
      %v1978 = vpop.permute.xlu0 %1977
      %1979 = vrot.lane.b32.xlu0 %v1268, 24
      %v1980 = vpop.permute.xlu0 %1979
      %1981 = vrot.lane.b32.xlu0 %v1269, 24
      %v1982 = vpop.permute.xlu0 %1981
      %1983 = vrot.lane.b32.xlu0 %v1270, 24
      %v1984 = vpop.permute.xlu0 %1983
      %1985 = vrot.lane.b32.xlu0 %v1271, 24
      %v1986 = vpop.permute.xlu0 %1985
      %1987 = vrot.lane.b32.xlu0 %v1272, 24
      %v1988 = vpop.permute.xlu0 %1987
      %1989 = vrot.lane.b32.xlu0 %v1273, 24
      %v1990 = vpop.permute.xlu0 %1989
      %1991 = vrot.lane.b32.xlu0 %v1274, 24
      %v1992 = vpop.permute.xlu0 %1991
      %1993 = vrot.lane.b32.xlu0 %v1275, 24
      %v1994 = vpop.permute.xlu0 %1993
      %1995 = vrot.lane.b32.xlu0 %v1276, 24
      %v1996 = vpop.permute.xlu0 %1995
      %1997 = vrot.lane.b32.xlu0 %v1277, 24
      %v1998 = vpop.permute.xlu0 %1997
      %1999 = vrot.lane.b32.xlu0 %v1278, 24
      %v2000 = vpop.permute.xlu0 %1999
      %2001 = vrot.lane.b32.xlu0 %v1279, 24
      %v2002 = vpop.permute.xlu0 %2001
      %2003 = vrot.lane.b32.xlu0 %v1280, 24
      %v2004 = vpop.permute.xlu0 %2003
      %2005 = vrot.lane.b32.xlu0 %v1281, 24
      %v2006 = vpop.permute.xlu0 %2005
      %2007 = vrot.lane.b32.xlu0 %v1282, 24
      %v2008 = vpop.permute.xlu0 %2007
      %2009 = vrot.lane.b32.xlu0 %v1283, 24
      %v2010 = vpop.permute.xlu0 %2009
      %2011 = vrot.lane.b32.xlu0 %v1284, 24
      %v2012 = vpop.permute.xlu0 %2011
      %2013 = vrot.lane.b32.xlu0 %v1285, 24
      %v2014 = vpop.permute.xlu0 %2013
      %2015 = vrot.lane.b32.xlu0 %v1286, 24
      %v2016 = vpop.permute.xlu0 %2015
      %2017 = vrot.lane.b32.xlu0 %v1287, 24
      %v2018 = vpop.permute.xlu0 %2017
      %2019 = vrot.lane.b32.xlu0 %v1288, 24
      %v2020 = vpop.permute.xlu0 %2019
      %2021 = vrot.lane.b32.xlu0 %v1289, 24
      %v2022 = vpop.permute.xlu0 %2021
      %2023 = vrot.lane.b32.xlu0 %v1290, 24
      %v2024 = vpop.permute.xlu0 %2023
      %2025 = vrot.lane.b32.xlu0 %v1291, 24
      %v2026 = vpop.permute.xlu0 %2025
      %2027 = vrot.lane.b32.xlu0 %v1292, 24
      %v2028 = vpop.permute.xlu0 %2027
      %2029 = vrot.lane.b32.xlu0 %v1293, 24
      %v2030 = vpop.permute.xlu0 %2029
      %2031 = vrot.lane.b32.xlu0 %v1294, 24
      %v2032 = vpop.permute.xlu0 %2031
      %2033 = vrot.lane.b32.xlu0 %v1295, 24
      %v2034 = vpop.permute.xlu0 %2033
      %2035 = vrot.lane.b32.xlu0 %v1296, 24
      %v2036 = vpop.permute.xlu0 %2035
      %2037 = vrot.lane.b32.xlu0 %v1297, 24
      %v2038 = vpop.permute.xlu0 %2037
      %2039 = vrot.lane.b32.xlu0 %v1298, 24
      %v2040 = vpop.permute.xlu0 %2039
      %2075 = vrot.lane.b32.xlu0 %v1039, 28
      %v2076 = vpop.permute.xlu0 %2075
      %2077 = vrot.lane.b32.xlu0 %v1040, 28
      %v2078 = vpop.permute.xlu0 %2077
      %2079 = vrot.lane.b32.xlu0 %v1041, 28
      %v2080 = vpop.permute.xlu0 %2079
      %2081 = vrot.lane.b32.xlu0 %v1042, 28
      %v2082 = vpop.permute.xlu0 %2081
      %2083 = vrot.lane.b32.xlu0 %v1043, 28
      %v2084 = vpop.permute.xlu0 %2083
      %2085 = vrot.lane.b32.xlu0 %v1044, 28
      %v2086 = vpop.permute.xlu0 %2085
      %2087 = vrot.lane.b32.xlu0 %v1045, 28
      %v2088 = vpop.permute.xlu0 %2087
      %2089 = vrot.lane.b32.xlu0 %v1046, 28
      %v2090 = vpop.permute.xlu0 %2089
      %2091 = vrot.lane.b32.xlu0 %v1047, 28
      %v2092 = vpop.permute.xlu0 %2091
      %2093 = vrot.lane.b32.xlu0 %v1048, 28
      %v2094 = vpop.permute.xlu0 %2093
      %2095 = vrot.lane.b32.xlu0 %v1049, 28
      %v2096 = vpop.permute.xlu0 %2095
      %2097 = vrot.lane.b32.xlu0 %v1050, 28
      %v2098 = vpop.permute.xlu0 %2097
      %2099 = vrot.lane.b32.xlu0 %v1051, 28
      %v2100 = vpop.permute.xlu0 %2099
      %2101 = vrot.lane.b32.xlu0 %v1052, 28
      %v2102 = vpop.permute.xlu0 %2101
      %2103 = vrot.lane.b32.xlu0 %v1053, 28
      %v2104 = vpop.permute.xlu0 %2103
      %2105 = vrot.lane.b32.xlu0 %v1054, 28
      %v2106 = vpop.permute.xlu0 %2105
      %2107 = vrot.lane.b32.xlu0 %v1055, 28
      %v2108 = vpop.permute.xlu0 %2107
      %2109 = vrot.lane.b32.xlu0 %v1056, 28
      %v2110 = vpop.permute.xlu0 %2109
      %2111 = vrot.lane.b32.xlu0 %v1057, 28
      %v2112 = vpop.permute.xlu0 %2111
      %2113 = vrot.lane.b32.xlu0 %v1058, 28
      %v2114 = vpop.permute.xlu0 %2113
      %2115 = vrot.lane.b32.xlu0 %v1059, 28
      %v2116 = vpop.permute.xlu0 %2115
      %2117 = vrot.lane.b32.xlu0 %v1060, 28
      %v2118 = vpop.permute.xlu0 %2117
      %2119 = vrot.lane.b32.xlu0 %v1061, 28
      %v2120 = vpop.permute.xlu0 %2119
      %2121 = vrot.lane.b32.xlu0 %v1062, 28
      %v2122 = vpop.permute.xlu0 %2121
      %2123 = vrot.lane.b32.xlu0 %v1063, 28
      %v2124 = vpop.permute.xlu0 %2123
      %2125 = vrot.lane.b32.xlu0 %v1064, 28
      %v2126 = vpop.permute.xlu0 %2125
      %2127 = vrot.lane.b32.xlu0 %v1065, 28
      %v2128 = vpop.permute.xlu0 %2127
      %2129 = vrot.lane.b32.xlu0 %v1066, 28
      %v2130 = vpop.permute.xlu0 %2129
      %2131 = vrot.lane.b32.xlu0 %v1229, 28
      %v2132 = vpop.permute.xlu0 %2131
      %2133 = vrot.lane.b32.xlu0 %v1230, 28
      %v2134 = vpop.permute.xlu0 %2133
      %2135 = vrot.lane.b32.xlu0 %v1299, 28
      %v2136 = vpop.permute.xlu0 %2135
      %2137 = vrot.lane.b32.xlu0 %v1300, 28
      %v2138 = vpop.permute.xlu0 %2137
      %2203 = vrot.lane.b32.xlu0 %v1303, 32
      %v2204 = vpop.permute.xlu0 %2203
      %2205 = vrot.lane.b32.xlu0 %v1304, 32
      %v2206 = vpop.permute.xlu0 %2205
      %2207 = vrot.lane.b32.xlu0 %v1305, 32
      %v2208 = vpop.permute.xlu0 %2207
      %2209 = vrot.lane.b32.xlu0 %v1306, 32
      %v2210 = vpop.permute.xlu0 %2209
      %2211 = vrot.lane.b32.xlu0 %v1307, 32
      %v2212 = vpop.permute.xlu0 %2211
      %2213 = vrot.lane.b32.xlu0 %v1308, 32
      %v2214 = vpop.permute.xlu0 %2213
      %2215 = vrot.lane.b32.xlu0 %v1309, 32
      %v2216 = vpop.permute.xlu0 %2215
      %2217 = vrot.lane.b32.xlu0 %v1310, 32
      %v2218 = vpop.permute.xlu0 %2217
      %2219 = vrot.lane.b32.xlu0 %v1311, 32
      %v2220 = vpop.permute.xlu0 %2219
      %2221 = vrot.lane.b32.xlu0 %v1312, 32
      %v2222 = vpop.permute.xlu0 %2221
      %2223 = vrot.lane.b32.xlu0 %v1313, 32
      %v2224 = vpop.permute.xlu0 %2223
      %2225 = vrot.lane.b32.xlu0 %v1314, 32
      %v2226 = vpop.permute.xlu0 %2225
      %2227 = vrot.lane.b32.xlu0 %v1315, 32
      %v2228 = vpop.permute.xlu0 %2227
      %2229 = vrot.lane.b32.xlu0 %v1316, 32
      %v2230 = vpop.permute.xlu0 %2229
      %2231 = vrot.lane.b32.xlu0 %v1317, 32
      %v2232 = vpop.permute.xlu0 %2231
      %2233 = vrot.lane.b32.xlu0 %v1318, 32
      %v2234 = vpop.permute.xlu0 %2233
      %2235 = vrot.lane.b32.xlu0 %v1319, 32
      %v2236 = vpop.permute.xlu0 %2235
      %2237 = vrot.lane.b32.xlu0 %v1320, 32
      %v2238 = vpop.permute.xlu0 %2237
      %2239 = vrot.lane.b32.xlu0 %v1321, 32
      %v2240 = vpop.permute.xlu0 %2239
      %2241 = vrot.lane.b32.xlu0 %v1322, 32
      %v2242 = vpop.permute.xlu0 %2241
      %2243 = vrot.lane.b32.xlu0 %v1323, 32
      %v2244 = vpop.permute.xlu0 %2243
      %2245 = vrot.lane.b32.xlu0 %v1324, 32
      %v2246 = vpop.permute.xlu0 %2245
      %2247 = vrot.lane.b32.xlu0 %v1325, 32
      %v2248 = vpop.permute.xlu0 %2247
      %2249 = vrot.lane.b32.xlu0 %v1326, 32
      %v2250 = vpop.permute.xlu0 %2249
      %2251 = vrot.lane.b32.xlu0 %v1327, 32
      %v2252 = vpop.permute.xlu0 %2251
      %2253 = vrot.lane.b32.xlu0 %v1328, 32
      %v2254 = vpop.permute.xlu0 %2253
      %2255 = vrot.lane.b32.xlu0 %v1329, 32
      %v2256 = vpop.permute.xlu0 %2255
      %2257 = vrot.lane.b32.xlu0 %v1330, 32
      %v2258 = vpop.permute.xlu0 %2257
      %2259 = vrot.lane.b32.xlu0 %v1331, 32
      %v2260 = vpop.permute.xlu0 %2259
      %2261 = vrot.lane.b32.xlu0 %v1332, 32
      %v2262 = vpop.permute.xlu0 %2261
      %2263 = vrot.lane.b32.xlu0 %v1333, 32
      %v2264 = vpop.permute.xlu0 %2263
      %2265 = vrot.lane.b32.xlu0 %v1334, 32
      %v2266 = vpop.permute.xlu0 %2265
      %vm2299 = vcmask 31744
      %v2300 = vsel %vm2299, %v1003, %v1368
      %v2301 = vsel %vm2299, %v1004, %v1370
      %v2302 = vsel %vm2299, %v1005, %v1372
      %v2303 = vsel %vm2299, %v1006, %v1374
      %v2304 = vsel %vm2299, %v1007, %v1376
      %v2305 = vsel %vm2299, %v1008, %v1378
      %v2306 = vsel %vm2299, %v1009, %v1380
      %v2307 = vsel %vm2299, %v1010, %v1382
      %v2308 = vsel %vm2299, %v1011, %v1384
      %v2309 = vsel %vm2299, %v1012, %v1386
      %v2310 = vsel %vm2299, %v1013, %v1388
      %v2311 = vsel %vm2299, %v1014, %v1390
      %v2312 = vsel %vm2299, %v1015, %v1392
      %v2313 = vsel %vm2299, %v1016, %v1394
      %v2314 = vsel %vm2299, %v1017, %v1396
      %v2315 = vsel %vm2299, %v1018, %v1398
      %v2316 = vsel %vm2299, %v1019, %v1400
      %v2317 = vsel %vm2299, %v1020, %v1402
      %v2318 = vsel %vm2299, %v1021, %v1404
      %v2319 = vsel %vm2299, %v1022, %v1406
      %v2320 = vsel %vm2299, %v1023, %v1408
      %v2321 = vsel %vm2299, %v1024, %v1410
      %v2322 = vsel %vm2299, %v1025, %v1412
      %v2323 = vsel %vm2299, %v1026, %v1414
      %v2324 = vsel %vm2299, %v1027, %v1416
      %v2325 = vsel %vm2299, %v1028, %v1418
      %v2326 = vsel %vm2299, %v1029, %v1420
      %v2327 = vsel %vm2299, %v1030, %v1422
      %v2328 = vsel %vm2299, %v1031, %v1424
      %v2329 = vsel %vm2299, %v1032, %v1426
      %v2330 = vsel %vm2299, %v1033, %v1428
      %v2331 = vsel %vm2299, %v1034, %v1430
      %vm2332 = vcmask 64512
      %v2333 = vsel %vm2332, %v2300, %v1496
      %v2334 = vsel %vm2332, %v2301, %v1498
      %v2335 = vsel %vm2332, %v2302, %v1500
      %v2336 = vsel %vm2332, %v2303, %v1502
      %v2337 = vsel %vm2332, %v2304, %v1504
      %v2338 = vsel %vm2332, %v2305, %v1506
      %v2339 = vsel %vm2332, %v2306, %v1508
      %v2340 = vsel %vm2332, %v2307, %v1510
      %v2341 = vsel %vm2332, %v2308, %v1512
      %v2342 = vsel %vm2332, %v2309, %v1514
      %v2343 = vsel %vm2332, %v2310, %v1516
      %v2344 = vsel %vm2332, %v2311, %v1518
      %v2345 = vsel %vm2332, %v2312, %v1520
      %v2346 = vsel %vm2332, %v2313, %v1522
      %v2347 = vsel %vm2332, %v2314, %v1524
      %v2348 = vsel %vm2332, %v2315, %v1526
      %v2349 = vsel %vm2332, %v2316, %v1528
      %v2350 = vsel %vm2332, %v2317, %v1530
      %v2351 = vsel %vm2332, %v2318, %v1532
      %v2352 = vsel %vm2332, %v2319, %v1534
      %v2353 = vsel %vm2332, %v2320, %v1536
      %v2354 = vsel %vm2332, %v2321, %v1538
      %v2355 = vsel %vm2332, %v2322, %v1540
      %v2356 = vsel %vm2332, %v2323, %v1542
      %v2357 = vsel %vm2332, %v2324, %v1544
      %v2358 = vsel %vm2332, %v2325, %v1546
      %v2359 = vsel %vm2332, %v2326, %v1548
      %v2360 = vsel %vm2332, %v2327, %v1550
      %v2361 = vsel %vm2332, %v2328, %v1552
      %v2362 = vsel %vm2332, %v2329, %v1554
      %v2363 = vsel %vm2332, %v2330, %v1556
      %v2364 = vsel %vm2332, %v2331, %v1558
      %vm2365 = vcmask 97280
      %v2366 = vsel %vm2365, %v2333, %v1624
      %v2367 = vsel %vm2365, %v2334, %v1626
      %v2368 = vsel %vm2365, %v2335, %v1628
      %v2369 = vsel %vm2365, %v2336, %v1630
      %v2370 = vsel %vm2365, %v2337, %v1632
      %v2371 = vsel %vm2365, %v2338, %v1634
      %v2372 = vsel %vm2365, %v2339, %v1636
      %v2373 = vsel %vm2365, %v2340, %v1638
      %v2374 = vsel %vm2365, %v2341, %v1640
      %v2375 = vsel %vm2365, %v2342, %v1642
      %v2376 = vsel %vm2365, %v2343, %v1644
      %v2377 = vsel %vm2365, %v2344, %v1646
      %v2378 = vsel %vm2365, %v2345, %v1648
      %v2379 = vsel %vm2365, %v2346, %v1650
      %v2380 = vsel %vm2365, %v2347, %v1652
      %v2381 = vsel %vm2365, %v2348, %v1654
      %v2382 = vsel %vm2365, %v2349, %v1656
      %v2383 = vsel %vm2365, %v2350, %v1658
      %v2384 = vsel %vm2365, %v2351, %v1660
      %v2385 = vsel %vm2365, %v2352, %v1662
      %v2386 = vsel %vm2365, %v2353, %v1664
      %v2387 = vsel %vm2365, %v2354, %v1666
      %v2388 = vsel %vm2365, %v2355, %v1668
      %v2389 = vsel %vm2365, %v2356, %v1670
      %v2390 = vsel %vm2365, %v2357, %v1672
      %v2391 = vsel %vm2365, %v2358, %v1674
      %v2392 = vsel %vm2365, %v2359, %v1676
      %v2393 = vsel %vm2365, %v2360, %v1678
      %v2394 = vsel %vm2365, %v2361, %v1680
      %v2395 = vsel %vm2365, %v2362, %v1682
      %v2396 = vsel %vm2365, %v2363, %v1684
      %v2397 = vsel %vm2365, %v2364, %v1686
      %vm2398 = vcmask 130048
      %v2399 = vsel %vm2398, %v2366, %v1722
      %v2400 = vsel %vm2398, %v2367, %v1724
      %v2401 = vsel %vm2398, %v2368, %v1726
      %v2402 = vsel %vm2398, %v2369, %v1728
      %v2403 = vsel %vm2398, %v2370, %v1730
      %v2404 = vsel %vm2398, %v2371, %v1732
      %v2405 = vsel %vm2398, %v2372, %v1734
      %v2406 = vsel %vm2398, %v2373, %v1736
      %v2407 = vsel %vm2398, %v2374, %v1738
      %v2408 = vsel %vm2398, %v2375, %v1740
      %v2409 = vsel %vm2398, %v2376, %v1742
      %v2410 = vsel %vm2398, %v2377, %v1744
      %v2411 = vsel %vm2398, %v2378, %v1746
      %v2412 = vsel %vm2398, %v2379, %v1748
      %v2413 = vsel %vm2398, %v2380, %v1750
      %v2414 = vsel %vm2398, %v2381, %v1752
      %v2415 = vsel %vm2398, %v2382, %v1754
      %v2416 = vsel %vm2398, %v2383, %v1756
      %v2417 = vsel %vm2398, %v2384, %v1758
      %v2418 = vsel %vm2398, %v2385, %v1760
      %v2419 = vsel %vm2398, %v2386, %v1762
      %v2420 = vsel %vm2398, %v2387, %v1764
      %v2421 = vsel %vm2398, %v2388, %v1766
      %v2422 = vsel %vm2398, %v2389, %v1768
      %v2423 = vsel %vm2398, %v2390, %v1770
      %v2424 = vsel %vm2398, %v2391, %v1772
      %v2425 = vsel %vm2398, %v2392, %v1774
      %v2426 = vsel %vm2398, %v2393, %v1776
      %v2427 = vsel %vm2398, %v2394, %v1778
      %v2428 = vsel %vm2398, %v2395, %v1780
      %v2429 = vsel %vm2398, %v2396, %v1782
      %v2430 = vsel %vm2398, %v2397, %v1784
      %vm2431 = vcmask 162816
      %v2432 = vsel %vm2431, %v2399, %v1850
      %v2433 = vsel %vm2431, %v2400, %v1852
      %v2434 = vsel %vm2431, %v2401, %v1854
      %v2435 = vsel %vm2431, %v2402, %v1856
      %v2436 = vsel %vm2431, %v2403, %v1858
      %v2437 = vsel %vm2431, %v2404, %v1860
      %v2438 = vsel %vm2431, %v2405, %v1862
      %v2439 = vsel %vm2431, %v2406, %v1864
      %v2440 = vsel %vm2431, %v2407, %v1866
      %v2441 = vsel %vm2431, %v2408, %v1868
      %v2442 = vsel %vm2431, %v2409, %v1870
      %v2443 = vsel %vm2431, %v2410, %v1872
      %v2444 = vsel %vm2431, %v2411, %v1874
      %v2445 = vsel %vm2431, %v2412, %v1876
      %v2446 = vsel %vm2431, %v2413, %v1878
      %v2447 = vsel %vm2431, %v2414, %v1880
      %v2448 = vsel %vm2431, %v2415, %v1882
      %v2449 = vsel %vm2431, %v2416, %v1884
      %v2450 = vsel %vm2431, %v2417, %v1886
      %v2451 = vsel %vm2431, %v2418, %v1888
      %v2452 = vsel %vm2431, %v2419, %v1890
      %v2453 = vsel %vm2431, %v2420, %v1892
      %v2454 = vsel %vm2431, %v2421, %v1894
      %v2455 = vsel %vm2431, %v2422, %v1896
      %v2456 = vsel %vm2431, %v2423, %v1898
      %v2457 = vsel %vm2431, %v2424, %v1900
      %v2458 = vsel %vm2431, %v2425, %v1902
      %v2459 = vsel %vm2431, %v2426, %v1904
      %v2460 = vsel %vm2431, %v2427, %v1906
      %v2461 = vsel %vm2431, %v2428, %v1908
      %v2462 = vsel %vm2431, %v2429, %v1910
      %v2463 = vsel %vm2431, %v2430, %v1912
      %vm2464 = vcmask 195584
      %v2465 = vsel %vm2464, %v2432, %v1978
      %v2466 = vsel %vm2464, %v2433, %v1980
      %v2467 = vsel %vm2464, %v2434, %v1982
      %v2468 = vsel %vm2464, %v2435, %v1984
      %v2469 = vsel %vm2464, %v2436, %v1986
      %v2470 = vsel %vm2464, %v2437, %v1988
      %v2471 = vsel %vm2464, %v2438, %v1990
      %v2472 = vsel %vm2464, %v2439, %v1992
      %v2473 = vsel %vm2464, %v2440, %v1994
      %v2474 = vsel %vm2464, %v2441, %v1996
      %v2475 = vsel %vm2464, %v2442, %v1998
      %v2476 = vsel %vm2464, %v2443, %v2000
      %v2477 = vsel %vm2464, %v2444, %v2002
      %v2478 = vsel %vm2464, %v2445, %v2004
      %v2479 = vsel %vm2464, %v2446, %v2006
      %v2480 = vsel %vm2464, %v2447, %v2008
      %v2481 = vsel %vm2464, %v2448, %v2010
      %v2482 = vsel %vm2464, %v2449, %v2012
      %v2483 = vsel %vm2464, %v2450, %v2014
      %v2484 = vsel %vm2464, %v2451, %v2016
      %v2485 = vsel %vm2464, %v2452, %v2018
      %v2486 = vsel %vm2464, %v2453, %v2020
      %v2487 = vsel %vm2464, %v2454, %v2022
      %v2488 = vsel %vm2464, %v2455, %v2024
      %v2489 = vsel %vm2464, %v2456, %v2026
      %v2490 = vsel %vm2464, %v2457, %v2028
      %v2491 = vsel %vm2464, %v2458, %v2030
      %v2492 = vsel %vm2464, %v2459, %v2032
      %v2493 = vsel %vm2464, %v2460, %v2034
      %v2494 = vsel %vm2464, %v2461, %v2036
      %v2495 = vsel %vm2464, %v2462, %v2038
      %v2496 = vsel %vm2464, %v2463, %v2040
      %vm2497 = vcmask 228352
      %v2498 = vsel %vm2497, %v2465, %v2076
      %v2499 = vsel %vm2497, %v2466, %v2078
      %v2500 = vsel %vm2497, %v2467, %v2080
      %v2501 = vsel %vm2497, %v2468, %v2082
      %v2502 = vsel %vm2497, %v2469, %v2084
      %v2503 = vsel %vm2497, %v2470, %v2086
      %v2504 = vsel %vm2497, %v2471, %v2088
      %v2505 = vsel %vm2497, %v2472, %v2090
      %v2506 = vsel %vm2497, %v2473, %v2092
      %v2507 = vsel %vm2497, %v2474, %v2094
      %v2508 = vsel %vm2497, %v2475, %v2096
      %v2509 = vsel %vm2497, %v2476, %v2098
      %v2510 = vsel %vm2497, %v2477, %v2100
      %v2511 = vsel %vm2497, %v2478, %v2102
      %v2512 = vsel %vm2497, %v2479, %v2104
      %v2513 = vsel %vm2497, %v2480, %v2106
      %v2514 = vsel %vm2497, %v2481, %v2108
      %v2515 = vsel %vm2497, %v2482, %v2110
      %v2516 = vsel %vm2497, %v2483, %v2112
      %v2517 = vsel %vm2497, %v2484, %v2114
      %v2518 = vsel %vm2497, %v2485, %v2116
      %v2519 = vsel %vm2497, %v2486, %v2118
      %v2520 = vsel %vm2497, %v2487, %v2120
      %v2521 = vsel %vm2497, %v2488, %v2122
      %v2522 = vsel %vm2497, %v2489, %v2124
      %v2523 = vsel %vm2497, %v2490, %v2126
      %v2524 = vsel %vm2497, %v2491, %v2128
      %v2525 = vsel %vm2497, %v2492, %v2130
      %v2526 = vsel %vm2497, %v2493, %v2132
      %v2527 = vsel %vm2497, %v2494, %v2134
      %v2528 = vsel %vm2497, %v2495, %v2136
      %v2529 = vsel %vm2497, %v2496, %v2138
      %v2530 = vsel %vm899, %v2498, %v2204
      %v2531 = vsel %vm899, %v2499, %v2206
      %v2532 = vsel %vm899, %v2500, %v2208
      %v2533 = vsel %vm899, %v2501, %v2210
      %v2534 = vsel %vm899, %v2502, %v2212
      %v2535 = vsel %vm899, %v2503, %v2214
      %v2536 = vsel %vm899, %v2504, %v2216
      %v2537 = vsel %vm899, %v2505, %v2218
      %v2538 = vsel %vm899, %v2506, %v2220
      %v2539 = vsel %vm899, %v2507, %v2222
      %v2540 = vsel %vm899, %v2508, %v2224
      %v2541 = vsel %vm899, %v2509, %v2226
      %v2542 = vsel %vm899, %v2510, %v2228
      %v2543 = vsel %vm899, %v2511, %v2230
      %v2544 = vsel %vm899, %v2512, %v2232
      %v2545 = vsel %vm899, %v2513, %v2234
      %v2546 = vsel %vm899, %v2514, %v2236
      %v2547 = vsel %vm899, %v2515, %v2238
      %v2548 = vsel %vm899, %v2516, %v2240
      %v2549 = vsel %vm899, %v2517, %v2242
      %v2550 = vsel %vm899, %v2518, %v2244
      %v2551 = vsel %vm899, %v2519, %v2246
      %v2552 = vsel %vm899, %v2520, %v2248
      %v2553 = vsel %vm899, %v2521, %v2250
      %v2554 = vsel %vm899, %v2522, %v2252
      %v2555 = vsel %vm899, %v2523, %v2254
      %v2556 = vsel %vm899, %v2524, %v2256
      %v2557 = vsel %vm899, %v2525, %v2258
      %v2558 = vsel %vm899, %v2526, %v2260
      %v2559 = vsel %vm899, %v2527, %v2262
      %v2560 = vsel %vm899, %v2528, %v2264
      %v2561 = vsel %vm899, %v2529, %v2266
      %v2562 = vpack.c.bf16 %v2531, %v2530
      %v2563 = vpack.c.bf16 %v2533, %v2532
      %v2564 = vpack.c.bf16 %v2535, %v2534
      %v2565 = vpack.c.bf16 %v2537, %v2536
      %v2566 = vpack.c.bf16 %v2539, %v2538
      %v2567 = vpack.c.bf16 %v2541, %v2540
      %v2568 = vpack.c.bf16 %v2543, %v2542
      %v2569 = vpack.c.bf16 %v2545, %v2544
      %v2570 = vpack.c.bf16 %v2547, %v2546
      %v2571 = vpack.c.bf16 %v2549, %v2548
      %v2572 = vpack.c.bf16 %v2551, %v2550
      %v2573 = vpack.c.bf16 %v2553, %v2552
      %v2574 = vpack.c.bf16 %v2555, %v2554
      %v2575 = vpack.c.bf16 %v2557, %v2556
      %v2576 = vpack.c.bf16 %v2559, %v2558
      %v2577 = vpack.c.bf16 %v2561, %v2560
      %v2578 = vld [vmem:[%s4] sm:$0xf]
      %v2579 = vld [vmem:[%s4 + $0x4] sm:$0xf]
      %v2580 = vld [vmem:[%s4 + $0x8] sm:$0xf]
      %v2581 = vld [vmem:[%s4 + $0xc] sm:$0xf]
      %v2582 = vld [vmem:[%s4 + $0x10] sm:$0x3]
      %v2583 = vlaneseq
      %v2584 = vshrl.u32 %v2583, 7
      %v2585 = vsub.s32 0, %v2584
      %v2586 = vrot.slane %v906, %v2585
      %v2592 = vunpack.c.l.b16 %v2578
      %v2593 = vunpack.c.l.b16 %v2579
      %v2594 = vunpack.c.l.b16 %v2580
      %v2595 = vunpack.c.l.b16 %v2581
      %v2596 = vunpack.c.l.b16 %v2582
      %v2597 = vpack.c.b16 %v2593, %v2592
      %v2598 = vpack.c.b16 %v2595, %v2594
      %v2599 = vpack.c.b16 %v2596, %v2596
      %vm2602 = vcmask 293888
      %v2604 = vsel %vm2602, %v2562, 0
      %v2607 = vsel %vm2602, %v2563, 0
      %v2610 = vsel %vm2602, %v2564, 0
      %v2613 = vsel %vm2602, %v2565, 0
      %v2616 = vsel %vm2602, %v2566, 0
      %v2619 = vsel %vm2602, %v2567, 0
      %v2622 = vsel %vm2602, %v2568, 0
      %v2625 = vsel %vm2602, %v2569, 0
      %v2628 = vsel %vm2602, %v2570, 0
      %v2631 = vsel %vm2602, %v2571, 0
      %v2634 = vsel %vm2602, %v2572, 0
      %v2637 = vsel %vm2602, %v2573, 0
      %v2640 = vsel %vm2602, %v2574, 0
      %v2643 = vsel %vm2602, %v2575, 0
      %v2646 = vsel %vm2602, %v2576, 0
      %v2649 = vsel %vm2602, %v2577, 0
      %vm2651 = vcmask 1041408
      %v2653 = vsel %vm2651, %v2599, 0
      %2655 = vmatprep.subr.bf16.mxu0 0
      %2656 = vmatpush1.bf16.msra.mxu0 0
      %2657 = vmatprep.subr.bf16.mxu0 0
      %2658 = vmatpush1.bf16.msra.mxu0 0
      %2659 = vmatprep.subr.bf16.mxu0 0
      %2660 = vmatpush1.bf16.msra.mxu0 0
      %2661 = vmatprep.subr.bf16.mxu0 0
      %2662 = vmatpush1.bf16.msra.mxu0 0
      %2663 = vmatprep.subr.bf16.mxu0 0
      %2664 = vmatpush1.bf16.msra.mxu0 0
      %2665 = vmatprep.subr.bf16.mxu0 0
      %2666 = vmatpush1.bf16.msra.mxu0 %v2653
      %2667 = vmatprep.subr.bf16.mxu0 0
      %2668 = vmatpush1.bf16.msra.mxu0 %v2598
      %2669 = vmatprep.subr.bf16.mxu0 0
      %2670 = vmatpush1.bf16.msra.mxu0 %v2597
      %2671 = vmatprep.subr.bf16.mxu0 0
      %2672 = vmatpush2.bf16.msra.mxu0 0
      %2673 = vmatprep.subr.bf16.mxu0 0
      %2674 = vmatpush2.bf16.msra.mxu0 0
      %2675 = vmatprep.subr.bf16.mxu0 0
      %2676 = vmatpush2.bf16.msra.mxu0 0
      %2677 = vmatprep.subr.bf16.mxu0 0
      %2678 = vmatpush2.bf16.msra.mxu0 0
      %2679 = vmatprep.subr.bf16.mxu0 0
      %2680 = vmatpush2.bf16.msra.mxu0 0
      %2681 = vmatprep.subr.bf16.mxu0 0
      %2682 = vmatpush2.bf16.msra.mxu0 0
      %2683 = vmatprep.subr.bf16.mxu0 0
      %2684 = vmatpush2.bf16.msra.mxu0 0
      %2685 = vmatprep.subr.bf16.mxu0 0
      %2686 = vmatpush2.bf16.msra.mxu0 0
      %2687 = vmatprep.mubr.bf16.mxu0 0
      %2688 = vmatmul.mubr.bf16.gmra.mxu0 %v2604
      %v2689 = vpop.f32.mrf.mxu0
      %v2690 = vadd.f32 %v2586, %v2689
      %v2691 = vpop.f32.mrf.mxu0
      %v2692 = vpop.f32.mrf.mxu0
      %v2693 = vadd.f32 %v2586, %v2692
      %v2694 = vpop.f32.mrf.mxu0
      %2695 = vmatprep.mubr.bf16.mxu0 0
      %2696 = vmatmul.mubr.bf16.gmra.mxu0 %v2607
      %v2697 = vpop.f32.mrf.mxu0
      %v2698 = vadd.f32 %v2586, %v2697
      %v2699 = vpop.f32.mrf.mxu0
      %v2700 = vpop.f32.mrf.mxu0
      %v2701 = vadd.f32 %v2586, %v2700
      %v2702 = vpop.f32.mrf.mxu0
      %2703 = vmatprep.mubr.bf16.mxu0 0
      %2704 = vmatmul.mubr.bf16.gmra.mxu0 %v2610
      %v2705 = vpop.f32.mrf.mxu0
      %v2706 = vadd.f32 %v2586, %v2705
      %v2707 = vpop.f32.mrf.mxu0
      %v2708 = vpop.f32.mrf.mxu0
      %v2709 = vadd.f32 %v2586, %v2708
      %v2710 = vpop.f32.mrf.mxu0
      %2711 = vmatprep.mubr.bf16.mxu0 0
      %2712 = vmatmul.mubr.bf16.gmra.mxu0 %v2613
      %v2713 = vpop.f32.mrf.mxu0
      %v2714 = vadd.f32 %v2586, %v2713
      %v2715 = vpop.f32.mrf.mxu0
      %v2716 = vpop.f32.mrf.mxu0
      %v2717 = vadd.f32 %v2586, %v2716
      %v2718 = vpop.f32.mrf.mxu0
      %2719 = vmatprep.mubr.bf16.mxu0 0
      %2720 = vmatmul.mubr.bf16.gmra.mxu0 %v2616
      %v2721 = vpop.f32.mrf.mxu0
      %v2722 = vadd.f32 %v2586, %v2721
      %v2723 = vpop.f32.mrf.mxu0
      %v2724 = vpop.f32.mrf.mxu0
      %v2725 = vadd.f32 %v2586, %v2724
      %v2726 = vpop.f32.mrf.mxu0
      %2727 = vmatprep.mubr.bf16.mxu0 0
      %2728 = vmatmul.mubr.bf16.gmra.mxu0 %v2619
      %v2729 = vpop.f32.mrf.mxu0
      %v2730 = vadd.f32 %v2586, %v2729
      %v2731 = vpop.f32.mrf.mxu0
      %v2732 = vpop.f32.mrf.mxu0
      %v2733 = vadd.f32 %v2586, %v2732
      %v2734 = vpop.f32.mrf.mxu0
      %2735 = vmatprep.mubr.bf16.mxu0 0
      %2736 = vmatmul.mubr.bf16.gmra.mxu0 %v2622
      %v2737 = vpop.f32.mrf.mxu0
      %v2738 = vadd.f32 %v2586, %v2737
      %v2739 = vpop.f32.mrf.mxu0
      %v2740 = vpop.f32.mrf.mxu0
      %v2741 = vadd.f32 %v2586, %v2740
      %v2742 = vpop.f32.mrf.mxu0
      %2743 = vmatprep.mubr.bf16.mxu0 0
      %2744 = vmatmul.mubr.bf16.gmra.mxu0 %v2625
      %v2745 = vpop.f32.mrf.mxu0
      %v2746 = vadd.f32 %v2586, %v2745
      %v2747 = vpop.f32.mrf.mxu0
      %v2748 = vpop.f32.mrf.mxu0
      %v2749 = vadd.f32 %v2586, %v2748
      %v2750 = vpop.f32.mrf.mxu0
      %2751 = vmatprep.mubr.bf16.mxu0 0
      %2752 = vmatmul.mubr.bf16.gmra.mxu0 %v2628
      %v2753 = vpop.f32.mrf.mxu0
      %v2754 = vadd.f32 %v2586, %v2753
      %v2755 = vpop.f32.mrf.mxu0
      %v2756 = vpop.f32.mrf.mxu0
      %v2757 = vadd.f32 %v2586, %v2756
      %v2758 = vpop.f32.mrf.mxu0
      %2759 = vmatprep.mubr.bf16.mxu0 0
      %2760 = vmatmul.mubr.bf16.gmra.mxu0 %v2631
      %v2761 = vpop.f32.mrf.mxu0
      %v2762 = vadd.f32 %v2586, %v2761
      %v2763 = vpop.f32.mrf.mxu0
      %v2764 = vpop.f32.mrf.mxu0
      %v2765 = vadd.f32 %v2586, %v2764
      %v2766 = vpop.f32.mrf.mxu0
      %2767 = vmatprep.mubr.bf16.mxu0 0
      %2768 = vmatmul.mubr.bf16.gmra.mxu0 %v2634
      %v2769 = vpop.f32.mrf.mxu0
      %v2770 = vadd.f32 %v2586, %v2769
      %v2771 = vpop.f32.mrf.mxu0
      %v2772 = vpop.f32.mrf.mxu0
      %v2773 = vadd.f32 %v2586, %v2772
      %v2774 = vpop.f32.mrf.mxu0
      %2775 = vmatprep.mubr.bf16.mxu0 0
      %2776 = vmatmul.mubr.bf16.gmra.mxu0 %v2637
      %v2777 = vpop.f32.mrf.mxu0
      %v2778 = vadd.f32 %v2586, %v2777
      %v2779 = vpop.f32.mrf.mxu0
      %v2780 = vpop.f32.mrf.mxu0
      %v2781 = vadd.f32 %v2586, %v2780
      %v2782 = vpop.f32.mrf.mxu0
      %2783 = vmatprep.mubr.bf16.mxu0 0
      %2784 = vmatmul.mubr.bf16.gmra.mxu0 %v2640
      %v2785 = vpop.f32.mrf.mxu0
      %v2786 = vadd.f32 %v2586, %v2785
      %v2787 = vpop.f32.mrf.mxu0
      %v2788 = vpop.f32.mrf.mxu0
      %v2789 = vadd.f32 %v2586, %v2788
      %v2790 = vpop.f32.mrf.mxu0
      %2791 = vmatprep.mubr.bf16.mxu0 0
      %2792 = vmatmul.mubr.bf16.gmra.mxu0 %v2643
      %v2793 = vpop.f32.mrf.mxu0
      %v2794 = vadd.f32 %v2586, %v2793
      %v2795 = vpop.f32.mrf.mxu0
      %v2796 = vpop.f32.mrf.mxu0
      %v2797 = vadd.f32 %v2586, %v2796
      %v2798 = vpop.f32.mrf.mxu0
      %2799 = vmatprep.mubr.bf16.mxu0 0
      %2800 = vmatmul.mubr.bf16.gmra.mxu0 %v2646
      %v2801 = vpop.f32.mrf.mxu0
      %v2802 = vadd.f32 %v2586, %v2801
      %v2803 = vpop.f32.mrf.mxu0
      %v2804 = vpop.f32.mrf.mxu0
      %v2805 = vadd.f32 %v2586, %v2804
      %v2806 = vpop.f32.mrf.mxu0
      %2807 = vmatprep.mubr.bf16.mxu0 0
      %2808 = vmatmul.mubr.bf16.gmra.mxu0 %v2649
      %v2809 = vpop.f32.mrf.mxu0
      %v2810 = vadd.f32 %v2586, %v2809
      %v2811 = vpop.f32.mrf.mxu0
      %v2812 = vpop.f32.mrf.mxu0
      %v2813 = vadd.f32 %v2586, %v2812
      %v2814 = vpop.f32.mrf.mxu0
      %2815 = vdwg.mxu0
      %v2816 = vxor.u32 %v2690, 2147483648
      %v2817 = vxor.u32 %v2693, 2147483648
      %v2818 = vxor.u32 %v2698, 2147483648
      %v2819 = vxor.u32 %v2701, 2147483648
      %v2820 = vxor.u32 %v2706, 2147483648
      %v2821 = vxor.u32 %v2709, 2147483648
      %v2822 = vxor.u32 %v2714, 2147483648
      %v2823 = vxor.u32 %v2717, 2147483648
      %v2824 = vxor.u32 %v2722, 2147483648
      %v2825 = vxor.u32 %v2725, 2147483648
      %v2826 = vxor.u32 %v2730, 2147483648
      %v2827 = vxor.u32 %v2733, 2147483648
      %v2828 = vxor.u32 %v2738, 2147483648
      %v2829 = vxor.u32 %v2741, 2147483648
      %v2830 = vxor.u32 %v2746, 2147483648
      %v2831 = vxor.u32 %v2749, 2147483648
      %v2832 = vxor.u32 %v2754, 2147483648
      %v2833 = vxor.u32 %v2757, 2147483648
      %v2834 = vxor.u32 %v2762, 2147483648
      %v2835 = vxor.u32 %v2765, 2147483648
      %v2836 = vxor.u32 %v2770, 2147483648
      %v2837 = vxor.u32 %v2773, 2147483648
      %v2838 = vxor.u32 %v2778, 2147483648
      %v2839 = vxor.u32 %v2781, 2147483648
      %v2840 = vxor.u32 %v2786, 2147483648
      %v2841 = vxor.u32 %v2789, 2147483648
      %v2842 = vxor.u32 %v2794, 2147483648
      %v2843 = vxor.u32 %v2797, 2147483648
      %v2844 = vxor.u32 %v2802, 2147483648
      %v2845 = vxor.u32 %v2805, 2147483648
      %v2846 = vxor.u32 %v2810, 2147483648
      %v2847 = vxor.u32 %v2813, 2147483648
      %v2848 = vmul.f32 %v2816, 1.442695
      %v2849 = vpow.pop %v2848
      %v2850 = vmul.f32 %v2817, 1.442695
      %v2851 = vpow.pop %v2850
      %v2852 = vmul.f32 %v2818, 1.442695
      %v2853 = vpow.pop %v2852
      %v2854 = vmul.f32 %v2819, 1.442695
      %v2855 = vpow.pop %v2854
      %v2856 = vmul.f32 %v2820, 1.442695
      %v2857 = vpow.pop %v2856
      %v2858 = vmul.f32 %v2821, 1.442695
      %v2859 = vpow.pop %v2858
      %v2860 = vmul.f32 %v2822, 1.442695
      %v2861 = vpow.pop %v2860
      %v2862 = vmul.f32 %v2823, 1.442695
      %v2863 = vpow.pop %v2862
      %v2864 = vmul.f32 %v2824, 1.442695
      %v2865 = vpow.pop %v2864
      %v2866 = vmul.f32 %v2825, 1.442695
      %v2867 = vpow.pop %v2866
      %v2868 = vmul.f32 %v2826, 1.442695
      %v2869 = vpow.pop %v2868
      %v2870 = vmul.f32 %v2827, 1.442695
      %v2871 = vpow.pop %v2870
      %v2872 = vmul.f32 %v2828, 1.442695
      %v2873 = vpow.pop %v2872
      %v2874 = vmul.f32 %v2829, 1.442695
      %v2875 = vpow.pop %v2874
      %v2876 = vmul.f32 %v2830, 1.442695
      %v2877 = vpow.pop %v2876
      %v2878 = vmul.f32 %v2831, 1.442695
      %v2879 = vpow.pop %v2878
      %v2880 = vmul.f32 %v2832, 1.442695
      %v2881 = vpow.pop %v2880
      %v2882 = vmul.f32 %v2833, 1.442695
      %v2883 = vpow.pop %v2882
      %v2884 = vmul.f32 %v2834, 1.442695
      %v2885 = vpow.pop %v2884
      %v2886 = vmul.f32 %v2835, 1.442695
      %v2887 = vpow.pop %v2886
      %v2888 = vmul.f32 %v2836, 1.442695
      %v2889 = vpow.pop %v2888
      %v2890 = vmul.f32 %v2837, 1.442695
      %v2891 = vpow.pop %v2890
      %v2892 = vmul.f32 %v2838, 1.442695
      %v2893 = vpow.pop %v2892
      %v2894 = vmul.f32 %v2839, 1.442695
      %v2895 = vpow.pop %v2894
      %v2896 = vmul.f32 %v2840, 1.442695
      %v2897 = vpow.pop %v2896
      %v2898 = vmul.f32 %v2841, 1.442695
      %v2899 = vpow.pop %v2898
      %v2900 = vmul.f32 %v2842, 1.442695
      %v2901 = vpow.pop %v2900
      %v2902 = vmul.f32 %v2843, 1.442695
      %v2903 = vpow.pop %v2902
      %v2904 = vmul.f32 %v2844, 1.442695
      %v2905 = vpow.pop %v2904
      %v2906 = vmul.f32 %v2845, 1.442695
      %v2907 = vpow.pop %v2906
      %v2908 = vmul.f32 %v2846, 1.442695
      %v2909 = vpow.pop %v2908
      %v2910 = vmul.f32 %v2847, 1.442695
      %v2911 = vpow.pop %v2910
      %v2912 = vadd.f32 %v2849, 1.0
      %v2913 = vadd.f32 %v2851, 1.0
      %v2914 = vadd.f32 %v2853, 1.0
      %v2915 = vadd.f32 %v2855, 1.0
      %v2916 = vadd.f32 %v2857, 1.0
      %v2917 = vadd.f32 %v2859, 1.0
      %v2918 = vadd.f32 %v2861, 1.0
      %v2919 = vadd.f32 %v2863, 1.0
      %v2920 = vadd.f32 %v2865, 1.0
      %v2921 = vadd.f32 %v2867, 1.0
      %v2922 = vadd.f32 %v2869, 1.0
      %v2923 = vadd.f32 %v2871, 1.0
      %v2924 = vadd.f32 %v2873, 1.0
      %v2925 = vadd.f32 %v2875, 1.0
      %v2926 = vadd.f32 %v2877, 1.0
      %v2927 = vadd.f32 %v2879, 1.0
      %v2928 = vadd.f32 %v2881, 1.0
      %v2929 = vadd.f32 %v2883, 1.0
      %v2930 = vadd.f32 %v2885, 1.0
      %v2931 = vadd.f32 %v2887, 1.0
      %v2932 = vadd.f32 %v2889, 1.0
      %v2933 = vadd.f32 %v2891, 1.0
      %v2934 = vadd.f32 %v2893, 1.0
      %v2935 = vadd.f32 %v2895, 1.0
      %v2936 = vadd.f32 %v2897, 1.0
      %v2937 = vadd.f32 %v2899, 1.0
      %v2938 = vadd.f32 %v2901, 1.0
      %v2939 = vadd.f32 %v2903, 1.0
      %v2940 = vadd.f32 %v2905, 1.0
      %v2941 = vadd.f32 %v2907, 1.0
      %v2942 = vadd.f32 %v2909, 1.0
      %v2943 = vadd.f32 %v2911, 1.0
      %v2944 = vrcp.pop %v2912
      %v2945 = vmul.f32 1.0, %v2944
      %v2946 = vrcp.pop %v2913
      %v2947 = vmul.f32 1.0, %v2946
      %v2948 = vrcp.pop %v2914
      %v2949 = vmul.f32 1.0, %v2948
      %v2950 = vrcp.pop %v2915
      %v2951 = vmul.f32 1.0, %v2950
      %v2952 = vrcp.pop %v2916
      %v2953 = vmul.f32 1.0, %v2952
      %v2954 = vrcp.pop %v2917
      %v2955 = vmul.f32 1.0, %v2954
      %v2956 = vrcp.pop %v2918
      %v2957 = vmul.f32 1.0, %v2956
      %v2958 = vrcp.pop %v2919
      %v2959 = vmul.f32 1.0, %v2958
      %v2960 = vrcp.pop %v2920
      %v2961 = vmul.f32 1.0, %v2960
      %v2962 = vrcp.pop %v2921
      %v2963 = vmul.f32 1.0, %v2962
      %v2964 = vrcp.pop %v2922
      %v2965 = vmul.f32 1.0, %v2964
      %v2966 = vrcp.pop %v2923
      %v2967 = vmul.f32 1.0, %v2966
      %v2968 = vrcp.pop %v2924
      %v2969 = vmul.f32 1.0, %v2968
      %v2970 = vrcp.pop %v2925
      %v2971 = vmul.f32 1.0, %v2970
      %v2972 = vrcp.pop %v2926
      %v2973 = vmul.f32 1.0, %v2972
      %v2974 = vrcp.pop %v2927
      %v2975 = vmul.f32 1.0, %v2974
      %v2976 = vrcp.pop %v2928
      %v2977 = vmul.f32 1.0, %v2976
      %v2978 = vrcp.pop %v2929
      %v2979 = vmul.f32 1.0, %v2978
      %v2980 = vrcp.pop %v2930
      %v2981 = vmul.f32 1.0, %v2980
      %v2982 = vrcp.pop %v2931
      %v2983 = vmul.f32 1.0, %v2982
      %v2984 = vrcp.pop %v2932
      %v2985 = vmul.f32 1.0, %v2984
      %v2986 = vrcp.pop %v2933
      %v2987 = vmul.f32 1.0, %v2986
      %v2988 = vrcp.pop %v2934
      %v2989 = vmul.f32 1.0, %v2988
      %v2990 = vrcp.pop %v2935
      %v2991 = vmul.f32 1.0, %v2990
      %v2992 = vrcp.pop %v2936
      %v2993 = vmul.f32 1.0, %v2992
      %v2994 = vrcp.pop %v2937
      %v2995 = vmul.f32 1.0, %v2994
      %v2996 = vrcp.pop %v2938
      %v2997 = vmul.f32 1.0, %v2996
      %v2998 = vrcp.pop %v2939
      %v2999 = vmul.f32 1.0, %v2998
      %v3000 = vrcp.pop %v2940
      %v3001 = vmul.f32 1.0, %v3000
      %v3002 = vrcp.pop %v2941
      %v3003 = vmul.f32 1.0, %v3002
      %v3004 = vrcp.pop %v2942
      %v3005 = vmul.f32 1.0, %v3004
      %v3006 = vrcp.pop %v2943
      %v3007 = vmul.f32 1.0, %v3006
      %v3008 = vmul.f32 %v2690, %v2945
      %v3009 = vmul.f32 %v2693, %v2947
      %v3010 = vmul.f32 %v2698, %v2949
      %v3011 = vmul.f32 %v2701, %v2951
      %v3012 = vmul.f32 %v2706, %v2953
      %v3013 = vmul.f32 %v2709, %v2955
      %v3014 = vmul.f32 %v2714, %v2957
      %v3015 = vmul.f32 %v2717, %v2959
      %v3016 = vmul.f32 %v2722, %v2961
      %v3017 = vmul.f32 %v2725, %v2963
      %v3018 = vmul.f32 %v2730, %v2965
      %v3019 = vmul.f32 %v2733, %v2967
      %v3020 = vmul.f32 %v2738, %v2969
      %v3021 = vmul.f32 %v2741, %v2971
      %v3022 = vmul.f32 %v2746, %v2973
      %v3023 = vmul.f32 %v2749, %v2975
      %v3024 = vmul.f32 %v2754, %v2977
      %v3025 = vmul.f32 %v2757, %v2979
      %v3026 = vmul.f32 %v2762, %v2981
      %v3027 = vmul.f32 %v2765, %v2983
      %v3028 = vmul.f32 %v2770, %v2985
      %v3029 = vmul.f32 %v2773, %v2987
      %v3030 = vmul.f32 %v2778, %v2989
      %v3031 = vmul.f32 %v2781, %v2991
      %v3032 = vmul.f32 %v2786, %v2993
      %v3033 = vmul.f32 %v2789, %v2995
      %v3034 = vmul.f32 %v2794, %v2997
      %v3035 = vmul.f32 %v2797, %v2999
      %v3036 = vmul.f32 %v2802, %v3001
      %v3037 = vmul.f32 %v2805, %v3003
      %v3038 = vmul.f32 %v2810, %v3005
      %v3039 = vmul.f32 %v2813, %v3007
      %3040 = vst.msk [vmem:[#allocation2 + $0x18] sm:$0xff] %vm899, %v3008
      %3041 = vst.msk [vmem:[#allocation2 + $0x20] sm:$0xff] %vm899, %v3009
      %3042 = vst.msk [vmem:[#allocation2 + $0x28] sm:$0xff] %vm899, %v3010
      %3043 = vst.msk [vmem:[#allocation2 + $0x30] sm:$0xff] %vm899, %v3011
      %3044 = vst.msk [vmem:[#allocation2 + $0x38] sm:$0xff] %vm899, %v3012
      %3045 = vst.msk [vmem:[#allocation2 + $0x40] sm:$0xff] %vm899, %v3013
      %3046 = vst.msk [vmem:[#allocation2 + $0x48] sm:$0xff] %vm899, %v3014
      %3047 = vst.msk [vmem:[#allocation2 + $0x50] sm:$0xff] %vm899, %v3015
      %3048 = vst.msk [vmem:[#allocation2 + $0x58] sm:$0xff] %vm899, %v3016
      %3049 = vst.msk [vmem:[#allocation2 + $0x60] sm:$0xff] %vm899, %v3017
      %3050 = vst.msk [vmem:[#allocation2 + $0x68] sm:$0xff] %vm899, %v3018
      %3051 = vst.msk [vmem:[#allocation2 + $0x70] sm:$0xff] %vm899, %v3019
      %3052 = vst.msk [vmem:[#allocation2 + $0x78] sm:$0xff] %vm899, %v3020
      %3053 = vst.msk [vmem:[#allocation2 + $0x80] sm:$0xff] %vm899, %v3021
      %3054 = vst.msk [vmem:[#allocation2 + $0x88] sm:$0xff] %vm899, %v3022
      %3055 = vst.msk [vmem:[#allocation2 + $0x90] sm:$0xff] %vm899, %v3023
      %3056 = vst.msk [vmem:[#allocation2 + $0x98] sm:$0xff] %vm899, %v3024
      %3057 = vst.msk [vmem:[#allocation2 + $0xa0] sm:$0xff] %vm899, %v3025
      %3058 = vst.msk [vmem:[#allocation2 + $0xa8] sm:$0xff] %vm899, %v3026
      %3059 = vst.msk [vmem:[#allocation2 + $0xb0] sm:$0xff] %vm899, %v3027
      %3060 = vst.msk [vmem:[#allocation2 + $0xb8] sm:$0xff] %vm899, %v3028
      %3061 = vst.msk [vmem:[#allocation2 + $0xc0] sm:$0xff] %vm899, %v3029
      %3062 = vst.msk [vmem:[#allocation2 + $0xc8] sm:$0xff] %vm899, %v3030
      %3063 = vst.msk [vmem:[#allocation2 + $0xd0] sm:$0xff] %vm899, %v3031
      %3064 = vst.msk [vmem:[#allocation2 + $0xd8] sm:$0xff] %vm899, %v3032
      %3065 = vst.msk [vmem:[#allocation2 + $0xe0] sm:$0xff] %vm899, %v3033
      %3066 = vst.msk [vmem:[#allocation2 + $0xe8] sm:$0xff] %vm899, %v3034
      %3067 = vst.msk [vmem:[#allocation2 + $0xf0] sm:$0xff] %vm899, %v3035
      %3068 = vst.msk [vmem:[#allocation2 + $0xf8] sm:$0xff] %vm899, %v3036
      %3069 = vst.msk [vmem:[#allocation2 + $0x100] sm:$0xff] %vm899, %v3037
      %3070 = vst.msk [vmem:[#allocation2 + $0x108] sm:$0xff] %vm899, %v3038
      %3071 = vst.msk [vmem:[#allocation2 + $0x110] sm:$0xff] %vm899, %v3039
      %v3072 = vld [vmem:[#allocation2 + $0x7] sm:$0xff]
      %v3073 = vld [vmem:[#allocation2 + $0xf] sm:$0xff]
      %v3074 = vld [vmem:[#allocation2 + $0x17] sm:$0xff]
      %v3075 = vld [vmem:[#allocation2 + $0x1f] sm:$0xff]
      %v3076 = vld [vmem:[#allocation2 + $0x27] sm:$0xff]
      %v3077 = vld [vmem:[#allocation2 + $0x2f] sm:$0xff]
      %v3078 = vld [vmem:[#allocation2 + $0x37] sm:$0xff]
      %v3079 = vld [vmem:[#allocation2 + $0x3f] sm:$0xff]
      %v3080 = vld [vmem:[#allocation2 + $0x47] sm:$0xff]
      %v3081 = vld [vmem:[#allocation2 + $0x4f] sm:$0xff]
      %v3082 = vld [vmem:[#allocation2 + $0x57] sm:$0xff]
      %v3083 = vld [vmem:[#allocation2 + $0x5f] sm:$0xff]
      %v3084 = vld [vmem:[#allocation2 + $0x67] sm:$0xff]
      %v3085 = vld [vmem:[#allocation2 + $0x6f] sm:$0xff]
      %v3086 = vld [vmem:[#allocation2 + $0x77] sm:$0xff]
      %v3087 = vld [vmem:[#allocation2 + $0x7f] sm:$0xff]
      %v3088 = vld [vmem:[#allocation2 + $0x87] sm:$0xff]
      %v3089 = vld [vmem:[#allocation2 + $0x8f] sm:$0xff]
      %v3090 = vld [vmem:[#allocation2 + $0x97] sm:$0xff]
      %v3091 = vld [vmem:[#allocation2 + $0x9f] sm:$0xff]
      %v3092 = vld [vmem:[#allocation2 + $0xa7] sm:$0xff]
      %v3093 = vld [vmem:[#allocation2 + $0xaf] sm:$0xff]
      %v3094 = vld [vmem:[#allocation2 + $0xb7] sm:$0xff]
      %v3095 = vld [vmem:[#allocation2 + $0xbf] sm:$0xff]
      %v3096 = vld [vmem:[#allocation2 + $0xc7] sm:$0xff]
      %v3097 = vld [vmem:[#allocation2 + $0xcf] sm:$0xff]
      %v3098 = vld [vmem:[#allocation2 + $0xd7] sm:$0xff]
      %v3099 = vld [vmem:[#allocation2 + $0xdf] sm:$0xff]
      %v3100 = vld [vmem:[#allocation2 + $0xe7] sm:$0xff]
      %v3101 = vld [vmem:[#allocation2 + $0xef] sm:$0xff]
      %v3102 = vld [vmem:[#allocation2 + $0xf7] sm:$0xff]
      %v3103 = vld [vmem:[#allocation2 + $0xff] sm:$0xff]
      %v3104 = vsel %vm971, %v3072, 0.0
      %v3105 = vsel %vm972, %v3073, 0.0
      %v3106 = vsel %vm973, %v3074, 0.0
      %v3107 = vsel %vm974, %v3075, 0.0
      %v3108 = vsel %vm975, %v3076, 0.0
      %v3109 = vsel %vm976, %v3077, 0.0
      %v3110 = vsel %vm977, %v3078, 0.0
      %v3111 = vsel %vm978, %v3079, 0.0
      %v3112 = vsel %vm979, %v3080, 0.0
      %v3113 = vsel %vm980, %v3081, 0.0
      %v3114 = vsel %vm981, %v3082, 0.0
      %v3115 = vsel %vm982, %v3083, 0.0
      %v3116 = vsel %vm983, %v3084, 0.0
      %v3117 = vsel %vm984, %v3085, 0.0
      %v3118 = vsel %vm985, %v3086, 0.0
      %v3119 = vsel %vm986, %v3087, 0.0
      %v3120 = vsel %vm987, %v3088, 0.0
      %v3121 = vsel %vm988, %v3089, 0.0
      %v3122 = vsel %vm989, %v3090, 0.0
      %v3123 = vsel %vm990, %v3091, 0.0
      %v3124 = vsel %vm991, %v3092, 0.0
      %v3125 = vsel %vm992, %v3093, 0.0
      %v3126 = vsel %vm993, %v3094, 0.0
      %v3127 = vsel %vm994, %v3095, 0.0
      %v3128 = vsel %vm995, %v3096, 0.0
      %v3129 = vsel %vm996, %v3097, 0.0
      %v3130 = vsel %vm997, %v3098, 0.0
      %v3131 = vsel %vm998, %v3099, 0.0
      %v3132 = vsel %vm999, %v3100, 0.0
      %v3133 = vsel %vm1000, %v3101, 0.0
      %v3134 = vsel %vm1001, %v3102, 0.0
      %v3135 = vsel %vm1002, %v3103, 0.0
      %v3136 = vld [vmem:[#allocation2 + $0x8] sm:$0xff]
      %v3137 = vld [vmem:[#allocation2 + $0x10] sm:$0xff]
      %v3138 = vld [vmem:[#allocation2 + $0x18] sm:$0xff]
      %v3139 = vld [vmem:[#allocation2 + $0x20] sm:$0xff]
      %v3140 = vld [vmem:[#allocation2 + $0x28] sm:$0xff]
      %v3141 = vld [vmem:[#allocation2 + $0x30] sm:$0xff]
      %v3142 = vld [vmem:[#allocation2 + $0x38] sm:$0xff]
      %v3143 = vld [vmem:[#allocation2 + $0x40] sm:$0xff]
      %v3144 = vld [vmem:[#allocation2 + $0x48] sm:$0xff]
      %v3145 = vld [vmem:[#allocation2 + $0x50] sm:$0xff]
      %v3146 = vld [vmem:[#allocation2 + $0x58] sm:$0xff]
      %v3147 = vld [vmem:[#allocation2 + $0x60] sm:$0xff]
      %v3148 = vld [vmem:[#allocation2 + $0x68] sm:$0xff]
      %v3149 = vld [vmem:[#allocation2 + $0x70] sm:$0xff]
      %v3150 = vld [vmem:[#allocation2 + $0x78] sm:$0xff]
      %v3151 = vld [vmem:[#allocation2 + $0x80] sm:$0xff]
      %v3152 = vld [vmem:[#allocation2 + $0x88] sm:$0xff]
      %v3153 = vld [vmem:[#allocation2 + $0x90] sm:$0xff]
      %v3154 = vld [vmem:[#allocation2 + $0x98] sm:$0xff]
      %v3155 = vld [vmem:[#allocation2 + $0xa0] sm:$0xff]
      %v3156 = vld [vmem:[#allocation2 + $0xa8] sm:$0xff]
      %v3157 = vld [vmem:[#allocation2 + $0xb0] sm:$0xff]
      %v3158 = vld [vmem:[#allocation2 + $0xb8] sm:$0xff]
      %v3159 = vld [vmem:[#allocation2 + $0xc0] sm:$0xff]
      %v3160 = vld [vmem:[#allocation2 + $0xc8] sm:$0xff]
      %v3161 = vld [vmem:[#allocation2 + $0xd0] sm:$0xff]
      %v3162 = vld [vmem:[#allocation2 + $0xd8] sm:$0xff]
      %v3163 = vld [vmem:[#allocation2 + $0xe0] sm:$0xff]
      %v3164 = vld [vmem:[#allocation2 + $0xe8] sm:$0xff]
      %v3165 = vld [vmem:[#allocation2 + $0xf0] sm:$0xff]
      %v3166 = vld [vmem:[#allocation2 + $0xf8] sm:$0xff]
      %v3167 = vld [vmem:[#allocation2 + $0x100] sm:$0xff]
      %v3168 = vld [vmem:[#allocation2 + $0x9] sm:$0xff]
      %v3169 = vld [vmem:[#allocation2 + $0x11] sm:$0xff]
      %v3170 = vld [vmem:[#allocation2 + $0x19] sm:$0xff]
      %v3171 = vld [vmem:[#allocation2 + $0x21] sm:$0xff]
      %v3172 = vld [vmem:[#allocation2 + $0x29] sm:$0xff]
      %v3173 = vld [vmem:[#allocation2 + $0x31] sm:$0xff]
      %v3174 = vld [vmem:[#allocation2 + $0x39] sm:$0xff]
      %v3175 = vld [vmem:[#allocation2 + $0x41] sm:$0xff]
      %v3176 = vld [vmem:[#allocation2 + $0x49] sm:$0xff]
      %v3177 = vld [vmem:[#allocation2 + $0x51] sm:$0xff]
      %v3178 = vld [vmem:[#allocation2 + $0x59] sm:$0xff]
      %v3179 = vld [vmem:[#allocation2 + $0x61] sm:$0xff]
      %v3180 = vld [vmem:[#allocation2 + $0x69] sm:$0xff]
      %v3181 = vld [vmem:[#allocation2 + $0x71] sm:$0xff]
      %v3182 = vld [vmem:[#allocation2 + $0x79] sm:$0xff]
      %v3183 = vld [vmem:[#allocation2 + $0x81] sm:$0xff]
      %v3184 = vld [vmem:[#allocation2 + $0x89] sm:$0xff]
      %v3185 = vld [vmem:[#allocation2 + $0x91] sm:$0xff]
      %v3186 = vld [vmem:[#allocation2 + $0x99] sm:$0xff]
      %v3187 = vld [vmem:[#allocation2 + $0xa1] sm:$0xff]
      %v3188 = vld [vmem:[#allocation2 + $0xa9] sm:$0xff]
      %v3189 = vld [vmem:[#allocation2 + $0xb1] sm:$0xff]
      %v3190 = vld [vmem:[#allocation2 + $0xb9] sm:$0xff]
      %v3191 = vld [vmem:[#allocation2 + $0xc1] sm:$0xff]
      %v3192 = vld [vmem:[#allocation2 + $0xc9] sm:$0xff]
      %v3193 = vld [vmem:[#allocation2 + $0xd1] sm:$0xff]
      %v3194 = vld [vmem:[#allocation2 + $0xd9] sm:$0xff]
      %v3195 = vld [vmem:[#allocation2 + $0xe1] sm:$0xff]
      %v3196 = vld [vmem:[#allocation2 + $0xe9] sm:$0xff]
      %v3197 = vld [vmem:[#allocation2 + $0xf1] sm:$0xff]
      %v3198 = vld [vmem:[#allocation2 + $0xf9] sm:$0xff]
      %v3199 = vld [vmem:[#allocation2 + $0x101] sm:$0xff]
      %v3200 = vsel %vm1131, %v3168, 0.0
      %v3201 = vsel %vm1132, %v3169, 0.0
      %v3202 = vsel %vm1133, %v3170, 0.0
      %v3203 = vsel %vm1134, %v3171, 0.0
      %v3204 = vsel %vm1135, %v3172, 0.0
      %v3205 = vsel %vm1136, %v3173, 0.0
      %v3206 = vsel %vm1137, %v3174, 0.0
      %v3207 = vsel %vm1138, %v3175, 0.0
      %v3208 = vsel %vm1139, %v3176, 0.0
      %v3209 = vsel %vm1140, %v3177, 0.0
      %v3210 = vsel %vm1141, %v3178, 0.0
      %v3211 = vsel %vm1142, %v3179, 0.0
      %v3212 = vsel %vm1143, %v3180, 0.0
      %v3213 = vsel %vm1144, %v3181, 0.0
      %v3214 = vsel %vm1145, %v3182, 0.0
      %v3215 = vsel %vm1146, %v3183, 0.0
      %v3216 = vsel %vm1147, %v3184, 0.0
      %v3217 = vsel %vm1148, %v3185, 0.0
      %v3218 = vsel %vm1149, %v3186, 0.0
      %v3219 = vsel %vm1150, %v3187, 0.0
      %v3220 = vsel %vm1151, %v3188, 0.0
      %v3221 = vsel %vm1152, %v3189, 0.0
      %v3222 = vsel %vm1153, %v3190, 0.0
      %v3223 = vsel %vm1154, %v3191, 0.0
      %v3224 = vsel %vm1155, %v3192, 0.0
      %v3225 = vsel %vm1156, %v3193, 0.0
      %v3226 = vsel %vm1157, %v3194, 0.0
      %v3227 = vsel %vm1158, %v3195, 0.0
      %v3228 = vsel %vm1159, %v3196, 0.0
      %v3229 = vsel %vm1160, %v3197, 0.0
      %v3230 = vsel %vm1161, %v3198, 0.0
      %v3231 = vsel %vm1162, %v3199, 0.0
      %v3232 = vld [vmem:[#allocation2 + $0x107] sm:$0xff]
      %v3233 = vld [vmem:[#allocation2 + $0x10f] sm:$0xff]
      %v3234 = vsel %vm971, %v3074, 0.0
      %v3235 = vsel %vm972, %v3075, 0.0
      %v3236 = vsel %vm973, %v3076, 0.0
      %v3237 = vsel %vm974, %v3077, 0.0
      %v3238 = vsel %vm975, %v3078, 0.0
      %v3239 = vsel %vm976, %v3079, 0.0
      %v3240 = vsel %vm977, %v3080, 0.0
      %v3241 = vsel %vm978, %v3081, 0.0
      %v3242 = vsel %vm979, %v3082, 0.0
      %v3243 = vsel %vm980, %v3083, 0.0
      %v3244 = vsel %vm981, %v3084, 0.0
      %v3245 = vsel %vm982, %v3085, 0.0
      %v3246 = vsel %vm983, %v3086, 0.0
      %v3247 = vsel %vm984, %v3087, 0.0
      %v3248 = vsel %vm985, %v3088, 0.0
      %v3249 = vsel %vm986, %v3089, 0.0
      %v3250 = vsel %vm987, %v3090, 0.0
      %v3251 = vsel %vm988, %v3091, 0.0
      %v3252 = vsel %vm989, %v3092, 0.0
      %v3253 = vsel %vm990, %v3093, 0.0
      %v3254 = vsel %vm991, %v3094, 0.0
      %v3255 = vsel %vm992, %v3095, 0.0
      %v3256 = vsel %vm993, %v3096, 0.0
      %v3257 = vsel %vm994, %v3097, 0.0
      %v3258 = vsel %vm995, %v3098, 0.0
      %v3259 = vsel %vm996, %v3099, 0.0
      %v3260 = vsel %vm997, %v3100, 0.0
      %v3261 = vsel %vm998, %v3101, 0.0
      %v3262 = vsel %vm999, %v3102, 0.0
      %v3263 = vsel %vm1000, %v3103, 0.0
      %v3264 = vsel %vm1001, %v3232, 0.0
      %v3265 = vsel %vm1002, %v3233, 0.0
      %v3266 = vld [vmem:[#allocation2 + $0x108] sm:$0xff]
      %v3267 = vld [vmem:[#allocation2 + $0x110] sm:$0xff]
      %v3268 = vld [vmem:[#allocation2 + $0x109] sm:$0xff]
      %v3269 = vld [vmem:[#allocation2 + $0x111] sm:$0xff]
      %v3270 = vsel %vm1131, %v3170, 0.0
      %v3271 = vsel %vm1132, %v3171, 0.0
      %v3272 = vsel %vm1133, %v3172, 0.0
      %v3273 = vsel %vm1134, %v3173, 0.0
      %v3274 = vsel %vm1135, %v3174, 0.0
      %v3275 = vsel %vm1136, %v3175, 0.0
      %v3276 = vsel %vm1137, %v3176, 0.0
      %v3277 = vsel %vm1138, %v3177, 0.0
      %v3278 = vsel %vm1139, %v3178, 0.0
      %v3279 = vsel %vm1140, %v3179, 0.0
      %v3280 = vsel %vm1141, %v3180, 0.0
      %v3281 = vsel %vm1142, %v3181, 0.0
      %v3282 = vsel %vm1143, %v3182, 0.0
      %v3283 = vsel %vm1144, %v3183, 0.0
      %v3284 = vsel %vm1145, %v3184, 0.0
      %v3285 = vsel %vm1146, %v3185, 0.0
      %v3286 = vsel %vm1147, %v3186, 0.0
      %v3287 = vsel %vm1148, %v3187, 0.0
      %v3288 = vsel %vm1149, %v3188, 0.0
      %v3289 = vsel %vm1150, %v3189, 0.0
      %v3290 = vsel %vm1151, %v3190, 0.0
      %v3291 = vsel %vm1152, %v3191, 0.0
      %v3292 = vsel %vm1153, %v3192, 0.0
      %v3293 = vsel %vm1154, %v3193, 0.0
      %v3294 = vsel %vm1155, %v3194, 0.0
      %v3295 = vsel %vm1156, %v3195, 0.0
      %v3296 = vsel %vm1157, %v3196, 0.0
      %v3297 = vsel %vm1158, %v3197, 0.0
      %v3298 = vsel %vm1159, %v3198, 0.0
      %v3299 = vsel %vm1160, %v3199, 0.0
      %v3300 = vsel %vm1161, %v3268, 0.0
      %v3301 = vsel %vm1162, %v3269, 0.0
      %v3302 = vld [vmem:[#allocation2 + $0x117] sm:$0xff]
      %v3303 = vld [vmem:[#allocation2 + $0x11f] sm:$0xff]
      %v3304 = vsel %vm971, %v3076, 0.0
      %v3305 = vsel %vm972, %v3077, 0.0
      %v3306 = vsel %vm973, %v3078, 0.0
      %v3307 = vsel %vm974, %v3079, 0.0
      %v3308 = vsel %vm975, %v3080, 0.0
      %v3309 = vsel %vm976, %v3081, 0.0
      %v3310 = vsel %vm977, %v3082, 0.0
      %v3311 = vsel %vm978, %v3083, 0.0
      %v3312 = vsel %vm979, %v3084, 0.0
      %v3313 = vsel %vm980, %v3085, 0.0
      %v3314 = vsel %vm981, %v3086, 0.0
      %v3315 = vsel %vm982, %v3087, 0.0
      %v3316 = vsel %vm983, %v3088, 0.0
      %v3317 = vsel %vm984, %v3089, 0.0
      %v3318 = vsel %vm985, %v3090, 0.0
      %v3319 = vsel %vm986, %v3091, 0.0
      %v3320 = vsel %vm987, %v3092, 0.0
      %v3321 = vsel %vm988, %v3093, 0.0
      %v3322 = vsel %vm989, %v3094, 0.0
      %v3323 = vsel %vm990, %v3095, 0.0
      %v3324 = vsel %vm991, %v3096, 0.0
      %v3325 = vsel %vm992, %v3097, 0.0
      %v3326 = vsel %vm993, %v3098, 0.0
      %v3327 = vsel %vm994, %v3099, 0.0
      %v3328 = vsel %vm995, %v3100, 0.0
      %v3329 = vsel %vm996, %v3101, 0.0
      %v3330 = vsel %vm997, %v3102, 0.0
      %v3331 = vsel %vm998, %v3103, 0.0
      %v3332 = vsel %vm999, %v3232, 0.0
      %v3333 = vsel %vm1000, %v3233, 0.0
      %v3334 = vsel %vm1001, %v3302, 0.0
      %v3335 = vsel %vm1002, %v3303, 0.0
      %v3336 = vld [vmem:[#allocation2 + $0x118] sm:$0xff]
      %v3337 = vld [vmem:[#allocation2 + $0x120] sm:$0xff]
      %v3338 = vld [vmem:[#allocation2 + $0x119] sm:$0xff]
      %v3339 = vld [vmem:[#allocation2 + $0x121] sm:$0xff]
      %v3340 = vsel %vm1131, %v3172, 0.0
      %v3341 = vsel %vm1132, %v3173, 0.0
      %v3342 = vsel %vm1133, %v3174, 0.0
      %v3343 = vsel %vm1134, %v3175, 0.0
      %v3344 = vsel %vm1135, %v3176, 0.0
      %v3345 = vsel %vm1136, %v3177, 0.0
      %v3346 = vsel %vm1137, %v3178, 0.0
      %v3347 = vsel %vm1138, %v3179, 0.0
      %v3348 = vsel %vm1139, %v3180, 0.0
      %v3349 = vsel %vm1140, %v3181, 0.0
      %v3350 = vsel %vm1141, %v3182, 0.0
      %v3351 = vsel %vm1142, %v3183, 0.0
      %v3352 = vsel %vm1143, %v3184, 0.0
      %v3353 = vsel %vm1144, %v3185, 0.0
      %v3354 = vsel %vm1145, %v3186, 0.0
      %v3355 = vsel %vm1146, %v3187, 0.0
      %v3356 = vsel %vm1147, %v3188, 0.0
      %v3357 = vsel %vm1148, %v3189, 0.0
      %v3358 = vsel %vm1149, %v3190, 0.0
      %v3359 = vsel %vm1150, %v3191, 0.0
      %v3360 = vsel %vm1151, %v3192, 0.0
      %v3361 = vsel %vm1152, %v3193, 0.0
      %v3362 = vsel %vm1153, %v3194, 0.0
      %v3363 = vsel %vm1154, %v3195, 0.0
      %v3364 = vsel %vm1155, %v3196, 0.0
      %v3365 = vsel %vm1156, %v3197, 0.0
      %v3366 = vsel %vm1157, %v3198, 0.0
      %v3367 = vsel %vm1158, %v3199, 0.0
      %v3368 = vsel %vm1159, %v3268, 0.0
      %v3369 = vsel %vm1160, %v3269, 0.0
      %v3370 = vsel %vm1161, %v3338, 0.0
      %v3371 = vsel %vm1162, %v3339, 0.0
      %3404 = vrot.lane.b32.xlu0 %v3136, 32
      %v3405 = vpop.permute.xlu0 %3404
      %3406 = vrot.lane.b32.xlu0 %v3137, 32
      %v3407 = vpop.permute.xlu0 %3406
      %3408 = vrot.lane.b32.xlu0 %v3138, 32
      %v3409 = vpop.permute.xlu0 %3408
      %3410 = vrot.lane.b32.xlu0 %v3139, 32
      %v3411 = vpop.permute.xlu0 %3410
      %3412 = vrot.lane.b32.xlu0 %v3140, 32
      %v3413 = vpop.permute.xlu0 %3412
      %3414 = vrot.lane.b32.xlu0 %v3141, 32
      %v3415 = vpop.permute.xlu0 %3414
      %3416 = vrot.lane.b32.xlu0 %v3142, 32
      %v3417 = vpop.permute.xlu0 %3416
      %3418 = vrot.lane.b32.xlu0 %v3143, 32
      %v3419 = vpop.permute.xlu0 %3418
      %3420 = vrot.lane.b32.xlu0 %v3144, 32
      %v3421 = vpop.permute.xlu0 %3420
      %3422 = vrot.lane.b32.xlu0 %v3145, 32
      %v3423 = vpop.permute.xlu0 %3422
      %3424 = vrot.lane.b32.xlu0 %v3146, 32
      %v3425 = vpop.permute.xlu0 %3424
      %3426 = vrot.lane.b32.xlu0 %v3147, 32
      %v3427 = vpop.permute.xlu0 %3426
      %3428 = vrot.lane.b32.xlu0 %v3148, 32
      %v3429 = vpop.permute.xlu0 %3428
      %3430 = vrot.lane.b32.xlu0 %v3149, 32
      %v3431 = vpop.permute.xlu0 %3430
      %3432 = vrot.lane.b32.xlu0 %v3150, 32
      %v3433 = vpop.permute.xlu0 %3432
      %3434 = vrot.lane.b32.xlu0 %v3151, 32
      %v3435 = vpop.permute.xlu0 %3434
      %3436 = vrot.lane.b32.xlu0 %v3152, 32
      %v3437 = vpop.permute.xlu0 %3436
      %3438 = vrot.lane.b32.xlu0 %v3153, 32
      %v3439 = vpop.permute.xlu0 %3438
      %3440 = vrot.lane.b32.xlu0 %v3154, 32
      %v3441 = vpop.permute.xlu0 %3440
      %3442 = vrot.lane.b32.xlu0 %v3155, 32
      %v3443 = vpop.permute.xlu0 %3442
      %3444 = vrot.lane.b32.xlu0 %v3156, 32
      %v3445 = vpop.permute.xlu0 %3444
      %3446 = vrot.lane.b32.xlu0 %v3157, 32
      %v3447 = vpop.permute.xlu0 %3446
      %3448 = vrot.lane.b32.xlu0 %v3158, 32
      %v3449 = vpop.permute.xlu0 %3448
      %3450 = vrot.lane.b32.xlu0 %v3159, 32
      %v3451 = vpop.permute.xlu0 %3450
      %3452 = vrot.lane.b32.xlu0 %v3160, 32
      %v3453 = vpop.permute.xlu0 %3452
      %3454 = vrot.lane.b32.xlu0 %v3161, 32
      %v3455 = vpop.permute.xlu0 %3454
      %3456 = vrot.lane.b32.xlu0 %v3162, 32
      %v3457 = vpop.permute.xlu0 %3456
      %3458 = vrot.lane.b32.xlu0 %v3163, 32
      %v3459 = vpop.permute.xlu0 %3458
      %3460 = vrot.lane.b32.xlu0 %v3164, 32
      %v3461 = vpop.permute.xlu0 %3460
      %3462 = vrot.lane.b32.xlu0 %v3165, 32
      %v3463 = vpop.permute.xlu0 %3462
      %3464 = vrot.lane.b32.xlu0 %v3166, 32
      %v3465 = vpop.permute.xlu0 %3464
      %3466 = vrot.lane.b32.xlu0 %v3167, 32
      %v3467 = vpop.permute.xlu0 %3466
      %3532 = vrot.lane.b32.xlu0 %v3200, 64
      %v3533 = vpop.permute.xlu0 %3532
      %3534 = vrot.lane.b32.xlu0 %v3201, 64
      %v3535 = vpop.permute.xlu0 %3534
      %3536 = vrot.lane.b32.xlu0 %v3202, 64
      %v3537 = vpop.permute.xlu0 %3536
      %3538 = vrot.lane.b32.xlu0 %v3203, 64
      %v3539 = vpop.permute.xlu0 %3538
      %3540 = vrot.lane.b32.xlu0 %v3204, 64
      %v3541 = vpop.permute.xlu0 %3540
      %3542 = vrot.lane.b32.xlu0 %v3205, 64
      %v3543 = vpop.permute.xlu0 %3542
      %3544 = vrot.lane.b32.xlu0 %v3206, 64
      %v3545 = vpop.permute.xlu0 %3544
      %3546 = vrot.lane.b32.xlu0 %v3207, 64
      %v3547 = vpop.permute.xlu0 %3546
      %3548 = vrot.lane.b32.xlu0 %v3208, 64
      %v3549 = vpop.permute.xlu0 %3548
      %3550 = vrot.lane.b32.xlu0 %v3209, 64
      %v3551 = vpop.permute.xlu0 %3550
      %3552 = vrot.lane.b32.xlu0 %v3210, 64
      %v3553 = vpop.permute.xlu0 %3552
      %3554 = vrot.lane.b32.xlu0 %v3211, 64
      %v3555 = vpop.permute.xlu0 %3554
      %3556 = vrot.lane.b32.xlu0 %v3212, 64
      %v3557 = vpop.permute.xlu0 %3556
      %3558 = vrot.lane.b32.xlu0 %v3213, 64
      %v3559 = vpop.permute.xlu0 %3558
      %3560 = vrot.lane.b32.xlu0 %v3214, 64
      %v3561 = vpop.permute.xlu0 %3560
      %3562 = vrot.lane.b32.xlu0 %v3215, 64
      %v3563 = vpop.permute.xlu0 %3562
      %3564 = vrot.lane.b32.xlu0 %v3216, 64
      %v3565 = vpop.permute.xlu0 %3564
      %3566 = vrot.lane.b32.xlu0 %v3217, 64
      %v3567 = vpop.permute.xlu0 %3566
      %3568 = vrot.lane.b32.xlu0 %v3218, 64
      %v3569 = vpop.permute.xlu0 %3568
      %3570 = vrot.lane.b32.xlu0 %v3219, 64
      %v3571 = vpop.permute.xlu0 %3570
      %3572 = vrot.lane.b32.xlu0 %v3220, 64
      %v3573 = vpop.permute.xlu0 %3572
      %3574 = vrot.lane.b32.xlu0 %v3221, 64
      %v3575 = vpop.permute.xlu0 %3574
      %3576 = vrot.lane.b32.xlu0 %v3222, 64
      %v3577 = vpop.permute.xlu0 %3576
      %3578 = vrot.lane.b32.xlu0 %v3223, 64
      %v3579 = vpop.permute.xlu0 %3578
      %3580 = vrot.lane.b32.xlu0 %v3224, 64
      %v3581 = vpop.permute.xlu0 %3580
      %3582 = vrot.lane.b32.xlu0 %v3225, 64
      %v3583 = vpop.permute.xlu0 %3582
      %3584 = vrot.lane.b32.xlu0 %v3226, 64
      %v3585 = vpop.permute.xlu0 %3584
      %3586 = vrot.lane.b32.xlu0 %v3227, 64
      %v3587 = vpop.permute.xlu0 %3586
      %3588 = vrot.lane.b32.xlu0 %v3228, 64
      %v3589 = vpop.permute.xlu0 %3588
      %3590 = vrot.lane.b32.xlu0 %v3229, 64
      %v3591 = vpop.permute.xlu0 %3590
      %3592 = vrot.lane.b32.xlu0 %v3230, 64
      %v3593 = vpop.permute.xlu0 %3592
      %3594 = vrot.lane.b32.xlu0 %v3231, 64
      %v3595 = vpop.permute.xlu0 %3594
      %3660 = vrot.lane.b32.xlu0 %v3234, 96
      %v3661 = vpop.permute.xlu0 %3660
      %3662 = vrot.lane.b32.xlu0 %v3235, 96
      %v3663 = vpop.permute.xlu0 %3662
      %3664 = vrot.lane.b32.xlu0 %v3236, 96
      %v3665 = vpop.permute.xlu0 %3664
      %3666 = vrot.lane.b32.xlu0 %v3237, 96
      %v3667 = vpop.permute.xlu0 %3666
      %3668 = vrot.lane.b32.xlu0 %v3238, 96
      %v3669 = vpop.permute.xlu0 %3668
      %3670 = vrot.lane.b32.xlu0 %v3239, 96
      %v3671 = vpop.permute.xlu0 %3670
      %3672 = vrot.lane.b32.xlu0 %v3240, 96
      %v3673 = vpop.permute.xlu0 %3672
      %3674 = vrot.lane.b32.xlu0 %v3241, 96
      %v3675 = vpop.permute.xlu0 %3674
      %3676 = vrot.lane.b32.xlu0 %v3242, 96
      %v3677 = vpop.permute.xlu0 %3676
      %3678 = vrot.lane.b32.xlu0 %v3243, 96
      %v3679 = vpop.permute.xlu0 %3678
      %3680 = vrot.lane.b32.xlu0 %v3244, 96
      %v3681 = vpop.permute.xlu0 %3680
      %3682 = vrot.lane.b32.xlu0 %v3245, 96
      %v3683 = vpop.permute.xlu0 %3682
      %3684 = vrot.lane.b32.xlu0 %v3246, 96
      %v3685 = vpop.permute.xlu0 %3684
      %3686 = vrot.lane.b32.xlu0 %v3247, 96
      %v3687 = vpop.permute.xlu0 %3686
      %3688 = vrot.lane.b32.xlu0 %v3248, 96
      %v3689 = vpop.permute.xlu0 %3688
      %3690 = vrot.lane.b32.xlu0 %v3249, 96
      %v3691 = vpop.permute.xlu0 %3690
      %3692 = vrot.lane.b32.xlu0 %v3250, 96
      %v3693 = vpop.permute.xlu0 %3692
      %3694 = vrot.lane.b32.xlu0 %v3251, 96
      %v3695 = vpop.permute.xlu0 %3694
      %3696 = vrot.lane.b32.xlu0 %v3252, 96
      %v3697 = vpop.permute.xlu0 %3696
      %3698 = vrot.lane.b32.xlu0 %v3253, 96
      %v3699 = vpop.permute.xlu0 %3698
      %3700 = vrot.lane.b32.xlu0 %v3254, 96
      %v3701 = vpop.permute.xlu0 %3700
      %3702 = vrot.lane.b32.xlu0 %v3255, 96
      %v3703 = vpop.permute.xlu0 %3702
      %3704 = vrot.lane.b32.xlu0 %v3256, 96
      %v3705 = vpop.permute.xlu0 %3704
      %3706 = vrot.lane.b32.xlu0 %v3257, 96
      %v3707 = vpop.permute.xlu0 %3706
      %3708 = vrot.lane.b32.xlu0 %v3258, 96
      %v3709 = vpop.permute.xlu0 %3708
      %3710 = vrot.lane.b32.xlu0 %v3259, 96
      %v3711 = vpop.permute.xlu0 %3710
      %3712 = vrot.lane.b32.xlu0 %v3260, 96
      %v3713 = vpop.permute.xlu0 %3712
      %3714 = vrot.lane.b32.xlu0 %v3261, 96
      %v3715 = vpop.permute.xlu0 %3714
      %3716 = vrot.lane.b32.xlu0 %v3262, 96
      %v3717 = vpop.permute.xlu0 %3716
      %3718 = vrot.lane.b32.xlu0 %v3263, 96
      %v3719 = vpop.permute.xlu0 %3718
      %3720 = vrot.lane.b32.xlu0 %v3264, 96
      %v3721 = vpop.permute.xlu0 %3720
      %3722 = vrot.lane.b32.xlu0 %v3265, 96
      %v3723 = vpop.permute.xlu0 %3722
      %3788 = vrot.lane.b32.xlu0 %v3270, 32
      %v3789 = vpop.permute.xlu0 %3788
      %3790 = vrot.lane.b32.xlu0 %v3271, 32
      %v3791 = vpop.permute.xlu0 %3790
      %3792 = vrot.lane.b32.xlu0 %v3272, 32
      %v3793 = vpop.permute.xlu0 %3792
      %3794 = vrot.lane.b32.xlu0 %v3273, 32
      %v3795 = vpop.permute.xlu0 %3794
      %3796 = vrot.lane.b32.xlu0 %v3274, 32
      %v3797 = vpop.permute.xlu0 %3796
      %3798 = vrot.lane.b32.xlu0 %v3275, 32
      %v3799 = vpop.permute.xlu0 %3798
      %3800 = vrot.lane.b32.xlu0 %v3276, 32
      %v3801 = vpop.permute.xlu0 %3800
      %3802 = vrot.lane.b32.xlu0 %v3277, 32
      %v3803 = vpop.permute.xlu0 %3802
      %3804 = vrot.lane.b32.xlu0 %v3278, 32
      %v3805 = vpop.permute.xlu0 %3804
      %3806 = vrot.lane.b32.xlu0 %v3279, 32
      %v3807 = vpop.permute.xlu0 %3806
      %3808 = vrot.lane.b32.xlu0 %v3280, 32
      %v3809 = vpop.permute.xlu0 %3808
      %3810 = vrot.lane.b32.xlu0 %v3281, 32
      %v3811 = vpop.permute.xlu0 %3810
      %3812 = vrot.lane.b32.xlu0 %v3282, 32
      %v3813 = vpop.permute.xlu0 %3812
      %3814 = vrot.lane.b32.xlu0 %v3283, 32
      %v3815 = vpop.permute.xlu0 %3814
      %3816 = vrot.lane.b32.xlu0 %v3284, 32
      %v3817 = vpop.permute.xlu0 %3816
      %3818 = vrot.lane.b32.xlu0 %v3285, 32
      %v3819 = vpop.permute.xlu0 %3818
      %3820 = vrot.lane.b32.xlu0 %v3286, 32
      %v3821 = vpop.permute.xlu0 %3820
      %3822 = vrot.lane.b32.xlu0 %v3287, 32
      %v3823 = vpop.permute.xlu0 %3822
      %3824 = vrot.lane.b32.xlu0 %v3288, 32
      %v3825 = vpop.permute.xlu0 %3824
      %3826 = vrot.lane.b32.xlu0 %v3289, 32
      %v3827 = vpop.permute.xlu0 %3826
      %3828 = vrot.lane.b32.xlu0 %v3290, 32
      %v3829 = vpop.permute.xlu0 %3828
      %3830 = vrot.lane.b32.xlu0 %v3291, 32
      %v3831 = vpop.permute.xlu0 %3830
      %3832 = vrot.lane.b32.xlu0 %v3292, 32
      %v3833 = vpop.permute.xlu0 %3832
      %3834 = vrot.lane.b32.xlu0 %v3293, 32
      %v3835 = vpop.permute.xlu0 %3834
      %3836 = vrot.lane.b32.xlu0 %v3294, 32
      %v3837 = vpop.permute.xlu0 %3836
      %3838 = vrot.lane.b32.xlu0 %v3295, 32
      %v3839 = vpop.permute.xlu0 %3838
      %3840 = vrot.lane.b32.xlu0 %v3296, 32
      %v3841 = vpop.permute.xlu0 %3840
      %3842 = vrot.lane.b32.xlu0 %v3297, 32
      %v3843 = vpop.permute.xlu0 %3842
      %3844 = vrot.lane.b32.xlu0 %v3298, 32
      %v3845 = vpop.permute.xlu0 %3844
      %3846 = vrot.lane.b32.xlu0 %v3299, 32
      %v3847 = vpop.permute.xlu0 %3846
      %3848 = vrot.lane.b32.xlu0 %v3300, 32
      %v3849 = vpop.permute.xlu0 %3848
      %3850 = vrot.lane.b32.xlu0 %v3301, 32
      %v3851 = vpop.permute.xlu0 %3850
      %3916 = vrot.lane.b32.xlu0 %v3304, 64
      %v3917 = vpop.permute.xlu0 %3916
      %3918 = vrot.lane.b32.xlu0 %v3305, 64
      %v3919 = vpop.permute.xlu0 %3918
      %3920 = vrot.lane.b32.xlu0 %v3306, 64
      %v3921 = vpop.permute.xlu0 %3920
      %3922 = vrot.lane.b32.xlu0 %v3307, 64
      %v3923 = vpop.permute.xlu0 %3922
      %3924 = vrot.lane.b32.xlu0 %v3308, 64
      %v3925 = vpop.permute.xlu0 %3924
      %3926 = vrot.lane.b32.xlu0 %v3309, 64
      %v3927 = vpop.permute.xlu0 %3926
      %3928 = vrot.lane.b32.xlu0 %v3310, 64
      %v3929 = vpop.permute.xlu0 %3928
      %3930 = vrot.lane.b32.xlu0 %v3311, 64
      %v3931 = vpop.permute.xlu0 %3930
      %3932 = vrot.lane.b32.xlu0 %v3312, 64
      %v3933 = vpop.permute.xlu0 %3932
      %3934 = vrot.lane.b32.xlu0 %v3313, 64
      %v3935 = vpop.permute.xlu0 %3934
      %3936 = vrot.lane.b32.xlu0 %v3314, 64
      %v3937 = vpop.permute.xlu0 %3936
      %3938 = vrot.lane.b32.xlu0 %v3315, 64
      %v3939 = vpop.permute.xlu0 %3938
      %3940 = vrot.lane.b32.xlu0 %v3316, 64
      %v3941 = vpop.permute.xlu0 %3940
      %3942 = vrot.lane.b32.xlu0 %v3317, 64
      %v3943 = vpop.permute.xlu0 %3942
      %3944 = vrot.lane.b32.xlu0 %v3318, 64
      %v3945 = vpop.permute.xlu0 %3944
      %3946 = vrot.lane.b32.xlu0 %v3319, 64
      %v3947 = vpop.permute.xlu0 %3946
      %3948 = vrot.lane.b32.xlu0 %v3320, 64
      %v3949 = vpop.permute.xlu0 %3948
      %3950 = vrot.lane.b32.xlu0 %v3321, 64
      %v3951 = vpop.permute.xlu0 %3950
      %3952 = vrot.lane.b32.xlu0 %v3322, 64
      %v3953 = vpop.permute.xlu0 %3952
      %3954 = vrot.lane.b32.xlu0 %v3323, 64
      %v3955 = vpop.permute.xlu0 %3954
      %3956 = vrot.lane.b32.xlu0 %v3324, 64
      %v3957 = vpop.permute.xlu0 %3956
      %3958 = vrot.lane.b32.xlu0 %v3325, 64
      %v3959 = vpop.permute.xlu0 %3958
      %3960 = vrot.lane.b32.xlu0 %v3326, 64
      %v3961 = vpop.permute.xlu0 %3960
      %3962 = vrot.lane.b32.xlu0 %v3327, 64
      %v3963 = vpop.permute.xlu0 %3962
      %3964 = vrot.lane.b32.xlu0 %v3328, 64
      %v3965 = vpop.permute.xlu0 %3964
      %3966 = vrot.lane.b32.xlu0 %v3329, 64
      %v3967 = vpop.permute.xlu0 %3966
      %3968 = vrot.lane.b32.xlu0 %v3330, 64
      %v3969 = vpop.permute.xlu0 %3968
      %3970 = vrot.lane.b32.xlu0 %v3331, 64
      %v3971 = vpop.permute.xlu0 %3970
      %3972 = vrot.lane.b32.xlu0 %v3332, 64
      %v3973 = vpop.permute.xlu0 %3972
      %3974 = vrot.lane.b32.xlu0 %v3333, 64
      %v3975 = vpop.permute.xlu0 %3974
      %3976 = vrot.lane.b32.xlu0 %v3334, 64
      %v3977 = vpop.permute.xlu0 %3976
      %3978 = vrot.lane.b32.xlu0 %v3335, 64
      %v3979 = vpop.permute.xlu0 %3978
      %4016 = vrot.lane.b32.xlu0 %v3140, 96
      %v4017 = vpop.permute.xlu0 %4016
      %4018 = vrot.lane.b32.xlu0 %v3141, 96
      %v4019 = vpop.permute.xlu0 %4018
      %4020 = vrot.lane.b32.xlu0 %v3142, 96
      %v4021 = vpop.permute.xlu0 %4020
      %4022 = vrot.lane.b32.xlu0 %v3143, 96
      %v4023 = vpop.permute.xlu0 %4022
      %4024 = vrot.lane.b32.xlu0 %v3144, 96
      %v4025 = vpop.permute.xlu0 %4024
      %4026 = vrot.lane.b32.xlu0 %v3145, 96
      %v4027 = vpop.permute.xlu0 %4026
      %4028 = vrot.lane.b32.xlu0 %v3146, 96
      %v4029 = vpop.permute.xlu0 %4028
      %4030 = vrot.lane.b32.xlu0 %v3147, 96
      %v4031 = vpop.permute.xlu0 %4030
      %4032 = vrot.lane.b32.xlu0 %v3148, 96
      %v4033 = vpop.permute.xlu0 %4032
      %4034 = vrot.lane.b32.xlu0 %v3149, 96
      %v4035 = vpop.permute.xlu0 %4034
      %4036 = vrot.lane.b32.xlu0 %v3150, 96
      %v4037 = vpop.permute.xlu0 %4036
      %4038 = vrot.lane.b32.xlu0 %v3151, 96
      %v4039 = vpop.permute.xlu0 %4038
      %4040 = vrot.lane.b32.xlu0 %v3152, 96
      %v4041 = vpop.permute.xlu0 %4040
      %4042 = vrot.lane.b32.xlu0 %v3153, 96
      %v4043 = vpop.permute.xlu0 %4042
      %4044 = vrot.lane.b32.xlu0 %v3154, 96
      %v4045 = vpop.permute.xlu0 %4044
      %4046 = vrot.lane.b32.xlu0 %v3155, 96
      %v4047 = vpop.permute.xlu0 %4046
      %4048 = vrot.lane.b32.xlu0 %v3156, 96
      %v4049 = vpop.permute.xlu0 %4048
      %4050 = vrot.lane.b32.xlu0 %v3157, 96
      %v4051 = vpop.permute.xlu0 %4050
      %4052 = vrot.lane.b32.xlu0 %v3158, 96
      %v4053 = vpop.permute.xlu0 %4052
      %4054 = vrot.lane.b32.xlu0 %v3159, 96
      %v4055 = vpop.permute.xlu0 %4054
      %4056 = vrot.lane.b32.xlu0 %v3160, 96
      %v4057 = vpop.permute.xlu0 %4056
      %4058 = vrot.lane.b32.xlu0 %v3161, 96
      %v4059 = vpop.permute.xlu0 %4058
      %4060 = vrot.lane.b32.xlu0 %v3162, 96
      %v4061 = vpop.permute.xlu0 %4060
      %4062 = vrot.lane.b32.xlu0 %v3163, 96
      %v4063 = vpop.permute.xlu0 %4062
      %4064 = vrot.lane.b32.xlu0 %v3164, 96
      %v4065 = vpop.permute.xlu0 %4064
      %4066 = vrot.lane.b32.xlu0 %v3165, 96
      %v4067 = vpop.permute.xlu0 %4066
      %4068 = vrot.lane.b32.xlu0 %v3166, 96
      %v4069 = vpop.permute.xlu0 %4068
      %4070 = vrot.lane.b32.xlu0 %v3167, 96
      %v4071 = vpop.permute.xlu0 %4070
      %4072 = vrot.lane.b32.xlu0 %v3266, 96
      %v4073 = vpop.permute.xlu0 %4072
      %4074 = vrot.lane.b32.xlu0 %v3267, 96
      %v4075 = vpop.permute.xlu0 %4074
      %4076 = vrot.lane.b32.xlu0 %v3336, 96
      %v4077 = vpop.permute.xlu0 %4076
      %4078 = vrot.lane.b32.xlu0 %v3337, 96
      %v4079 = vpop.permute.xlu0 %4078
      %v4112 = vsel %vm899, %v3104, %v3405
      %v4113 = vsel %vm899, %v3105, %v3407
      %v4114 = vsel %vm899, %v3106, %v3409
      %v4115 = vsel %vm899, %v3107, %v3411
      %v4116 = vsel %vm899, %v3108, %v3413
      %v4117 = vsel %vm899, %v3109, %v3415
      %v4118 = vsel %vm899, %v3110, %v3417
      %v4119 = vsel %vm899, %v3111, %v3419
      %v4120 = vsel %vm899, %v3112, %v3421
      %v4121 = vsel %vm899, %v3113, %v3423
      %v4122 = vsel %vm899, %v3114, %v3425
      %v4123 = vsel %vm899, %v3115, %v3427
      %v4124 = vsel %vm899, %v3116, %v3429
      %v4125 = vsel %vm899, %v3117, %v3431
      %v4126 = vsel %vm899, %v3118, %v3433
      %v4127 = vsel %vm899, %v3119, %v3435
      %v4128 = vsel %vm899, %v3120, %v3437
      %v4129 = vsel %vm899, %v3121, %v3439
      %v4130 = vsel %vm899, %v3122, %v3441
      %v4131 = vsel %vm899, %v3123, %v3443
      %v4132 = vsel %vm899, %v3124, %v3445
      %v4133 = vsel %vm899, %v3125, %v3447
      %v4134 = vsel %vm899, %v3126, %v3449
      %v4135 = vsel %vm899, %v3127, %v3451
      %v4136 = vsel %vm899, %v3128, %v3453
      %v4137 = vsel %vm899, %v3129, %v3455
      %v4138 = vsel %vm899, %v3130, %v3457
      %v4139 = vsel %vm899, %v3131, %v3459
      %v4140 = vsel %vm899, %v3132, %v3461
      %v4141 = vsel %vm899, %v3133, %v3463
      %v4142 = vsel %vm899, %v3134, %v3465
      %v4143 = vsel %vm899, %v3135, %v3467
      %vm4144 = vcmask 523264
      %v4145 = vsel %vm4144, %v4112, %v3533
      %v4146 = vsel %vm4144, %v4113, %v3535
      %v4147 = vsel %vm4144, %v4114, %v3537
      %v4148 = vsel %vm4144, %v4115, %v3539
      %v4149 = vsel %vm4144, %v4116, %v3541
      %v4150 = vsel %vm4144, %v4117, %v3543
      %v4151 = vsel %vm4144, %v4118, %v3545
      %v4152 = vsel %vm4144, %v4119, %v3547
      %v4153 = vsel %vm4144, %v4120, %v3549
      %v4154 = vsel %vm4144, %v4121, %v3551
      %v4155 = vsel %vm4144, %v4122, %v3553
      %v4156 = vsel %vm4144, %v4123, %v3555
      %v4157 = vsel %vm4144, %v4124, %v3557
      %v4158 = vsel %vm4144, %v4125, %v3559
      %v4159 = vsel %vm4144, %v4126, %v3561
      %v4160 = vsel %vm4144, %v4127, %v3563
      %v4161 = vsel %vm4144, %v4128, %v3565
      %v4162 = vsel %vm4144, %v4129, %v3567
      %v4163 = vsel %vm4144, %v4130, %v3569
      %v4164 = vsel %vm4144, %v4131, %v3571
      %v4165 = vsel %vm4144, %v4132, %v3573
      %v4166 = vsel %vm4144, %v4133, %v3575
      %v4167 = vsel %vm4144, %v4134, %v3577
      %v4168 = vsel %vm4144, %v4135, %v3579
      %v4169 = vsel %vm4144, %v4136, %v3581
      %v4170 = vsel %vm4144, %v4137, %v3583
      %v4171 = vsel %vm4144, %v4138, %v3585
      %v4172 = vsel %vm4144, %v4139, %v3587
      %v4173 = vsel %vm4144, %v4140, %v3589
      %v4174 = vsel %vm4144, %v4141, %v3591
      %v4175 = vsel %vm4144, %v4142, %v3593
      %v4176 = vsel %vm4144, %v4143, %v3595
      %vm4177 = vcmask 785408
      %v4178 = vsel %vm4177, %v4145, %v3661
      %v4179 = vsel %vm4177, %v4146, %v3663
      %v4180 = vsel %vm4177, %v4147, %v3665
      %v4181 = vsel %vm4177, %v4148, %v3667
      %v4182 = vsel %vm4177, %v4149, %v3669
      %v4183 = vsel %vm4177, %v4150, %v3671
      %v4184 = vsel %vm4177, %v4151, %v3673
      %v4185 = vsel %vm4177, %v4152, %v3675
      %v4186 = vsel %vm4177, %v4153, %v3677
      %v4187 = vsel %vm4177, %v4154, %v3679
      %v4188 = vsel %vm4177, %v4155, %v3681
      %v4189 = vsel %vm4177, %v4156, %v3683
      %v4190 = vsel %vm4177, %v4157, %v3685
      %v4191 = vsel %vm4177, %v4158, %v3687
      %v4192 = vsel %vm4177, %v4159, %v3689
      %v4193 = vsel %vm4177, %v4160, %v3691
      %v4194 = vsel %vm4177, %v4161, %v3693
      %v4195 = vsel %vm4177, %v4162, %v3695
      %v4196 = vsel %vm4177, %v4163, %v3697
      %v4197 = vsel %vm4177, %v4164, %v3699
      %v4198 = vsel %vm4177, %v4165, %v3701
      %v4199 = vsel %vm4177, %v4166, %v3703
      %v4200 = vsel %vm4177, %v4167, %v3705
      %v4201 = vsel %vm4177, %v4168, %v3707
      %v4202 = vsel %vm4177, %v4169, %v3709
      %v4203 = vsel %vm4177, %v4170, %v3711
      %v4204 = vsel %vm4177, %v4171, %v3713
      %v4205 = vsel %vm4177, %v4172, %v3715
      %v4206 = vsel %vm4177, %v4173, %v3717
      %v4207 = vsel %vm4177, %v4174, %v3719
      %v4208 = vsel %vm4177, %v4175, %v3721
      %v4209 = vsel %vm4177, %v4176, %v3723
      %v4210 = vsel %vm899, %v3138, %v3789
      %v4211 = vsel %vm899, %v3139, %v3791
      %v4212 = vsel %vm899, %v3140, %v3793
      %v4213 = vsel %vm899, %v3141, %v3795
      %v4214 = vsel %vm899, %v3142, %v3797
      %v4215 = vsel %vm899, %v3143, %v3799
      %v4216 = vsel %vm899, %v3144, %v3801
      %v4217 = vsel %vm899, %v3145, %v3803
      %v4218 = vsel %vm899, %v3146, %v3805
      %v4219 = vsel %vm899, %v3147, %v3807
      %v4220 = vsel %vm899, %v3148, %v3809
      %v4221 = vsel %vm899, %v3149, %v3811
      %v4222 = vsel %vm899, %v3150, %v3813
      %v4223 = vsel %vm899, %v3151, %v3815
      %v4224 = vsel %vm899, %v3152, %v3817
      %v4225 = vsel %vm899, %v3153, %v3819
      %v4226 = vsel %vm899, %v3154, %v3821
      %v4227 = vsel %vm899, %v3155, %v3823
      %v4228 = vsel %vm899, %v3156, %v3825
      %v4229 = vsel %vm899, %v3157, %v3827
      %v4230 = vsel %vm899, %v3158, %v3829
      %v4231 = vsel %vm899, %v3159, %v3831
      %v4232 = vsel %vm899, %v3160, %v3833
      %v4233 = vsel %vm899, %v3161, %v3835
      %v4234 = vsel %vm899, %v3162, %v3837
      %v4235 = vsel %vm899, %v3163, %v3839
      %v4236 = vsel %vm899, %v3164, %v3841
      %v4237 = vsel %vm899, %v3165, %v3843
      %v4238 = vsel %vm899, %v3166, %v3845
      %v4239 = vsel %vm899, %v3167, %v3847
      %v4240 = vsel %vm899, %v3266, %v3849
      %v4241 = vsel %vm899, %v3267, %v3851
      %v4242 = vsel %vm4144, %v4210, %v3917
      %v4243 = vsel %vm4144, %v4211, %v3919
      %v4244 = vsel %vm4144, %v4212, %v3921
      %v4245 = vsel %vm4144, %v4213, %v3923
      %v4246 = vsel %vm4144, %v4214, %v3925
      %v4247 = vsel %vm4144, %v4215, %v3927
      %v4248 = vsel %vm4144, %v4216, %v3929
      %v4249 = vsel %vm4144, %v4217, %v3931
      %v4250 = vsel %vm4144, %v4218, %v3933
      %v4251 = vsel %vm4144, %v4219, %v3935
      %v4252 = vsel %vm4144, %v4220, %v3937
      %v4253 = vsel %vm4144, %v4221, %v3939
      %v4254 = vsel %vm4144, %v4222, %v3941
      %v4255 = vsel %vm4144, %v4223, %v3943
      %v4256 = vsel %vm4144, %v4224, %v3945
      %v4257 = vsel %vm4144, %v4225, %v3947
      %v4258 = vsel %vm4144, %v4226, %v3949
      %v4259 = vsel %vm4144, %v4227, %v3951
      %v4260 = vsel %vm4144, %v4228, %v3953
      %v4261 = vsel %vm4144, %v4229, %v3955
      %v4262 = vsel %vm4144, %v4230, %v3957
      %v4263 = vsel %vm4144, %v4231, %v3959
      %v4264 = vsel %vm4144, %v4232, %v3961
      %v4265 = vsel %vm4144, %v4233, %v3963
      %v4266 = vsel %vm4144, %v4234, %v3965
      %v4267 = vsel %vm4144, %v4235, %v3967
      %v4268 = vsel %vm4144, %v4236, %v3969
      %v4269 = vsel %vm4144, %v4237, %v3971
      %v4270 = vsel %vm4144, %v4238, %v3973
      %v4271 = vsel %vm4144, %v4239, %v3975
      %v4272 = vsel %vm4144, %v4240, %v3977
      %v4273 = vsel %vm4144, %v4241, %v3979
      %v4274 = vsel %vm4177, %v4242, %v4017
      %v4275 = vsel %vm4177, %v4243, %v4019
      %v4276 = vsel %vm4177, %v4244, %v4021
      %v4277 = vsel %vm4177, %v4245, %v4023
      %v4278 = vsel %vm4177, %v4246, %v4025
      %v4279 = vsel %vm4177, %v4247, %v4027
      %v4280 = vsel %vm4177, %v4248, %v4029
      %v4281 = vsel %vm4177, %v4249, %v4031
      %v4282 = vsel %vm4177, %v4250, %v4033
      %v4283 = vsel %vm4177, %v4251, %v4035
      %v4284 = vsel %vm4177, %v4252, %v4037
      %v4285 = vsel %vm4177, %v4253, %v4039
      %v4286 = vsel %vm4177, %v4254, %v4041
      %v4287 = vsel %vm4177, %v4255, %v4043
      %v4288 = vsel %vm4177, %v4256, %v4045
      %v4289 = vsel %vm4177, %v4257, %v4047
      %v4290 = vsel %vm4177, %v4258, %v4049
      %v4291 = vsel %vm4177, %v4259, %v4051
      %v4292 = vsel %vm4177, %v4260, %v4053
      %v4293 = vsel %vm4177, %v4261, %v4055
      %v4294 = vsel %vm4177, %v4262, %v4057
      %v4295 = vsel %vm4177, %v4263, %v4059
      %v4296 = vsel %vm4177, %v4264, %v4061
      %v4297 = vsel %vm4177, %v4265, %v4063
      %v4298 = vsel %vm4177, %v4266, %v4065
      %v4299 = vsel %vm4177, %v4267, %v4067
      %v4300 = vsel %vm4177, %v4268, %v4069
      %v4301 = vsel %vm4177, %v4269, %v4071
      %v4302 = vsel %vm4177, %v4270, %v4073
      %v4303 = vsel %vm4177, %v4271, %v4075
      %v4304 = vsel %vm4177, %v4272, %v4077
      %v4305 = vsel %vm4177, %v4273, %v4079
      %v4306 = vpack.c.bf16 %v4179, %v4178
      %v4307 = vpack.c.bf16 %v4275, %v4274
      %v4308 = vpack.c.bf16 %v3341, %v3340
      %v4309 = vpack.c.bf16 %v4181, %v4180
      %v4310 = vpack.c.bf16 %v4277, %v4276
      %v4311 = vpack.c.bf16 %v3343, %v3342
      %v4312 = vpack.c.bf16 %v4183, %v4182
      %v4313 = vpack.c.bf16 %v4279, %v4278
      %v4314 = vpack.c.bf16 %v3345, %v3344
      %v4315 = vpack.c.bf16 %v4185, %v4184
      %v4316 = vpack.c.bf16 %v4281, %v4280
      %v4317 = vpack.c.bf16 %v3347, %v3346
      %v4318 = vpack.c.bf16 %v4187, %v4186
      %v4319 = vpack.c.bf16 %v4283, %v4282
      %v4320 = vpack.c.bf16 %v3349, %v3348
      %v4321 = vpack.c.bf16 %v4189, %v4188
      %v4322 = vpack.c.bf16 %v4285, %v4284
      %v4323 = vpack.c.bf16 %v3351, %v3350
      %v4324 = vpack.c.bf16 %v4191, %v4190
      %v4325 = vpack.c.bf16 %v4287, %v4286
      %v4326 = vpack.c.bf16 %v3353, %v3352
      %v4327 = vpack.c.bf16 %v4193, %v4192
      %v4328 = vpack.c.bf16 %v4289, %v4288
      %v4329 = vpack.c.bf16 %v3355, %v3354
      %v4330 = vpack.c.bf16 %v4195, %v4194
      %v4331 = vpack.c.bf16 %v4291, %v4290
      %v4332 = vpack.c.bf16 %v3357, %v3356
      %v4333 = vpack.c.bf16 %v4197, %v4196
      %v4334 = vpack.c.bf16 %v4293, %v4292
      %v4335 = vpack.c.bf16 %v3359, %v3358
      %v4336 = vpack.c.bf16 %v4199, %v4198
      %v4337 = vpack.c.bf16 %v4295, %v4294
      %v4338 = vpack.c.bf16 %v3361, %v3360
      %v4339 = vpack.c.bf16 %v4201, %v4200
      %v4340 = vpack.c.bf16 %v4297, %v4296
      %v4341 = vpack.c.bf16 %v3363, %v3362
      %v4342 = vpack.c.bf16 %v4203, %v4202
      %v4343 = vpack.c.bf16 %v4299, %v4298
      %v4344 = vpack.c.bf16 %v3365, %v3364
      %v4345 = vpack.c.bf16 %v4205, %v4204
      %v4346 = vpack.c.bf16 %v4301, %v4300
      %v4347 = vpack.c.bf16 %v3367, %v3366
      %v4348 = vpack.c.bf16 %v4207, %v4206
      %v4349 = vpack.c.bf16 %v4303, %v4302
      %v4350 = vpack.c.bf16 %v3369, %v3368
      %v4351 = vpack.c.bf16 %v4209, %v4208
      %v4352 = vpack.c.bf16 %v4305, %v4304
      %v4353 = vpack.c.bf16 %v3371, %v3370
      %v4354 = vld [vmem:[%s5] sm:$0xf]
      %v4355 = vld [vmem:[%s5 + $0x4] sm:$0xf]
      %v4356 = vld [vmem:[%s5 + $0x8] sm:$0xf]
      %v4357 = vld [vmem:[%s5 + $0xc] sm:$0xf]
      %v4358 = vld [vmem:[%s5 + $0x10] sm:$0xf]
      %v4359 = vld [vmem:[%s5 + $0x14] sm:$0xf]
      %v4360 = vld [vmem:[%s5 + $0x18] sm:$0xf]
      %v4361 = vld [vmem:[%s5 + $0x1c] sm:$0xf]
      %v4362 = vld [vmem:[%s5 + $0x20] sm:$0xf]
      %v4363 = vld [vmem:[%s5 + $0x24] sm:$0xf]
      %v4364 = vld [vmem:[%s5 + $0x28] sm:$0xf]
      %v4365 = vld [vmem:[%s5 + $0x2c] sm:$0xf]
      %v4366 = vld [vmem:[%s5 + $0x30] sm:$0xf]
      %v4367 = vld [vmem:[%s5 + $0x34] sm:$0xf]
      %v4368 = vld [vmem:[%s5 + $0x38] sm:$0xf]
      %v4369 = vld [vmem:[%s5 + $0x3c] sm:$0xf]
      %v4370 = vld [vmem:[%s5 + $0x40] sm:$0xf]
      %v4371 = vld [vmem:[%s5 + $0x44] sm:$0xf]
      %v4372 = vld [vmem:[%s5 + $0x48] sm:$0xf]
      %v4373 = vld [vmem:[%s5 + $0x4c] sm:$0xf]
      %v4374 = vld [vmem:[%s5 + $0x50] sm:$0xf]
      %v4375 = vld [vmem:[%s5 + $0x54] sm:$0xf]
      %v4376 = vld [vmem:[%s5 + $0x58] sm:$0xf]
      %v4377 = vld [vmem:[%s5 + $0x5c] sm:$0xf]
      %v4378 = vld [vmem:[%s5 + $0x60] sm:$0xf]
      %v4379 = vld [vmem:[%s5 + $0x64] sm:$0xf]
      %v4380 = vld [vmem:[%s5 + $0x68] sm:$0xf]
      %v4381 = vld [vmem:[%s5 + $0x6c] sm:$0xf]
      %v4382 = vld [vmem:[%s5 + $0x70] sm:$0xf]
      %v4383 = vld [vmem:[%s5 + $0x74] sm:$0xf]
      %v4384 = vld [vmem:[%s5 + $0x78] sm:$0xf]
      %v4385 = vld [vmem:[%s5 + $0x7c] sm:$0xf]
      %v4386 = vld [vmem:[%s5 + $0x80] sm:$0xf]
      %v4387 = vld [vmem:[%s5 + $0x84] sm:$0xf]
      %v4388 = vld [vmem:[%s5 + $0x88] sm:$0xf]
      %v4389 = vld [vmem:[%s5 + $0x8c] sm:$0xf]
      %v4390 = vlaneseq
      %v4391 = vshrl.u32 %v4390, 7
      %v4392 = vsub.s32 1, %v4391
      %v4393 = vrot.slane %v906, %v4392
      %v4430 = vunpack.c.l.b16 %v4354
      %v4431 = vunpack.c.l.b16 %v4355
      %v4432 = vunpack.c.l.b16 %v4356
      %v4433 = vunpack.c.l.b16 %v4357
      %v4434 = vunpack.c.l.b16 %v4358
      %v4435 = vunpack.c.l.b16 %v4359
      %v4436 = vunpack.c.l.b16 %v4360
      %v4437 = vunpack.c.l.b16 %v4361
      %v4438 = vunpack.c.l.b16 %v4362
      %v4439 = vunpack.c.l.b16 %v4363
      %v4440 = vunpack.c.l.b16 %v4364
      %v4441 = vunpack.c.l.b16 %v4365
      %v4442 = vunpack.c.l.b16 %v4366
      %v4443 = vunpack.c.l.b16 %v4367
      %v4444 = vunpack.c.l.b16 %v4368
      %v4445 = vunpack.c.l.b16 %v4369
      %v4446 = vunpack.c.l.b16 %v4370
      %v4447 = vunpack.c.l.b16 %v4371
      %v4448 = vunpack.c.l.b16 %v4372
      %v4449 = vunpack.c.l.b16 %v4373
      %v4450 = vunpack.c.l.b16 %v4374
      %v4451 = vunpack.c.l.b16 %v4375
      %v4452 = vunpack.c.l.b16 %v4376
      %v4453 = vunpack.c.l.b16 %v4377
      %v4454 = vunpack.c.l.b16 %v4378
      %v4455 = vunpack.c.l.b16 %v4379
      %v4456 = vunpack.c.l.b16 %v4380
      %v4457 = vunpack.c.l.b16 %v4381
      %v4458 = vunpack.c.l.b16 %v4382
      %v4459 = vunpack.c.l.b16 %v4383
      %v4460 = vunpack.c.l.b16 %v4384
      %v4461 = vunpack.c.l.b16 %v4385
      %v4462 = vunpack.c.l.b16 %v4386
      %v4463 = vunpack.c.l.b16 %v4387
      %v4464 = vunpack.c.l.b16 %v4388
      %v4465 = vunpack.c.l.b16 %v4389
      %v4466 = vpack.c.b16 %v4431, %v4430
      %v4467 = vpack.c.b16 %v4433, %v4432
      %v4468 = vpack.c.b16 %v4435, %v4434
      %v4469 = vpack.c.b16 %v4437, %v4436
      %v4470 = vpack.c.b16 %v4439, %v4438
      %v4471 = vpack.c.b16 %v4441, %v4440
      %v4472 = vpack.c.b16 %v4443, %v4442
      %v4473 = vpack.c.b16 %v4445, %v4444
      %v4474 = vpack.c.b16 %v4447, %v4446
      %v4475 = vpack.c.b16 %v4449, %v4448
      %v4476 = vpack.c.b16 %v4451, %v4450
      %v4477 = vpack.c.b16 %v4453, %v4452
      %v4478 = vpack.c.b16 %v4455, %v4454
      %v4479 = vpack.c.b16 %v4457, %v4456
      %v4480 = vpack.c.b16 %v4459, %v4458
      %v4481 = vpack.c.b16 %v4461, %v4460
      %v4482 = vpack.c.b16 %v4463, %v4462
      %v4483 = vpack.c.b16 %v4465, %v4464
      %v4503 = vsel %vm899, %v4308, 0
      %v4506 = vsel %vm899, %v4311, 0
      %v4509 = vsel %vm899, %v4314, 0
      %v4512 = vsel %vm899, %v4317, 0
      %v4515 = vsel %vm899, %v4320, 0
      %v4518 = vsel %vm899, %v4323, 0
      %v4521 = vsel %vm899, %v4326, 0
      %v4524 = vsel %vm899, %v4329, 0
      %v4527 = vsel %vm899, %v4332, 0
      %v4530 = vsel %vm899, %v4335, 0
      %v4533 = vsel %vm899, %v4338, 0
      %v4536 = vsel %vm899, %v4341, 0
      %v4539 = vsel %vm899, %v4344, 0
      %v4542 = vsel %vm899, %v4347, 0
      %v4545 = vsel %vm899, %v4350, 0
      %v4548 = vsel %vm899, %v4353, 0
      %4550 = vmatprep.subr.bf16.mxu0 0
      %4551 = vmatpush1.bf16.msra.mxu0 %v4473
      %4552 = vmatprep.subr.bf16.mxu0 0
      %4553 = vmatpush1.bf16.msra.mxu0 %v4472
      %4554 = vmatprep.subr.bf16.mxu0 0
      %4555 = vmatpush1.bf16.msra.mxu0 %v4471
      %4556 = vmatprep.subr.bf16.mxu0 0
      %4557 = vmatpush1.bf16.msra.mxu0 %v4470
      %4558 = vmatprep.subr.bf16.mxu0 0
      %4559 = vmatpush1.bf16.msra.mxu0 %v4469
      %4560 = vmatprep.subr.bf16.mxu0 0
      %4561 = vmatpush1.bf16.msra.mxu0 %v4468
      %4562 = vmatprep.subr.bf16.mxu0 0
      %4563 = vmatpush1.bf16.msra.mxu0 %v4467
      %4564 = vmatprep.subr.bf16.mxu0 0
      %4565 = vmatpush1.bf16.msra.mxu0 %v4466
      %4566 = vmatprep.subr.bf16.mxu0 0
      %4567 = vmatpush2.bf16.msra.mxu0 %v4481
      %4568 = vmatprep.subr.bf16.mxu0 0
      %4569 = vmatpush2.bf16.msra.mxu0 %v4480
      %4570 = vmatprep.subr.bf16.mxu0 0
      %4571 = vmatpush2.bf16.msra.mxu0 %v4479
      %4572 = vmatprep.subr.bf16.mxu0 0
      %4573 = vmatpush2.bf16.msra.mxu0 %v4478
      %4574 = vmatprep.subr.bf16.mxu0 0
      %4575 = vmatpush2.bf16.msra.mxu0 %v4477
      %4576 = vmatprep.subr.bf16.mxu0 0
      %4577 = vmatpush2.bf16.msra.mxu0 %v4476
      %4578 = vmatprep.subr.bf16.mxu0 0
      %4579 = vmatpush2.bf16.msra.mxu0 %v4475
      %4580 = vmatprep.subr.bf16.mxu0 0
      %4581 = vmatpush2.bf16.msra.mxu0 %v4474
      %4582 = vmatprep.mubr.bf16.mxu0 %v4307
      %4583 = vmatmul.mubr.bf16.gmra.mxu0 %v4306
      %v4584 = vpop.f32.mrf.mxu0
      %v4585 = vadd.f32 %v4393, %v4584
      %v4586 = vpop.f32.mrf.mxu0
      %v4587 = vpop.f32.mrf.mxu0
      %v4588 = vadd.f32 %v4393, %v4587
      %v4589 = vpop.f32.mrf.mxu0
      %4590 = vmatprep.mubr.bf16.mxu0 %v4310
      %4591 = vmatmul.mubr.bf16.gmra.mxu0 %v4309
      %v4592 = vpop.f32.mrf.mxu0
      %v4593 = vadd.f32 %v4393, %v4592
      %v4594 = vpop.f32.mrf.mxu0
      %v4595 = vpop.f32.mrf.mxu0
      %v4596 = vadd.f32 %v4393, %v4595
      %v4597 = vpop.f32.mrf.mxu0
      %4598 = vmatprep.mubr.bf16.mxu0 %v4313
      %4599 = vmatmul.mubr.bf16.gmra.mxu0 %v4312
      %v4600 = vpop.f32.mrf.mxu0
      %v4601 = vadd.f32 %v4393, %v4600
      %v4602 = vpop.f32.mrf.mxu0
      %v4603 = vpop.f32.mrf.mxu0
      %v4604 = vadd.f32 %v4393, %v4603
      %v4605 = vpop.f32.mrf.mxu0
      %4606 = vmatprep.mubr.bf16.mxu0 %v4316
      %4607 = vmatmul.mubr.bf16.gmra.mxu0 %v4315
      %v4608 = vpop.f32.mrf.mxu0
      %v4609 = vadd.f32 %v4393, %v4608
      %v4610 = vpop.f32.mrf.mxu0
      %v4611 = vpop.f32.mrf.mxu0
      %v4612 = vadd.f32 %v4393, %v4611
      %v4613 = vpop.f32.mrf.mxu0
      %4614 = vmatprep.mubr.bf16.mxu0 %v4319
      %4615 = vmatmul.mubr.bf16.gmra.mxu0 %v4318
      %v4616 = vpop.f32.mrf.mxu0
      %v4617 = vadd.f32 %v4393, %v4616
      %v4618 = vpop.f32.mrf.mxu0
      %v4619 = vpop.f32.mrf.mxu0
      %v4620 = vadd.f32 %v4393, %v4619
      %v4621 = vpop.f32.mrf.mxu0
      %4622 = vmatprep.mubr.bf16.mxu0 %v4322
      %4623 = vmatmul.mubr.bf16.gmra.mxu0 %v4321
      %v4624 = vpop.f32.mrf.mxu0
      %v4625 = vadd.f32 %v4393, %v4624
      %v4626 = vpop.f32.mrf.mxu0
      %v4627 = vpop.f32.mrf.mxu0
      %v4628 = vadd.f32 %v4393, %v4627
      %v4629 = vpop.f32.mrf.mxu0
      %4630 = vmatprep.mubr.bf16.mxu0 %v4325
      %4631 = vmatmul.mubr.bf16.gmra.mxu0 %v4324
      %v4632 = vpop.f32.mrf.mxu0
      %v4633 = vadd.f32 %v4393, %v4632
      %v4634 = vpop.f32.mrf.mxu0
      %v4635 = vpop.f32.mrf.mxu0
      %v4636 = vadd.f32 %v4393, %v4635
      %v4637 = vpop.f32.mrf.mxu0
      %4638 = vmatprep.mubr.bf16.mxu0 %v4328
      %4639 = vmatmul.mubr.bf16.gmra.mxu0 %v4327
      %v4640 = vpop.f32.mrf.mxu0
      %v4641 = vadd.f32 %v4393, %v4640
      %v4642 = vpop.f32.mrf.mxu0
      %v4643 = vpop.f32.mrf.mxu0
      %v4644 = vadd.f32 %v4393, %v4643
      %v4645 = vpop.f32.mrf.mxu0
      %4646 = vmatprep.mubr.bf16.mxu0 %v4331
      %4647 = vmatmul.mubr.bf16.gmra.mxu0 %v4330
      %v4648 = vpop.f32.mrf.mxu0
      %v4649 = vadd.f32 %v4393, %v4648
      %v4650 = vpop.f32.mrf.mxu0
      %v4651 = vpop.f32.mrf.mxu0
      %v4652 = vadd.f32 %v4393, %v4651
      %v4653 = vpop.f32.mrf.mxu0
      %4654 = vmatprep.mubr.bf16.mxu0 %v4334
      %4655 = vmatmul.mubr.bf16.gmra.mxu0 %v4333
      %v4656 = vpop.f32.mrf.mxu0
      %v4657 = vadd.f32 %v4393, %v4656
      %v4658 = vpop.f32.mrf.mxu0
      %v4659 = vpop.f32.mrf.mxu0
      %v4660 = vadd.f32 %v4393, %v4659
      %v4661 = vpop.f32.mrf.mxu0
      %4662 = vmatprep.mubr.bf16.mxu0 %v4337
      %4663 = vmatmul.mubr.bf16.gmra.mxu0 %v4336
      %v4664 = vpop.f32.mrf.mxu0
      %v4665 = vadd.f32 %v4393, %v4664
      %v4666 = vpop.f32.mrf.mxu0
      %v4667 = vpop.f32.mrf.mxu0
      %v4668 = vadd.f32 %v4393, %v4667
      %v4669 = vpop.f32.mrf.mxu0
      %4670 = vmatprep.mubr.bf16.mxu0 %v4340
      %4671 = vmatmul.mubr.bf16.gmra.mxu0 %v4339
      %v4672 = vpop.f32.mrf.mxu0
      %v4673 = vadd.f32 %v4393, %v4672
      %v4674 = vpop.f32.mrf.mxu0
      %v4675 = vpop.f32.mrf.mxu0
      %v4676 = vadd.f32 %v4393, %v4675
      %v4677 = vpop.f32.mrf.mxu0
      %4678 = vmatprep.mubr.bf16.mxu0 %v4343
      %4679 = vmatmul.mubr.bf16.gmra.mxu0 %v4342
      %v4680 = vpop.f32.mrf.mxu0
      %v4681 = vadd.f32 %v4393, %v4680
      %v4682 = vpop.f32.mrf.mxu0
      %v4683 = vpop.f32.mrf.mxu0
      %v4684 = vadd.f32 %v4393, %v4683
      %v4685 = vpop.f32.mrf.mxu0
      %4686 = vmatprep.mubr.bf16.mxu0 %v4346
      %4687 = vmatmul.mubr.bf16.gmra.mxu0 %v4345
      %v4688 = vpop.f32.mrf.mxu0
      %v4689 = vadd.f32 %v4393, %v4688
      %v4690 = vpop.f32.mrf.mxu0
      %v4691 = vpop.f32.mrf.mxu0
      %v4692 = vadd.f32 %v4393, %v4691
      %v4693 = vpop.f32.mrf.mxu0
      %4694 = vmatprep.mubr.bf16.mxu0 %v4349
      %4695 = vmatmul.mubr.bf16.gmra.mxu0 %v4348
      %v4696 = vpop.f32.mrf.mxu0
      %v4697 = vadd.f32 %v4393, %v4696
      %v4698 = vpop.f32.mrf.mxu0
      %v4699 = vpop.f32.mrf.mxu0
      %v4700 = vadd.f32 %v4393, %v4699
      %v4701 = vpop.f32.mrf.mxu0
      %4702 = vmatprep.mubr.bf16.mxu0 %v4352
      %4703 = vmatmul.mubr.bf16.gmra.mxu0 %v4351
      %v4704 = vpop.f32.mrf.mxu0
      %v4705 = vadd.f32 %v4393, %v4704
      %v4706 = vpop.f32.mrf.mxu0
      %v4707 = vpop.f32.mrf.mxu0
      %v4708 = vadd.f32 %v4393, %v4707
      %v4709 = vpop.f32.mrf.mxu0
      %4710 = vdwg.mxu0
      %4711 = vmatprep.subr.bf16.mxu0 0
      %4712 = vmatpush1.bf16.msra.mxu0 0
      %4713 = vmatprep.subr.bf16.mxu0 0
      %4714 = vmatpush1.bf16.msra.mxu0 0
      %4715 = vmatprep.subr.bf16.mxu0 0
      %4716 = vmatpush1.bf16.msra.mxu0 0
      %4717 = vmatprep.subr.bf16.mxu0 0
      %4718 = vmatpush1.bf16.msra.mxu0 0
      %4719 = vmatprep.subr.bf16.mxu0 0
      %4720 = vmatpush1.bf16.msra.mxu0 0
      %4721 = vmatprep.subr.bf16.mxu0 0
      %4722 = vmatpush1.bf16.msra.mxu0 0
      %4723 = vmatprep.subr.bf16.mxu0 0
      %4724 = vmatpush1.bf16.msra.mxu0 %v4483
      %4725 = vmatprep.subr.bf16.mxu0 0
      %4726 = vmatpush1.bf16.msra.mxu0 %v4482
      %4727 = vmatprep.subr.bf16.mxu0 0
      %4728 = vmatpush2.bf16.msra.mxu0 0
      %4729 = vmatprep.subr.bf16.mxu0 0
      %4730 = vmatpush2.bf16.msra.mxu0 0
      %4731 = vmatprep.subr.bf16.mxu0 0
      %4732 = vmatpush2.bf16.msra.mxu0 0
      %4733 = vmatprep.subr.bf16.mxu0 0
      %4734 = vmatpush2.bf16.msra.mxu0 0
      %4735 = vmatprep.subr.bf16.mxu0 0
      %4736 = vmatpush2.bf16.msra.mxu0 0
      %4737 = vmatprep.subr.bf16.mxu0 0
      %4738 = vmatpush2.bf16.msra.mxu0 0
      %4739 = vmatprep.subr.bf16.mxu0 0
      %4740 = vmatpush2.bf16.msra.mxu0 0
      %4741 = vmatprep.subr.bf16.mxu0 0
      %4742 = vmatpush2.bf16.msra.mxu0 0
      %4743 = vmatprep.mubr.bf16.mxu0 0
      %4744 = vmatmul.mubr.bf16.gmra.mxu0 %v4503
      %v4745 = vpop.f32.mrf.mxu0
      %v4746 = vadd.f32 %v4585, %v4745
      %v4747 = vpop.f32.mrf.mxu0
      %v4748 = vpop.f32.mrf.mxu0
      %v4749 = vadd.f32 %v4588, %v4748
      %v4750 = vpop.f32.mrf.mxu0
      %4751 = vmatprep.mubr.bf16.mxu0 0
      %4752 = vmatmul.mubr.bf16.gmra.mxu0 %v4506
      %v4753 = vpop.f32.mrf.mxu0
      %v4754 = vadd.f32 %v4593, %v4753
      %v4755 = vpop.f32.mrf.mxu0
      %v4756 = vpop.f32.mrf.mxu0
      %v4757 = vadd.f32 %v4596, %v4756
      %v4758 = vpop.f32.mrf.mxu0
      %4759 = vmatprep.mubr.bf16.mxu0 0
      %4760 = vmatmul.mubr.bf16.gmra.mxu0 %v4509
      %v4761 = vpop.f32.mrf.mxu0
      %v4762 = vadd.f32 %v4601, %v4761
      %v4763 = vpop.f32.mrf.mxu0
      %v4764 = vpop.f32.mrf.mxu0
      %v4765 = vadd.f32 %v4604, %v4764
      %v4766 = vpop.f32.mrf.mxu0
      %4767 = vmatprep.mubr.bf16.mxu0 0
      %4768 = vmatmul.mubr.bf16.gmra.mxu0 %v4512
      %v4769 = vpop.f32.mrf.mxu0
      %v4770 = vadd.f32 %v4609, %v4769
      %v4771 = vpop.f32.mrf.mxu0
      %v4772 = vpop.f32.mrf.mxu0
      %v4773 = vadd.f32 %v4612, %v4772
      %v4774 = vpop.f32.mrf.mxu0
      %4775 = vmatprep.mubr.bf16.mxu0 0
      %4776 = vmatmul.mubr.bf16.gmra.mxu0 %v4515
      %v4777 = vpop.f32.mrf.mxu0
      %v4778 = vadd.f32 %v4617, %v4777
      %v4779 = vpop.f32.mrf.mxu0
      %v4780 = vpop.f32.mrf.mxu0
      %v4781 = vadd.f32 %v4620, %v4780
      %v4782 = vpop.f32.mrf.mxu0
      %4783 = vmatprep.mubr.bf16.mxu0 0
      %4784 = vmatmul.mubr.bf16.gmra.mxu0 %v4518
      %v4785 = vpop.f32.mrf.mxu0
      %v4786 = vadd.f32 %v4625, %v4785
      %v4787 = vpop.f32.mrf.mxu0
      %v4788 = vpop.f32.mrf.mxu0
      %v4789 = vadd.f32 %v4628, %v4788
      %v4790 = vpop.f32.mrf.mxu0
      %4791 = vmatprep.mubr.bf16.mxu0 0
      %4792 = vmatmul.mubr.bf16.gmra.mxu0 %v4521
      %v4793 = vpop.f32.mrf.mxu0
      %v4794 = vadd.f32 %v4633, %v4793
      %v4795 = vpop.f32.mrf.mxu0
      %v4796 = vpop.f32.mrf.mxu0
      %v4797 = vadd.f32 %v4636, %v4796
      %v4798 = vpop.f32.mrf.mxu0
      %4799 = vmatprep.mubr.bf16.mxu0 0
      %4800 = vmatmul.mubr.bf16.gmra.mxu0 %v4524
      %v4801 = vpop.f32.mrf.mxu0
      %v4802 = vadd.f32 %v4641, %v4801
      %v4803 = vpop.f32.mrf.mxu0
      %v4804 = vpop.f32.mrf.mxu0
      %v4805 = vadd.f32 %v4644, %v4804
      %v4806 = vpop.f32.mrf.mxu0
      %4807 = vmatprep.mubr.bf16.mxu0 0
      %4808 = vmatmul.mubr.bf16.gmra.mxu0 %v4527
      %v4809 = vpop.f32.mrf.mxu0
      %v4810 = vadd.f32 %v4649, %v4809
      %v4811 = vpop.f32.mrf.mxu0
      %v4812 = vpop.f32.mrf.mxu0
      %v4813 = vadd.f32 %v4652, %v4812
      %v4814 = vpop.f32.mrf.mxu0
      %4815 = vmatprep.mubr.bf16.mxu0 0
      %4816 = vmatmul.mubr.bf16.gmra.mxu0 %v4530
      %v4817 = vpop.f32.mrf.mxu0
      %v4818 = vadd.f32 %v4657, %v4817
      %v4819 = vpop.f32.mrf.mxu0
      %v4820 = vpop.f32.mrf.mxu0
      %v4821 = vadd.f32 %v4660, %v4820
      %v4822 = vpop.f32.mrf.mxu0
      %4823 = vmatprep.mubr.bf16.mxu0 0
      %4824 = vmatmul.mubr.bf16.gmra.mxu0 %v4533
      %v4825 = vpop.f32.mrf.mxu0
      %v4826 = vadd.f32 %v4665, %v4825
      %v4827 = vpop.f32.mrf.mxu0
      %v4828 = vpop.f32.mrf.mxu0
      %v4829 = vadd.f32 %v4668, %v4828
      %v4830 = vpop.f32.mrf.mxu0
      %4831 = vmatprep.mubr.bf16.mxu0 0
      %4832 = vmatmul.mubr.bf16.gmra.mxu0 %v4536
      %v4833 = vpop.f32.mrf.mxu0
      %v4834 = vadd.f32 %v4673, %v4833
      %v4835 = vpop.f32.mrf.mxu0
      %v4836 = vpop.f32.mrf.mxu0
      %v4837 = vadd.f32 %v4676, %v4836
      %v4838 = vpop.f32.mrf.mxu0
      %4839 = vmatprep.mubr.bf16.mxu0 0
      %4840 = vmatmul.mubr.bf16.gmra.mxu0 %v4539
      %v4841 = vpop.f32.mrf.mxu0
      %v4842 = vadd.f32 %v4681, %v4841
      %v4843 = vpop.f32.mrf.mxu0
      %v4844 = vpop.f32.mrf.mxu0
      %v4845 = vadd.f32 %v4684, %v4844
      %v4846 = vpop.f32.mrf.mxu0
      %4847 = vmatprep.mubr.bf16.mxu0 0
      %4848 = vmatmul.mubr.bf16.gmra.mxu0 %v4542
      %v4849 = vpop.f32.mrf.mxu0
      %v4850 = vadd.f32 %v4689, %v4849
      %v4851 = vpop.f32.mrf.mxu0
      %v4852 = vpop.f32.mrf.mxu0
      %v4853 = vadd.f32 %v4692, %v4852
      %v4854 = vpop.f32.mrf.mxu0
      %4855 = vmatprep.mubr.bf16.mxu0 0
      %4856 = vmatmul.mubr.bf16.gmra.mxu0 %v4545
      %v4857 = vpop.f32.mrf.mxu0
      %v4858 = vadd.f32 %v4697, %v4857
      %v4859 = vpop.f32.mrf.mxu0
      %v4860 = vpop.f32.mrf.mxu0
      %v4861 = vadd.f32 %v4700, %v4860
      %v4862 = vpop.f32.mrf.mxu0
      %4863 = vmatprep.mubr.bf16.mxu0 0
      %4864 = vmatmul.mubr.bf16.gmra.mxu0 %v4548
      %v4865 = vpop.f32.mrf.mxu0
      %v4866 = vadd.f32 %v4705, %v4865
      %v4867 = vpop.f32.mrf.mxu0
      %v4868 = vpop.f32.mrf.mxu0
      %v4869 = vadd.f32 %v4708, %v4868
      %v4870 = vpop.f32.mrf.mxu0
      %4871 = vdwg.mxu0
      %v4872 = vxor.u32 %v4746, 2147483648
      %v4873 = vxor.u32 %v4749, 2147483648
      %v4874 = vxor.u32 %v4754, 2147483648
      %v4875 = vxor.u32 %v4757, 2147483648
      %v4876 = vxor.u32 %v4762, 2147483648
      %v4877 = vxor.u32 %v4765, 2147483648
      %v4878 = vxor.u32 %v4770, 2147483648
      %v4879 = vxor.u32 %v4773, 2147483648
      %v4880 = vxor.u32 %v4778, 2147483648
      %v4881 = vxor.u32 %v4781, 2147483648
      %v4882 = vxor.u32 %v4786, 2147483648
      %v4883 = vxor.u32 %v4789, 2147483648
      %v4884 = vxor.u32 %v4794, 2147483648
      %v4885 = vxor.u32 %v4797, 2147483648
      %v4886 = vxor.u32 %v4802, 2147483648
      %v4887 = vxor.u32 %v4805, 2147483648
      %v4888 = vxor.u32 %v4810, 2147483648
      %v4889 = vxor.u32 %v4813, 2147483648
      %v4890 = vxor.u32 %v4818, 2147483648
      %v4891 = vxor.u32 %v4821, 2147483648
      %v4892 = vxor.u32 %v4826, 2147483648
      %v4893 = vxor.u32 %v4829, 2147483648
      %v4894 = vxor.u32 %v4834, 2147483648
      %v4895 = vxor.u32 %v4837, 2147483648
      %v4896 = vxor.u32 %v4842, 2147483648
      %v4897 = vxor.u32 %v4845, 2147483648
      %v4898 = vxor.u32 %v4850, 2147483648
      %v4899 = vxor.u32 %v4853, 2147483648
      %v4900 = vxor.u32 %v4858, 2147483648
      %v4901 = vxor.u32 %v4861, 2147483648
      %v4902 = vxor.u32 %v4866, 2147483648
      %v4903 = vxor.u32 %v4869, 2147483648
      %v4904 = vmul.f32 %v4872, 1.442695
      %v4905 = vpow.pop %v4904
      %v4906 = vmul.f32 %v4873, 1.442695
      %v4907 = vpow.pop %v4906
      %v4908 = vmul.f32 %v4874, 1.442695
      %v4909 = vpow.pop %v4908
      %v4910 = vmul.f32 %v4875, 1.442695
      %v4911 = vpow.pop %v4910
      %v4912 = vmul.f32 %v4876, 1.442695
      %v4913 = vpow.pop %v4912
      %v4914 = vmul.f32 %v4877, 1.442695
      %v4915 = vpow.pop %v4914
      %v4916 = vmul.f32 %v4878, 1.442695
      %v4917 = vpow.pop %v4916
      %v4918 = vmul.f32 %v4879, 1.442695
      %v4919 = vpow.pop %v4918
      %v4920 = vmul.f32 %v4880, 1.442695
      %v4921 = vpow.pop %v4920
      %v4922 = vmul.f32 %v4881, 1.442695
      %v4923 = vpow.pop %v4922
      %v4924 = vmul.f32 %v4882, 1.442695
      %v4925 = vpow.pop %v4924
      %v4926 = vmul.f32 %v4883, 1.442695
      %v4927 = vpow.pop %v4926
      %v4928 = vmul.f32 %v4884, 1.442695
      %v4929 = vpow.pop %v4928
      %v4930 = vmul.f32 %v4885, 1.442695
      %v4931 = vpow.pop %v4930
      %v4932 = vmul.f32 %v4886, 1.442695
      %v4933 = vpow.pop %v4932
      %v4934 = vmul.f32 %v4887, 1.442695
      %v4935 = vpow.pop %v4934
      %v4936 = vmul.f32 %v4888, 1.442695
      %v4937 = vpow.pop %v4936
      %v4938 = vmul.f32 %v4889, 1.442695
      %v4939 = vpow.pop %v4938
      %v4940 = vmul.f32 %v4890, 1.442695
      %v4941 = vpow.pop %v4940
      %v4942 = vmul.f32 %v4891, 1.442695
      %v4943 = vpow.pop %v4942
      %v4944 = vmul.f32 %v4892, 1.442695
      %v4945 = vpow.pop %v4944
      %v4946 = vmul.f32 %v4893, 1.442695
      %v4947 = vpow.pop %v4946
      %v4948 = vmul.f32 %v4894, 1.442695
      %v4949 = vpow.pop %v4948
      %v4950 = vmul.f32 %v4895, 1.442695
      %v4951 = vpow.pop %v4950
      %v4952 = vmul.f32 %v4896, 1.442695
      %v4953 = vpow.pop %v4952
      %v4954 = vmul.f32 %v4897, 1.442695
      %v4955 = vpow.pop %v4954
      %v4956 = vmul.f32 %v4898, 1.442695
      %v4957 = vpow.pop %v4956
      %v4958 = vmul.f32 %v4899, 1.442695
      %v4959 = vpow.pop %v4958
      %v4960 = vmul.f32 %v4900, 1.442695
      %v4961 = vpow.pop %v4960
      %v4962 = vmul.f32 %v4901, 1.442695
      %v4963 = vpow.pop %v4962
      %v4964 = vmul.f32 %v4902, 1.442695
      %v4965 = vpow.pop %v4964
      %v4966 = vmul.f32 %v4903, 1.442695
      %v4967 = vpow.pop %v4966
      %v4968 = vadd.f32 %v4905, 1.0
      %v4969 = vadd.f32 %v4907, 1.0
      %v4970 = vadd.f32 %v4909, 1.0
      %v4971 = vadd.f32 %v4911, 1.0
      %v4972 = vadd.f32 %v4913, 1.0
      %v4973 = vadd.f32 %v4915, 1.0
      %v4974 = vadd.f32 %v4917, 1.0
      %v4975 = vadd.f32 %v4919, 1.0
      %v4976 = vadd.f32 %v4921, 1.0
      %v4977 = vadd.f32 %v4923, 1.0
      %v4978 = vadd.f32 %v4925, 1.0
      %v4979 = vadd.f32 %v4927, 1.0
      %v4980 = vadd.f32 %v4929, 1.0
      %v4981 = vadd.f32 %v4931, 1.0
      %v4982 = vadd.f32 %v4933, 1.0
      %v4983 = vadd.f32 %v4935, 1.0
      %v4984 = vadd.f32 %v4937, 1.0
      %v4985 = vadd.f32 %v4939, 1.0
      %v4986 = vadd.f32 %v4941, 1.0
      %v4987 = vadd.f32 %v4943, 1.0
      %v4988 = vadd.f32 %v4945, 1.0
      %v4989 = vadd.f32 %v4947, 1.0
      %v4990 = vadd.f32 %v4949, 1.0
      %v4991 = vadd.f32 %v4951, 1.0
      %v4992 = vadd.f32 %v4953, 1.0
      %v4993 = vadd.f32 %v4955, 1.0
      %v4994 = vadd.f32 %v4957, 1.0
      %v4995 = vadd.f32 %v4959, 1.0
      %v4996 = vadd.f32 %v4961, 1.0
      %v4997 = vadd.f32 %v4963, 1.0
      %v4998 = vadd.f32 %v4965, 1.0
      %v4999 = vadd.f32 %v4967, 1.0
      %v5000 = vrcp.pop %v4968
      %v5001 = vmul.f32 1.0, %v5000
      %v5002 = vrcp.pop %v4969
      %v5003 = vmul.f32 1.0, %v5002
      %v5004 = vrcp.pop %v4970
      %v5005 = vmul.f32 1.0, %v5004
      %v5006 = vrcp.pop %v4971
      %v5007 = vmul.f32 1.0, %v5006
      %v5008 = vrcp.pop %v4972
      %v5009 = vmul.f32 1.0, %v5008
      %v5010 = vrcp.pop %v4973
      %v5011 = vmul.f32 1.0, %v5010
      %v5012 = vrcp.pop %v4974
      %v5013 = vmul.f32 1.0, %v5012
      %v5014 = vrcp.pop %v4975
      %v5015 = vmul.f32 1.0, %v5014
      %v5016 = vrcp.pop %v4976
      %v5017 = vmul.f32 1.0, %v5016
      %v5018 = vrcp.pop %v4977
      %v5019 = vmul.f32 1.0, %v5018
      %v5020 = vrcp.pop %v4978
      %v5021 = vmul.f32 1.0, %v5020
      %v5022 = vrcp.pop %v4979
      %v5023 = vmul.f32 1.0, %v5022
      %v5024 = vrcp.pop %v4980
      %v5025 = vmul.f32 1.0, %v5024
      %v5026 = vrcp.pop %v4981
      %v5027 = vmul.f32 1.0, %v5026
      %v5028 = vrcp.pop %v4982
      %v5029 = vmul.f32 1.0, %v5028
      %v5030 = vrcp.pop %v4983
      %v5031 = vmul.f32 1.0, %v5030
      %v5032 = vrcp.pop %v4984
      %v5033 = vmul.f32 1.0, %v5032
      %v5034 = vrcp.pop %v4985
      %v5035 = vmul.f32 1.0, %v5034
      %v5036 = vrcp.pop %v4986
      %v5037 = vmul.f32 1.0, %v5036
      %v5038 = vrcp.pop %v4987
      %v5039 = vmul.f32 1.0, %v5038
      %v5040 = vrcp.pop %v4988
      %v5041 = vmul.f32 1.0, %v5040
      %v5042 = vrcp.pop %v4989
      %v5043 = vmul.f32 1.0, %v5042
      %v5044 = vrcp.pop %v4990
      %v5045 = vmul.f32 1.0, %v5044
      %v5046 = vrcp.pop %v4991
      %v5047 = vmul.f32 1.0, %v5046
      %v5048 = vrcp.pop %v4992
      %v5049 = vmul.f32 1.0, %v5048
      %v5050 = vrcp.pop %v4993
      %v5051 = vmul.f32 1.0, %v5050
      %v5052 = vrcp.pop %v4994
      %v5053 = vmul.f32 1.0, %v5052
      %v5054 = vrcp.pop %v4995
      %v5055 = vmul.f32 1.0, %v5054
      %v5056 = vrcp.pop %v4996
      %v5057 = vmul.f32 1.0, %v5056
      %v5058 = vrcp.pop %v4997
      %v5059 = vmul.f32 1.0, %v5058
      %v5060 = vrcp.pop %v4998
      %v5061 = vmul.f32 1.0, %v5060
      %v5062 = vrcp.pop %v4999
      %v5063 = vmul.f32 1.0, %v5062
      %v5064 = vmul.f32 %v4746, %v5001
      %v5065 = vmul.f32 %v4749, %v5003
      %v5066 = vmul.f32 %v4754, %v5005
      %v5067 = vmul.f32 %v4757, %v5007
      %v5068 = vmul.f32 %v4762, %v5009
      %v5069 = vmul.f32 %v4765, %v5011
      %v5070 = vmul.f32 %v4770, %v5013
      %v5071 = vmul.f32 %v4773, %v5015
      %v5072 = vmul.f32 %v4778, %v5017
      %v5073 = vmul.f32 %v4781, %v5019
      %v5074 = vmul.f32 %v4786, %v5021
      %v5075 = vmul.f32 %v4789, %v5023
      %v5076 = vmul.f32 %v4794, %v5025
      %v5077 = vmul.f32 %v4797, %v5027
      %v5078 = vmul.f32 %v4802, %v5029
      %v5079 = vmul.f32 %v4805, %v5031
      %v5080 = vmul.f32 %v4810, %v5033
      %v5081 = vmul.f32 %v4813, %v5035
      %v5082 = vmul.f32 %v4818, %v5037
      %v5083 = vmul.f32 %v4821, %v5039
      %v5084 = vmul.f32 %v4826, %v5041
      %v5085 = vmul.f32 %v4829, %v5043
      %v5086 = vmul.f32 %v4834, %v5045
      %v5087 = vmul.f32 %v4837, %v5047
      %v5088 = vmul.f32 %v4842, %v5049
      %v5089 = vmul.f32 %v4845, %v5051
      %v5090 = vmul.f32 %v4850, %v5053
      %v5091 = vmul.f32 %v4853, %v5055
      %v5092 = vmul.f32 %v4858, %v5057
      %v5093 = vmul.f32 %v4861, %v5059
      %v5094 = vmul.f32 %v4866, %v5061
      %v5095 = vmul.f32 %v4869, %v5063
      %5096 = vst.msk [vmem:[#allocation3] sm:$0xff] %vm899, %v5064
      %5097 = vst.msk [vmem:[#allocation3 + $0x8] sm:$0xff] %vm899, %v5065
      %5098 = vst.msk [vmem:[#allocation3 + $0x10] sm:$0xff] %vm899, %v5066
      %5099 = vst.msk [vmem:[#allocation3 + $0x18] sm:$0xff] %vm899, %v5067
      %5100 = vst.msk [vmem:[#allocation3 + $0x20] sm:$0xff] %vm899, %v5068
      %5101 = vst.msk [vmem:[#allocation3 + $0x28] sm:$0xff] %vm899, %v5069
      %5102 = vst.msk [vmem:[#allocation3 + $0x30] sm:$0xff] %vm899, %v5070
      %5103 = vst.msk [vmem:[#allocation3 + $0x38] sm:$0xff] %vm899, %v5071
      %5104 = vst.msk [vmem:[#allocation3 + $0x40] sm:$0xff] %vm899, %v5072
      %5105 = vst.msk [vmem:[#allocation3 + $0x48] sm:$0xff] %vm899, %v5073
      %5106 = vst.msk [vmem:[#allocation3 + $0x50] sm:$0xff] %vm899, %v5074
      %5107 = vst.msk [vmem:[#allocation3 + $0x58] sm:$0xff] %vm899, %v5075
      %5108 = vst.msk [vmem:[#allocation3 + $0x60] sm:$0xff] %vm899, %v5076
      %5109 = vst.msk [vmem:[#allocation3 + $0x68] sm:$0xff] %vm899, %v5077
      %5110 = vst.msk [vmem:[#allocation3 + $0x70] sm:$0xff] %vm899, %v5078
      %5111 = vst.msk [vmem:[#allocation3 + $0x78] sm:$0xff] %vm899, %v5079
      %5112 = vst.msk [vmem:[#allocation3 + $0x80] sm:$0xff] %vm899, %v5080
      %5113 = vst.msk [vmem:[#allocation3 + $0x88] sm:$0xff] %vm899, %v5081
      %5114 = vst.msk [vmem:[#allocation3 + $0x90] sm:$0xff] %vm899, %v5082
      %5115 = vst.msk [vmem:[#allocation3 + $0x98] sm:$0xff] %vm899, %v5083
      %5116 = vst.msk [vmem:[#allocation3 + $0xa0] sm:$0xff] %vm899, %v5084
      %5117 = vst.msk [vmem:[#allocation3 + $0xa8] sm:$0xff] %vm899, %v5085
      %5118 = vst.msk [vmem:[#allocation3 + $0xb0] sm:$0xff] %vm899, %v5086
      %5119 = vst.msk [vmem:[#allocation3 + $0xb8] sm:$0xff] %vm899, %v5087
      %5120 = vst.msk [vmem:[#allocation3 + $0xc0] sm:$0xff] %vm899, %v5088
      %5121 = vst.msk [vmem:[#allocation3 + $0xc8] sm:$0xff] %vm899, %v5089
      %5122 = vst.msk [vmem:[#allocation3 + $0xd0] sm:$0xff] %vm899, %v5090
      %5123 = vst.msk [vmem:[#allocation3 + $0xd8] sm:$0xff] %vm899, %v5091
      %5124 = vst.msk [vmem:[#allocation3 + $0xe0] sm:$0xff] %vm899, %v5092
      %5125 = vst.msk [vmem:[#allocation3 + $0xe8] sm:$0xff] %vm899, %v5093
      %5126 = vst.msk [vmem:[#allocation3 + $0xf0] sm:$0xff] %vm899, %v5094
      %5127 = vst.msk [vmem:[#allocation3 + $0xf8] sm:$0xff] %vm899, %v5095
      %v5128 = vld [vmem:[%s402 + $0x7] sm:$0xff]
      %v5129 = vld [vmem:[%s402 + $0xf] sm:$0xff]
      %v5130 = vld [vmem:[%s402 + $0x17] sm:$0xff]
      %v5131 = vld [vmem:[%s402 + $0x1f] sm:$0xff]
      %v5132 = vld [vmem:[%s402 + $0x27] sm:$0xff]
      %v5133 = vld [vmem:[%s402 + $0x2f] sm:$0xff]
      %v5134 = vld [vmem:[%s402 + $0x37] sm:$0xff]
      %v5135 = vld [vmem:[%s402 + $0x3f] sm:$0xff]
      %v5136 = vld [vmem:[%s402 + $0x47] sm:$0xff]
      %v5137 = vld [vmem:[%s402 + $0x4f] sm:$0xff]
      %v5138 = vld [vmem:[%s402 + $0x57] sm:$0xff]
      %v5139 = vld [vmem:[%s402 + $0x5f] sm:$0xff]
      %v5140 = vld [vmem:[%s402 + $0x67] sm:$0xff]
      %v5141 = vld [vmem:[%s402 + $0x6f] sm:$0xff]
      %v5142 = vld [vmem:[%s402 + $0x77] sm:$0xff]
      %v5143 = vld [vmem:[%s402 + $0x7f] sm:$0xff]
      %v5144 = vld [vmem:[%s402 + $0x87] sm:$0xff]
      %v5145 = vld [vmem:[%s402 + $0x8f] sm:$0xff]
      %v5146 = vld [vmem:[%s402 + $0x97] sm:$0xff]
      %v5147 = vld [vmem:[%s402 + $0x9f] sm:$0xff]
      %v5148 = vld [vmem:[%s402 + $0xa7] sm:$0xff]
      %v5149 = vld [vmem:[%s402 + $0xaf] sm:$0xff]
      %v5150 = vld [vmem:[%s402 + $0xb7] sm:$0xff]
      %v5151 = vld [vmem:[%s402 + $0xbf] sm:$0xff]
      %v5152 = vld [vmem:[%s402 + $0xc7] sm:$0xff]
      %v5153 = vld [vmem:[%s402 + $0xcf] sm:$0xff]
      %v5154 = vld [vmem:[%s402 + $0xd7] sm:$0xff]
      %v5155 = vld [vmem:[%s402 + $0xdf] sm:$0xff]
      %v5156 = vld [vmem:[%s402 + $0xe7] sm:$0xff]
      %v5157 = vld [vmem:[%s402 + $0xef] sm:$0xff]
      %v5158 = vld [vmem:[%s402 + $0xf7] sm:$0xff]
      %v5159 = vld [vmem:[%s402 + $0xff] sm:$0xff]
      %v5160 = vld [vmem:[%s407 + $0x7] sm:$0xff]
      %v5161 = vld [vmem:[%s407 + $0xf] sm:$0xff]
      %v5162 = vld [vmem:[%s407 + $0x17] sm:$0xff]
      %v5163 = vld [vmem:[%s407 + $0x1f] sm:$0xff]
      %v5164 = vld [vmem:[%s407 + $0x27] sm:$0xff]
      %v5165 = vld [vmem:[%s407 + $0x2f] sm:$0xff]
      %v5166 = vld [vmem:[%s407 + $0x37] sm:$0xff]
      %v5167 = vld [vmem:[%s407 + $0x3f] sm:$0xff]
      %v5168 = vld [vmem:[%s407 + $0x47] sm:$0xff]
      %v5169 = vld [vmem:[%s407 + $0x4f] sm:$0xff]
      %v5170 = vld [vmem:[%s407 + $0x57] sm:$0xff]
      %v5171 = vld [vmem:[%s407 + $0x5f] sm:$0xff]
      %v5172 = vld [vmem:[%s407 + $0x67] sm:$0xff]
      %v5173 = vld [vmem:[%s407 + $0x6f] sm:$0xff]
      %v5174 = vld [vmem:[%s407 + $0x77] sm:$0xff]
      %v5175 = vld [vmem:[%s407 + $0x7f] sm:$0xff]
      %v5176 = vld [vmem:[%s407 + $0x87] sm:$0xff]
      %v5177 = vld [vmem:[%s407 + $0x8f] sm:$0xff]
      %v5178 = vld [vmem:[%s407 + $0x97] sm:$0xff]
      %v5179 = vld [vmem:[%s407 + $0x9f] sm:$0xff]
      %v5180 = vld [vmem:[%s407 + $0xa7] sm:$0xff]
      %v5181 = vld [vmem:[%s407 + $0xaf] sm:$0xff]
      %v5182 = vld [vmem:[%s407 + $0xb7] sm:$0xff]
      %v5183 = vld [vmem:[%s407 + $0xbf] sm:$0xff]
      %v5184 = vld [vmem:[%s407 + $0xc7] sm:$0xff]
      %v5185 = vld [vmem:[%s407 + $0xcf] sm:$0xff]
      %v5186 = vld [vmem:[%s407 + $0xd7] sm:$0xff]
      %v5187 = vld [vmem:[%s407 + $0xdf] sm:$0xff]
      %v5188 = vld [vmem:[%s407 + $0xe7] sm:$0xff]
      %v5189 = vld [vmem:[%s407 + $0xef] sm:$0xff]
      %v5190 = vld [vmem:[%s407 + $0xf7] sm:$0xff]
      %v5191 = vld [vmem:[%s407 + $0xff] sm:$0xff]
      %5224 = vrot.lane.b32.xlu0 %v5160, 4
      %v5225 = vpop.permute.xlu0 %5224
      %5226 = vrot.lane.b32.xlu0 %v5161, 4
      %v5227 = vpop.permute.xlu0 %5226
      %5228 = vrot.lane.b32.xlu0 %v5162, 4
      %v5229 = vpop.permute.xlu0 %5228
      %5230 = vrot.lane.b32.xlu0 %v5163, 4
      %v5231 = vpop.permute.xlu0 %5230
      %5232 = vrot.lane.b32.xlu0 %v5164, 4
      %v5233 = vpop.permute.xlu0 %5232
      %5234 = vrot.lane.b32.xlu0 %v5165, 4
      %v5235 = vpop.permute.xlu0 %5234
      %5236 = vrot.lane.b32.xlu0 %v5166, 4
      %v5237 = vpop.permute.xlu0 %5236
      %5238 = vrot.lane.b32.xlu0 %v5167, 4
      %v5239 = vpop.permute.xlu0 %5238
      %5240 = vrot.lane.b32.xlu0 %v5168, 4
      %v5241 = vpop.permute.xlu0 %5240
      %5242 = vrot.lane.b32.xlu0 %v5169, 4
      %v5243 = vpop.permute.xlu0 %5242
      %5244 = vrot.lane.b32.xlu0 %v5170, 4
      %v5245 = vpop.permute.xlu0 %5244
      %5246 = vrot.lane.b32.xlu0 %v5171, 4
      %v5247 = vpop.permute.xlu0 %5246
      %5248 = vrot.lane.b32.xlu0 %v5172, 4
      %v5249 = vpop.permute.xlu0 %5248
      %5250 = vrot.lane.b32.xlu0 %v5173, 4
      %v5251 = vpop.permute.xlu0 %5250
      %5252 = vrot.lane.b32.xlu0 %v5174, 4
      %v5253 = vpop.permute.xlu0 %5252
      %5254 = vrot.lane.b32.xlu0 %v5175, 4
      %v5255 = vpop.permute.xlu0 %5254
      %5256 = vrot.lane.b32.xlu0 %v5176, 4
      %v5257 = vpop.permute.xlu0 %5256
      %5258 = vrot.lane.b32.xlu0 %v5177, 4
      %v5259 = vpop.permute.xlu0 %5258
      %5260 = vrot.lane.b32.xlu0 %v5178, 4
      %v5261 = vpop.permute.xlu0 %5260
      %5262 = vrot.lane.b32.xlu0 %v5179, 4
      %v5263 = vpop.permute.xlu0 %5262
      %5264 = vrot.lane.b32.xlu0 %v5180, 4
      %v5265 = vpop.permute.xlu0 %5264
      %5266 = vrot.lane.b32.xlu0 %v5181, 4
      %v5267 = vpop.permute.xlu0 %5266
      %5268 = vrot.lane.b32.xlu0 %v5182, 4
      %v5269 = vpop.permute.xlu0 %5268
      %5270 = vrot.lane.b32.xlu0 %v5183, 4
      %v5271 = vpop.permute.xlu0 %5270
      %5272 = vrot.lane.b32.xlu0 %v5184, 4
      %v5273 = vpop.permute.xlu0 %5272
      %5274 = vrot.lane.b32.xlu0 %v5185, 4
      %v5275 = vpop.permute.xlu0 %5274
      %5276 = vrot.lane.b32.xlu0 %v5186, 4
      %v5277 = vpop.permute.xlu0 %5276
      %5278 = vrot.lane.b32.xlu0 %v5187, 4
      %v5279 = vpop.permute.xlu0 %5278
      %5280 = vrot.lane.b32.xlu0 %v5188, 4
      %v5281 = vpop.permute.xlu0 %5280
      %5282 = vrot.lane.b32.xlu0 %v5189, 4
      %v5283 = vpop.permute.xlu0 %5282
      %5284 = vrot.lane.b32.xlu0 %v5190, 4
      %v5285 = vpop.permute.xlu0 %5284
      %5286 = vrot.lane.b32.xlu0 %v5191, 4
      %v5287 = vpop.permute.xlu0 %5286
      %v5320 = vsel %vm2299, %v5128, %v5225
      %v5321 = vsel %vm2299, %v5129, %v5227
      %v5322 = vsel %vm2299, %v5130, %v5229
      %v5323 = vsel %vm2299, %v5131, %v5231
      %v5324 = vsel %vm2299, %v5132, %v5233
      %v5325 = vsel %vm2299, %v5133, %v5235
      %v5326 = vsel %vm2299, %v5134, %v5237
      %v5327 = vsel %vm2299, %v5135, %v5239
      %v5328 = vsel %vm2299, %v5136, %v5241
      %v5329 = vsel %vm2299, %v5137, %v5243
      %v5330 = vsel %vm2299, %v5138, %v5245
      %v5331 = vsel %vm2299, %v5139, %v5247
      %v5332 = vsel %vm2299, %v5140, %v5249
      %v5333 = vsel %vm2299, %v5141, %v5251
      %v5334 = vsel %vm2299, %v5142, %v5253
      %v5335 = vsel %vm2299, %v5143, %v5255
      %v5336 = vsel %vm2299, %v5144, %v5257
      %v5337 = vsel %vm2299, %v5145, %v5259
      %v5338 = vsel %vm2299, %v5146, %v5261
      %v5339 = vsel %vm2299, %v5147, %v5263
      %v5340 = vsel %vm2299, %v5148, %v5265
      %v5341 = vsel %vm2299, %v5149, %v5267
      %v5342 = vsel %vm2299, %v5150, %v5269
      %v5343 = vsel %vm2299, %v5151, %v5271
      %v5344 = vsel %vm2299, %v5152, %v5273
      %v5345 = vsel %vm2299, %v5153, %v5275
      %v5346 = vsel %vm2299, %v5154, %v5277
      %v5347 = vsel %vm2299, %v5155, %v5279
      %v5348 = vsel %vm2299, %v5156, %v5281
      %v5349 = vsel %vm2299, %v5157, %v5283
      %v5350 = vsel %vm2299, %v5158, %v5285
      %v5351 = vsel %vm2299, %v5159, %v5287
      %v5352 = vsel %vm971, %v5320, 0.0
      %v5353 = vsel %vm972, %v5321, 0.0
      %v5354 = vsel %vm973, %v5322, 0.0
      %v5355 = vsel %vm974, %v5323, 0.0
      %v5356 = vsel %vm975, %v5324, 0.0
      %v5357 = vsel %vm976, %v5325, 0.0
      %v5358 = vsel %vm977, %v5326, 0.0
      %v5359 = vsel %vm978, %v5327, 0.0
      %v5360 = vsel %vm979, %v5328, 0.0
      %v5361 = vsel %vm980, %v5329, 0.0
      %v5362 = vsel %vm981, %v5330, 0.0
      %v5363 = vsel %vm982, %v5331, 0.0
      %v5364 = vsel %vm983, %v5332, 0.0
      %v5365 = vsel %vm984, %v5333, 0.0
      %v5366 = vsel %vm985, %v5334, 0.0
      %v5367 = vsel %vm986, %v5335, 0.0
      %v5368 = vsel %vm987, %v5336, 0.0
      %v5369 = vsel %vm988, %v5337, 0.0
      %v5370 = vsel %vm989, %v5338, 0.0
      %v5371 = vsel %vm990, %v5339, 0.0
      %v5372 = vsel %vm991, %v5340, 0.0
      %v5373 = vsel %vm992, %v5341, 0.0
      %v5374 = vsel %vm993, %v5342, 0.0
      %v5375 = vsel %vm994, %v5343, 0.0
      %v5376 = vsel %vm995, %v5344, 0.0
      %v5377 = vsel %vm996, %v5345, 0.0
      %v5378 = vsel %vm997, %v5346, 0.0
      %v5379 = vsel %vm998, %v5347, 0.0
      %v5380 = vsel %vm999, %v5348, 0.0
      %v5381 = vsel %vm1000, %v5349, 0.0
      %v5382 = vsel %vm1001, %v5350, 0.0
      %v5383 = vsel %vm1002, %v5351, 0.0
      %v5384 = vld [vmem:[%s402 + $0x8] sm:$0xff]
      %v5385 = vld [vmem:[%s402 + $0x10] sm:$0xff]
      %v5386 = vld [vmem:[%s402 + $0x18] sm:$0xff]
      %v5387 = vld [vmem:[%s402 + $0x20] sm:$0xff]
      %v5388 = vld [vmem:[%s402 + $0x28] sm:$0xff]
      %v5389 = vld [vmem:[%s402 + $0x30] sm:$0xff]
      %v5390 = vld [vmem:[%s402 + $0x38] sm:$0xff]
      %v5391 = vld [vmem:[%s402 + $0x40] sm:$0xff]
      %v5392 = vld [vmem:[%s402 + $0x48] sm:$0xff]
      %v5393 = vld [vmem:[%s402 + $0x50] sm:$0xff]
      %v5394 = vld [vmem:[%s402 + $0x58] sm:$0xff]
      %v5395 = vld [vmem:[%s402 + $0x60] sm:$0xff]
      %v5396 = vld [vmem:[%s402 + $0x68] sm:$0xff]
      %v5397 = vld [vmem:[%s402 + $0x70] sm:$0xff]
      %v5398 = vld [vmem:[%s402 + $0x78] sm:$0xff]
      %v5399 = vld [vmem:[%s402 + $0x80] sm:$0xff]
      %v5400 = vld [vmem:[%s402 + $0x88] sm:$0xff]
      %v5401 = vld [vmem:[%s402 + $0x90] sm:$0xff]
      %v5402 = vld [vmem:[%s402 + $0x98] sm:$0xff]
      %v5403 = vld [vmem:[%s402 + $0xa0] sm:$0xff]
      %v5404 = vld [vmem:[%s402 + $0xa8] sm:$0xff]
      %v5405 = vld [vmem:[%s402 + $0xb0] sm:$0xff]
      %v5406 = vld [vmem:[%s402 + $0xb8] sm:$0xff]
      %v5407 = vld [vmem:[%s402 + $0xc0] sm:$0xff]
      %v5408 = vld [vmem:[%s402 + $0xc8] sm:$0xff]
      %v5409 = vld [vmem:[%s402 + $0xd0] sm:$0xff]
      %v5410 = vld [vmem:[%s402 + $0xd8] sm:$0xff]
      %v5411 = vld [vmem:[%s402 + $0xe0] sm:$0xff]
      %v5412 = vld [vmem:[%s402 + $0xe8] sm:$0xff]
      %v5413 = vld [vmem:[%s402 + $0xf0] sm:$0xff]
      %v5414 = vld [vmem:[%s402 + $0xf8] sm:$0xff]
      %v5415 = vld [vmem:[%s402 + $0x100] sm:$0xff]
      %v5416 = vld [vmem:[%s407 + $0x8] sm:$0xff]
      %v5417 = vld [vmem:[%s407 + $0x10] sm:$0xff]
      %v5418 = vld [vmem:[%s407 + $0x18] sm:$0xff]
      %v5419 = vld [vmem:[%s407 + $0x20] sm:$0xff]
      %v5420 = vld [vmem:[%s407 + $0x28] sm:$0xff]
      %v5421 = vld [vmem:[%s407 + $0x30] sm:$0xff]
      %v5422 = vld [vmem:[%s407 + $0x38] sm:$0xff]
      %v5423 = vld [vmem:[%s407 + $0x40] sm:$0xff]
      %v5424 = vld [vmem:[%s407 + $0x48] sm:$0xff]
      %v5425 = vld [vmem:[%s407 + $0x50] sm:$0xff]
      %v5426 = vld [vmem:[%s407 + $0x58] sm:$0xff]
      %v5427 = vld [vmem:[%s407 + $0x60] sm:$0xff]
      %v5428 = vld [vmem:[%s407 + $0x68] sm:$0xff]
      %v5429 = vld [vmem:[%s407 + $0x70] sm:$0xff]
      %v5430 = vld [vmem:[%s407 + $0x78] sm:$0xff]
      %v5431 = vld [vmem:[%s407 + $0x80] sm:$0xff]
      %v5432 = vld [vmem:[%s407 + $0x88] sm:$0xff]
      %v5433 = vld [vmem:[%s407 + $0x90] sm:$0xff]
      %v5434 = vld [vmem:[%s407 + $0x98] sm:$0xff]
      %v5435 = vld [vmem:[%s407 + $0xa0] sm:$0xff]
      %v5436 = vld [vmem:[%s407 + $0xa8] sm:$0xff]
      %v5437 = vld [vmem:[%s407 + $0xb0] sm:$0xff]
      %v5438 = vld [vmem:[%s407 + $0xb8] sm:$0xff]
      %v5439 = vld [vmem:[%s407 + $0xc0] sm:$0xff]
      %v5440 = vld [vmem:[%s407 + $0xc8] sm:$0xff]
      %v5441 = vld [vmem:[%s407 + $0xd0] sm:$0xff]
      %v5442 = vld [vmem:[%s407 + $0xd8] sm:$0xff]
      %v5443 = vld [vmem:[%s407 + $0xe0] sm:$0xff]
      %v5444 = vld [vmem:[%s407 + $0xe8] sm:$0xff]
      %v5445 = vld [vmem:[%s407 + $0xf0] sm:$0xff]
      %v5446 = vld [vmem:[%s407 + $0xf8] sm:$0xff]
      %v5447 = vld [vmem:[%s407 + $0x100] sm:$0xff]
      %5480 = vrot.lane.b32.xlu0 %v5416, 4
      %v5481 = vpop.permute.xlu0 %5480
      %5482 = vrot.lane.b32.xlu0 %v5417, 4
      %v5483 = vpop.permute.xlu0 %5482
      %5484 = vrot.lane.b32.xlu0 %v5418, 4
      %v5485 = vpop.permute.xlu0 %5484
      %5486 = vrot.lane.b32.xlu0 %v5419, 4
      %v5487 = vpop.permute.xlu0 %5486
      %5488 = vrot.lane.b32.xlu0 %v5420, 4
      %v5489 = vpop.permute.xlu0 %5488
      %5490 = vrot.lane.b32.xlu0 %v5421, 4
      %v5491 = vpop.permute.xlu0 %5490
      %5492 = vrot.lane.b32.xlu0 %v5422, 4
      %v5493 = vpop.permute.xlu0 %5492
      %5494 = vrot.lane.b32.xlu0 %v5423, 4
      %v5495 = vpop.permute.xlu0 %5494
      %5496 = vrot.lane.b32.xlu0 %v5424, 4
      %v5497 = vpop.permute.xlu0 %5496
      %5498 = vrot.lane.b32.xlu0 %v5425, 4
      %v5499 = vpop.permute.xlu0 %5498
      %5500 = vrot.lane.b32.xlu0 %v5426, 4
      %v5501 = vpop.permute.xlu0 %5500
      %5502 = vrot.lane.b32.xlu0 %v5427, 4
      %v5503 = vpop.permute.xlu0 %5502
      %5504 = vrot.lane.b32.xlu0 %v5428, 4
      %v5505 = vpop.permute.xlu0 %5504
      %5506 = vrot.lane.b32.xlu0 %v5429, 4
      %v5507 = vpop.permute.xlu0 %5506
      %5508 = vrot.lane.b32.xlu0 %v5430, 4
      %v5509 = vpop.permute.xlu0 %5508
      %5510 = vrot.lane.b32.xlu0 %v5431, 4
      %v5511 = vpop.permute.xlu0 %5510
      %5512 = vrot.lane.b32.xlu0 %v5432, 4
      %v5513 = vpop.permute.xlu0 %5512
      %5514 = vrot.lane.b32.xlu0 %v5433, 4
      %v5515 = vpop.permute.xlu0 %5514
      %5516 = vrot.lane.b32.xlu0 %v5434, 4
      %v5517 = vpop.permute.xlu0 %5516
      %5518 = vrot.lane.b32.xlu0 %v5435, 4
      %v5519 = vpop.permute.xlu0 %5518
      %5520 = vrot.lane.b32.xlu0 %v5436, 4
      %v5521 = vpop.permute.xlu0 %5520
      %5522 = vrot.lane.b32.xlu0 %v5437, 4
      %v5523 = vpop.permute.xlu0 %5522
      %5524 = vrot.lane.b32.xlu0 %v5438, 4
      %v5525 = vpop.permute.xlu0 %5524
      %5526 = vrot.lane.b32.xlu0 %v5439, 4
      %v5527 = vpop.permute.xlu0 %5526
      %5528 = vrot.lane.b32.xlu0 %v5440, 4
      %v5529 = vpop.permute.xlu0 %5528
      %5530 = vrot.lane.b32.xlu0 %v5441, 4
      %v5531 = vpop.permute.xlu0 %5530
      %5532 = vrot.lane.b32.xlu0 %v5442, 4
      %v5533 = vpop.permute.xlu0 %5532
      %5534 = vrot.lane.b32.xlu0 %v5443, 4
      %v5535 = vpop.permute.xlu0 %5534
      %5536 = vrot.lane.b32.xlu0 %v5444, 4
      %v5537 = vpop.permute.xlu0 %5536
      %5538 = vrot.lane.b32.xlu0 %v5445, 4
      %v5539 = vpop.permute.xlu0 %5538
      %5540 = vrot.lane.b32.xlu0 %v5446, 4
      %v5541 = vpop.permute.xlu0 %5540
      %5542 = vrot.lane.b32.xlu0 %v5447, 4
      %v5543 = vpop.permute.xlu0 %5542
      %v5576 = vsel %vm2299, %v5384, %v5481
      %v5577 = vsel %vm2299, %v5385, %v5483
      %v5578 = vsel %vm2299, %v5386, %v5485
      %v5579 = vsel %vm2299, %v5387, %v5487
      %v5580 = vsel %vm2299, %v5388, %v5489
      %v5581 = vsel %vm2299, %v5389, %v5491
      %v5582 = vsel %vm2299, %v5390, %v5493
      %v5583 = vsel %vm2299, %v5391, %v5495
      %v5584 = vsel %vm2299, %v5392, %v5497
      %v5585 = vsel %vm2299, %v5393, %v5499
      %v5586 = vsel %vm2299, %v5394, %v5501
      %v5587 = vsel %vm2299, %v5395, %v5503
      %v5588 = vsel %vm2299, %v5396, %v5505
      %v5589 = vsel %vm2299, %v5397, %v5507
      %v5590 = vsel %vm2299, %v5398, %v5509
      %v5591 = vsel %vm2299, %v5399, %v5511
      %v5592 = vsel %vm2299, %v5400, %v5513
      %v5593 = vsel %vm2299, %v5401, %v5515
      %v5594 = vsel %vm2299, %v5402, %v5517
      %v5595 = vsel %vm2299, %v5403, %v5519
      %v5596 = vsel %vm2299, %v5404, %v5521
      %v5597 = vsel %vm2299, %v5405, %v5523
      %v5598 = vsel %vm2299, %v5406, %v5525
      %v5599 = vsel %vm2299, %v5407, %v5527
      %v5600 = vsel %vm2299, %v5408, %v5529
      %v5601 = vsel %vm2299, %v5409, %v5531
      %v5602 = vsel %vm2299, %v5410, %v5533
      %v5603 = vsel %vm2299, %v5411, %v5535
      %v5604 = vsel %vm2299, %v5412, %v5537
      %v5605 = vsel %vm2299, %v5413, %v5539
      %v5606 = vsel %vm2299, %v5414, %v5541
      %v5607 = vsel %vm2299, %v5415, %v5543
      %v5608 = vld [vmem:[%s402 + $0x9] sm:$0xff]
      %v5609 = vld [vmem:[%s402 + $0x11] sm:$0xff]
      %v5610 = vld [vmem:[%s402 + $0x19] sm:$0xff]
      %v5611 = vld [vmem:[%s402 + $0x21] sm:$0xff]
      %v5612 = vld [vmem:[%s402 + $0x29] sm:$0xff]
      %v5613 = vld [vmem:[%s402 + $0x31] sm:$0xff]
      %v5614 = vld [vmem:[%s402 + $0x39] sm:$0xff]
      %v5615 = vld [vmem:[%s402 + $0x41] sm:$0xff]
      %v5616 = vld [vmem:[%s402 + $0x49] sm:$0xff]
      %v5617 = vld [vmem:[%s402 + $0x51] sm:$0xff]
      %v5618 = vld [vmem:[%s402 + $0x59] sm:$0xff]
      %v5619 = vld [vmem:[%s402 + $0x61] sm:$0xff]
      %v5620 = vld [vmem:[%s402 + $0x69] sm:$0xff]
      %v5621 = vld [vmem:[%s402 + $0x71] sm:$0xff]
      %v5622 = vld [vmem:[%s402 + $0x79] sm:$0xff]
      %v5623 = vld [vmem:[%s402 + $0x81] sm:$0xff]
      %v5624 = vld [vmem:[%s402 + $0x89] sm:$0xff]
      %v5625 = vld [vmem:[%s402 + $0x91] sm:$0xff]
      %v5626 = vld [vmem:[%s402 + $0x99] sm:$0xff]
      %v5627 = vld [vmem:[%s402 + $0xa1] sm:$0xff]
      %v5628 = vld [vmem:[%s402 + $0xa9] sm:$0xff]
      %v5629 = vld [vmem:[%s402 + $0xb1] sm:$0xff]
      %v5630 = vld [vmem:[%s402 + $0xb9] sm:$0xff]
      %v5631 = vld [vmem:[%s402 + $0xc1] sm:$0xff]
      %v5632 = vld [vmem:[%s402 + $0xc9] sm:$0xff]
      %v5633 = vld [vmem:[%s402 + $0xd1] sm:$0xff]
      %v5634 = vld [vmem:[%s402 + $0xd9] sm:$0xff]
      %v5635 = vld [vmem:[%s402 + $0xe1] sm:$0xff]
      %v5636 = vld [vmem:[%s402 + $0xe9] sm:$0xff]
      %v5637 = vld [vmem:[%s402 + $0xf1] sm:$0xff]
      %v5638 = vld [vmem:[%s402 + $0xf9] sm:$0xff]
      %v5639 = vld [vmem:[%s402 + $0x101] sm:$0xff]
      %v5640 = vld [vmem:[%s407 + $0x9] sm:$0xff]
      %v5641 = vld [vmem:[%s407 + $0x11] sm:$0xff]
      %v5642 = vld [vmem:[%s407 + $0x19] sm:$0xff]
      %v5643 = vld [vmem:[%s407 + $0x21] sm:$0xff]
      %v5644 = vld [vmem:[%s407 + $0x29] sm:$0xff]
      %v5645 = vld [vmem:[%s407 + $0x31] sm:$0xff]
      %v5646 = vld [vmem:[%s407 + $0x39] sm:$0xff]
      %v5647 = vld [vmem:[%s407 + $0x41] sm:$0xff]
      %v5648 = vld [vmem:[%s407 + $0x49] sm:$0xff]
      %v5649 = vld [vmem:[%s407 + $0x51] sm:$0xff]
      %v5650 = vld [vmem:[%s407 + $0x59] sm:$0xff]
      %v5651 = vld [vmem:[%s407 + $0x61] sm:$0xff]
      %v5652 = vld [vmem:[%s407 + $0x69] sm:$0xff]
      %v5653 = vld [vmem:[%s407 + $0x71] sm:$0xff]
      %v5654 = vld [vmem:[%s407 + $0x79] sm:$0xff]
      %v5655 = vld [vmem:[%s407 + $0x81] sm:$0xff]
      %v5656 = vld [vmem:[%s407 + $0x89] sm:$0xff]
      %v5657 = vld [vmem:[%s407 + $0x91] sm:$0xff]
      %v5658 = vld [vmem:[%s407 + $0x99] sm:$0xff]
      %v5659 = vld [vmem:[%s407 + $0xa1] sm:$0xff]
      %v5660 = vld [vmem:[%s407 + $0xa9] sm:$0xff]
      %v5661 = vld [vmem:[%s407 + $0xb1] sm:$0xff]
      %v5662 = vld [vmem:[%s407 + $0xb9] sm:$0xff]
      %v5663 = vld [vmem:[%s407 + $0xc1] sm:$0xff]
      %v5664 = vld [vmem:[%s407 + $0xc9] sm:$0xff]
      %v5665 = vld [vmem:[%s407 + $0xd1] sm:$0xff]
      %v5666 = vld [vmem:[%s407 + $0xd9] sm:$0xff]
      %v5667 = vld [vmem:[%s407 + $0xe1] sm:$0xff]
      %v5668 = vld [vmem:[%s407 + $0xe9] sm:$0xff]
      %v5669 = vld [vmem:[%s407 + $0xf1] sm:$0xff]
      %v5670 = vld [vmem:[%s407 + $0xf9] sm:$0xff]
      %v5671 = vld [vmem:[%s407 + $0x101] sm:$0xff]
      %5704 = vrot.lane.b32.xlu0 %v5640, 4
      %v5705 = vpop.permute.xlu0 %5704
      %5706 = vrot.lane.b32.xlu0 %v5641, 4
      %v5707 = vpop.permute.xlu0 %5706
      %5708 = vrot.lane.b32.xlu0 %v5642, 4
      %v5709 = vpop.permute.xlu0 %5708
      %5710 = vrot.lane.b32.xlu0 %v5643, 4
      %v5711 = vpop.permute.xlu0 %5710
      %5712 = vrot.lane.b32.xlu0 %v5644, 4
      %v5713 = vpop.permute.xlu0 %5712
      %5714 = vrot.lane.b32.xlu0 %v5645, 4
      %v5715 = vpop.permute.xlu0 %5714
      %5716 = vrot.lane.b32.xlu0 %v5646, 4
      %v5717 = vpop.permute.xlu0 %5716
      %5718 = vrot.lane.b32.xlu0 %v5647, 4
      %v5719 = vpop.permute.xlu0 %5718
      %5720 = vrot.lane.b32.xlu0 %v5648, 4
      %v5721 = vpop.permute.xlu0 %5720
      %5722 = vrot.lane.b32.xlu0 %v5649, 4
      %v5723 = vpop.permute.xlu0 %5722
      %5724 = vrot.lane.b32.xlu0 %v5650, 4
      %v5725 = vpop.permute.xlu0 %5724
      %5726 = vrot.lane.b32.xlu0 %v5651, 4
      %v5727 = vpop.permute.xlu0 %5726
      %5728 = vrot.lane.b32.xlu0 %v5652, 4
      %v5729 = vpop.permute.xlu0 %5728
      %5730 = vrot.lane.b32.xlu0 %v5653, 4
      %v5731 = vpop.permute.xlu0 %5730
      %5732 = vrot.lane.b32.xlu0 %v5654, 4
      %v5733 = vpop.permute.xlu0 %5732
      %5734 = vrot.lane.b32.xlu0 %v5655, 4
      %v5735 = vpop.permute.xlu0 %5734
      %5736 = vrot.lane.b32.xlu0 %v5656, 4
      %v5737 = vpop.permute.xlu0 %5736
      %5738 = vrot.lane.b32.xlu0 %v5657, 4
      %v5739 = vpop.permute.xlu0 %5738
      %5740 = vrot.lane.b32.xlu0 %v5658, 4
      %v5741 = vpop.permute.xlu0 %5740
      %5742 = vrot.lane.b32.xlu0 %v5659, 4
      %v5743 = vpop.permute.xlu0 %5742
      %5744 = vrot.lane.b32.xlu0 %v5660, 4
      %v5745 = vpop.permute.xlu0 %5744
      %5746 = vrot.lane.b32.xlu0 %v5661, 4
      %v5747 = vpop.permute.xlu0 %5746
      %5748 = vrot.lane.b32.xlu0 %v5662, 4
      %v5749 = vpop.permute.xlu0 %5748
      %5750 = vrot.lane.b32.xlu0 %v5663, 4
      %v5751 = vpop.permute.xlu0 %5750
      %5752 = vrot.lane.b32.xlu0 %v5664, 4
      %v5753 = vpop.permute.xlu0 %5752
      %5754 = vrot.lane.b32.xlu0 %v5665, 4
      %v5755 = vpop.permute.xlu0 %5754
      %5756 = vrot.lane.b32.xlu0 %v5666, 4
      %v5757 = vpop.permute.xlu0 %5756
      %5758 = vrot.lane.b32.xlu0 %v5667, 4
      %v5759 = vpop.permute.xlu0 %5758
      %5760 = vrot.lane.b32.xlu0 %v5668, 4
      %v5761 = vpop.permute.xlu0 %5760
      %5762 = vrot.lane.b32.xlu0 %v5669, 4
      %v5763 = vpop.permute.xlu0 %5762
      %5764 = vrot.lane.b32.xlu0 %v5670, 4
      %v5765 = vpop.permute.xlu0 %5764
      %5766 = vrot.lane.b32.xlu0 %v5671, 4
      %v5767 = vpop.permute.xlu0 %5766
      %v5800 = vsel %vm2299, %v5608, %v5705
      %v5801 = vsel %vm2299, %v5609, %v5707
      %v5802 = vsel %vm2299, %v5610, %v5709
      %v5803 = vsel %vm2299, %v5611, %v5711
      %v5804 = vsel %vm2299, %v5612, %v5713
      %v5805 = vsel %vm2299, %v5613, %v5715
      %v5806 = vsel %vm2299, %v5614, %v5717
      %v5807 = vsel %vm2299, %v5615, %v5719
      %v5808 = vsel %vm2299, %v5616, %v5721
      %v5809 = vsel %vm2299, %v5617, %v5723
      %v5810 = vsel %vm2299, %v5618, %v5725
      %v5811 = vsel %vm2299, %v5619, %v5727
      %v5812 = vsel %vm2299, %v5620, %v5729
      %v5813 = vsel %vm2299, %v5621, %v5731
      %v5814 = vsel %vm2299, %v5622, %v5733
      %v5815 = vsel %vm2299, %v5623, %v5735
      %v5816 = vsel %vm2299, %v5624, %v5737
      %v5817 = vsel %vm2299, %v5625, %v5739
      %v5818 = vsel %vm2299, %v5626, %v5741
      %v5819 = vsel %vm2299, %v5627, %v5743
      %v5820 = vsel %vm2299, %v5628, %v5745
      %v5821 = vsel %vm2299, %v5629, %v5747
      %v5822 = vsel %vm2299, %v5630, %v5749
      %v5823 = vsel %vm2299, %v5631, %v5751
      %v5824 = vsel %vm2299, %v5632, %v5753
      %v5825 = vsel %vm2299, %v5633, %v5755
      %v5826 = vsel %vm2299, %v5634, %v5757
      %v5827 = vsel %vm2299, %v5635, %v5759
      %v5828 = vsel %vm2299, %v5636, %v5761
      %v5829 = vsel %vm2299, %v5637, %v5763
      %v5830 = vsel %vm2299, %v5638, %v5765
      %v5831 = vsel %vm2299, %v5639, %v5767
      %v5832 = vsel %vm1131, %v5800, 0.0
      %v5833 = vsel %vm1132, %v5801, 0.0
      %v5834 = vsel %vm1133, %v5802, 0.0
      %v5835 = vsel %vm1134, %v5803, 0.0
      %v5836 = vsel %vm1135, %v5804, 0.0
      %v5837 = vsel %vm1136, %v5805, 0.0
      %v5838 = vsel %vm1137, %v5806, 0.0
      %v5839 = vsel %vm1138, %v5807, 0.0
      %v5840 = vsel %vm1139, %v5808, 0.0
      %v5841 = vsel %vm1140, %v5809, 0.0
      %v5842 = vsel %vm1141, %v5810, 0.0
      %v5843 = vsel %vm1142, %v5811, 0.0
      %v5844 = vsel %vm1143, %v5812, 0.0
      %v5845 = vsel %vm1144, %v5813, 0.0
      %v5846 = vsel %vm1145, %v5814, 0.0
      %v5847 = vsel %vm1146, %v5815, 0.0
      %v5848 = vsel %vm1147, %v5816, 0.0
      %v5849 = vsel %vm1148, %v5817, 0.0
      %v5850 = vsel %vm1149, %v5818, 0.0
      %v5851 = vsel %vm1150, %v5819, 0.0
      %v5852 = vsel %vm1151, %v5820, 0.0
      %v5853 = vsel %vm1152, %v5821, 0.0
      %v5854 = vsel %vm1153, %v5822, 0.0
      %v5855 = vsel %vm1154, %v5823, 0.0
      %v5856 = vsel %vm1155, %v5824, 0.0
      %v5857 = vsel %vm1156, %v5825, 0.0
      %v5858 = vsel %vm1157, %v5826, 0.0
      %v5859 = vsel %vm1158, %v5827, 0.0
      %v5860 = vsel %vm1159, %v5828, 0.0
      %v5861 = vsel %vm1160, %v5829, 0.0
      %v5862 = vsel %vm1161, %v5830, 0.0
      %v5863 = vsel %vm1162, %v5831, 0.0
      %v5864 = vld [vmem:[%s402 + $0x107] sm:$0xff]
      %v5865 = vld [vmem:[%s402 + $0x10f] sm:$0xff]
      %v5866 = vld [vmem:[%s407 + $0x107] sm:$0xff]
      %v5867 = vld [vmem:[%s407 + $0x10f] sm:$0xff]
      %5870 = vrot.lane.b32.xlu0 %v5866, 4
      %v5871 = vpop.permute.xlu0 %5870
      %5872 = vrot.lane.b32.xlu0 %v5867, 4
      %v5873 = vpop.permute.xlu0 %5872
      %v5876 = vsel %vm2299, %v5864, %v5871
      %v5877 = vsel %vm2299, %v5865, %v5873
      %v5878 = vsel %vm971, %v5322, 0.0
      %v5879 = vsel %vm972, %v5323, 0.0
      %v5880 = vsel %vm973, %v5324, 0.0
      %v5881 = vsel %vm974, %v5325, 0.0
      %v5882 = vsel %vm975, %v5326, 0.0
      %v5883 = vsel %vm976, %v5327, 0.0
      %v5884 = vsel %vm977, %v5328, 0.0
      %v5885 = vsel %vm978, %v5329, 0.0
      %v5886 = vsel %vm979, %v5330, 0.0
      %v5887 = vsel %vm980, %v5331, 0.0
      %v5888 = vsel %vm981, %v5332, 0.0
      %v5889 = vsel %vm982, %v5333, 0.0
      %v5890 = vsel %vm983, %v5334, 0.0
      %v5891 = vsel %vm984, %v5335, 0.0
      %v5892 = vsel %vm985, %v5336, 0.0
      %v5893 = vsel %vm986, %v5337, 0.0
      %v5894 = vsel %vm987, %v5338, 0.0
      %v5895 = vsel %vm988, %v5339, 0.0
      %v5896 = vsel %vm989, %v5340, 0.0
      %v5897 = vsel %vm990, %v5341, 0.0
      %v5898 = vsel %vm991, %v5342, 0.0
      %v5899 = vsel %vm992, %v5343, 0.0
      %v5900 = vsel %vm993, %v5344, 0.0
      %v5901 = vsel %vm994, %v5345, 0.0
      %v5902 = vsel %vm995, %v5346, 0.0
      %v5903 = vsel %vm996, %v5347, 0.0
      %v5904 = vsel %vm997, %v5348, 0.0
      %v5905 = vsel %vm998, %v5349, 0.0
      %v5906 = vsel %vm999, %v5350, 0.0
      %v5907 = vsel %vm1000, %v5351, 0.0
      %v5908 = vsel %vm1001, %v5876, 0.0
      %v5909 = vsel %vm1002, %v5877, 0.0
      %v5910 = vld [vmem:[%s402 + $0x108] sm:$0xff]
      %v5911 = vld [vmem:[%s402 + $0x110] sm:$0xff]
      %v5912 = vld [vmem:[%s407 + $0x108] sm:$0xff]
      %v5913 = vld [vmem:[%s407 + $0x110] sm:$0xff]
      %5916 = vrot.lane.b32.xlu0 %v5912, 4
      %v5917 = vpop.permute.xlu0 %5916
      %5918 = vrot.lane.b32.xlu0 %v5913, 4
      %v5919 = vpop.permute.xlu0 %5918
      %v5922 = vsel %vm2299, %v5910, %v5917
      %v5923 = vsel %vm2299, %v5911, %v5919
      %v5924 = vld [vmem:[%s402 + $0x109] sm:$0xff]
      %v5925 = vld [vmem:[%s402 + $0x111] sm:$0xff]
      %v5926 = vld [vmem:[%s407 + $0x109] sm:$0xff]
      %v5927 = vld [vmem:[%s407 + $0x111] sm:$0xff]
      %5930 = vrot.lane.b32.xlu0 %v5926, 4
      %v5931 = vpop.permute.xlu0 %5930
      %5932 = vrot.lane.b32.xlu0 %v5927, 4
      %v5933 = vpop.permute.xlu0 %5932
      %v5936 = vsel %vm2299, %v5924, %v5931
      %v5937 = vsel %vm2299, %v5925, %v5933
      %v5938 = vsel %vm1131, %v5802, 0.0
      %v5939 = vsel %vm1132, %v5803, 0.0
      %v5940 = vsel %vm1133, %v5804, 0.0
      %v5941 = vsel %vm1134, %v5805, 0.0
      %v5942 = vsel %vm1135, %v5806, 0.0
      %v5943 = vsel %vm1136, %v5807, 0.0
      %v5944 = vsel %vm1137, %v5808, 0.0
      %v5945 = vsel %vm1138, %v5809, 0.0
      %v5946 = vsel %vm1139, %v5810, 0.0
      %v5947 = vsel %vm1140, %v5811, 0.0
      %v5948 = vsel %vm1141, %v5812, 0.0
      %v5949 = vsel %vm1142, %v5813, 0.0
      %v5950 = vsel %vm1143, %v5814, 0.0
      %v5951 = vsel %vm1144, %v5815, 0.0
      %v5952 = vsel %vm1145, %v5816, 0.0
      %v5953 = vsel %vm1146, %v5817, 0.0
      %v5954 = vsel %vm1147, %v5818, 0.0
      %v5955 = vsel %vm1148, %v5819, 0.0
      %v5956 = vsel %vm1149, %v5820, 0.0
      %v5957 = vsel %vm1150, %v5821, 0.0
      %v5958 = vsel %vm1151, %v5822, 0.0
      %v5959 = vsel %vm1152, %v5823, 0.0
      %v5960 = vsel %vm1153, %v5824, 0.0
      %v5961 = vsel %vm1154, %v5825, 0.0
      %v5962 = vsel %vm1155, %v5826, 0.0
      %v5963 = vsel %vm1156, %v5827, 0.0
      %v5964 = vsel %vm1157, %v5828, 0.0
      %v5965 = vsel %vm1158, %v5829, 0.0
      %v5966 = vsel %vm1159, %v5830, 0.0
      %v5967 = vsel %vm1160, %v5831, 0.0
      %v5968 = vsel %vm1161, %v5936, 0.0
      %v5969 = vsel %vm1162, %v5937, 0.0
      %v5970 = vld [vmem:[%s402 + $0x117] sm:$0xff]
      %v5971 = vld [vmem:[%s402 + $0x11f] sm:$0xff]
      %v5972 = vld [vmem:[%s407 + $0x117] sm:$0xff]
      %v5973 = vld [vmem:[%s407 + $0x11f] sm:$0xff]
      %5976 = vrot.lane.b32.xlu0 %v5972, 4
      %v5977 = vpop.permute.xlu0 %5976
      %5978 = vrot.lane.b32.xlu0 %v5973, 4
      %v5979 = vpop.permute.xlu0 %5978
      %v5982 = vsel %vm2299, %v5970, %v5977
      %v5983 = vsel %vm2299, %v5971, %v5979
      %v5984 = vsel %vm971, %v5324, 0.0
      %v5985 = vsel %vm972, %v5325, 0.0
      %v5986 = vsel %vm973, %v5326, 0.0
      %v5987 = vsel %vm974, %v5327, 0.0
      %v5988 = vsel %vm975, %v5328, 0.0
      %v5989 = vsel %vm976, %v5329, 0.0
      %v5990 = vsel %vm977, %v5330, 0.0
      %v5991 = vsel %vm978, %v5331, 0.0
      %v5992 = vsel %vm979, %v5332, 0.0
      %v5993 = vsel %vm980, %v5333, 0.0
      %v5994 = vsel %vm981, %v5334, 0.0
      %v5995 = vsel %vm982, %v5335, 0.0
      %v5996 = vsel %vm983, %v5336, 0.0
      %v5997 = vsel %vm984, %v5337, 0.0
      %v5998 = vsel %vm985, %v5338, 0.0
      %v5999 = vsel %vm986, %v5339, 0.0
      %v6000 = vsel %vm987, %v5340, 0.0
      %v6001 = vsel %vm988, %v5341, 0.0
      %v6002 = vsel %vm989, %v5342, 0.0
      %v6003 = vsel %vm990, %v5343, 0.0
      %v6004 = vsel %vm991, %v5344, 0.0
      %v6005 = vsel %vm992, %v5345, 0.0
      %v6006 = vsel %vm993, %v5346, 0.0
      %v6007 = vsel %vm994, %v5347, 0.0
      %v6008 = vsel %vm995, %v5348, 0.0
      %v6009 = vsel %vm996, %v5349, 0.0
      %v6010 = vsel %vm997, %v5350, 0.0
      %v6011 = vsel %vm998, %v5351, 0.0
      %v6012 = vsel %vm999, %v5876, 0.0
      %v6013 = vsel %vm1000, %v5877, 0.0
      %v6014 = vsel %vm1001, %v5982, 0.0
      %v6015 = vsel %vm1002, %v5983, 0.0
      %v6016 = vld [vmem:[%s402 + $0x118] sm:$0xff]
      %v6017 = vld [vmem:[%s402 + $0x120] sm:$0xff]
      %v6018 = vld [vmem:[%s407 + $0x118] sm:$0xff]
      %v6019 = vld [vmem:[%s407 + $0x120] sm:$0xff]
      %6022 = vrot.lane.b32.xlu0 %v6018, 4
      %v6023 = vpop.permute.xlu0 %6022
      %6024 = vrot.lane.b32.xlu0 %v6019, 4
      %v6025 = vpop.permute.xlu0 %6024
      %v6028 = vsel %vm2299, %v6016, %v6023
      %v6029 = vsel %vm2299, %v6017, %v6025
      %v6030 = vld [vmem:[%s402 + $0x119] sm:$0xff]
      %v6031 = vld [vmem:[%s402 + $0x121] sm:$0xff]
      %v6032 = vld [vmem:[%s407 + $0x119] sm:$0xff]
      %v6033 = vld [vmem:[%s407 + $0x121] sm:$0xff]
      %6036 = vrot.lane.b32.xlu0 %v6032, 4
      %v6037 = vpop.permute.xlu0 %6036
      %6038 = vrot.lane.b32.xlu0 %v6033, 4
      %v6039 = vpop.permute.xlu0 %6038
      %v6042 = vsel %vm2299, %v6030, %v6037
      %v6043 = vsel %vm2299, %v6031, %v6039
      %v6044 = vsel %vm1131, %v5804, 0.0
      %v6045 = vsel %vm1132, %v5805, 0.0
      %v6046 = vsel %vm1133, %v5806, 0.0
      %v6047 = vsel %vm1134, %v5807, 0.0
      %v6048 = vsel %vm1135, %v5808, 0.0
      %v6049 = vsel %vm1136, %v5809, 0.0
      %v6050 = vsel %vm1137, %v5810, 0.0
      %v6051 = vsel %vm1138, %v5811, 0.0
      %v6052 = vsel %vm1139, %v5812, 0.0
      %v6053 = vsel %vm1140, %v5813, 0.0
      %v6054 = vsel %vm1141, %v5814, 0.0
      %v6055 = vsel %vm1142, %v5815, 0.0
      %v6056 = vsel %vm1143, %v5816, 0.0
      %v6057 = vsel %vm1144, %v5817, 0.0
      %v6058 = vsel %vm1145, %v5818, 0.0
      %v6059 = vsel %vm1146, %v5819, 0.0
      %v6060 = vsel %vm1147, %v5820, 0.0
      %v6061 = vsel %vm1148, %v5821, 0.0
      %v6062 = vsel %vm1149, %v5822, 0.0
      %v6063 = vsel %vm1150, %v5823, 0.0
      %v6064 = vsel %vm1151, %v5824, 0.0
      %v6065 = vsel %vm1152, %v5825, 0.0
      %v6066 = vsel %vm1153, %v5826, 0.0
      %v6067 = vsel %vm1154, %v5827, 0.0
      %v6068 = vsel %vm1155, %v5828, 0.0
      %v6069 = vsel %vm1156, %v5829, 0.0
      %v6070 = vsel %vm1157, %v5830, 0.0
      %v6071 = vsel %vm1158, %v5831, 0.0
      %v6072 = vsel %vm1159, %v5936, 0.0
      %v6073 = vsel %vm1160, %v5937, 0.0
      %v6074 = vsel %vm1161, %v6042, 0.0
      %v6075 = vsel %vm1162, %v6043, 0.0
      %6108 = vrot.lane.b32.xlu0 %v5576, 8
      %v6109 = vpop.permute.xlu0 %6108
      %6110 = vrot.lane.b32.xlu0 %v5577, 8
      %v6111 = vpop.permute.xlu0 %6110
      %6112 = vrot.lane.b32.xlu0 %v5578, 8
      %v6113 = vpop.permute.xlu0 %6112
      %6114 = vrot.lane.b32.xlu0 %v5579, 8
      %v6115 = vpop.permute.xlu0 %6114
      %6116 = vrot.lane.b32.xlu0 %v5580, 8
      %v6117 = vpop.permute.xlu0 %6116
      %6118 = vrot.lane.b32.xlu0 %v5581, 8
      %v6119 = vpop.permute.xlu0 %6118
      %6120 = vrot.lane.b32.xlu0 %v5582, 8
      %v6121 = vpop.permute.xlu0 %6120
      %6122 = vrot.lane.b32.xlu0 %v5583, 8
      %v6123 = vpop.permute.xlu0 %6122
      %6124 = vrot.lane.b32.xlu0 %v5584, 8
      %v6125 = vpop.permute.xlu0 %6124
      %6126 = vrot.lane.b32.xlu0 %v5585, 8
      %v6127 = vpop.permute.xlu0 %6126
      %6128 = vrot.lane.b32.xlu0 %v5586, 8
      %v6129 = vpop.permute.xlu0 %6128
      %6130 = vrot.lane.b32.xlu0 %v5587, 8
      %v6131 = vpop.permute.xlu0 %6130
      %6132 = vrot.lane.b32.xlu0 %v5588, 8
      %v6133 = vpop.permute.xlu0 %6132
      %6134 = vrot.lane.b32.xlu0 %v5589, 8
      %v6135 = vpop.permute.xlu0 %6134
      %6136 = vrot.lane.b32.xlu0 %v5590, 8
      %v6137 = vpop.permute.xlu0 %6136
      %6138 = vrot.lane.b32.xlu0 %v5591, 8
      %v6139 = vpop.permute.xlu0 %6138
      %6140 = vrot.lane.b32.xlu0 %v5592, 8
      %v6141 = vpop.permute.xlu0 %6140
      %6142 = vrot.lane.b32.xlu0 %v5593, 8
      %v6143 = vpop.permute.xlu0 %6142
      %6144 = vrot.lane.b32.xlu0 %v5594, 8
      %v6145 = vpop.permute.xlu0 %6144
      %6146 = vrot.lane.b32.xlu0 %v5595, 8
      %v6147 = vpop.permute.xlu0 %6146
      %6148 = vrot.lane.b32.xlu0 %v5596, 8
      %v6149 = vpop.permute.xlu0 %6148
      %6150 = vrot.lane.b32.xlu0 %v5597, 8
      %v6151 = vpop.permute.xlu0 %6150
      %6152 = vrot.lane.b32.xlu0 %v5598, 8
      %v6153 = vpop.permute.xlu0 %6152
      %6154 = vrot.lane.b32.xlu0 %v5599, 8
      %v6155 = vpop.permute.xlu0 %6154
      %6156 = vrot.lane.b32.xlu0 %v5600, 8
      %v6157 = vpop.permute.xlu0 %6156
      %6158 = vrot.lane.b32.xlu0 %v5601, 8
      %v6159 = vpop.permute.xlu0 %6158
      %6160 = vrot.lane.b32.xlu0 %v5602, 8
      %v6161 = vpop.permute.xlu0 %6160
      %6162 = vrot.lane.b32.xlu0 %v5603, 8
      %v6163 = vpop.permute.xlu0 %6162
      %6164 = vrot.lane.b32.xlu0 %v5604, 8
      %v6165 = vpop.permute.xlu0 %6164
      %6166 = vrot.lane.b32.xlu0 %v5605, 8
      %v6167 = vpop.permute.xlu0 %6166
      %6168 = vrot.lane.b32.xlu0 %v5606, 8
      %v6169 = vpop.permute.xlu0 %6168
      %6170 = vrot.lane.b32.xlu0 %v5607, 8
      %v6171 = vpop.permute.xlu0 %6170
      %6236 = vrot.lane.b32.xlu0 %v5832, 16
      %v6237 = vpop.permute.xlu0 %6236
      %6238 = vrot.lane.b32.xlu0 %v5833, 16
      %v6239 = vpop.permute.xlu0 %6238
      %6240 = vrot.lane.b32.xlu0 %v5834, 16
      %v6241 = vpop.permute.xlu0 %6240
      %6242 = vrot.lane.b32.xlu0 %v5835, 16
      %v6243 = vpop.permute.xlu0 %6242
      %6244 = vrot.lane.b32.xlu0 %v5836, 16
      %v6245 = vpop.permute.xlu0 %6244
      %6246 = vrot.lane.b32.xlu0 %v5837, 16
      %v6247 = vpop.permute.xlu0 %6246
      %6248 = vrot.lane.b32.xlu0 %v5838, 16
      %v6249 = vpop.permute.xlu0 %6248
      %6250 = vrot.lane.b32.xlu0 %v5839, 16
      %v6251 = vpop.permute.xlu0 %6250
      %6252 = vrot.lane.b32.xlu0 %v5840, 16
      %v6253 = vpop.permute.xlu0 %6252
      %6254 = vrot.lane.b32.xlu0 %v5841, 16
      %v6255 = vpop.permute.xlu0 %6254
      %6256 = vrot.lane.b32.xlu0 %v5842, 16
      %v6257 = vpop.permute.xlu0 %6256
      %6258 = vrot.lane.b32.xlu0 %v5843, 16
      %v6259 = vpop.permute.xlu0 %6258
      %6260 = vrot.lane.b32.xlu0 %v5844, 16
      %v6261 = vpop.permute.xlu0 %6260
      %6262 = vrot.lane.b32.xlu0 %v5845, 16
      %v6263 = vpop.permute.xlu0 %6262
      %6264 = vrot.lane.b32.xlu0 %v5846, 16
      %v6265 = vpop.permute.xlu0 %6264
      %6266 = vrot.lane.b32.xlu0 %v5847, 16
      %v6267 = vpop.permute.xlu0 %6266
      %6268 = vrot.lane.b32.xlu0 %v5848, 16
      %v6269 = vpop.permute.xlu0 %6268
      %6270 = vrot.lane.b32.xlu0 %v5849, 16
      %v6271 = vpop.permute.xlu0 %6270
      %6272 = vrot.lane.b32.xlu0 %v5850, 16
      %v6273 = vpop.permute.xlu0 %6272
      %6274 = vrot.lane.b32.xlu0 %v5851, 16
      %v6275 = vpop.permute.xlu0 %6274
      %6276 = vrot.lane.b32.xlu0 %v5852, 16
      %v6277 = vpop.permute.xlu0 %6276
      %6278 = vrot.lane.b32.xlu0 %v5853, 16
      %v6279 = vpop.permute.xlu0 %6278
      %6280 = vrot.lane.b32.xlu0 %v5854, 16
      %v6281 = vpop.permute.xlu0 %6280
      %6282 = vrot.lane.b32.xlu0 %v5855, 16
      %v6283 = vpop.permute.xlu0 %6282
      %6284 = vrot.lane.b32.xlu0 %v5856, 16
      %v6285 = vpop.permute.xlu0 %6284
      %6286 = vrot.lane.b32.xlu0 %v5857, 16
      %v6287 = vpop.permute.xlu0 %6286
      %6288 = vrot.lane.b32.xlu0 %v5858, 16
      %v6289 = vpop.permute.xlu0 %6288
      %6290 = vrot.lane.b32.xlu0 %v5859, 16
      %v6291 = vpop.permute.xlu0 %6290
      %6292 = vrot.lane.b32.xlu0 %v5860, 16
      %v6293 = vpop.permute.xlu0 %6292
      %6294 = vrot.lane.b32.xlu0 %v5861, 16
      %v6295 = vpop.permute.xlu0 %6294
      %6296 = vrot.lane.b32.xlu0 %v5862, 16
      %v6297 = vpop.permute.xlu0 %6296
      %6298 = vrot.lane.b32.xlu0 %v5863, 16
      %v6299 = vpop.permute.xlu0 %6298
      %6364 = vrot.lane.b32.xlu0 %v5878, 24
      %v6365 = vpop.permute.xlu0 %6364
      %6366 = vrot.lane.b32.xlu0 %v5879, 24
      %v6367 = vpop.permute.xlu0 %6366
      %6368 = vrot.lane.b32.xlu0 %v5880, 24
      %v6369 = vpop.permute.xlu0 %6368
      %6370 = vrot.lane.b32.xlu0 %v5881, 24
      %v6371 = vpop.permute.xlu0 %6370
      %6372 = vrot.lane.b32.xlu0 %v5882, 24
      %v6373 = vpop.permute.xlu0 %6372
      %6374 = vrot.lane.b32.xlu0 %v5883, 24
      %v6375 = vpop.permute.xlu0 %6374
      %6376 = vrot.lane.b32.xlu0 %v5884, 24
      %v6377 = vpop.permute.xlu0 %6376
      %6378 = vrot.lane.b32.xlu0 %v5885, 24
      %v6379 = vpop.permute.xlu0 %6378
      %6380 = vrot.lane.b32.xlu0 %v5886, 24
      %v6381 = vpop.permute.xlu0 %6380
      %6382 = vrot.lane.b32.xlu0 %v5887, 24
      %v6383 = vpop.permute.xlu0 %6382
      %6384 = vrot.lane.b32.xlu0 %v5888, 24
      %v6385 = vpop.permute.xlu0 %6384
      %6386 = vrot.lane.b32.xlu0 %v5889, 24
      %v6387 = vpop.permute.xlu0 %6386
      %6388 = vrot.lane.b32.xlu0 %v5890, 24
      %v6389 = vpop.permute.xlu0 %6388
      %6390 = vrot.lane.b32.xlu0 %v5891, 24
      %v6391 = vpop.permute.xlu0 %6390
      %6392 = vrot.lane.b32.xlu0 %v5892, 24
      %v6393 = vpop.permute.xlu0 %6392
      %6394 = vrot.lane.b32.xlu0 %v5893, 24
      %v6395 = vpop.permute.xlu0 %6394
      %6396 = vrot.lane.b32.xlu0 %v5894, 24
      %v6397 = vpop.permute.xlu0 %6396
      %6398 = vrot.lane.b32.xlu0 %v5895, 24
      %v6399 = vpop.permute.xlu0 %6398
      %6400 = vrot.lane.b32.xlu0 %v5896, 24
      %v6401 = vpop.permute.xlu0 %6400
      %6402 = vrot.lane.b32.xlu0 %v5897, 24
      %v6403 = vpop.permute.xlu0 %6402
      %6404 = vrot.lane.b32.xlu0 %v5898, 24
      %v6405 = vpop.permute.xlu0 %6404
      %6406 = vrot.lane.b32.xlu0 %v5899, 24
      %v6407 = vpop.permute.xlu0 %6406
      %6408 = vrot.lane.b32.xlu0 %v5900, 24
      %v6409 = vpop.permute.xlu0 %6408
      %6410 = vrot.lane.b32.xlu0 %v5901, 24
      %v6411 = vpop.permute.xlu0 %6410
      %6412 = vrot.lane.b32.xlu0 %v5902, 24
      %v6413 = vpop.permute.xlu0 %6412
      %6414 = vrot.lane.b32.xlu0 %v5903, 24
      %v6415 = vpop.permute.xlu0 %6414
      %6416 = vrot.lane.b32.xlu0 %v5904, 24
      %v6417 = vpop.permute.xlu0 %6416
      %6418 = vrot.lane.b32.xlu0 %v5905, 24
      %v6419 = vpop.permute.xlu0 %6418
      %6420 = vrot.lane.b32.xlu0 %v5906, 24
      %v6421 = vpop.permute.xlu0 %6420
      %6422 = vrot.lane.b32.xlu0 %v5907, 24
      %v6423 = vpop.permute.xlu0 %6422
      %6424 = vrot.lane.b32.xlu0 %v5908, 24
      %v6425 = vpop.permute.xlu0 %6424
      %6426 = vrot.lane.b32.xlu0 %v5909, 24
      %v6427 = vpop.permute.xlu0 %6426
      %6462 = vrot.lane.b32.xlu0 %v5578, 32
      %v6463 = vpop.permute.xlu0 %6462
      %6464 = vrot.lane.b32.xlu0 %v5579, 32
      %v6465 = vpop.permute.xlu0 %6464
      %6466 = vrot.lane.b32.xlu0 %v5580, 32
      %v6467 = vpop.permute.xlu0 %6466
      %6468 = vrot.lane.b32.xlu0 %v5581, 32
      %v6469 = vpop.permute.xlu0 %6468
      %6470 = vrot.lane.b32.xlu0 %v5582, 32
      %v6471 = vpop.permute.xlu0 %6470
      %6472 = vrot.lane.b32.xlu0 %v5583, 32
      %v6473 = vpop.permute.xlu0 %6472
      %6474 = vrot.lane.b32.xlu0 %v5584, 32
      %v6475 = vpop.permute.xlu0 %6474
      %6476 = vrot.lane.b32.xlu0 %v5585, 32
      %v6477 = vpop.permute.xlu0 %6476
      %6478 = vrot.lane.b32.xlu0 %v5586, 32
      %v6479 = vpop.permute.xlu0 %6478
      %6480 = vrot.lane.b32.xlu0 %v5587, 32
      %v6481 = vpop.permute.xlu0 %6480
      %6482 = vrot.lane.b32.xlu0 %v5588, 32
      %v6483 = vpop.permute.xlu0 %6482
      %6484 = vrot.lane.b32.xlu0 %v5589, 32
      %v6485 = vpop.permute.xlu0 %6484
      %6486 = vrot.lane.b32.xlu0 %v5590, 32
      %v6487 = vpop.permute.xlu0 %6486
      %6488 = vrot.lane.b32.xlu0 %v5591, 32
      %v6489 = vpop.permute.xlu0 %6488
      %6490 = vrot.lane.b32.xlu0 %v5592, 32
      %v6491 = vpop.permute.xlu0 %6490
      %6492 = vrot.lane.b32.xlu0 %v5593, 32
      %v6493 = vpop.permute.xlu0 %6492
      %6494 = vrot.lane.b32.xlu0 %v5594, 32
      %v6495 = vpop.permute.xlu0 %6494
      %6496 = vrot.lane.b32.xlu0 %v5595, 32
      %v6497 = vpop.permute.xlu0 %6496
      %6498 = vrot.lane.b32.xlu0 %v5596, 32
      %v6499 = vpop.permute.xlu0 %6498
      %6500 = vrot.lane.b32.xlu0 %v5597, 32
      %v6501 = vpop.permute.xlu0 %6500
      %6502 = vrot.lane.b32.xlu0 %v5598, 32
      %v6503 = vpop.permute.xlu0 %6502
      %6504 = vrot.lane.b32.xlu0 %v5599, 32
      %v6505 = vpop.permute.xlu0 %6504
      %6506 = vrot.lane.b32.xlu0 %v5600, 32
      %v6507 = vpop.permute.xlu0 %6506
      %6508 = vrot.lane.b32.xlu0 %v5601, 32
      %v6509 = vpop.permute.xlu0 %6508
      %6510 = vrot.lane.b32.xlu0 %v5602, 32
      %v6511 = vpop.permute.xlu0 %6510
      %6512 = vrot.lane.b32.xlu0 %v5603, 32
      %v6513 = vpop.permute.xlu0 %6512
      %6514 = vrot.lane.b32.xlu0 %v5604, 32
      %v6515 = vpop.permute.xlu0 %6514
      %6516 = vrot.lane.b32.xlu0 %v5605, 32
      %v6517 = vpop.permute.xlu0 %6516
      %6518 = vrot.lane.b32.xlu0 %v5606, 32
      %v6519 = vpop.permute.xlu0 %6518
      %6520 = vrot.lane.b32.xlu0 %v5607, 32
      %v6521 = vpop.permute.xlu0 %6520
      %6522 = vrot.lane.b32.xlu0 %v5922, 32
      %v6523 = vpop.permute.xlu0 %6522
      %6524 = vrot.lane.b32.xlu0 %v5923, 32
      %v6525 = vpop.permute.xlu0 %6524
      %6590 = vrot.lane.b32.xlu0 %v5938, 40
      %v6591 = vpop.permute.xlu0 %6590
      %6592 = vrot.lane.b32.xlu0 %v5939, 40
      %v6593 = vpop.permute.xlu0 %6592
      %6594 = vrot.lane.b32.xlu0 %v5940, 40
      %v6595 = vpop.permute.xlu0 %6594
      %6596 = vrot.lane.b32.xlu0 %v5941, 40
      %v6597 = vpop.permute.xlu0 %6596
      %6598 = vrot.lane.b32.xlu0 %v5942, 40
      %v6599 = vpop.permute.xlu0 %6598
      %6600 = vrot.lane.b32.xlu0 %v5943, 40
      %v6601 = vpop.permute.xlu0 %6600
      %6602 = vrot.lane.b32.xlu0 %v5944, 40
      %v6603 = vpop.permute.xlu0 %6602
      %6604 = vrot.lane.b32.xlu0 %v5945, 40
      %v6605 = vpop.permute.xlu0 %6604
      %6606 = vrot.lane.b32.xlu0 %v5946, 40
      %v6607 = vpop.permute.xlu0 %6606
      %6608 = vrot.lane.b32.xlu0 %v5947, 40
      %v6609 = vpop.permute.xlu0 %6608
      %6610 = vrot.lane.b32.xlu0 %v5948, 40
      %v6611 = vpop.permute.xlu0 %6610
      %6612 = vrot.lane.b32.xlu0 %v5949, 40
      %v6613 = vpop.permute.xlu0 %6612
      %6614 = vrot.lane.b32.xlu0 %v5950, 40
      %v6615 = vpop.permute.xlu0 %6614
      %6616 = vrot.lane.b32.xlu0 %v5951, 40
      %v6617 = vpop.permute.xlu0 %6616
      %6618 = vrot.lane.b32.xlu0 %v5952, 40
      %v6619 = vpop.permute.xlu0 %6618
      %6620 = vrot.lane.b32.xlu0 %v5953, 40
      %v6621 = vpop.permute.xlu0 %6620
      %6622 = vrot.lane.b32.xlu0 %v5954, 40
      %v6623 = vpop.permute.xlu0 %6622
      %6624 = vrot.lane.b32.xlu0 %v5955, 40
      %v6625 = vpop.permute.xlu0 %6624
      %6626 = vrot.lane.b32.xlu0 %v5956, 40
      %v6627 = vpop.permute.xlu0 %6626
      %6628 = vrot.lane.b32.xlu0 %v5957, 40
      %v6629 = vpop.permute.xlu0 %6628
      %6630 = vrot.lane.b32.xlu0 %v5958, 40
      %v6631 = vpop.permute.xlu0 %6630
      %6632 = vrot.lane.b32.xlu0 %v5959, 40
      %v6633 = vpop.permute.xlu0 %6632
      %6634 = vrot.lane.b32.xlu0 %v5960, 40
      %v6635 = vpop.permute.xlu0 %6634
      %6636 = vrot.lane.b32.xlu0 %v5961, 40
      %v6637 = vpop.permute.xlu0 %6636
      %6638 = vrot.lane.b32.xlu0 %v5962, 40
      %v6639 = vpop.permute.xlu0 %6638
      %6640 = vrot.lane.b32.xlu0 %v5963, 40
      %v6641 = vpop.permute.xlu0 %6640
      %6642 = vrot.lane.b32.xlu0 %v5964, 40
      %v6643 = vpop.permute.xlu0 %6642
      %6644 = vrot.lane.b32.xlu0 %v5965, 40
      %v6645 = vpop.permute.xlu0 %6644
      %6646 = vrot.lane.b32.xlu0 %v5966, 40
      %v6647 = vpop.permute.xlu0 %6646
      %6648 = vrot.lane.b32.xlu0 %v5967, 40
      %v6649 = vpop.permute.xlu0 %6648
      %6650 = vrot.lane.b32.xlu0 %v5968, 40
      %v6651 = vpop.permute.xlu0 %6650
      %6652 = vrot.lane.b32.xlu0 %v5969, 40
      %v6653 = vpop.permute.xlu0 %6652
      %6718 = vrot.lane.b32.xlu0 %v5984, 48
      %v6719 = vpop.permute.xlu0 %6718
      %6720 = vrot.lane.b32.xlu0 %v5985, 48
      %v6721 = vpop.permute.xlu0 %6720
      %6722 = vrot.lane.b32.xlu0 %v5986, 48
      %v6723 = vpop.permute.xlu0 %6722
      %6724 = vrot.lane.b32.xlu0 %v5987, 48
      %v6725 = vpop.permute.xlu0 %6724
      %6726 = vrot.lane.b32.xlu0 %v5988, 48
      %v6727 = vpop.permute.xlu0 %6726
      %6728 = vrot.lane.b32.xlu0 %v5989, 48
      %v6729 = vpop.permute.xlu0 %6728
      %6730 = vrot.lane.b32.xlu0 %v5990, 48
      %v6731 = vpop.permute.xlu0 %6730
      %6732 = vrot.lane.b32.xlu0 %v5991, 48
      %v6733 = vpop.permute.xlu0 %6732
      %6734 = vrot.lane.b32.xlu0 %v5992, 48
      %v6735 = vpop.permute.xlu0 %6734
      %6736 = vrot.lane.b32.xlu0 %v5993, 48
      %v6737 = vpop.permute.xlu0 %6736
      %6738 = vrot.lane.b32.xlu0 %v5994, 48
      %v6739 = vpop.permute.xlu0 %6738
      %6740 = vrot.lane.b32.xlu0 %v5995, 48
      %v6741 = vpop.permute.xlu0 %6740
      %6742 = vrot.lane.b32.xlu0 %v5996, 48
      %v6743 = vpop.permute.xlu0 %6742
      %6744 = vrot.lane.b32.xlu0 %v5997, 48
      %v6745 = vpop.permute.xlu0 %6744
      %6746 = vrot.lane.b32.xlu0 %v5998, 48
      %v6747 = vpop.permute.xlu0 %6746
      %6748 = vrot.lane.b32.xlu0 %v5999, 48
      %v6749 = vpop.permute.xlu0 %6748
      %6750 = vrot.lane.b32.xlu0 %v6000, 48
      %v6751 = vpop.permute.xlu0 %6750
      %6752 = vrot.lane.b32.xlu0 %v6001, 48
      %v6753 = vpop.permute.xlu0 %6752
      %6754 = vrot.lane.b32.xlu0 %v6002, 48
      %v6755 = vpop.permute.xlu0 %6754
      %6756 = vrot.lane.b32.xlu0 %v6003, 48
      %v6757 = vpop.permute.xlu0 %6756
      %6758 = vrot.lane.b32.xlu0 %v6004, 48
      %v6759 = vpop.permute.xlu0 %6758
      %6760 = vrot.lane.b32.xlu0 %v6005, 48
      %v6761 = vpop.permute.xlu0 %6760
      %6762 = vrot.lane.b32.xlu0 %v6006, 48
      %v6763 = vpop.permute.xlu0 %6762
      %6764 = vrot.lane.b32.xlu0 %v6007, 48
      %v6765 = vpop.permute.xlu0 %6764
      %6766 = vrot.lane.b32.xlu0 %v6008, 48
      %v6767 = vpop.permute.xlu0 %6766
      %6768 = vrot.lane.b32.xlu0 %v6009, 48
      %v6769 = vpop.permute.xlu0 %6768
      %6770 = vrot.lane.b32.xlu0 %v6010, 48
      %v6771 = vpop.permute.xlu0 %6770
      %6772 = vrot.lane.b32.xlu0 %v6011, 48
      %v6773 = vpop.permute.xlu0 %6772
      %6774 = vrot.lane.b32.xlu0 %v6012, 48
      %v6775 = vpop.permute.xlu0 %6774
      %6776 = vrot.lane.b32.xlu0 %v6013, 48
      %v6777 = vpop.permute.xlu0 %6776
      %6778 = vrot.lane.b32.xlu0 %v6014, 48
      %v6779 = vpop.permute.xlu0 %6778
      %6780 = vrot.lane.b32.xlu0 %v6015, 48
      %v6781 = vpop.permute.xlu0 %6780
      %6816 = vrot.lane.b32.xlu0 %v5580, 56
      %v6817 = vpop.permute.xlu0 %6816
      %6818 = vrot.lane.b32.xlu0 %v5581, 56
      %v6819 = vpop.permute.xlu0 %6818
      %6820 = vrot.lane.b32.xlu0 %v5582, 56
      %v6821 = vpop.permute.xlu0 %6820
      %6822 = vrot.lane.b32.xlu0 %v5583, 56
      %v6823 = vpop.permute.xlu0 %6822
      %6824 = vrot.lane.b32.xlu0 %v5584, 56
      %v6825 = vpop.permute.xlu0 %6824
      %6826 = vrot.lane.b32.xlu0 %v5585, 56
      %v6827 = vpop.permute.xlu0 %6826
      %6828 = vrot.lane.b32.xlu0 %v5586, 56
      %v6829 = vpop.permute.xlu0 %6828
      %6830 = vrot.lane.b32.xlu0 %v5587, 56
      %v6831 = vpop.permute.xlu0 %6830
      %6832 = vrot.lane.b32.xlu0 %v5588, 56
      %v6833 = vpop.permute.xlu0 %6832
      %6834 = vrot.lane.b32.xlu0 %v5589, 56
      %v6835 = vpop.permute.xlu0 %6834
      %6836 = vrot.lane.b32.xlu0 %v5590, 56
      %v6837 = vpop.permute.xlu0 %6836
      %6838 = vrot.lane.b32.xlu0 %v5591, 56
      %v6839 = vpop.permute.xlu0 %6838
      %6840 = vrot.lane.b32.xlu0 %v5592, 56
      %v6841 = vpop.permute.xlu0 %6840
      %6842 = vrot.lane.b32.xlu0 %v5593, 56
      %v6843 = vpop.permute.xlu0 %6842
      %6844 = vrot.lane.b32.xlu0 %v5594, 56
      %v6845 = vpop.permute.xlu0 %6844
      %6846 = vrot.lane.b32.xlu0 %v5595, 56
      %v6847 = vpop.permute.xlu0 %6846
      %6848 = vrot.lane.b32.xlu0 %v5596, 56
      %v6849 = vpop.permute.xlu0 %6848
      %6850 = vrot.lane.b32.xlu0 %v5597, 56
      %v6851 = vpop.permute.xlu0 %6850
      %6852 = vrot.lane.b32.xlu0 %v5598, 56
      %v6853 = vpop.permute.xlu0 %6852
      %6854 = vrot.lane.b32.xlu0 %v5599, 56
      %v6855 = vpop.permute.xlu0 %6854
      %6856 = vrot.lane.b32.xlu0 %v5600, 56
      %v6857 = vpop.permute.xlu0 %6856
      %6858 = vrot.lane.b32.xlu0 %v5601, 56
      %v6859 = vpop.permute.xlu0 %6858
      %6860 = vrot.lane.b32.xlu0 %v5602, 56
      %v6861 = vpop.permute.xlu0 %6860
      %6862 = vrot.lane.b32.xlu0 %v5603, 56
      %v6863 = vpop.permute.xlu0 %6862
      %6864 = vrot.lane.b32.xlu0 %v5604, 56
      %v6865 = vpop.permute.xlu0 %6864
      %6866 = vrot.lane.b32.xlu0 %v5605, 56
      %v6867 = vpop.permute.xlu0 %6866
      %6868 = vrot.lane.b32.xlu0 %v5606, 56
      %v6869 = vpop.permute.xlu0 %6868
      %6870 = vrot.lane.b32.xlu0 %v5607, 56
      %v6871 = vpop.permute.xlu0 %6870
      %6872 = vrot.lane.b32.xlu0 %v5922, 56
      %v6873 = vpop.permute.xlu0 %6872
      %6874 = vrot.lane.b32.xlu0 %v5923, 56
      %v6875 = vpop.permute.xlu0 %6874
      %6876 = vrot.lane.b32.xlu0 %v6028, 56
      %v6877 = vpop.permute.xlu0 %6876
      %6878 = vrot.lane.b32.xlu0 %v6029, 56
      %v6879 = vpop.permute.xlu0 %6878
      %6944 = vrot.lane.b32.xlu0 %v6044, 64
      %v6945 = vpop.permute.xlu0 %6944
      %6946 = vrot.lane.b32.xlu0 %v6045, 64
      %v6947 = vpop.permute.xlu0 %6946
      %6948 = vrot.lane.b32.xlu0 %v6046, 64
      %v6949 = vpop.permute.xlu0 %6948
      %6950 = vrot.lane.b32.xlu0 %v6047, 64
      %v6951 = vpop.permute.xlu0 %6950
      %6952 = vrot.lane.b32.xlu0 %v6048, 64
      %v6953 = vpop.permute.xlu0 %6952
      %6954 = vrot.lane.b32.xlu0 %v6049, 64
      %v6955 = vpop.permute.xlu0 %6954
      %6956 = vrot.lane.b32.xlu0 %v6050, 64
      %v6957 = vpop.permute.xlu0 %6956
      %6958 = vrot.lane.b32.xlu0 %v6051, 64
      %v6959 = vpop.permute.xlu0 %6958
      %6960 = vrot.lane.b32.xlu0 %v6052, 64
      %v6961 = vpop.permute.xlu0 %6960
      %6962 = vrot.lane.b32.xlu0 %v6053, 64
      %v6963 = vpop.permute.xlu0 %6962
      %6964 = vrot.lane.b32.xlu0 %v6054, 64
      %v6965 = vpop.permute.xlu0 %6964
      %6966 = vrot.lane.b32.xlu0 %v6055, 64
      %v6967 = vpop.permute.xlu0 %6966
      %6968 = vrot.lane.b32.xlu0 %v6056, 64
      %v6969 = vpop.permute.xlu0 %6968
      %6970 = vrot.lane.b32.xlu0 %v6057, 64
      %v6971 = vpop.permute.xlu0 %6970
      %6972 = vrot.lane.b32.xlu0 %v6058, 64
      %v6973 = vpop.permute.xlu0 %6972
      %6974 = vrot.lane.b32.xlu0 %v6059, 64
      %v6975 = vpop.permute.xlu0 %6974
      %6976 = vrot.lane.b32.xlu0 %v6060, 64
      %v6977 = vpop.permute.xlu0 %6976
      %6978 = vrot.lane.b32.xlu0 %v6061, 64
      %v6979 = vpop.permute.xlu0 %6978
      %6980 = vrot.lane.b32.xlu0 %v6062, 64
      %v6981 = vpop.permute.xlu0 %6980
      %6982 = vrot.lane.b32.xlu0 %v6063, 64
      %v6983 = vpop.permute.xlu0 %6982
      %6984 = vrot.lane.b32.xlu0 %v6064, 64
      %v6985 = vpop.permute.xlu0 %6984
      %6986 = vrot.lane.b32.xlu0 %v6065, 64
      %v6987 = vpop.permute.xlu0 %6986
      %6988 = vrot.lane.b32.xlu0 %v6066, 64
      %v6989 = vpop.permute.xlu0 %6988
      %6990 = vrot.lane.b32.xlu0 %v6067, 64
      %v6991 = vpop.permute.xlu0 %6990
      %6992 = vrot.lane.b32.xlu0 %v6068, 64
      %v6993 = vpop.permute.xlu0 %6992
      %6994 = vrot.lane.b32.xlu0 %v6069, 64
      %v6995 = vpop.permute.xlu0 %6994
      %6996 = vrot.lane.b32.xlu0 %v6070, 64
      %v6997 = vpop.permute.xlu0 %6996
      %6998 = vrot.lane.b32.xlu0 %v6071, 64
      %v6999 = vpop.permute.xlu0 %6998
      %7000 = vrot.lane.b32.xlu0 %v6072, 64
      %v7001 = vpop.permute.xlu0 %7000
      %7002 = vrot.lane.b32.xlu0 %v6073, 64
      %v7003 = vpop.permute.xlu0 %7002
      %7004 = vrot.lane.b32.xlu0 %v6074, 64
      %v7005 = vpop.permute.xlu0 %7004
      %7006 = vrot.lane.b32.xlu0 %v6075, 64
      %v7007 = vpop.permute.xlu0 %7006
      %v7040 = vsel %vm2332, %v5352, %v6109
      %v7041 = vsel %vm2332, %v5353, %v6111
      %v7042 = vsel %vm2332, %v5354, %v6113
      %v7043 = vsel %vm2332, %v5355, %v6115
      %v7044 = vsel %vm2332, %v5356, %v6117
      %v7045 = vsel %vm2332, %v5357, %v6119
      %v7046 = vsel %vm2332, %v5358, %v6121
      %v7047 = vsel %vm2332, %v5359, %v6123
      %v7048 = vsel %vm2332, %v5360, %v6125
      %v7049 = vsel %vm2332, %v5361, %v6127
      %v7050 = vsel %vm2332, %v5362, %v6129
      %v7051 = vsel %vm2332, %v5363, %v6131
      %v7052 = vsel %vm2332, %v5364, %v6133
      %v7053 = vsel %vm2332, %v5365, %v6135
      %v7054 = vsel %vm2332, %v5366, %v6137
      %v7055 = vsel %vm2332, %v5367, %v6139
      %v7056 = vsel %vm2332, %v5368, %v6141
      %v7057 = vsel %vm2332, %v5369, %v6143
      %v7058 = vsel %vm2332, %v5370, %v6145
      %v7059 = vsel %vm2332, %v5371, %v6147
      %v7060 = vsel %vm2332, %v5372, %v6149
      %v7061 = vsel %vm2332, %v5373, %v6151
      %v7062 = vsel %vm2332, %v5374, %v6153
      %v7063 = vsel %vm2332, %v5375, %v6155
      %v7064 = vsel %vm2332, %v5376, %v6157
      %v7065 = vsel %vm2332, %v5377, %v6159
      %v7066 = vsel %vm2332, %v5378, %v6161
      %v7067 = vsel %vm2332, %v5379, %v6163
      %v7068 = vsel %vm2332, %v5380, %v6165
      %v7069 = vsel %vm2332, %v5381, %v6167
      %v7070 = vsel %vm2332, %v5382, %v6169
      %v7071 = vsel %vm2332, %v5383, %v6171
      %v7072 = vsel %vm2398, %v7040, %v6237
      %v7073 = vsel %vm2398, %v7041, %v6239
      %v7074 = vsel %vm2398, %v7042, %v6241
      %v7075 = vsel %vm2398, %v7043, %v6243
      %v7076 = vsel %vm2398, %v7044, %v6245
      %v7077 = vsel %vm2398, %v7045, %v6247
      %v7078 = vsel %vm2398, %v7046, %v6249
      %v7079 = vsel %vm2398, %v7047, %v6251
      %v7080 = vsel %vm2398, %v7048, %v6253
      %v7081 = vsel %vm2398, %v7049, %v6255
      %v7082 = vsel %vm2398, %v7050, %v6257
      %v7083 = vsel %vm2398, %v7051, %v6259
      %v7084 = vsel %vm2398, %v7052, %v6261
      %v7085 = vsel %vm2398, %v7053, %v6263
      %v7086 = vsel %vm2398, %v7054, %v6265
      %v7087 = vsel %vm2398, %v7055, %v6267
      %v7088 = vsel %vm2398, %v7056, %v6269
      %v7089 = vsel %vm2398, %v7057, %v6271
      %v7090 = vsel %vm2398, %v7058, %v6273
      %v7091 = vsel %vm2398, %v7059, %v6275
      %v7092 = vsel %vm2398, %v7060, %v6277
      %v7093 = vsel %vm2398, %v7061, %v6279
      %v7094 = vsel %vm2398, %v7062, %v6281
      %v7095 = vsel %vm2398, %v7063, %v6283
      %v7096 = vsel %vm2398, %v7064, %v6285
      %v7097 = vsel %vm2398, %v7065, %v6287
      %v7098 = vsel %vm2398, %v7066, %v6289
      %v7099 = vsel %vm2398, %v7067, %v6291
      %v7100 = vsel %vm2398, %v7068, %v6293
      %v7101 = vsel %vm2398, %v7069, %v6295
      %v7102 = vsel %vm2398, %v7070, %v6297
      %v7103 = vsel %vm2398, %v7071, %v6299
      %v7104 = vsel %vm2464, %v7072, %v6365
      %v7105 = vsel %vm2464, %v7073, %v6367
      %v7106 = vsel %vm2464, %v7074, %v6369
      %v7107 = vsel %vm2464, %v7075, %v6371
      %v7108 = vsel %vm2464, %v7076, %v6373
      %v7109 = vsel %vm2464, %v7077, %v6375
      %v7110 = vsel %vm2464, %v7078, %v6377
      %v7111 = vsel %vm2464, %v7079, %v6379
      %v7112 = vsel %vm2464, %v7080, %v6381
      %v7113 = vsel %vm2464, %v7081, %v6383
      %v7114 = vsel %vm2464, %v7082, %v6385
      %v7115 = vsel %vm2464, %v7083, %v6387
      %v7116 = vsel %vm2464, %v7084, %v6389
      %v7117 = vsel %vm2464, %v7085, %v6391
      %v7118 = vsel %vm2464, %v7086, %v6393
      %v7119 = vsel %vm2464, %v7087, %v6395
      %v7120 = vsel %vm2464, %v7088, %v6397
      %v7121 = vsel %vm2464, %v7089, %v6399
      %v7122 = vsel %vm2464, %v7090, %v6401
      %v7123 = vsel %vm2464, %v7091, %v6403
      %v7124 = vsel %vm2464, %v7092, %v6405
      %v7125 = vsel %vm2464, %v7093, %v6407
      %v7126 = vsel %vm2464, %v7094, %v6409
      %v7127 = vsel %vm2464, %v7095, %v6411
      %v7128 = vsel %vm2464, %v7096, %v6413
      %v7129 = vsel %vm2464, %v7097, %v6415
      %v7130 = vsel %vm2464, %v7098, %v6417
      %v7131 = vsel %vm2464, %v7099, %v6419
      %v7132 = vsel %vm2464, %v7100, %v6421
      %v7133 = vsel %vm2464, %v7101, %v6423
      %v7134 = vsel %vm2464, %v7102, %v6425
      %v7135 = vsel %vm2464, %v7103, %v6427
      %v7136 = vsel %vm899, %v7104, %v6463
      %v7137 = vsel %vm899, %v7105, %v6465
      %v7138 = vsel %vm899, %v7106, %v6467
      %v7139 = vsel %vm899, %v7107, %v6469
      %v7140 = vsel %vm899, %v7108, %v6471
      %v7141 = vsel %vm899, %v7109, %v6473
      %v7142 = vsel %vm899, %v7110, %v6475
      %v7143 = vsel %vm899, %v7111, %v6477
      %v7144 = vsel %vm899, %v7112, %v6479
      %v7145 = vsel %vm899, %v7113, %v6481
      %v7146 = vsel %vm899, %v7114, %v6483
      %v7147 = vsel %vm899, %v7115, %v6485
      %v7148 = vsel %vm899, %v7116, %v6487
      %v7149 = vsel %vm899, %v7117, %v6489
      %v7150 = vsel %vm899, %v7118, %v6491
      %v7151 = vsel %vm899, %v7119, %v6493
      %v7152 = vsel %vm899, %v7120, %v6495
      %v7153 = vsel %vm899, %v7121, %v6497
      %v7154 = vsel %vm899, %v7122, %v6499
      %v7155 = vsel %vm899, %v7123, %v6501
      %v7156 = vsel %vm899, %v7124, %v6503
      %v7157 = vsel %vm899, %v7125, %v6505
      %v7158 = vsel %vm899, %v7126, %v6507
      %v7159 = vsel %vm899, %v7127, %v6509
      %v7160 = vsel %vm899, %v7128, %v6511
      %v7161 = vsel %vm899, %v7129, %v6513
      %v7162 = vsel %vm899, %v7130, %v6515
      %v7163 = vsel %vm899, %v7131, %v6517
      %v7164 = vsel %vm899, %v7132, %v6519
      %v7165 = vsel %vm899, %v7133, %v6521
      %v7166 = vsel %vm899, %v7134, %v6523
      %v7167 = vsel %vm899, %v7135, %v6525
      %vm7168 = vcmask 326656
      %v7169 = vsel %vm7168, %v7136, %v6591
      %v7170 = vsel %vm7168, %v7137, %v6593
      %v7171 = vsel %vm7168, %v7138, %v6595
      %v7172 = vsel %vm7168, %v7139, %v6597
      %v7173 = vsel %vm7168, %v7140, %v6599
      %v7174 = vsel %vm7168, %v7141, %v6601
      %v7175 = vsel %vm7168, %v7142, %v6603
      %v7176 = vsel %vm7168, %v7143, %v6605
      %v7177 = vsel %vm7168, %v7144, %v6607
      %v7178 = vsel %vm7168, %v7145, %v6609
      %v7179 = vsel %vm7168, %v7146, %v6611
      %v7180 = vsel %vm7168, %v7147, %v6613
      %v7181 = vsel %vm7168, %v7148, %v6615
      %v7182 = vsel %vm7168, %v7149, %v6617
      %v7183 = vsel %vm7168, %v7150, %v6619
      %v7184 = vsel %vm7168, %v7151, %v6621
      %v7185 = vsel %vm7168, %v7152, %v6623
      %v7186 = vsel %vm7168, %v7153, %v6625
      %v7187 = vsel %vm7168, %v7154, %v6627
      %v7188 = vsel %vm7168, %v7155, %v6629
      %v7189 = vsel %vm7168, %v7156, %v6631
      %v7190 = vsel %vm7168, %v7157, %v6633
      %v7191 = vsel %vm7168, %v7158, %v6635
      %v7192 = vsel %vm7168, %v7159, %v6637
      %v7193 = vsel %vm7168, %v7160, %v6639
      %v7194 = vsel %vm7168, %v7161, %v6641
      %v7195 = vsel %vm7168, %v7162, %v6643
      %v7196 = vsel %vm7168, %v7163, %v6645
      %v7197 = vsel %vm7168, %v7164, %v6647
      %v7198 = vsel %vm7168, %v7165, %v6649
      %v7199 = vsel %vm7168, %v7166, %v6651
      %v7200 = vsel %vm7168, %v7167, %v6653
      %vm7201 = vcmask 392192
      %v7202 = vsel %vm7201, %v7169, %v6719
      %v7203 = vsel %vm7201, %v7170, %v6721
      %v7204 = vsel %vm7201, %v7171, %v6723
      %v7205 = vsel %vm7201, %v7172, %v6725
      %v7206 = vsel %vm7201, %v7173, %v6727
      %v7207 = vsel %vm7201, %v7174, %v6729
      %v7208 = vsel %vm7201, %v7175, %v6731
      %v7209 = vsel %vm7201, %v7176, %v6733
      %v7210 = vsel %vm7201, %v7177, %v6735
      %v7211 = vsel %vm7201, %v7178, %v6737
      %v7212 = vsel %vm7201, %v7179, %v6739
      %v7213 = vsel %vm7201, %v7180, %v6741
      %v7214 = vsel %vm7201, %v7181, %v6743
      %v7215 = vsel %vm7201, %v7182, %v6745
      %v7216 = vsel %vm7201, %v7183, %v6747
      %v7217 = vsel %vm7201, %v7184, %v6749
      %v7218 = vsel %vm7201, %v7185, %v6751
      %v7219 = vsel %vm7201, %v7186, %v6753
      %v7220 = vsel %vm7201, %v7187, %v6755
      %v7221 = vsel %vm7201, %v7188, %v6757
      %v7222 = vsel %vm7201, %v7189, %v6759
      %v7223 = vsel %vm7201, %v7190, %v6761
      %v7224 = vsel %vm7201, %v7191, %v6763
      %v7225 = vsel %vm7201, %v7192, %v6765
      %v7226 = vsel %vm7201, %v7193, %v6767
      %v7227 = vsel %vm7201, %v7194, %v6769
      %v7228 = vsel %vm7201, %v7195, %v6771
      %v7229 = vsel %vm7201, %v7196, %v6773
      %v7230 = vsel %vm7201, %v7197, %v6775
      %v7231 = vsel %vm7201, %v7198, %v6777
      %v7232 = vsel %vm7201, %v7199, %v6779
      %v7233 = vsel %vm7201, %v7200, %v6781
      %vm7234 = vcmask 457728
      %v7235 = vsel %vm7234, %v7202, %v6817
      %v7236 = vsel %vm7234, %v7203, %v6819
      %v7237 = vsel %vm7234, %v7204, %v6821
      %v7238 = vsel %vm7234, %v7205, %v6823
      %v7239 = vsel %vm7234, %v7206, %v6825
      %v7240 = vsel %vm7234, %v7207, %v6827
      %v7241 = vsel %vm7234, %v7208, %v6829
      %v7242 = vsel %vm7234, %v7209, %v6831
      %v7243 = vsel %vm7234, %v7210, %v6833
      %v7244 = vsel %vm7234, %v7211, %v6835
      %v7245 = vsel %vm7234, %v7212, %v6837
      %v7246 = vsel %vm7234, %v7213, %v6839
      %v7247 = vsel %vm7234, %v7214, %v6841
      %v7248 = vsel %vm7234, %v7215, %v6843
      %v7249 = vsel %vm7234, %v7216, %v6845
      %v7250 = vsel %vm7234, %v7217, %v6847
      %v7251 = vsel %vm7234, %v7218, %v6849
      %v7252 = vsel %vm7234, %v7219, %v6851
      %v7253 = vsel %vm7234, %v7220, %v6853
      %v7254 = vsel %vm7234, %v7221, %v6855
      %v7255 = vsel %vm7234, %v7222, %v6857
      %v7256 = vsel %vm7234, %v7223, %v6859
      %v7257 = vsel %vm7234, %v7224, %v6861
      %v7258 = vsel %vm7234, %v7225, %v6863
      %v7259 = vsel %vm7234, %v7226, %v6865
      %v7260 = vsel %vm7234, %v7227, %v6867
      %v7261 = vsel %vm7234, %v7228, %v6869
      %v7262 = vsel %vm7234, %v7229, %v6871
      %v7263 = vsel %vm7234, %v7230, %v6873
      %v7264 = vsel %vm7234, %v7231, %v6875
      %v7265 = vsel %vm7234, %v7232, %v6877
      %v7266 = vsel %vm7234, %v7233, %v6879
      %v7267 = vsel %vm4144, %v7235, %v6945
      %v7268 = vsel %vm4144, %v7236, %v6947
      %v7269 = vsel %vm4144, %v7237, %v6949
      %v7270 = vsel %vm4144, %v7238, %v6951
      %v7271 = vsel %vm4144, %v7239, %v6953
      %v7272 = vsel %vm4144, %v7240, %v6955
      %v7273 = vsel %vm4144, %v7241, %v6957
      %v7274 = vsel %vm4144, %v7242, %v6959
      %v7275 = vsel %vm4144, %v7243, %v6961
      %v7276 = vsel %vm4144, %v7244, %v6963
      %v7277 = vsel %vm4144, %v7245, %v6965
      %v7278 = vsel %vm4144, %v7246, %v6967
      %v7279 = vsel %vm4144, %v7247, %v6969
      %v7280 = vsel %vm4144, %v7248, %v6971
      %v7281 = vsel %vm4144, %v7249, %v6973
      %v7282 = vsel %vm4144, %v7250, %v6975
      %v7283 = vsel %vm4144, %v7251, %v6977
      %v7284 = vsel %vm4144, %v7252, %v6979
      %v7285 = vsel %vm4144, %v7253, %v6981
      %v7286 = vsel %vm4144, %v7254, %v6983
      %v7287 = vsel %vm4144, %v7255, %v6985
      %v7288 = vsel %vm4144, %v7256, %v6987
      %v7289 = vsel %vm4144, %v7257, %v6989
      %v7290 = vsel %vm4144, %v7258, %v6991
      %v7291 = vsel %vm4144, %v7259, %v6993
      %v7292 = vsel %vm4144, %v7260, %v6995
      %v7293 = vsel %vm4144, %v7261, %v6997
      %v7294 = vsel %vm4144, %v7262, %v6999
      %v7295 = vsel %vm4144, %v7263, %v7001
      %v7296 = vsel %vm4144, %v7264, %v7003
      %v7297 = vsel %vm4144, %v7265, %v7005
      %v7298 = vsel %vm4144, %v7266, %v7007
      %v7299 = vpack.c.bf16 %v7268, %v7267
      %v7300 = vpack.c.bf16 %v7270, %v7269
      %v7301 = vpack.c.bf16 %v7272, %v7271
      %v7302 = vpack.c.bf16 %v7274, %v7273
      %v7303 = vpack.c.bf16 %v7276, %v7275
      %v7304 = vpack.c.bf16 %v7278, %v7277
      %v7305 = vpack.c.bf16 %v7280, %v7279
      %v7306 = vpack.c.bf16 %v7282, %v7281
      %v7307 = vpack.c.bf16 %v7284, %v7283
      %v7308 = vpack.c.bf16 %v7286, %v7285
      %v7309 = vpack.c.bf16 %v7288, %v7287
      %v7310 = vpack.c.bf16 %v7290, %v7289
      %v7311 = vpack.c.bf16 %v7292, %v7291
      %v7312 = vpack.c.bf16 %v7294, %v7293
      %v7313 = vpack.c.bf16 %v7296, %v7295
      %v7314 = vpack.c.bf16 %v7298, %v7297
      %v7315 = vld [vmem:[%s6] sm:$0xf]
      %v7316 = vld [vmem:[%s6 + $0x4] sm:$0xf]
      %v7317 = vld [vmem:[%s6 + $0x8] sm:$0xf]
      %v7318 = vld [vmem:[%s6 + $0xc] sm:$0xf]
      %v7319 = vld [vmem:[%s6 + $0x10] sm:$0xf]
      %v7320 = vld [vmem:[%s6 + $0x14] sm:$0xf]
      %v7321 = vld [vmem:[%s6 + $0x18] sm:$0xf]
      %v7322 = vld [vmem:[%s6 + $0x1c] sm:$0xf]
      %v7323 = vld [vmem:[%s6 + $0x20] sm:$0xf]
      %v7324 = vlaneseq
      %v7325 = vshrl.u32 %v7324, 7
      %v7326 = vsub.s32 2, %v7325
      %v7327 = vrot.slane %v906, %v7326
      %v7337 = vunpack.c.l.b16 %v7315
      %v7338 = vunpack.c.l.b16 %v7316
      %v7339 = vunpack.c.l.b16 %v7317
      %v7340 = vunpack.c.l.b16 %v7318
      %v7341 = vunpack.c.l.b16 %v7319
      %v7342 = vunpack.c.l.b16 %v7320
      %v7343 = vunpack.c.l.b16 %v7321
      %v7344 = vunpack.c.l.b16 %v7322
      %v7345 = vunpack.c.l.b16 %v7323
      %v7346 = vpack.c.b16 %v7338, %v7337
      %v7347 = vpack.c.b16 %v7340, %v7339
      %v7348 = vpack.c.b16 %v7342, %v7341
      %v7349 = vpack.c.b16 %v7344, %v7343
      %v7350 = vpack.c.b16 %v7345, %v7345
      %vm7355 = vcmask 588800
      %v7357 = vsel %vm7355, %v7299, 0
      %v7360 = vsel %vm7355, %v7300, 0
      %v7363 = vsel %vm7355, %v7301, 0
      %v7366 = vsel %vm7355, %v7302, 0
      %v7369 = vsel %vm7355, %v7303, 0
      %v7372 = vsel %vm7355, %v7304, 0
      %v7375 = vsel %vm7355, %v7305, 0
      %v7378 = vsel %vm7355, %v7306, 0
      %v7381 = vsel %vm7355, %v7307, 0
      %v7384 = vsel %vm7355, %v7308, 0
      %v7387 = vsel %vm7355, %v7309, 0
      %v7390 = vsel %vm7355, %v7310, 0
      %v7393 = vsel %vm7355, %v7311, 0
      %v7396 = vsel %vm7355, %v7312, 0
      %v7399 = vsel %vm7355, %v7313, 0
      %v7402 = vsel %vm7355, %v7314, 0
      %vm7404 = vcmask 1043456
      %v7406 = vsel %vm7404, %v7350, 0
      %7408 = vmatprep.subr.bf16.mxu0 0
      %7409 = vmatpush1.bf16.msra.mxu0 0
      %7410 = vmatprep.subr.bf16.mxu0 0
      %7411 = vmatpush1.bf16.msra.mxu0 0
      %7412 = vmatprep.subr.bf16.mxu0 0
      %7413 = vmatpush1.bf16.msra.mxu0 0
      %7414 = vmatprep.subr.bf16.mxu0 0
      %7415 = vmatpush1.bf16.msra.mxu0 %v7406
      %7416 = vmatprep.subr.bf16.mxu0 0
      %7417 = vmatpush1.bf16.msra.mxu0 %v7349
      %7418 = vmatprep.subr.bf16.mxu0 0
      %7419 = vmatpush1.bf16.msra.mxu0 %v7348
      %7420 = vmatprep.subr.bf16.mxu0 0
      %7421 = vmatpush1.bf16.msra.mxu0 %v7347
      %7422 = vmatprep.subr.bf16.mxu0 0
      %7423 = vmatpush1.bf16.msra.mxu0 %v7346
      %7424 = vmatprep.subr.bf16.mxu0 0
      %7425 = vmatpush2.bf16.msra.mxu0 0
      %7426 = vmatprep.subr.bf16.mxu0 0
      %7427 = vmatpush2.bf16.msra.mxu0 0
      %7428 = vmatprep.subr.bf16.mxu0 0
      %7429 = vmatpush2.bf16.msra.mxu0 0
      %7430 = vmatprep.subr.bf16.mxu0 0
      %7431 = vmatpush2.bf16.msra.mxu0 0
      %7432 = vmatprep.subr.bf16.mxu0 0
      %7433 = vmatpush2.bf16.msra.mxu0 0
      %7434 = vmatprep.subr.bf16.mxu0 0
      %7435 = vmatpush2.bf16.msra.mxu0 0
      %7436 = vmatprep.subr.bf16.mxu0 0
      %7437 = vmatpush2.bf16.msra.mxu0 0
      %7438 = vmatprep.subr.bf16.mxu0 0
      %7439 = vmatpush2.bf16.msra.mxu0 0
      %7440 = vmatprep.mubr.bf16.mxu0 0
      %7441 = vmatmul.mubr.bf16.gmra.mxu0 %v7357
      %v7442 = vpop.f32.mrf.mxu0
      %v7443 = vadd.f32 %v7327, %v7442
      %v7444 = vpop.f32.mrf.mxu0
      %v7445 = vpop.f32.mrf.mxu0
      %v7446 = vadd.f32 %v7327, %v7445
      %v7447 = vpop.f32.mrf.mxu0
      %7448 = vmatprep.mubr.bf16.mxu0 0
      %7449 = vmatmul.mubr.bf16.gmra.mxu0 %v7360
      %v7450 = vpop.f32.mrf.mxu0
      %v7451 = vadd.f32 %v7327, %v7450
      %v7452 = vpop.f32.mrf.mxu0
      %v7453 = vpop.f32.mrf.mxu0
      %v7454 = vadd.f32 %v7327, %v7453
      %v7455 = vpop.f32.mrf.mxu0
      %7456 = vmatprep.mubr.bf16.mxu0 0
      %7457 = vmatmul.mubr.bf16.gmra.mxu0 %v7363
      %v7458 = vpop.f32.mrf.mxu0
      %v7459 = vadd.f32 %v7327, %v7458
      %v7460 = vpop.f32.mrf.mxu0
      %v7461 = vpop.f32.mrf.mxu0
      %v7462 = vadd.f32 %v7327, %v7461
      %v7463 = vpop.f32.mrf.mxu0
      %7464 = vmatprep.mubr.bf16.mxu0 0
      %7465 = vmatmul.mubr.bf16.gmra.mxu0 %v7366
      %v7466 = vpop.f32.mrf.mxu0
      %v7467 = vadd.f32 %v7327, %v7466
      %v7468 = vpop.f32.mrf.mxu0
      %v7469 = vpop.f32.mrf.mxu0
      %v7470 = vadd.f32 %v7327, %v7469
      %v7471 = vpop.f32.mrf.mxu0
      %7472 = vmatprep.mubr.bf16.mxu0 0
      %7473 = vmatmul.mubr.bf16.gmra.mxu0 %v7369
      %v7474 = vpop.f32.mrf.mxu0
      %v7475 = vadd.f32 %v7327, %v7474
      %v7476 = vpop.f32.mrf.mxu0
      %v7477 = vpop.f32.mrf.mxu0
      %v7478 = vadd.f32 %v7327, %v7477
      %v7479 = vpop.f32.mrf.mxu0
      %7480 = vmatprep.mubr.bf16.mxu0 0
      %7481 = vmatmul.mubr.bf16.gmra.mxu0 %v7372
      %v7482 = vpop.f32.mrf.mxu0
      %v7483 = vadd.f32 %v7327, %v7482
      %v7484 = vpop.f32.mrf.mxu0
      %v7485 = vpop.f32.mrf.mxu0
      %v7486 = vadd.f32 %v7327, %v7485
      %v7487 = vpop.f32.mrf.mxu0
      %7488 = vmatprep.mubr.bf16.mxu0 0
      %7489 = vmatmul.mubr.bf16.gmra.mxu0 %v7375
      %v7490 = vpop.f32.mrf.mxu0
      %v7491 = vadd.f32 %v7327, %v7490
      %v7492 = vpop.f32.mrf.mxu0
      %v7493 = vpop.f32.mrf.mxu0
      %v7494 = vadd.f32 %v7327, %v7493
      %v7495 = vpop.f32.mrf.mxu0
      %7496 = vmatprep.mubr.bf16.mxu0 0
      %7497 = vmatmul.mubr.bf16.gmra.mxu0 %v7378
      %v7498 = vpop.f32.mrf.mxu0
      %v7499 = vadd.f32 %v7327, %v7498
      %v7500 = vpop.f32.mrf.mxu0
      %v7501 = vpop.f32.mrf.mxu0
      %v7502 = vadd.f32 %v7327, %v7501
      %v7503 = vpop.f32.mrf.mxu0
      %7504 = vmatprep.mubr.bf16.mxu0 0
      %7505 = vmatmul.mubr.bf16.gmra.mxu0 %v7381
      %v7506 = vpop.f32.mrf.mxu0
      %v7507 = vadd.f32 %v7327, %v7506
      %v7508 = vpop.f32.mrf.mxu0
      %v7509 = vpop.f32.mrf.mxu0
      %v7510 = vadd.f32 %v7327, %v7509
      %v7511 = vpop.f32.mrf.mxu0
      %7512 = vmatprep.mubr.bf16.mxu0 0
      %7513 = vmatmul.mubr.bf16.gmra.mxu0 %v7384
      %v7514 = vpop.f32.mrf.mxu0
      %v7515 = vadd.f32 %v7327, %v7514
      %v7516 = vpop.f32.mrf.mxu0
      %v7517 = vpop.f32.mrf.mxu0
      %v7518 = vadd.f32 %v7327, %v7517
      %v7519 = vpop.f32.mrf.mxu0
      %7520 = vmatprep.mubr.bf16.mxu0 0
      %7521 = vmatmul.mubr.bf16.gmra.mxu0 %v7387
      %v7522 = vpop.f32.mrf.mxu0
      %v7523 = vadd.f32 %v7327, %v7522
      %v7524 = vpop.f32.mrf.mxu0
      %v7525 = vpop.f32.mrf.mxu0
      %v7526 = vadd.f32 %v7327, %v7525
      %v7527 = vpop.f32.mrf.mxu0
      %7528 = vmatprep.mubr.bf16.mxu0 0
      %7529 = vmatmul.mubr.bf16.gmra.mxu0 %v7390
      %v7530 = vpop.f32.mrf.mxu0
      %v7531 = vadd.f32 %v7327, %v7530
      %v7532 = vpop.f32.mrf.mxu0
      %v7533 = vpop.f32.mrf.mxu0
      %v7534 = vadd.f32 %v7327, %v7533
      %v7535 = vpop.f32.mrf.mxu0
      %7536 = vmatprep.mubr.bf16.mxu0 0
      %7537 = vmatmul.mubr.bf16.gmra.mxu0 %v7393
      %v7538 = vpop.f32.mrf.mxu0
      %v7539 = vadd.f32 %v7327, %v7538
      %v7540 = vpop.f32.mrf.mxu0
      %v7541 = vpop.f32.mrf.mxu0
      %v7542 = vadd.f32 %v7327, %v7541
      %v7543 = vpop.f32.mrf.mxu0
      %7544 = vmatprep.mubr.bf16.mxu0 0
      %7545 = vmatmul.mubr.bf16.gmra.mxu0 %v7396
      %v7546 = vpop.f32.mrf.mxu0
      %v7547 = vadd.f32 %v7327, %v7546
      %v7548 = vpop.f32.mrf.mxu0
      %v7549 = vpop.f32.mrf.mxu0
      %v7550 = vadd.f32 %v7327, %v7549
      %v7551 = vpop.f32.mrf.mxu0
      %7552 = vmatprep.mubr.bf16.mxu0 0
      %7553 = vmatmul.mubr.bf16.gmra.mxu0 %v7399
      %v7554 = vpop.f32.mrf.mxu0
      %v7555 = vadd.f32 %v7327, %v7554
      %v7556 = vpop.f32.mrf.mxu0
      %v7557 = vpop.f32.mrf.mxu0
      %v7558 = vadd.f32 %v7327, %v7557
      %v7559 = vpop.f32.mrf.mxu0
      %7560 = vmatprep.mubr.bf16.mxu0 0
      %7561 = vmatmul.mubr.bf16.gmra.mxu0 %v7402
      %v7562 = vpop.f32.mrf.mxu0
      %v7563 = vadd.f32 %v7327, %v7562
      %v7564 = vpop.f32.mrf.mxu0
      %v7565 = vpop.f32.mrf.mxu0
      %v7566 = vadd.f32 %v7327, %v7565
      %v7567 = vpop.f32.mrf.mxu0
      %7568 = vdwg.mxu0
      %v7569 = vld [vmem:[#allocation2 + $0x18] sm:$0xff]
      %v7570 = vld [vmem:[#allocation2 + $0x20] sm:$0xff]
      %v7571 = vld [vmem:[#allocation2 + $0x28] sm:$0xff]
      %v7572 = vld [vmem:[#allocation2 + $0x30] sm:$0xff]
      %v7573 = vld [vmem:[#allocation2 + $0x38] sm:$0xff]
      %v7574 = vld [vmem:[#allocation2 + $0x40] sm:$0xff]
      %v7575 = vld [vmem:[#allocation2 + $0x48] sm:$0xff]
      %v7576 = vld [vmem:[#allocation2 + $0x50] sm:$0xff]
      %v7577 = vld [vmem:[#allocation2 + $0x58] sm:$0xff]
      %v7578 = vld [vmem:[#allocation2 + $0x60] sm:$0xff]
      %v7579 = vld [vmem:[#allocation2 + $0x68] sm:$0xff]
      %v7580 = vld [vmem:[#allocation2 + $0x70] sm:$0xff]
      %v7581 = vld [vmem:[#allocation2 + $0x78] sm:$0xff]
      %v7582 = vld [vmem:[#allocation2 + $0x80] sm:$0xff]
      %v7583 = vld [vmem:[#allocation2 + $0x88] sm:$0xff]
      %v7584 = vld [vmem:[#allocation2 + $0x90] sm:$0xff]
      %v7585 = vld [vmem:[#allocation2 + $0x98] sm:$0xff]
      %v7586 = vld [vmem:[#allocation2 + $0xa0] sm:$0xff]
      %v7587 = vld [vmem:[#allocation2 + $0xa8] sm:$0xff]
      %v7588 = vld [vmem:[#allocation2 + $0xb0] sm:$0xff]
      %v7589 = vld [vmem:[#allocation2 + $0xb8] sm:$0xff]
      %v7590 = vld [vmem:[#allocation2 + $0xc0] sm:$0xff]
      %v7591 = vld [vmem:[#allocation2 + $0xc8] sm:$0xff]
      %v7592 = vld [vmem:[#allocation2 + $0xd0] sm:$0xff]
      %v7593 = vld [vmem:[#allocation2 + $0xd8] sm:$0xff]
      %v7594 = vld [vmem:[#allocation2 + $0xe0] sm:$0xff]
      %v7595 = vld [vmem:[#allocation2 + $0xe8] sm:$0xff]
      %v7596 = vld [vmem:[#allocation2 + $0xf0] sm:$0xff]
      %v7597 = vld [vmem:[#allocation2 + $0xf8] sm:$0xff]
      %v7598 = vld [vmem:[#allocation2 + $0x100] sm:$0xff]
      %v7599 = vld [vmem:[#allocation2 + $0x108] sm:$0xff]
      %v7600 = vld [vmem:[#allocation2 + $0x110] sm:$0xff]
      %v7601 = vadd.f32 %v7443, %v7569
      %v7602 = vadd.f32 %v7446, %v7570
      %v7603 = vadd.f32 %v7451, %v7571
      %v7604 = vadd.f32 %v7454, %v7572
      %v7605 = vadd.f32 %v7459, %v7573
      %v7606 = vadd.f32 %v7462, %v7574
      %v7607 = vadd.f32 %v7467, %v7575
      %v7608 = vadd.f32 %v7470, %v7576
      %v7609 = vadd.f32 %v7475, %v7577
      %v7610 = vadd.f32 %v7478, %v7578
      %v7611 = vadd.f32 %v7483, %v7579
      %v7612 = vadd.f32 %v7486, %v7580
      %v7613 = vadd.f32 %v7491, %v7581
      %v7614 = vadd.f32 %v7494, %v7582
      %v7615 = vadd.f32 %v7499, %v7583
      %v7616 = vadd.f32 %v7502, %v7584
      %v7617 = vadd.f32 %v7507, %v7585
      %v7618 = vadd.f32 %v7510, %v7586
      %v7619 = vadd.f32 %v7515, %v7587
      %v7620 = vadd.f32 %v7518, %v7588
      %v7621 = vadd.f32 %v7523, %v7589
      %v7622 = vadd.f32 %v7526, %v7590
      %v7623 = vadd.f32 %v7531, %v7591
      %v7624 = vadd.f32 %v7534, %v7592
      %v7625 = vadd.f32 %v7539, %v7593
      %v7626 = vadd.f32 %v7542, %v7594
      %v7627 = vadd.f32 %v7547, %v7595
      %v7628 = vadd.f32 %v7550, %v7596
      %v7629 = vadd.f32 %v7555, %v7597
      %v7630 = vadd.f32 %v7558, %v7598
      %v7631 = vadd.f32 %v7563, %v7599
      %v7632 = vadd.f32 %v7566, %v7600
      %v7633 = vxor.u32 %v7601, 2147483648
      %v7634 = vxor.u32 %v7602, 2147483648
      %v7635 = vxor.u32 %v7603, 2147483648
      %v7636 = vxor.u32 %v7604, 2147483648
      %v7637 = vxor.u32 %v7605, 2147483648
      %v7638 = vxor.u32 %v7606, 2147483648
      %v7639 = vxor.u32 %v7607, 2147483648
      %v7640 = vxor.u32 %v7608, 2147483648
      %v7641 = vxor.u32 %v7609, 2147483648
      %v7642 = vxor.u32 %v7610, 2147483648
      %v7643 = vxor.u32 %v7611, 2147483648
      %v7644 = vxor.u32 %v7612, 2147483648
      %v7645 = vxor.u32 %v7613, 2147483648
      %v7646 = vxor.u32 %v7614, 2147483648
      %v7647 = vxor.u32 %v7615, 2147483648
      %v7648 = vxor.u32 %v7616, 2147483648
      %v7649 = vxor.u32 %v7617, 2147483648
      %v7650 = vxor.u32 %v7618, 2147483648
      %v7651 = vxor.u32 %v7619, 2147483648
      %v7652 = vxor.u32 %v7620, 2147483648
      %v7653 = vxor.u32 %v7621, 2147483648
      %v7654 = vxor.u32 %v7622, 2147483648
      %v7655 = vxor.u32 %v7623, 2147483648
      %v7656 = vxor.u32 %v7624, 2147483648
      %v7657 = vxor.u32 %v7625, 2147483648
      %v7658 = vxor.u32 %v7626, 2147483648
      %v7659 = vxor.u32 %v7627, 2147483648
      %v7660 = vxor.u32 %v7628, 2147483648
      %v7661 = vxor.u32 %v7629, 2147483648
      %v7662 = vxor.u32 %v7630, 2147483648
      %v7663 = vxor.u32 %v7631, 2147483648
      %v7664 = vxor.u32 %v7632, 2147483648
      %v7665 = vmul.f32 %v7633, 1.442695
      %v7666 = vpow.pop %v7665
      %v7667 = vmul.f32 %v7634, 1.442695
      %v7668 = vpow.pop %v7667
      %v7669 = vmul.f32 %v7635, 1.442695
      %v7670 = vpow.pop %v7669
      %v7671 = vmul.f32 %v7636, 1.442695
      %v7672 = vpow.pop %v7671
      %v7673 = vmul.f32 %v7637, 1.442695
      %v7674 = vpow.pop %v7673
      %v7675 = vmul.f32 %v7638, 1.442695
      %v7676 = vpow.pop %v7675
      %v7677 = vmul.f32 %v7639, 1.442695
      %v7678 = vpow.pop %v7677
      %v7679 = vmul.f32 %v7640, 1.442695
      %v7680 = vpow.pop %v7679
      %v7681 = vmul.f32 %v7641, 1.442695
      %v7682 = vpow.pop %v7681
      %v7683 = vmul.f32 %v7642, 1.442695
      %v7684 = vpow.pop %v7683
      %v7685 = vmul.f32 %v7643, 1.442695
      %v7686 = vpow.pop %v7685
      %v7687 = vmul.f32 %v7644, 1.442695
      %v7688 = vpow.pop %v7687
      %v7689 = vmul.f32 %v7645, 1.442695
      %v7690 = vpow.pop %v7689
      %v7691 = vmul.f32 %v7646, 1.442695
      %v7692 = vpow.pop %v7691
      %v7693 = vmul.f32 %v7647, 1.442695
      %v7694 = vpow.pop %v7693
      %v7695 = vmul.f32 %v7648, 1.442695
      %v7696 = vpow.pop %v7695
      %v7697 = vmul.f32 %v7649, 1.442695
      %v7698 = vpow.pop %v7697
      %v7699 = vmul.f32 %v7650, 1.442695
      %v7700 = vpow.pop %v7699
      %v7701 = vmul.f32 %v7651, 1.442695
      %v7702 = vpow.pop %v7701
      %v7703 = vmul.f32 %v7652, 1.442695
      %v7704 = vpow.pop %v7703
      %v7705 = vmul.f32 %v7653, 1.442695
      %v7706 = vpow.pop %v7705
      %v7707 = vmul.f32 %v7654, 1.442695
      %v7708 = vpow.pop %v7707
      %v7709 = vmul.f32 %v7655, 1.442695
      %v7710 = vpow.pop %v7709
      %v7711 = vmul.f32 %v7656, 1.442695
      %v7712 = vpow.pop %v7711
      %v7713 = vmul.f32 %v7657, 1.442695
      %v7714 = vpow.pop %v7713
      %v7715 = vmul.f32 %v7658, 1.442695
      %v7716 = vpow.pop %v7715
      %v7717 = vmul.f32 %v7659, 1.442695
      %v7718 = vpow.pop %v7717
      %v7719 = vmul.f32 %v7660, 1.442695
      %v7720 = vpow.pop %v7719
      %v7721 = vmul.f32 %v7661, 1.442695
      %v7722 = vpow.pop %v7721
      %v7723 = vmul.f32 %v7662, 1.442695
      %v7724 = vpow.pop %v7723
      %v7725 = vmul.f32 %v7663, 1.442695
      %v7726 = vpow.pop %v7725
      %v7727 = vmul.f32 %v7664, 1.442695
      %v7728 = vpow.pop %v7727
      %v7729 = vadd.f32 %v7666, 1.0
      %v7730 = vadd.f32 %v7668, 1.0
      %v7731 = vadd.f32 %v7670, 1.0
      %v7732 = vadd.f32 %v7672, 1.0
      %v7733 = vadd.f32 %v7674, 1.0
      %v7734 = vadd.f32 %v7676, 1.0
      %v7735 = vadd.f32 %v7678, 1.0
      %v7736 = vadd.f32 %v7680, 1.0
      %v7737 = vadd.f32 %v7682, 1.0
      %v7738 = vadd.f32 %v7684, 1.0
      %v7739 = vadd.f32 %v7686, 1.0
      %v7740 = vadd.f32 %v7688, 1.0
      %v7741 = vadd.f32 %v7690, 1.0
      %v7742 = vadd.f32 %v7692, 1.0
      %v7743 = vadd.f32 %v7694, 1.0
      %v7744 = vadd.f32 %v7696, 1.0
      %v7745 = vadd.f32 %v7698, 1.0
      %v7746 = vadd.f32 %v7700, 1.0
      %v7747 = vadd.f32 %v7702, 1.0
      %v7748 = vadd.f32 %v7704, 1.0
      %v7749 = vadd.f32 %v7706, 1.0
      %v7750 = vadd.f32 %v7708, 1.0
      %v7751 = vadd.f32 %v7710, 1.0
      %v7752 = vadd.f32 %v7712, 1.0
      %v7753 = vadd.f32 %v7714, 1.0
      %v7754 = vadd.f32 %v7716, 1.0
      %v7755 = vadd.f32 %v7718, 1.0
      %v7756 = vadd.f32 %v7720, 1.0
      %v7757 = vadd.f32 %v7722, 1.0
      %v7758 = vadd.f32 %v7724, 1.0
      %v7759 = vadd.f32 %v7726, 1.0
      %v7760 = vadd.f32 %v7728, 1.0
      %v7761 = vrcp.pop %v7729
      %v7762 = vmul.f32 1.0, %v7761
      %v7763 = vrcp.pop %v7730
      %v7764 = vmul.f32 1.0, %v7763
      %v7765 = vrcp.pop %v7731
      %v7766 = vmul.f32 1.0, %v7765
      %v7767 = vrcp.pop %v7732
      %v7768 = vmul.f32 1.0, %v7767
      %v7769 = vrcp.pop %v7733
      %v7770 = vmul.f32 1.0, %v7769
      %v7771 = vrcp.pop %v7734
      %v7772 = vmul.f32 1.0, %v7771
      %v7773 = vrcp.pop %v7735
      %v7774 = vmul.f32 1.0, %v7773
      %v7775 = vrcp.pop %v7736
      %v7776 = vmul.f32 1.0, %v7775
      %v7777 = vrcp.pop %v7737
      %v7778 = vmul.f32 1.0, %v7777
      %v7779 = vrcp.pop %v7738
      %v7780 = vmul.f32 1.0, %v7779
      %v7781 = vrcp.pop %v7739
      %v7782 = vmul.f32 1.0, %v7781
      %v7783 = vrcp.pop %v7740
      %v7784 = vmul.f32 1.0, %v7783
      %v7785 = vrcp.pop %v7741
      %v7786 = vmul.f32 1.0, %v7785
      %v7787 = vrcp.pop %v7742
      %v7788 = vmul.f32 1.0, %v7787
      %v7789 = vrcp.pop %v7743
      %v7790 = vmul.f32 1.0, %v7789
      %v7791 = vrcp.pop %v7744
      %v7792 = vmul.f32 1.0, %v7791
      %v7793 = vrcp.pop %v7745
      %v7794 = vmul.f32 1.0, %v7793
      %v7795 = vrcp.pop %v7746
      %v7796 = vmul.f32 1.0, %v7795
      %v7797 = vrcp.pop %v7747
      %v7798 = vmul.f32 1.0, %v7797
      %v7799 = vrcp.pop %v7748
      %v7800 = vmul.f32 1.0, %v7799
      %v7801 = vrcp.pop %v7749
      %v7802 = vmul.f32 1.0, %v7801
      %v7803 = vrcp.pop %v7750
      %v7804 = vmul.f32 1.0, %v7803
      %v7805 = vrcp.pop %v7751
      %v7806 = vmul.f32 1.0, %v7805
      %v7807 = vrcp.pop %v7752
      %v7808 = vmul.f32 1.0, %v7807
      %v7809 = vrcp.pop %v7753
      %v7810 = vmul.f32 1.0, %v7809
      %v7811 = vrcp.pop %v7754
      %v7812 = vmul.f32 1.0, %v7811
      %v7813 = vrcp.pop %v7755
      %v7814 = vmul.f32 1.0, %v7813
      %v7815 = vrcp.pop %v7756
      %v7816 = vmul.f32 1.0, %v7815
      %v7817 = vrcp.pop %v7757
      %v7818 = vmul.f32 1.0, %v7817
      %v7819 = vrcp.pop %v7758
      %v7820 = vmul.f32 1.0, %v7819
      %v7821 = vrcp.pop %v7759
      %v7822 = vmul.f32 1.0, %v7821
      %v7823 = vrcp.pop %v7760
      %v7824 = vmul.f32 1.0, %v7823
      %v7825 = vmul.f32 %v7601, %v7762
      %v7826 = vmul.f32 %v7602, %v7764
      %v7827 = vmul.f32 %v7603, %v7766
      %v7828 = vmul.f32 %v7604, %v7768
      %v7829 = vmul.f32 %v7605, %v7770
      %v7830 = vmul.f32 %v7606, %v7772
      %v7831 = vmul.f32 %v7607, %v7774
      %v7832 = vmul.f32 %v7608, %v7776
      %v7833 = vmul.f32 %v7609, %v7778
      %v7834 = vmul.f32 %v7610, %v7780
      %v7835 = vmul.f32 %v7611, %v7782
      %v7836 = vmul.f32 %v7612, %v7784
      %v7837 = vmul.f32 %v7613, %v7786
      %v7838 = vmul.f32 %v7614, %v7788
      %v7839 = vmul.f32 %v7615, %v7790
      %v7840 = vmul.f32 %v7616, %v7792
      %v7841 = vmul.f32 %v7617, %v7794
      %v7842 = vmul.f32 %v7618, %v7796
      %v7843 = vmul.f32 %v7619, %v7798
      %v7844 = vmul.f32 %v7620, %v7800
      %v7845 = vmul.f32 %v7621, %v7802
      %v7846 = vmul.f32 %v7622, %v7804
      %v7847 = vmul.f32 %v7623, %v7806
      %v7848 = vmul.f32 %v7624, %v7808
      %v7849 = vmul.f32 %v7625, %v7810
      %v7850 = vmul.f32 %v7626, %v7812
      %v7851 = vmul.f32 %v7627, %v7814
      %v7852 = vmul.f32 %v7628, %v7816
      %v7853 = vmul.f32 %v7629, %v7818
      %v7854 = vmul.f32 %v7630, %v7820
      %v7855 = vmul.f32 %v7631, %v7822
      %v7856 = vmul.f32 %v7632, %v7824
      %7857 = vst.msk [vmem:[#allocation2 + $0x18] sm:$0xff] %vm899, %v7825
      %7858 = vst.msk [vmem:[#allocation2 + $0x20] sm:$0xff] %vm899, %v7826
      %7859 = vst.msk [vmem:[#allocation2 + $0x28] sm:$0xff] %vm899, %v7827
      %7860 = vst.msk [vmem:[#allocation2 + $0x30] sm:$0xff] %vm899, %v7828
      %7861 = vst.msk [vmem:[#allocation2 + $0x38] sm:$0xff] %vm899, %v7829
      %7862 = vst.msk [vmem:[#allocation2 + $0x40] sm:$0xff] %vm899, %v7830
      %7863 = vst.msk [vmem:[#allocation2 + $0x48] sm:$0xff] %vm899, %v7831
      %7864 = vst.msk [vmem:[#allocation2 + $0x50] sm:$0xff] %vm899, %v7832
      %7865 = vst.msk [vmem:[#allocation2 + $0x58] sm:$0xff] %vm899, %v7833
      %7866 = vst.msk [vmem:[#allocation2 + $0x60] sm:$0xff] %vm899, %v7834
      %7867 = vst.msk [vmem:[#allocation2 + $0x68] sm:$0xff] %vm899, %v7835
      %7868 = vst.msk [vmem:[#allocation2 + $0x70] sm:$0xff] %vm899, %v7836
      %7869 = vst.msk [vmem:[#allocation2 + $0x78] sm:$0xff] %vm899, %v7837
      %7870 = vst.msk [vmem:[#allocation2 + $0x80] sm:$0xff] %vm899, %v7838
      %7871 = vst.msk [vmem:[#allocation2 + $0x88] sm:$0xff] %vm899, %v7839
      %7872 = vst.msk [vmem:[#allocation2 + $0x90] sm:$0xff] %vm899, %v7840
      %7873 = vst.msk [vmem:[#allocation2 + $0x98] sm:$0xff] %vm899, %v7841
      %7874 = vst.msk [vmem:[#allocation2 + $0xa0] sm:$0xff] %vm899, %v7842
      %7875 = vst.msk [vmem:[#allocation2 + $0xa8] sm:$0xff] %vm899, %v7843
      %7876 = vst.msk [vmem:[#allocation2 + $0xb0] sm:$0xff] %vm899, %v7844
      %7877 = vst.msk [vmem:[#allocation2 + $0xb8] sm:$0xff] %vm899, %v7845
      %7878 = vst.msk [vmem:[#allocation2 + $0xc0] sm:$0xff] %vm899, %v7846
      %7879 = vst.msk [vmem:[#allocation2 + $0xc8] sm:$0xff] %vm899, %v7847
      %7880 = vst.msk [vmem:[#allocation2 + $0xd0] sm:$0xff] %vm899, %v7848
      %7881 = vst.msk [vmem:[#allocation2 + $0xd8] sm:$0xff] %vm899, %v7849
      %7882 = vst.msk [vmem:[#allocation2 + $0xe0] sm:$0xff] %vm899, %v7850
      %7883 = vst.msk [vmem:[#allocation2 + $0xe8] sm:$0xff] %vm899, %v7851
      %7884 = vst.msk [vmem:[#allocation2 + $0xf0] sm:$0xff] %vm899, %v7852
      %7885 = vst.msk [vmem:[#allocation2 + $0xf8] sm:$0xff] %vm899, %v7853
      %7886 = vst.msk [vmem:[#allocation2 + $0x100] sm:$0xff] %vm899, %v7854
      %7887 = vst.msk [vmem:[#allocation2 + $0x108] sm:$0xff] %vm899, %v7855
      %7888 = vst.msk [vmem:[#allocation2 + $0x110] sm:$0xff] %vm899, %v7856
      %v7889 = vld [vmem:[#allocation2 + $0x7] sm:$0xff]
      %v7890 = vld [vmem:[#allocation2 + $0xf] sm:$0xff]
      %v7891 = vld [vmem:[#allocation2 + $0x17] sm:$0xff]
      %v7892 = vld [vmem:[#allocation2 + $0x1f] sm:$0xff]
      %v7893 = vld [vmem:[#allocation2 + $0x27] sm:$0xff]
      %v7894 = vld [vmem:[#allocation2 + $0x2f] sm:$0xff]
      %v7895 = vld [vmem:[#allocation2 + $0x37] sm:$0xff]
      %v7896 = vld [vmem:[#allocation2 + $0x3f] sm:$0xff]
      %v7897 = vld [vmem:[#allocation2 + $0x47] sm:$0xff]
      %v7898 = vld [vmem:[#allocation2 + $0x4f] sm:$0xff]
      %v7899 = vld [vmem:[#allocation2 + $0x57] sm:$0xff]
      %v7900 = vld [vmem:[#allocation2 + $0x5f] sm:$0xff]
      %v7901 = vld [vmem:[#allocation2 + $0x67] sm:$0xff]
      %v7902 = vld [vmem:[#allocation2 + $0x6f] sm:$0xff]
      %v7903 = vld [vmem:[#allocation2 + $0x77] sm:$0xff]
      %v7904 = vld [vmem:[#allocation2 + $0x7f] sm:$0xff]
      %v7905 = vld [vmem:[#allocation2 + $0x87] sm:$0xff]
      %v7906 = vld [vmem:[#allocation2 + $0x8f] sm:$0xff]
      %v7907 = vld [vmem:[#allocation2 + $0x97] sm:$0xff]
      %v7908 = vld [vmem:[#allocation2 + $0x9f] sm:$0xff]
      %v7909 = vld [vmem:[#allocation2 + $0xa7] sm:$0xff]
      %v7910 = vld [vmem:[#allocation2 + $0xaf] sm:$0xff]
      %v7911 = vld [vmem:[#allocation2 + $0xb7] sm:$0xff]
      %v7912 = vld [vmem:[#allocation2 + $0xbf] sm:$0xff]
      %v7913 = vld [vmem:[#allocation2 + $0xc7] sm:$0xff]
      %v7914 = vld [vmem:[#allocation2 + $0xcf] sm:$0xff]
      %v7915 = vld [vmem:[#allocation2 + $0xd7] sm:$0xff]
      %v7916 = vld [vmem:[#allocation2 + $0xdf] sm:$0xff]
      %v7917 = vld [vmem:[#allocation2 + $0xe7] sm:$0xff]
      %v7918 = vld [vmem:[#allocation2 + $0xef] sm:$0xff]
      %v7919 = vld [vmem:[#allocation2 + $0xf7] sm:$0xff]
      %v7920 = vld [vmem:[#allocation2 + $0xff] sm:$0xff]
      %v7921 = vsel %vm971, %v7889, 0.0
      %v7922 = vsel %vm972, %v7890, 0.0
      %v7923 = vsel %vm973, %v7891, 0.0
      %v7924 = vsel %vm974, %v7892, 0.0
      %v7925 = vsel %vm975, %v7893, 0.0
      %v7926 = vsel %vm976, %v7894, 0.0
      %v7927 = vsel %vm977, %v7895, 0.0
      %v7928 = vsel %vm978, %v7896, 0.0
      %v7929 = vsel %vm979, %v7897, 0.0
      %v7930 = vsel %vm980, %v7898, 0.0
      %v7931 = vsel %vm981, %v7899, 0.0
      %v7932 = vsel %vm982, %v7900, 0.0
      %v7933 = vsel %vm983, %v7901, 0.0
      %v7934 = vsel %vm984, %v7902, 0.0
      %v7935 = vsel %vm985, %v7903, 0.0
      %v7936 = vsel %vm986, %v7904, 0.0
      %v7937 = vsel %vm987, %v7905, 0.0
      %v7938 = vsel %vm988, %v7906, 0.0
      %v7939 = vsel %vm989, %v7907, 0.0
      %v7940 = vsel %vm990, %v7908, 0.0
      %v7941 = vsel %vm991, %v7909, 0.0
      %v7942 = vsel %vm992, %v7910, 0.0
      %v7943 = vsel %vm993, %v7911, 0.0
      %v7944 = vsel %vm994, %v7912, 0.0
      %v7945 = vsel %vm995, %v7913, 0.0
      %v7946 = vsel %vm996, %v7914, 0.0
      %v7947 = vsel %vm997, %v7915, 0.0
      %v7948 = vsel %vm998, %v7916, 0.0
      %v7949 = vsel %vm999, %v7917, 0.0
      %v7950 = vsel %vm1000, %v7918, 0.0
      %v7951 = vsel %vm1001, %v7919, 0.0
      %v7952 = vsel %vm1002, %v7920, 0.0
      %v7953 = vld [vmem:[#allocation2 + $0x8] sm:$0xff]
      %v7954 = vld [vmem:[#allocation2 + $0x10] sm:$0xff]
      %v7955 = vld [vmem:[#allocation2 + $0x18] sm:$0xff]
      %v7956 = vld [vmem:[#allocation2 + $0x20] sm:$0xff]
      %v7957 = vld [vmem:[#allocation2 + $0x28] sm:$0xff]
      %v7958 = vld [vmem:[#allocation2 + $0x30] sm:$0xff]
      %v7959 = vld [vmem:[#allocation2 + $0x38] sm:$0xff]
      %v7960 = vld [vmem:[#allocation2 + $0x40] sm:$0xff]
      %v7961 = vld [vmem:[#allocation2 + $0x48] sm:$0xff]
      %v7962 = vld [vmem:[#allocation2 + $0x50] sm:$0xff]
      %v7963 = vld [vmem:[#allocation2 + $0x58] sm:$0xff]
      %v7964 = vld [vmem:[#allocation2 + $0x60] sm:$0xff]
      %v7965 = vld [vmem:[#allocation2 + $0x68] sm:$0xff]
      %v7966 = vld [vmem:[#allocation2 + $0x70] sm:$0xff]
      %v7967 = vld [vmem:[#allocation2 + $0x78] sm:$0xff]
      %v7968 = vld [vmem:[#allocation2 + $0x80] sm:$0xff]
      %v7969 = vld [vmem:[#allocation2 + $0x88] sm:$0xff]
      %v7970 = vld [vmem:[#allocation2 + $0x90] sm:$0xff]
      %v7971 = vld [vmem:[#allocation2 + $0x98] sm:$0xff]
      %v7972 = vld [vmem:[#allocation2 + $0xa0] sm:$0xff]
      %v7973 = vld [vmem:[#allocation2 + $0xa8] sm:$0xff]
      %v7974 = vld [vmem:[#allocation2 + $0xb0] sm:$0xff]
      %v7975 = vld [vmem:[#allocation2 + $0xb8] sm:$0xff]
      %v7976 = vld [vmem:[#allocation2 + $0xc0] sm:$0xff]
      %v7977 = vld [vmem:[#allocation2 + $0xc8] sm:$0xff]
      %v7978 = vld [vmem:[#allocation2 + $0xd0] sm:$0xff]
      %v7979 = vld [vmem:[#allocation2 + $0xd8] sm:$0xff]
      %v7980 = vld [vmem:[#allocation2 + $0xe0] sm:$0xff]
      %v7981 = vld [vmem:[#allocation2 + $0xe8] sm:$0xff]
      %v7982 = vld [vmem:[#allocation2 + $0xf0] sm:$0xff]
      %v7983 = vld [vmem:[#allocation2 + $0xf8] sm:$0xff]
      %v7984 = vld [vmem:[#allocation2 + $0x100] sm:$0xff]
      %v7985 = vld [vmem:[#allocation2 + $0x9] sm:$0xff]
      %v7986 = vld [vmem:[#allocation2 + $0x11] sm:$0xff]
      %v7987 = vld [vmem:[#allocation2 + $0x19] sm:$0xff]
      %v7988 = vld [vmem:[#allocation2 + $0x21] sm:$0xff]
      %v7989 = vld [vmem:[#allocation2 + $0x29] sm:$0xff]
      %v7990 = vld [vmem:[#allocation2 + $0x31] sm:$0xff]
      %v7991 = vld [vmem:[#allocation2 + $0x39] sm:$0xff]
      %v7992 = vld [vmem:[#allocation2 + $0x41] sm:$0xff]
      %v7993 = vld [vmem:[#allocation2 + $0x49] sm:$0xff]
      %v7994 = vld [vmem:[#allocation2 + $0x51] sm:$0xff]
      %v7995 = vld [vmem:[#allocation2 + $0x59] sm:$0xff]
      %v7996 = vld [vmem:[#allocation2 + $0x61] sm:$0xff]
      %v7997 = vld [vmem:[#allocation2 + $0x69] sm:$0xff]
      %v7998 = vld [vmem:[#allocation2 + $0x71] sm:$0xff]
      %v7999 = vld [vmem:[#allocation2 + $0x79] sm:$0xff]
      %v8000 = vld [vmem:[#allocation2 + $0x81] sm:$0xff]
      %v8001 = vld [vmem:[#allocation2 + $0x89] sm:$0xff]
      %v8002 = vld [vmem:[#allocation2 + $0x91] sm:$0xff]
      %v8003 = vld [vmem:[#allocation2 + $0x99] sm:$0xff]
      %v8004 = vld [vmem:[#allocation2 + $0xa1] sm:$0xff]
      %v8005 = vld [vmem:[#allocation2 + $0xa9] sm:$0xff]
      %v8006 = vld [vmem:[#allocation2 + $0xb1] sm:$0xff]
      %v8007 = vld [vmem:[#allocation2 + $0xb9] sm:$0xff]
      %v8008 = vld [vmem:[#allocation2 + $0xc1] sm:$0xff]
      %v8009 = vld [vmem:[#allocation2 + $0xc9] sm:$0xff]
      %v8010 = vld [vmem:[#allocation2 + $0xd1] sm:$0xff]
      %v8011 = vld [vmem:[#allocation2 + $0xd9] sm:$0xff]
      %v8012 = vld [vmem:[#allocation2 + $0xe1] sm:$0xff]
      %v8013 = vld [vmem:[#allocation2 + $0xe9] sm:$0xff]
      %v8014 = vld [vmem:[#allocation2 + $0xf1] sm:$0xff]
      %v8015 = vld [vmem:[#allocation2 + $0xf9] sm:$0xff]
      %v8016 = vld [vmem:[#allocation2 + $0x101] sm:$0xff]
      %v8017 = vsel %vm1131, %v7985, 0.0
      %v8018 = vsel %vm1132, %v7986, 0.0
      %v8019 = vsel %vm1133, %v7987, 0.0
      %v8020 = vsel %vm1134, %v7988, 0.0
      %v8021 = vsel %vm1135, %v7989, 0.0
      %v8022 = vsel %vm1136, %v7990, 0.0
      %v8023 = vsel %vm1137, %v7991, 0.0
      %v8024 = vsel %vm1138, %v7992, 0.0
      %v8025 = vsel %vm1139, %v7993, 0.0
      %v8026 = vsel %vm1140, %v7994, 0.0
      %v8027 = vsel %vm1141, %v7995, 0.0
      %v8028 = vsel %vm1142, %v7996, 0.0
      %v8029 = vsel %vm1143, %v7997, 0.0
      %v8030 = vsel %vm1144, %v7998, 0.0
      %v8031 = vsel %vm1145, %v7999, 0.0
      %v8032 = vsel %vm1146, %v8000, 0.0
      %v8033 = vsel %vm1147, %v8001, 0.0
      %v8034 = vsel %vm1148, %v8002, 0.0
      %v8035 = vsel %vm1149, %v8003, 0.0
      %v8036 = vsel %vm1150, %v8004, 0.0
      %v8037 = vsel %vm1151, %v8005, 0.0
      %v8038 = vsel %vm1152, %v8006, 0.0
      %v8039 = vsel %vm1153, %v8007, 0.0
      %v8040 = vsel %vm1154, %v8008, 0.0
      %v8041 = vsel %vm1155, %v8009, 0.0
      %v8042 = vsel %vm1156, %v8010, 0.0
      %v8043 = vsel %vm1157, %v8011, 0.0
      %v8044 = vsel %vm1158, %v8012, 0.0
      %v8045 = vsel %vm1159, %v8013, 0.0
      %v8046 = vsel %vm1160, %v8014, 0.0
      %v8047 = vsel %vm1161, %v8015, 0.0
      %v8048 = vsel %vm1162, %v8016, 0.0
      %v8049 = vld [vmem:[#allocation2 + $0x107] sm:$0xff]
      %v8050 = vld [vmem:[#allocation2 + $0x10f] sm:$0xff]
      %v8051 = vsel %vm971, %v7891, 0.0
      %v8052 = vsel %vm972, %v7892, 0.0
      %v8053 = vsel %vm973, %v7893, 0.0
      %v8054 = vsel %vm974, %v7894, 0.0
      %v8055 = vsel %vm975, %v7895, 0.0
      %v8056 = vsel %vm976, %v7896, 0.0
      %v8057 = vsel %vm977, %v7897, 0.0
      %v8058 = vsel %vm978, %v7898, 0.0
      %v8059 = vsel %vm979, %v7899, 0.0
      %v8060 = vsel %vm980, %v7900, 0.0
      %v8061 = vsel %vm981, %v7901, 0.0
      %v8062 = vsel %vm982, %v7902, 0.0
      %v8063 = vsel %vm983, %v7903, 0.0
      %v8064 = vsel %vm984, %v7904, 0.0
      %v8065 = vsel %vm985, %v7905, 0.0
      %v8066 = vsel %vm986, %v7906, 0.0
      %v8067 = vsel %vm987, %v7907, 0.0
      %v8068 = vsel %vm988, %v7908, 0.0
      %v8069 = vsel %vm989, %v7909, 0.0
      %v8070 = vsel %vm990, %v7910, 0.0
      %v8071 = vsel %vm991, %v7911, 0.0
      %v8072 = vsel %vm992, %v7912, 0.0
      %v8073 = vsel %vm993, %v7913, 0.0
      %v8074 = vsel %vm994, %v7914, 0.0
      %v8075 = vsel %vm995, %v7915, 0.0
      %v8076 = vsel %vm996, %v7916, 0.0
      %v8077 = vsel %vm997, %v7917, 0.0
      %v8078 = vsel %vm998, %v7918, 0.0
      %v8079 = vsel %vm999, %v7919, 0.0
      %v8080 = vsel %vm1000, %v7920, 0.0
      %v8081 = vsel %vm1001, %v8049, 0.0
      %v8082 = vsel %vm1002, %v8050, 0.0
      %v8083 = vld [vmem:[#allocation2 + $0x108] sm:$0xff]
      %v8084 = vld [vmem:[#allocation2 + $0x110] sm:$0xff]
      %v8085 = vld [vmem:[#allocation2 + $0x109] sm:$0xff]
      %v8086 = vld [vmem:[#allocation2 + $0x111] sm:$0xff]
      %v8087 = vsel %vm1131, %v7987, 0.0
      %v8088 = vsel %vm1132, %v7988, 0.0
      %v8089 = vsel %vm1133, %v7989, 0.0
      %v8090 = vsel %vm1134, %v7990, 0.0
      %v8091 = vsel %vm1135, %v7991, 0.0
      %v8092 = vsel %vm1136, %v7992, 0.0
      %v8093 = vsel %vm1137, %v7993, 0.0
      %v8094 = vsel %vm1138, %v7994, 0.0
      %v8095 = vsel %vm1139, %v7995, 0.0
      %v8096 = vsel %vm1140, %v7996, 0.0
      %v8097 = vsel %vm1141, %v7997, 0.0
      %v8098 = vsel %vm1142, %v7998, 0.0
      %v8099 = vsel %vm1143, %v7999, 0.0
      %v8100 = vsel %vm1144, %v8000, 0.0
      %v8101 = vsel %vm1145, %v8001, 0.0
      %v8102 = vsel %vm1146, %v8002, 0.0
      %v8103 = vsel %vm1147, %v8003, 0.0
      %v8104 = vsel %vm1148, %v8004, 0.0
      %v8105 = vsel %vm1149, %v8005, 0.0
      %v8106 = vsel %vm1150, %v8006, 0.0
      %v8107 = vsel %vm1151, %v8007, 0.0
      %v8108 = vsel %vm1152, %v8008, 0.0
      %v8109 = vsel %vm1153, %v8009, 0.0
      %v8110 = vsel %vm1154, %v8010, 0.0
      %v8111 = vsel %vm1155, %v8011, 0.0
      %v8112 = vsel %vm1156, %v8012, 0.0
      %v8113 = vsel %vm1157, %v8013, 0.0
      %v8114 = vsel %vm1158, %v8014, 0.0
      %v8115 = vsel %vm1159, %v8015, 0.0
      %v8116 = vsel %vm1160, %v8016, 0.0
      %v8117 = vsel %vm1161, %v8085, 0.0
      %v8118 = vsel %vm1162, %v8086, 0.0
      %v8119 = vld [vmem:[#allocation2 + $0x117] sm:$0xff]
      %v8120 = vld [vmem:[#allocation2 + $0x11f] sm:$0xff]
      %v8121 = vsel %vm971, %v7893, 0.0
      %v8122 = vsel %vm972, %v7894, 0.0
      %v8123 = vsel %vm973, %v7895, 0.0
      %v8124 = vsel %vm974, %v7896, 0.0
      %v8125 = vsel %vm975, %v7897, 0.0
      %v8126 = vsel %vm976, %v7898, 0.0
      %v8127 = vsel %vm977, %v7899, 0.0
      %v8128 = vsel %vm978, %v7900, 0.0
      %v8129 = vsel %vm979, %v7901, 0.0
      %v8130 = vsel %vm980, %v7902, 0.0
      %v8131 = vsel %vm981, %v7903, 0.0
      %v8132 = vsel %vm982, %v7904, 0.0
      %v8133 = vsel %vm983, %v7905, 0.0
      %v8134 = vsel %vm984, %v7906, 0.0
      %v8135 = vsel %vm985, %v7907, 0.0
      %v8136 = vsel %vm986, %v7908, 0.0
      %v8137 = vsel %vm987, %v7909, 0.0
      %v8138 = vsel %vm988, %v7910, 0.0
      %v8139 = vsel %vm989, %v7911, 0.0
      %v8140 = vsel %vm990, %v7912, 0.0
      %v8141 = vsel %vm991, %v7913, 0.0
      %v8142 = vsel %vm992, %v7914, 0.0
      %v8143 = vsel %vm993, %v7915, 0.0
      %v8144 = vsel %vm994, %v7916, 0.0
      %v8145 = vsel %vm995, %v7917, 0.0
      %v8146 = vsel %vm996, %v7918, 0.0
      %v8147 = vsel %vm997, %v7919, 0.0
      %v8148 = vsel %vm998, %v7920, 0.0
      %v8149 = vsel %vm999, %v8049, 0.0
      %v8150 = vsel %vm1000, %v8050, 0.0
      %v8151 = vsel %vm1001, %v8119, 0.0
      %v8152 = vsel %vm1002, %v8120, 0.0
      %v8153 = vld [vmem:[#allocation2 + $0x118] sm:$0xff]
      %v8154 = vld [vmem:[#allocation2 + $0x120] sm:$0xff]
      %v8155 = vld [vmem:[#allocation2 + $0x119] sm:$0xff]
      %v8156 = vld [vmem:[#allocation2 + $0x121] sm:$0xff]
      %v8157 = vsel %vm1131, %v7989, 0.0
      %v8158 = vsel %vm1132, %v7990, 0.0
      %v8159 = vsel %vm1133, %v7991, 0.0
      %v8160 = vsel %vm1134, %v7992, 0.0
      %v8161 = vsel %vm1135, %v7993, 0.0
      %v8162 = vsel %vm1136, %v7994, 0.0
      %v8163 = vsel %vm1137, %v7995, 0.0
      %v8164 = vsel %vm1138, %v7996, 0.0
      %v8165 = vsel %vm1139, %v7997, 0.0
      %v8166 = vsel %vm1140, %v7998, 0.0
      %v8167 = vsel %vm1141, %v7999, 0.0
      %v8168 = vsel %vm1142, %v8000, 0.0
      %v8169 = vsel %vm1143, %v8001, 0.0
      %v8170 = vsel %vm1144, %v8002, 0.0
      %v8171 = vsel %vm1145, %v8003, 0.0
      %v8172 = vsel %vm1146, %v8004, 0.0
      %v8173 = vsel %vm1147, %v8005, 0.0
      %v8174 = vsel %vm1148, %v8006, 0.0
      %v8175 = vsel %vm1149, %v8007, 0.0
      %v8176 = vsel %vm1150, %v8008, 0.0
      %v8177 = vsel %vm1151, %v8009, 0.0
      %v8178 = vsel %vm1152, %v8010, 0.0
      %v8179 = vsel %vm1153, %v8011, 0.0
      %v8180 = vsel %vm1154, %v8012, 0.0
      %v8181 = vsel %vm1155, %v8013, 0.0
      %v8182 = vsel %vm1156, %v8014, 0.0
      %v8183 = vsel %vm1157, %v8015, 0.0
      %v8184 = vsel %vm1158, %v8016, 0.0
      %v8185 = vsel %vm1159, %v8085, 0.0
      %v8186 = vsel %vm1160, %v8086, 0.0
      %v8187 = vsel %vm1161, %v8155, 0.0
      %v8188 = vsel %vm1162, %v8156, 0.0
      %8221 = vrot.lane.b32.xlu0 %v7953, 32
      %v8222 = vpop.permute.xlu0 %8221
      %8223 = vrot.lane.b32.xlu0 %v7954, 32
      %v8224 = vpop.permute.xlu0 %8223
      %8225 = vrot.lane.b32.xlu0 %v7955, 32
      %v8226 = vpop.permute.xlu0 %8225
      %8227 = vrot.lane.b32.xlu0 %v7956, 32
      %v8228 = vpop.permute.xlu0 %8227
      %8229 = vrot.lane.b32.xlu0 %v7957, 32
      %v8230 = vpop.permute.xlu0 %8229
      %8231 = vrot.lane.b32.xlu0 %v7958, 32
      %v8232 = vpop.permute.xlu0 %8231
      %8233 = vrot.lane.b32.xlu0 %v7959, 32
      %v8234 = vpop.permute.xlu0 %8233
      %8235 = vrot.lane.b32.xlu0 %v7960, 32
      %v8236 = vpop.permute.xlu0 %8235
      %8237 = vrot.lane.b32.xlu0 %v7961, 32
      %v8238 = vpop.permute.xlu0 %8237
      %8239 = vrot.lane.b32.xlu0 %v7962, 32
      %v8240 = vpop.permute.xlu0 %8239
      %8241 = vrot.lane.b32.xlu0 %v7963, 32
      %v8242 = vpop.permute.xlu0 %8241
      %8243 = vrot.lane.b32.xlu0 %v7964, 32
      %v8244 = vpop.permute.xlu0 %8243
      %8245 = vrot.lane.b32.xlu0 %v7965, 32
      %v8246 = vpop.permute.xlu0 %8245
      %8247 = vrot.lane.b32.xlu0 %v7966, 32
      %v8248 = vpop.permute.xlu0 %8247
      %8249 = vrot.lane.b32.xlu0 %v7967, 32
      %v8250 = vpop.permute.xlu0 %8249
      %8251 = vrot.lane.b32.xlu0 %v7968, 32
      %v8252 = vpop.permute.xlu0 %8251
      %8253 = vrot.lane.b32.xlu0 %v7969, 32
      %v8254 = vpop.permute.xlu0 %8253
      %8255 = vrot.lane.b32.xlu0 %v7970, 32
      %v8256 = vpop.permute.xlu0 %8255
      %8257 = vrot.lane.b32.xlu0 %v7971, 32
      %v8258 = vpop.permute.xlu0 %8257
      %8259 = vrot.lane.b32.xlu0 %v7972, 32
      %v8260 = vpop.permute.xlu0 %8259
      %8261 = vrot.lane.b32.xlu0 %v7973, 32
      %v8262 = vpop.permute.xlu0 %8261
      %8263 = vrot.lane.b32.xlu0 %v7974, 32
      %v8264 = vpop.permute.xlu0 %8263
      %8265 = vrot.lane.b32.xlu0 %v7975, 32
      %v8266 = vpop.permute.xlu0 %8265
      %8267 = vrot.lane.b32.xlu0 %v7976, 32
      %v8268 = vpop.permute.xlu0 %8267
      %8269 = vrot.lane.b32.xlu0 %v7977, 32
      %v8270 = vpop.permute.xlu0 %8269
      %8271 = vrot.lane.b32.xlu0 %v7978, 32
      %v8272 = vpop.permute.xlu0 %8271
      %8273 = vrot.lane.b32.xlu0 %v7979, 32
      %v8274 = vpop.permute.xlu0 %8273
      %8275 = vrot.lane.b32.xlu0 %v7980, 32
      %v8276 = vpop.permute.xlu0 %8275
      %8277 = vrot.lane.b32.xlu0 %v7981, 32
      %v8278 = vpop.permute.xlu0 %8277
      %8279 = vrot.lane.b32.xlu0 %v7982, 32
      %v8280 = vpop.permute.xlu0 %8279
      %8281 = vrot.lane.b32.xlu0 %v7983, 32
      %v8282 = vpop.permute.xlu0 %8281
      %8283 = vrot.lane.b32.xlu0 %v7984, 32
      %v8284 = vpop.permute.xlu0 %8283
      %8349 = vrot.lane.b32.xlu0 %v8017, 64
      %v8350 = vpop.permute.xlu0 %8349
      %8351 = vrot.lane.b32.xlu0 %v8018, 64
      %v8352 = vpop.permute.xlu0 %8351
      %8353 = vrot.lane.b32.xlu0 %v8019, 64
      %v8354 = vpop.permute.xlu0 %8353
      %8355 = vrot.lane.b32.xlu0 %v8020, 64
      %v8356 = vpop.permute.xlu0 %8355
      %8357 = vrot.lane.b32.xlu0 %v8021, 64
      %v8358 = vpop.permute.xlu0 %8357
      %8359 = vrot.lane.b32.xlu0 %v8022, 64
      %v8360 = vpop.permute.xlu0 %8359
      %8361 = vrot.lane.b32.xlu0 %v8023, 64
      %v8362 = vpop.permute.xlu0 %8361
      %8363 = vrot.lane.b32.xlu0 %v8024, 64
      %v8364 = vpop.permute.xlu0 %8363
      %8365 = vrot.lane.b32.xlu0 %v8025, 64
      %v8366 = vpop.permute.xlu0 %8365
      %8367 = vrot.lane.b32.xlu0 %v8026, 64
      %v8368 = vpop.permute.xlu0 %8367
      %8369 = vrot.lane.b32.xlu0 %v8027, 64
      %v8370 = vpop.permute.xlu0 %8369
      %8371 = vrot.lane.b32.xlu0 %v8028, 64
      %v8372 = vpop.permute.xlu0 %8371
      %8373 = vrot.lane.b32.xlu0 %v8029, 64
      %v8374 = vpop.permute.xlu0 %8373
      %8375 = vrot.lane.b32.xlu0 %v8030, 64
      %v8376 = vpop.permute.xlu0 %8375
      %8377 = vrot.lane.b32.xlu0 %v8031, 64
      %v8378 = vpop.permute.xlu0 %8377
      %8379 = vrot.lane.b32.xlu0 %v8032, 64
      %v8380 = vpop.permute.xlu0 %8379
      %8381 = vrot.lane.b32.xlu0 %v8033, 64
      %v8382 = vpop.permute.xlu0 %8381
      %8383 = vrot.lane.b32.xlu0 %v8034, 64
      %v8384 = vpop.permute.xlu0 %8383
      %8385 = vrot.lane.b32.xlu0 %v8035, 64
      %v8386 = vpop.permute.xlu0 %8385
      %8387 = vrot.lane.b32.xlu0 %v8036, 64
      %v8388 = vpop.permute.xlu0 %8387
      %8389 = vrot.lane.b32.xlu0 %v8037, 64
      %v8390 = vpop.permute.xlu0 %8389
      %8391 = vrot.lane.b32.xlu0 %v8038, 64
      %v8392 = vpop.permute.xlu0 %8391
      %8393 = vrot.lane.b32.xlu0 %v8039, 64
      %v8394 = vpop.permute.xlu0 %8393
      %8395 = vrot.lane.b32.xlu0 %v8040, 64
      %v8396 = vpop.permute.xlu0 %8395
      %8397 = vrot.lane.b32.xlu0 %v8041, 64
      %v8398 = vpop.permute.xlu0 %8397
      %8399 = vrot.lane.b32.xlu0 %v8042, 64
      %v8400 = vpop.permute.xlu0 %8399
      %8401 = vrot.lane.b32.xlu0 %v8043, 64
      %v8402 = vpop.permute.xlu0 %8401
      %8403 = vrot.lane.b32.xlu0 %v8044, 64
      %v8404 = vpop.permute.xlu0 %8403
      %8405 = vrot.lane.b32.xlu0 %v8045, 64
      %v8406 = vpop.permute.xlu0 %8405
      %8407 = vrot.lane.b32.xlu0 %v8046, 64
      %v8408 = vpop.permute.xlu0 %8407
      %8409 = vrot.lane.b32.xlu0 %v8047, 64
      %v8410 = vpop.permute.xlu0 %8409
      %8411 = vrot.lane.b32.xlu0 %v8048, 64
      %v8412 = vpop.permute.xlu0 %8411
      %8477 = vrot.lane.b32.xlu0 %v8051, 96
      %v8478 = vpop.permute.xlu0 %8477
      %8479 = vrot.lane.b32.xlu0 %v8052, 96
      %v8480 = vpop.permute.xlu0 %8479
      %8481 = vrot.lane.b32.xlu0 %v8053, 96
      %v8482 = vpop.permute.xlu0 %8481
      %8483 = vrot.lane.b32.xlu0 %v8054, 96
      %v8484 = vpop.permute.xlu0 %8483
      %8485 = vrot.lane.b32.xlu0 %v8055, 96
      %v8486 = vpop.permute.xlu0 %8485
      %8487 = vrot.lane.b32.xlu0 %v8056, 96
      %v8488 = vpop.permute.xlu0 %8487
      %8489 = vrot.lane.b32.xlu0 %v8057, 96
      %v8490 = vpop.permute.xlu0 %8489
      %8491 = vrot.lane.b32.xlu0 %v8058, 96
      %v8492 = vpop.permute.xlu0 %8491
      %8493 = vrot.lane.b32.xlu0 %v8059, 96
      %v8494 = vpop.permute.xlu0 %8493
      %8495 = vrot.lane.b32.xlu0 %v8060, 96
      %v8496 = vpop.permute.xlu0 %8495
      %8497 = vrot.lane.b32.xlu0 %v8061, 96
      %v8498 = vpop.permute.xlu0 %8497
      %8499 = vrot.lane.b32.xlu0 %v8062, 96
      %v8500 = vpop.permute.xlu0 %8499
      %8501 = vrot.lane.b32.xlu0 %v8063, 96
      %v8502 = vpop.permute.xlu0 %8501
      %8503 = vrot.lane.b32.xlu0 %v8064, 96
      %v8504 = vpop.permute.xlu0 %8503
      %8505 = vrot.lane.b32.xlu0 %v8065, 96
      %v8506 = vpop.permute.xlu0 %8505
      %8507 = vrot.lane.b32.xlu0 %v8066, 96
      %v8508 = vpop.permute.xlu0 %8507
      %8509 = vrot.lane.b32.xlu0 %v8067, 96
      %v8510 = vpop.permute.xlu0 %8509
      %8511 = vrot.lane.b32.xlu0 %v8068, 96
      %v8512 = vpop.permute.xlu0 %8511
      %8513 = vrot.lane.b32.xlu0 %v8069, 96
      %v8514 = vpop.permute.xlu0 %8513
      %8515 = vrot.lane.b32.xlu0 %v8070, 96
      %v8516 = vpop.permute.xlu0 %8515
      %8517 = vrot.lane.b32.xlu0 %v8071, 96
      %v8518 = vpop.permute.xlu0 %8517
      %8519 = vrot.lane.b32.xlu0 %v8072, 96
      %v8520 = vpop.permute.xlu0 %8519
      %8521 = vrot.lane.b32.xlu0 %v8073, 96
      %v8522 = vpop.permute.xlu0 %8521
      %8523 = vrot.lane.b32.xlu0 %v8074, 96
      %v8524 = vpop.permute.xlu0 %8523
      %8525 = vrot.lane.b32.xlu0 %v8075, 96
      %v8526 = vpop.permute.xlu0 %8525
      %8527 = vrot.lane.b32.xlu0 %v8076, 96
      %v8528 = vpop.permute.xlu0 %8527
      %8529 = vrot.lane.b32.xlu0 %v8077, 96
      %v8530 = vpop.permute.xlu0 %8529
      %8531 = vrot.lane.b32.xlu0 %v8078, 96
      %v8532 = vpop.permute.xlu0 %8531
      %8533 = vrot.lane.b32.xlu0 %v8079, 96
      %v8534 = vpop.permute.xlu0 %8533
      %8535 = vrot.lane.b32.xlu0 %v8080, 96
      %v8536 = vpop.permute.xlu0 %8535
      %8537 = vrot.lane.b32.xlu0 %v8081, 96
      %v8538 = vpop.permute.xlu0 %8537
      %8539 = vrot.lane.b32.xlu0 %v8082, 96
      %v8540 = vpop.permute.xlu0 %8539
      %8605 = vrot.lane.b32.xlu0 %v8087, 32
      %v8606 = vpop.permute.xlu0 %8605
      %8607 = vrot.lane.b32.xlu0 %v8088, 32
      %v8608 = vpop.permute.xlu0 %8607
      %8609 = vrot.lane.b32.xlu0 %v8089, 32
      %v8610 = vpop.permute.xlu0 %8609
      %8611 = vrot.lane.b32.xlu0 %v8090, 32
      %v8612 = vpop.permute.xlu0 %8611
      %8613 = vrot.lane.b32.xlu0 %v8091, 32
      %v8614 = vpop.permute.xlu0 %8613
      %8615 = vrot.lane.b32.xlu0 %v8092, 32
      %v8616 = vpop.permute.xlu0 %8615
      %8617 = vrot.lane.b32.xlu0 %v8093, 32
      %v8618 = vpop.permute.xlu0 %8617
      %8619 = vrot.lane.b32.xlu0 %v8094, 32
      %v8620 = vpop.permute.xlu0 %8619
      %8621 = vrot.lane.b32.xlu0 %v8095, 32
      %v8622 = vpop.permute.xlu0 %8621
      %8623 = vrot.lane.b32.xlu0 %v8096, 32
      %v8624 = vpop.permute.xlu0 %8623
      %8625 = vrot.lane.b32.xlu0 %v8097, 32
      %v8626 = vpop.permute.xlu0 %8625
      %8627 = vrot.lane.b32.xlu0 %v8098, 32
      %v8628 = vpop.permute.xlu0 %8627
      %8629 = vrot.lane.b32.xlu0 %v8099, 32
      %v8630 = vpop.permute.xlu0 %8629
      %8631 = vrot.lane.b32.xlu0 %v8100, 32
      %v8632 = vpop.permute.xlu0 %8631
      %8633 = vrot.lane.b32.xlu0 %v8101, 32
      %v8634 = vpop.permute.xlu0 %8633
      %8635 = vrot.lane.b32.xlu0 %v8102, 32
      %v8636 = vpop.permute.xlu0 %8635
      %8637 = vrot.lane.b32.xlu0 %v8103, 32
      %v8638 = vpop.permute.xlu0 %8637
      %8639 = vrot.lane.b32.xlu0 %v8104, 32
      %v8640 = vpop.permute.xlu0 %8639
      %8641 = vrot.lane.b32.xlu0 %v8105, 32
      %v8642 = vpop.permute.xlu0 %8641
      %8643 = vrot.lane.b32.xlu0 %v8106, 32
      %v8644 = vpop.permute.xlu0 %8643
      %8645 = vrot.lane.b32.xlu0 %v8107, 32
      %v8646 = vpop.permute.xlu0 %8645
      %8647 = vrot.lane.b32.xlu0 %v8108, 32
      %v8648 = vpop.permute.xlu0 %8647
      %8649 = vrot.lane.b32.xlu0 %v8109, 32
      %v8650 = vpop.permute.xlu0 %8649
      %8651 = vrot.lane.b32.xlu0 %v8110, 32
      %v8652 = vpop.permute.xlu0 %8651
      %8653 = vrot.lane.b32.xlu0 %v8111, 32
      %v8654 = vpop.permute.xlu0 %8653
      %8655 = vrot.lane.b32.xlu0 %v8112, 32
      %v8656 = vpop.permute.xlu0 %8655
      %8657 = vrot.lane.b32.xlu0 %v8113, 32
      %v8658 = vpop.permute.xlu0 %8657
      %8659 = vrot.lane.b32.xlu0 %v8114, 32
      %v8660 = vpop.permute.xlu0 %8659
      %8661 = vrot.lane.b32.xlu0 %v8115, 32
      %v8662 = vpop.permute.xlu0 %8661
      %8663 = vrot.lane.b32.xlu0 %v8116, 32
      %v8664 = vpop.permute.xlu0 %8663
      %8665 = vrot.lane.b32.xlu0 %v8117, 32
      %v8666 = vpop.permute.xlu0 %8665
      %8667 = vrot.lane.b32.xlu0 %v8118, 32
      %v8668 = vpop.permute.xlu0 %8667
      %8733 = vrot.lane.b32.xlu0 %v8121, 64
      %v8734 = vpop.permute.xlu0 %8733
      %8735 = vrot.lane.b32.xlu0 %v8122, 64
      %v8736 = vpop.permute.xlu0 %8735
      %8737 = vrot.lane.b32.xlu0 %v8123, 64
      %v8738 = vpop.permute.xlu0 %8737
      %8739 = vrot.lane.b32.xlu0 %v8124, 64
      %v8740 = vpop.permute.xlu0 %8739
      %8741 = vrot.lane.b32.xlu0 %v8125, 64
      %v8742 = vpop.permute.xlu0 %8741
      %8743 = vrot.lane.b32.xlu0 %v8126, 64
      %v8744 = vpop.permute.xlu0 %8743
      %8745 = vrot.lane.b32.xlu0 %v8127, 64
      %v8746 = vpop.permute.xlu0 %8745
      %8747 = vrot.lane.b32.xlu0 %v8128, 64
      %v8748 = vpop.permute.xlu0 %8747
      %8749 = vrot.lane.b32.xlu0 %v8129, 64
      %v8750 = vpop.permute.xlu0 %8749
      %8751 = vrot.lane.b32.xlu0 %v8130, 64
      %v8752 = vpop.permute.xlu0 %8751
      %8753 = vrot.lane.b32.xlu0 %v8131, 64
      %v8754 = vpop.permute.xlu0 %8753
      %8755 = vrot.lane.b32.xlu0 %v8132, 64
      %v8756 = vpop.permute.xlu0 %8755
      %8757 = vrot.lane.b32.xlu0 %v8133, 64
      %v8758 = vpop.permute.xlu0 %8757
      %8759 = vrot.lane.b32.xlu0 %v8134, 64
      %v8760 = vpop.permute.xlu0 %8759
      %8761 = vrot.lane.b32.xlu0 %v8135, 64
      %v8762 = vpop.permute.xlu0 %8761
      %8763 = vrot.lane.b32.xlu0 %v8136, 64
      %v8764 = vpop.permute.xlu0 %8763
      %8765 = vrot.lane.b32.xlu0 %v8137, 64
      %v8766 = vpop.permute.xlu0 %8765
      %8767 = vrot.lane.b32.xlu0 %v8138, 64
      %v8768 = vpop.permute.xlu0 %8767
      %8769 = vrot.lane.b32.xlu0 %v8139, 64
      %v8770 = vpop.permute.xlu0 %8769
      %8771 = vrot.lane.b32.xlu0 %v8140, 64
      %v8772 = vpop.permute.xlu0 %8771
      %8773 = vrot.lane.b32.xlu0 %v8141, 64
      %v8774 = vpop.permute.xlu0 %8773
      %8775 = vrot.lane.b32.xlu0 %v8142, 64
      %v8776 = vpop.permute.xlu0 %8775
      %8777 = vrot.lane.b32.xlu0 %v8143, 64
      %v8778 = vpop.permute.xlu0 %8777
      %8779 = vrot.lane.b32.xlu0 %v8144, 64
      %v8780 = vpop.permute.xlu0 %8779
      %8781 = vrot.lane.b32.xlu0 %v8145, 64
      %v8782 = vpop.permute.xlu0 %8781
      %8783 = vrot.lane.b32.xlu0 %v8146, 64
      %v8784 = vpop.permute.xlu0 %8783
      %8785 = vrot.lane.b32.xlu0 %v8147, 64
      %v8786 = vpop.permute.xlu0 %8785
      %8787 = vrot.lane.b32.xlu0 %v8148, 64
      %v8788 = vpop.permute.xlu0 %8787
      %8789 = vrot.lane.b32.xlu0 %v8149, 64
      %v8790 = vpop.permute.xlu0 %8789
      %8791 = vrot.lane.b32.xlu0 %v8150, 64
      %v8792 = vpop.permute.xlu0 %8791
      %8793 = vrot.lane.b32.xlu0 %v8151, 64
      %v8794 = vpop.permute.xlu0 %8793
      %8795 = vrot.lane.b32.xlu0 %v8152, 64
      %v8796 = vpop.permute.xlu0 %8795
      %8833 = vrot.lane.b32.xlu0 %v7957, 96
      %v8834 = vpop.permute.xlu0 %8833
      %8835 = vrot.lane.b32.xlu0 %v7958, 96
      %v8836 = vpop.permute.xlu0 %8835
      %8837 = vrot.lane.b32.xlu0 %v7959, 96
      %v8838 = vpop.permute.xlu0 %8837
      %8839 = vrot.lane.b32.xlu0 %v7960, 96
      %v8840 = vpop.permute.xlu0 %8839
      %8841 = vrot.lane.b32.xlu0 %v7961, 96
      %v8842 = vpop.permute.xlu0 %8841
      %8843 = vrot.lane.b32.xlu0 %v7962, 96
      %v8844 = vpop.permute.xlu0 %8843
      %8845 = vrot.lane.b32.xlu0 %v7963, 96
      %v8846 = vpop.permute.xlu0 %8845
      %8847 = vrot.lane.b32.xlu0 %v7964, 96
      %v8848 = vpop.permute.xlu0 %8847
      %8849 = vrot.lane.b32.xlu0 %v7965, 96
      %v8850 = vpop.permute.xlu0 %8849
      %8851 = vrot.lane.b32.xlu0 %v7966, 96
      %v8852 = vpop.permute.xlu0 %8851
      %8853 = vrot.lane.b32.xlu0 %v7967, 96
      %v8854 = vpop.permute.xlu0 %8853
      %8855 = vrot.lane.b32.xlu0 %v7968, 96
      %v8856 = vpop.permute.xlu0 %8855
      %8857 = vrot.lane.b32.xlu0 %v7969, 96
      %v8858 = vpop.permute.xlu0 %8857
      %8859 = vrot.lane.b32.xlu0 %v7970, 96
      %v8860 = vpop.permute.xlu0 %8859
      %8861 = vrot.lane.b32.xlu0 %v7971, 96
      %v8862 = vpop.permute.xlu0 %8861
      %8863 = vrot.lane.b32.xlu0 %v7972, 96
      %v8864 = vpop.permute.xlu0 %8863
      %8865 = vrot.lane.b32.xlu0 %v7973, 96
      %v8866 = vpop.permute.xlu0 %8865
      %8867 = vrot.lane.b32.xlu0 %v7974, 96
      %v8868 = vpop.permute.xlu0 %8867
      %8869 = vrot.lane.b32.xlu0 %v7975, 96
      %v8870 = vpop.permute.xlu0 %8869
      %8871 = vrot.lane.b32.xlu0 %v7976, 96
      %v8872 = vpop.permute.xlu0 %8871
      %8873 = vrot.lane.b32.xlu0 %v7977, 96
      %v8874 = vpop.permute.xlu0 %8873
      %8875 = vrot.lane.b32.xlu0 %v7978, 96
      %v8876 = vpop.permute.xlu0 %8875
      %8877 = vrot.lane.b32.xlu0 %v7979, 96
      %v8878 = vpop.permute.xlu0 %8877
      %8879 = vrot.lane.b32.xlu0 %v7980, 96
      %v8880 = vpop.permute.xlu0 %8879
      %8881 = vrot.lane.b32.xlu0 %v7981, 96
      %v8882 = vpop.permute.xlu0 %8881
      %8883 = vrot.lane.b32.xlu0 %v7982, 96
      %v8884 = vpop.permute.xlu0 %8883
      %8885 = vrot.lane.b32.xlu0 %v7983, 96
      %v8886 = vpop.permute.xlu0 %8885
      %8887 = vrot.lane.b32.xlu0 %v7984, 96
      %v8888 = vpop.permute.xlu0 %8887
      %8889 = vrot.lane.b32.xlu0 %v8083, 96
      %v8890 = vpop.permute.xlu0 %8889
      %8891 = vrot.lane.b32.xlu0 %v8084, 96
      %v8892 = vpop.permute.xlu0 %8891
      %8893 = vrot.lane.b32.xlu0 %v8153, 96
      %v8894 = vpop.permute.xlu0 %8893
      %8895 = vrot.lane.b32.xlu0 %v8154, 96
      %v8896 = vpop.permute.xlu0 %8895
      %v8929 = vsel %vm899, %v7921, %v8222
      %v8930 = vsel %vm899, %v7922, %v8224
      %v8931 = vsel %vm899, %v7923, %v8226
      %v8932 = vsel %vm899, %v7924, %v8228
      %v8933 = vsel %vm899, %v7925, %v8230
      %v8934 = vsel %vm899, %v7926, %v8232
      %v8935 = vsel %vm899, %v7927, %v8234
      %v8936 = vsel %vm899, %v7928, %v8236
      %v8937 = vsel %vm899, %v7929, %v8238
      %v8938 = vsel %vm899, %v7930, %v8240
      %v8939 = vsel %vm899, %v7931, %v8242
      %v8940 = vsel %vm899, %v7932, %v8244
      %v8941 = vsel %vm899, %v7933, %v8246
      %v8942 = vsel %vm899, %v7934, %v8248
      %v8943 = vsel %vm899, %v7935, %v8250
      %v8944 = vsel %vm899, %v7936, %v8252
      %v8945 = vsel %vm899, %v7937, %v8254
      %v8946 = vsel %vm899, %v7938, %v8256
      %v8947 = vsel %vm899, %v7939, %v8258
      %v8948 = vsel %vm899, %v7940, %v8260
      %v8949 = vsel %vm899, %v7941, %v8262
      %v8950 = vsel %vm899, %v7942, %v8264
      %v8951 = vsel %vm899, %v7943, %v8266
      %v8952 = vsel %vm899, %v7944, %v8268
      %v8953 = vsel %vm899, %v7945, %v8270
      %v8954 = vsel %vm899, %v7946, %v8272
      %v8955 = vsel %vm899, %v7947, %v8274
      %v8956 = vsel %vm899, %v7948, %v8276
      %v8957 = vsel %vm899, %v7949, %v8278
      %v8958 = vsel %vm899, %v7950, %v8280
      %v8959 = vsel %vm899, %v7951, %v8282
      %v8960 = vsel %vm899, %v7952, %v8284
      %v8961 = vsel %vm4144, %v8929, %v8350
      %v8962 = vsel %vm4144, %v8930, %v8352
      %v8963 = vsel %vm4144, %v8931, %v8354
      %v8964 = vsel %vm4144, %v8932, %v8356
      %v8965 = vsel %vm4144, %v8933, %v8358
      %v8966 = vsel %vm4144, %v8934, %v8360
      %v8967 = vsel %vm4144, %v8935, %v8362
      %v8968 = vsel %vm4144, %v8936, %v8364
      %v8969 = vsel %vm4144, %v8937, %v8366
      %v8970 = vsel %vm4144, %v8938, %v8368
      %v8971 = vsel %vm4144, %v8939, %v8370
      %v8972 = vsel %vm4144, %v8940, %v8372
      %v8973 = vsel %vm4144, %v8941, %v8374
      %v8974 = vsel %vm4144, %v8942, %v8376
      %v8975 = vsel %vm4144, %v8943, %v8378
      %v8976 = vsel %vm4144, %v8944, %v8380
      %v8977 = vsel %vm4144, %v8945, %v8382
      %v8978 = vsel %vm4144, %v8946, %v8384
      %v8979 = vsel %vm4144, %v8947, %v8386
      %v8980 = vsel %vm4144, %v8948, %v8388
      %v8981 = vsel %vm4144, %v8949, %v8390
      %v8982 = vsel %vm4144, %v8950, %v8392
      %v8983 = vsel %vm4144, %v8951, %v8394
      %v8984 = vsel %vm4144, %v8952, %v8396
      %v8985 = vsel %vm4144, %v8953, %v8398
      %v8986 = vsel %vm4144, %v8954, %v8400
      %v8987 = vsel %vm4144, %v8955, %v8402
      %v8988 = vsel %vm4144, %v8956, %v8404
      %v8989 = vsel %vm4144, %v8957, %v8406
      %v8990 = vsel %vm4144, %v8958, %v8408
      %v8991 = vsel %vm4144, %v8959, %v8410
      %v8992 = vsel %vm4144, %v8960, %v8412
      %v8993 = vsel %vm4177, %v8961, %v8478
      %v8994 = vsel %vm4177, %v8962, %v8480
      %v8995 = vsel %vm4177, %v8963, %v8482
      %v8996 = vsel %vm4177, %v8964, %v8484
      %v8997 = vsel %vm4177, %v8965, %v8486
      %v8998 = vsel %vm4177, %v8966, %v8488
      %v8999 = vsel %vm4177, %v8967, %v8490
      %v9000 = vsel %vm4177, %v8968, %v8492
      %v9001 = vsel %vm4177, %v8969, %v8494
      %v9002 = vsel %vm4177, %v8970, %v8496
      %v9003 = vsel %vm4177, %v8971, %v8498
      %v9004 = vsel %vm4177, %v8972, %v8500
      %v9005 = vsel %vm4177, %v8973, %v8502
      %v9006 = vsel %vm4177, %v8974, %v8504
      %v9007 = vsel %vm4177, %v8975, %v8506
      %v9008 = vsel %vm4177, %v8976, %v8508
      %v9009 = vsel %vm4177, %v8977, %v8510
      %v9010 = vsel %vm4177, %v8978, %v8512
      %v9011 = vsel %vm4177, %v8979, %v8514
      %v9012 = vsel %vm4177, %v8980, %v8516
      %v9013 = vsel %vm4177, %v8981, %v8518
      %v9014 = vsel %vm4177, %v8982, %v8520
      %v9015 = vsel %vm4177, %v8983, %v8522
      %v9016 = vsel %vm4177, %v8984, %v8524
      %v9017 = vsel %vm4177, %v8985, %v8526
      %v9018 = vsel %vm4177, %v8986, %v8528
      %v9019 = vsel %vm4177, %v8987, %v8530
      %v9020 = vsel %vm4177, %v8988, %v8532
      %v9021 = vsel %vm4177, %v8989, %v8534
      %v9022 = vsel %vm4177, %v8990, %v8536
      %v9023 = vsel %vm4177, %v8991, %v8538
      %v9024 = vsel %vm4177, %v8992, %v8540
      %v9025 = vsel %vm899, %v7955, %v8606
      %v9026 = vsel %vm899, %v7956, %v8608
      %v9027 = vsel %vm899, %v7957, %v8610
      %v9028 = vsel %vm899, %v7958, %v8612
      %v9029 = vsel %vm899, %v7959, %v8614
      %v9030 = vsel %vm899, %v7960, %v8616
      %v9031 = vsel %vm899, %v7961, %v8618
      %v9032 = vsel %vm899, %v7962, %v8620
      %v9033 = vsel %vm899, %v7963, %v8622
      %v9034 = vsel %vm899, %v7964, %v8624
      %v9035 = vsel %vm899, %v7965, %v8626
      %v9036 = vsel %vm899, %v7966, %v8628
      %v9037 = vsel %vm899, %v7967, %v8630
      %v9038 = vsel %vm899, %v7968, %v8632
      %v9039 = vsel %vm899, %v7969, %v8634
      %v9040 = vsel %vm899, %v7970, %v8636
      %v9041 = vsel %vm899, %v7971, %v8638
      %v9042 = vsel %vm899, %v7972, %v8640
      %v9043 = vsel %vm899, %v7973, %v8642
      %v9044 = vsel %vm899, %v7974, %v8644
      %v9045 = vsel %vm899, %v7975, %v8646
      %v9046 = vsel %vm899, %v7976, %v8648
      %v9047 = vsel %vm899, %v7977, %v8650
      %v9048 = vsel %vm899, %v7978, %v8652
      %v9049 = vsel %vm899, %v7979, %v8654
      %v9050 = vsel %vm899, %v7980, %v8656
      %v9051 = vsel %vm899, %v7981, %v8658
      %v9052 = vsel %vm899, %v7982, %v8660
      %v9053 = vsel %vm899, %v7983, %v8662
      %v9054 = vsel %vm899, %v7984, %v8664
      %v9055 = vsel %vm899, %v8083, %v8666
      %v9056 = vsel %vm899, %v8084, %v8668
      %v9057 = vsel %vm4144, %v9025, %v8734
      %v9058 = vsel %vm4144, %v9026, %v8736
      %v9059 = vsel %vm4144, %v9027, %v8738
      %v9060 = vsel %vm4144, %v9028, %v8740
      %v9061 = vsel %vm4144, %v9029, %v8742
      %v9062 = vsel %vm4144, %v9030, %v8744
      %v9063 = vsel %vm4144, %v9031, %v8746
      %v9064 = vsel %vm4144, %v9032, %v8748
      %v9065 = vsel %vm4144, %v9033, %v8750
      %v9066 = vsel %vm4144, %v9034, %v8752
      %v9067 = vsel %vm4144, %v9035, %v8754
      %v9068 = vsel %vm4144, %v9036, %v8756
      %v9069 = vsel %vm4144, %v9037, %v8758
      %v9070 = vsel %vm4144, %v9038, %v8760
      %v9071 = vsel %vm4144, %v9039, %v8762
      %v9072 = vsel %vm4144, %v9040, %v8764
      %v9073 = vsel %vm4144, %v9041, %v8766
      %v9074 = vsel %vm4144, %v9042, %v8768
      %v9075 = vsel %vm4144, %v9043, %v8770
      %v9076 = vsel %vm4144, %v9044, %v8772
      %v9077 = vsel %vm4144, %v9045, %v8774
      %v9078 = vsel %vm4144, %v9046, %v8776
      %v9079 = vsel %vm4144, %v9047, %v8778
      %v9080 = vsel %vm4144, %v9048, %v8780
      %v9081 = vsel %vm4144, %v9049, %v8782
      %v9082 = vsel %vm4144, %v9050, %v8784
      %v9083 = vsel %vm4144, %v9051, %v8786
      %v9084 = vsel %vm4144, %v9052, %v8788
      %v9085 = vsel %vm4144, %v9053, %v8790
      %v9086 = vsel %vm4144, %v9054, %v8792
      %v9087 = vsel %vm4144, %v9055, %v8794
      %v9088 = vsel %vm4144, %v9056, %v8796
      %v9089 = vsel %vm4177, %v9057, %v8834
      %v9090 = vsel %vm4177, %v9058, %v8836
      %v9091 = vsel %vm4177, %v9059, %v8838
      %v9092 = vsel %vm4177, %v9060, %v8840
      %v9093 = vsel %vm4177, %v9061, %v8842
      %v9094 = vsel %vm4177, %v9062, %v8844
      %v9095 = vsel %vm4177, %v9063, %v8846
      %v9096 = vsel %vm4177, %v9064, %v8848
      %v9097 = vsel %vm4177, %v9065, %v8850
      %v9098 = vsel %vm4177, %v9066, %v8852
      %v9099 = vsel %vm4177, %v9067, %v8854
      %v9100 = vsel %vm4177, %v9068, %v8856
      %v9101 = vsel %vm4177, %v9069, %v8858
      %v9102 = vsel %vm4177, %v9070, %v8860
      %v9103 = vsel %vm4177, %v9071, %v8862
      %v9104 = vsel %vm4177, %v9072, %v8864
      %v9105 = vsel %vm4177, %v9073, %v8866
      %v9106 = vsel %vm4177, %v9074, %v8868
      %v9107 = vsel %vm4177, %v9075, %v8870
      %v9108 = vsel %vm4177, %v9076, %v8872
      %v9109 = vsel %vm4177, %v9077, %v8874
      %v9110 = vsel %vm4177, %v9078, %v8876
      %v9111 = vsel %vm4177, %v9079, %v8878
      %v9112 = vsel %vm4177, %v9080, %v8880
      %v9113 = vsel %vm4177, %v9081, %v8882
      %v9114 = vsel %vm4177, %v9082, %v8884
      %v9115 = vsel %vm4177, %v9083, %v8886
      %v9116 = vsel %vm4177, %v9084, %v8888
      %v9117 = vsel %vm4177, %v9085, %v8890
      %v9118 = vsel %vm4177, %v9086, %v8892
      %v9119 = vsel %vm4177, %v9087, %v8894
      %v9120 = vsel %vm4177, %v9088, %v8896
      %v9121 = vpack.c.bf16 %v8994, %v8993
      %v9122 = vpack.c.bf16 %v9090, %v9089
      %v9123 = vpack.c.bf16 %v8158, %v8157
      %v9124 = vpack.c.bf16 %v8996, %v8995
      %v9125 = vpack.c.bf16 %v9092, %v9091
      %v9126 = vpack.c.bf16 %v8160, %v8159
      %v9127 = vpack.c.bf16 %v8998, %v8997
      %v9128 = vpack.c.bf16 %v9094, %v9093
      %v9129 = vpack.c.bf16 %v8162, %v8161
      %v9130 = vpack.c.bf16 %v9000, %v8999
      %v9131 = vpack.c.bf16 %v9096, %v9095
      %v9132 = vpack.c.bf16 %v8164, %v8163
      %v9133 = vpack.c.bf16 %v9002, %v9001
      %v9134 = vpack.c.bf16 %v9098, %v9097
      %v9135 = vpack.c.bf16 %v8166, %v8165
      %v9136 = vpack.c.bf16 %v9004, %v9003
      %v9137 = vpack.c.bf16 %v9100, %v9099
      %v9138 = vpack.c.bf16 %v8168, %v8167
      %v9139 = vpack.c.bf16 %v9006, %v9005
      %v9140 = vpack.c.bf16 %v9102, %v9101
      %v9141 = vpack.c.bf16 %v8170, %v8169
      %v9142 = vpack.c.bf16 %v9008, %v9007
      %v9143 = vpack.c.bf16 %v9104, %v9103
      %v9144 = vpack.c.bf16 %v8172, %v8171
      %v9145 = vpack.c.bf16 %v9010, %v9009
      %v9146 = vpack.c.bf16 %v9106, %v9105
      %v9147 = vpack.c.bf16 %v8174, %v8173
      %v9148 = vpack.c.bf16 %v9012, %v9011
      %v9149 = vpack.c.bf16 %v9108, %v9107
      %v9150 = vpack.c.bf16 %v8176, %v8175
      %v9151 = vpack.c.bf16 %v9014, %v9013
      %v9152 = vpack.c.bf16 %v9110, %v9109
      %v9153 = vpack.c.bf16 %v8178, %v8177
      %v9154 = vpack.c.bf16 %v9016, %v9015
      %v9155 = vpack.c.bf16 %v9112, %v9111
      %v9156 = vpack.c.bf16 %v8180, %v8179
      %v9157 = vpack.c.bf16 %v9018, %v9017
      %v9158 = vpack.c.bf16 %v9114, %v9113
      %v9159 = vpack.c.bf16 %v8182, %v8181
      %v9160 = vpack.c.bf16 %v9020, %v9019
      %v9161 = vpack.c.bf16 %v9116, %v9115
      %v9162 = vpack.c.bf16 %v8184, %v8183
      %v9163 = vpack.c.bf16 %v9022, %v9021
      %v9164 = vpack.c.bf16 %v9118, %v9117
      %v9165 = vpack.c.bf16 %v8186, %v8185
      %v9166 = vpack.c.bf16 %v9024, %v9023
      %v9167 = vpack.c.bf16 %v9120, %v9119
      %v9168 = vpack.c.bf16 %v8188, %v8187
      %v9169 = vld [vmem:[%s7] sm:$0xf]
      %v9170 = vld [vmem:[%s7 + $0x4] sm:$0xf]
      %v9171 = vld [vmem:[%s7 + $0x8] sm:$0xf]
      %v9172 = vld [vmem:[%s7 + $0xc] sm:$0xf]
      %v9173 = vld [vmem:[%s7 + $0x10] sm:$0xf]
      %v9174 = vld [vmem:[%s7 + $0x14] sm:$0xf]
      %v9175 = vld [vmem:[%s7 + $0x18] sm:$0xf]
      %v9176 = vld [vmem:[%s7 + $0x1c] sm:$0xf]
      %v9177 = vld [vmem:[%s7 + $0x20] sm:$0xf]
      %v9178 = vld [vmem:[%s7 + $0x24] sm:$0xf]
      %v9179 = vld [vmem:[%s7 + $0x28] sm:$0xf]
      %v9180 = vld [vmem:[%s7 + $0x2c] sm:$0xf]
      %v9181 = vld [vmem:[%s7 + $0x30] sm:$0xf]
      %v9182 = vld [vmem:[%s7 + $0x34] sm:$0xf]
      %v9183 = vld [vmem:[%s7 + $0x38] sm:$0xf]
      %v9184 = vld [vmem:[%s7 + $0x3c] sm:$0xf]
      %v9185 = vld [vmem:[%s7 + $0x40] sm:$0xf]
      %v9186 = vld [vmem:[%s7 + $0x44] sm:$0xf]
      %v9187 = vld [vmem:[%s7 + $0x48] sm:$0xf]
      %v9188 = vld [vmem:[%s7 + $0x4c] sm:$0xf]
      %v9189 = vld [vmem:[%s7 + $0x50] sm:$0xf]
      %v9190 = vld [vmem:[%s7 + $0x54] sm:$0xf]
      %v9191 = vld [vmem:[%s7 + $0x58] sm:$0xf]
      %v9192 = vld [vmem:[%s7 + $0x5c] sm:$0xf]
      %v9193 = vld [vmem:[%s7 + $0x60] sm:$0xf]
      %v9194 = vld [vmem:[%s7 + $0x64] sm:$0xf]
      %v9195 = vld [vmem:[%s7 + $0x68] sm:$0xf]
      %v9196 = vld [vmem:[%s7 + $0x6c] sm:$0xf]
      %v9197 = vld [vmem:[%s7 + $0x70] sm:$0xf]
      %v9198 = vld [vmem:[%s7 + $0x74] sm:$0xf]
      %v9199 = vld [vmem:[%s7 + $0x78] sm:$0xf]
      %v9200 = vld [vmem:[%s7 + $0x7c] sm:$0xf]
      %v9201 = vld [vmem:[%s7 + $0x80] sm:$0xf]
      %v9202 = vld [vmem:[%s7 + $0x84] sm:$0xf]
      %v9203 = vld [vmem:[%s7 + $0x88] sm:$0xf]
      %v9204 = vld [vmem:[%s7 + $0x8c] sm:$0xf]
      %v9205 = vlaneseq
      %v9206 = vshrl.u32 %v9205, 7
      %v9207 = vsub.s32 3, %v9206
      %v9208 = vrot.slane %v906, %v9207
      %v9245 = vunpack.c.l.b16 %v9169
      %v9246 = vunpack.c.l.b16 %v9170
      %v9247 = vunpack.c.l.b16 %v9171
      %v9248 = vunpack.c.l.b16 %v9172
      %v9249 = vunpack.c.l.b16 %v9173
      %v9250 = vunpack.c.l.b16 %v9174
      %v9251 = vunpack.c.l.b16 %v9175
      %v9252 = vunpack.c.l.b16 %v9176
      %v9253 = vunpack.c.l.b16 %v9177
      %v9254 = vunpack.c.l.b16 %v9178
      %v9255 = vunpack.c.l.b16 %v9179
      %v9256 = vunpack.c.l.b16 %v9180
      %v9257 = vunpack.c.l.b16 %v9181
      %v9258 = vunpack.c.l.b16 %v9182
      %v9259 = vunpack.c.l.b16 %v9183
      %v9260 = vunpack.c.l.b16 %v9184
      %v9261 = vunpack.c.l.b16 %v9185
      %v9262 = vunpack.c.l.b16 %v9186
      %v9263 = vunpack.c.l.b16 %v9187
      %v9264 = vunpack.c.l.b16 %v9188
      %v9265 = vunpack.c.l.b16 %v9189
      %v9266 = vunpack.c.l.b16 %v9190
      %v9267 = vunpack.c.l.b16 %v9191
      %v9268 = vunpack.c.l.b16 %v9192
      %v9269 = vunpack.c.l.b16 %v9193
      %v9270 = vunpack.c.l.b16 %v9194
      %v9271 = vunpack.c.l.b16 %v9195
      %v9272 = vunpack.c.l.b16 %v9196
      %v9273 = vunpack.c.l.b16 %v9197
      %v9274 = vunpack.c.l.b16 %v9198
      %v9275 = vunpack.c.l.b16 %v9199
      %v9276 = vunpack.c.l.b16 %v9200
      %v9277 = vunpack.c.l.b16 %v9201
      %v9278 = vunpack.c.l.b16 %v9202
      %v9279 = vunpack.c.l.b16 %v9203
      %v9280 = vunpack.c.l.b16 %v9204
      %v9281 = vpack.c.b16 %v9246, %v9245
      %v9282 = vpack.c.b16 %v9248, %v9247
      %v9283 = vpack.c.b16 %v9250, %v9249
      %v9284 = vpack.c.b16 %v9252, %v9251
      %v9285 = vpack.c.b16 %v9254, %v9253
      %v9286 = vpack.c.b16 %v9256, %v9255
      %v9287 = vpack.c.b16 %v9258, %v9257
      %v9288 = vpack.c.b16 %v9260, %v9259
      %v9289 = vpack.c.b16 %v9262, %v9261
      %v9290 = vpack.c.b16 %v9264, %v9263
      %v9291 = vpack.c.b16 %v9266, %v9265
      %v9292 = vpack.c.b16 %v9268, %v9267
      %v9293 = vpack.c.b16 %v9270, %v9269
      %v9294 = vpack.c.b16 %v9272, %v9271
      %v9295 = vpack.c.b16 %v9274, %v9273
      %v9296 = vpack.c.b16 %v9276, %v9275
      %v9297 = vpack.c.b16 %v9278, %v9277
      %v9298 = vpack.c.b16 %v9280, %v9279
      %v9318 = vsel %vm899, %v9123, 0
      %v9321 = vsel %vm899, %v9126, 0
      %v9324 = vsel %vm899, %v9129, 0
      %v9327 = vsel %vm899, %v9132, 0
      %v9330 = vsel %vm899, %v9135, 0
      %v9333 = vsel %vm899, %v9138, 0
      %v9336 = vsel %vm899, %v9141, 0
      %v9339 = vsel %vm899, %v9144, 0
      %v9342 = vsel %vm899, %v9147, 0
      %v9345 = vsel %vm899, %v9150, 0
      %v9348 = vsel %vm899, %v9153, 0
      %v9351 = vsel %vm899, %v9156, 0
      %v9354 = vsel %vm899, %v9159, 0
      %v9357 = vsel %vm899, %v9162, 0
      %v9360 = vsel %vm899, %v9165, 0
      %v9363 = vsel %vm899, %v9168, 0
      %9365 = vmatprep.subr.bf16.mxu0 0
      %9366 = vmatpush1.bf16.msra.mxu0 %v9288
      %9367 = vmatprep.subr.bf16.mxu0 0
      %9368 = vmatpush1.bf16.msra.mxu0 %v9287
      %9369 = vmatprep.subr.bf16.mxu0 0
      %9370 = vmatpush1.bf16.msra.mxu0 %v9286
      %9371 = vmatprep.subr.bf16.mxu0 0
      %9372 = vmatpush1.bf16.msra.mxu0 %v9285
      %9373 = vmatprep.subr.bf16.mxu0 0
      %9374 = vmatpush1.bf16.msra.mxu0 %v9284
      %9375 = vmatprep.subr.bf16.mxu0 0
      %9376 = vmatpush1.bf16.msra.mxu0 %v9283
      %9377 = vmatprep.subr.bf16.mxu0 0
      %9378 = vmatpush1.bf16.msra.mxu0 %v9282
      %9379 = vmatprep.subr.bf16.mxu0 0
      %9380 = vmatpush1.bf16.msra.mxu0 %v9281
      %9381 = vmatprep.subr.bf16.mxu0 0
      %9382 = vmatpush2.bf16.msra.mxu0 %v9296
      %9383 = vmatprep.subr.bf16.mxu0 0
      %9384 = vmatpush2.bf16.msra.mxu0 %v9295
      %9385 = vmatprep.subr.bf16.mxu0 0
      %9386 = vmatpush2.bf16.msra.mxu0 %v9294
      %9387 = vmatprep.subr.bf16.mxu0 0
      %9388 = vmatpush2.bf16.msra.mxu0 %v9293
      %9389 = vmatprep.subr.bf16.mxu0 0
      %9390 = vmatpush2.bf16.msra.mxu0 %v9292
      %9391 = vmatprep.subr.bf16.mxu0 0
      %9392 = vmatpush2.bf16.msra.mxu0 %v9291
      %9393 = vmatprep.subr.bf16.mxu0 0
      %9394 = vmatpush2.bf16.msra.mxu0 %v9290
      %9395 = vmatprep.subr.bf16.mxu0 0
      %9396 = vmatpush2.bf16.msra.mxu0 %v9289
      %9397 = vmatprep.mubr.bf16.mxu0 %v9122
      %9398 = vmatmul.mubr.bf16.gmra.mxu0 %v9121
      %v9399 = vpop.f32.mrf.mxu0
      %v9400 = vadd.f32 %v9208, %v9399
      %v9401 = vpop.f32.mrf.mxu0
      %v9402 = vpop.f32.mrf.mxu0
      %v9403 = vadd.f32 %v9208, %v9402
      %v9404 = vpop.f32.mrf.mxu0
      %9405 = vmatprep.mubr.bf16.mxu0 %v9125
      %9406 = vmatmul.mubr.bf16.gmra.mxu0 %v9124
      %v9407 = vpop.f32.mrf.mxu0
      %v9408 = vadd.f32 %v9208, %v9407
      %v9409 = vpop.f32.mrf.mxu0
      %v9410 = vpop.f32.mrf.mxu0
      %v9411 = vadd.f32 %v9208, %v9410
      %v9412 = vpop.f32.mrf.mxu0
      %9413 = vmatprep.mubr.bf16.mxu0 %v9128
      %9414 = vmatmul.mubr.bf16.gmra.mxu0 %v9127
      %v9415 = vpop.f32.mrf.mxu0
      %v9416 = vadd.f32 %v9208, %v9415
      %v9417 = vpop.f32.mrf.mxu0
      %v9418 = vpop.f32.mrf.mxu0
      %v9419 = vadd.f32 %v9208, %v9418
      %v9420 = vpop.f32.mrf.mxu0
      %9421 = vmatprep.mubr.bf16.mxu0 %v9131
      %9422 = vmatmul.mubr.bf16.gmra.mxu0 %v9130
      %v9423 = vpop.f32.mrf.mxu0
      %v9424 = vadd.f32 %v9208, %v9423
      %v9425 = vpop.f32.mrf.mxu0
      %v9426 = vpop.f32.mrf.mxu0
      %v9427 = vadd.f32 %v9208, %v9426
      %v9428 = vpop.f32.mrf.mxu0
      %9429 = vmatprep.mubr.bf16.mxu0 %v9134
      %9430 = vmatmul.mubr.bf16.gmra.mxu0 %v9133
      %v9431 = vpop.f32.mrf.mxu0
      %v9432 = vadd.f32 %v9208, %v9431
      %v9433 = vpop.f32.mrf.mxu0
      %v9434 = vpop.f32.mrf.mxu0
      %v9435 = vadd.f32 %v9208, %v9434
      %v9436 = vpop.f32.mrf.mxu0
      %9437 = vmatprep.mubr.bf16.mxu0 %v9137
      %9438 = vmatmul.mubr.bf16.gmra.mxu0 %v9136
      %v9439 = vpop.f32.mrf.mxu0
      %v9440 = vadd.f32 %v9208, %v9439
      %v9441 = vpop.f32.mrf.mxu0
      %v9442 = vpop.f32.mrf.mxu0
      %v9443 = vadd.f32 %v9208, %v9442
      %v9444 = vpop.f32.mrf.mxu0
      %9445 = vmatprep.mubr.bf16.mxu0 %v9140
      %9446 = vmatmul.mubr.bf16.gmra.mxu0 %v9139
      %v9447 = vpop.f32.mrf.mxu0
      %v9448 = vadd.f32 %v9208, %v9447
      %v9449 = vpop.f32.mrf.mxu0
      %v9450 = vpop.f32.mrf.mxu0
      %v9451 = vadd.f32 %v9208, %v9450
      %v9452 = vpop.f32.mrf.mxu0
      %9453 = vmatprep.mubr.bf16.mxu0 %v9143
      %9454 = vmatmul.mubr.bf16.gmra.mxu0 %v9142
      %v9455 = vpop.f32.mrf.mxu0
      %v9456 = vadd.f32 %v9208, %v9455
      %v9457 = vpop.f32.mrf.mxu0
      %v9458 = vpop.f32.mrf.mxu0
      %v9459 = vadd.f32 %v9208, %v9458
      %v9460 = vpop.f32.mrf.mxu0
      %9461 = vmatprep.mubr.bf16.mxu0 %v9146
      %9462 = vmatmul.mubr.bf16.gmra.mxu0 %v9145
      %v9463 = vpop.f32.mrf.mxu0
      %v9464 = vadd.f32 %v9208, %v9463
      %v9465 = vpop.f32.mrf.mxu0
      %v9466 = vpop.f32.mrf.mxu0
      %v9467 = vadd.f32 %v9208, %v9466
      %v9468 = vpop.f32.mrf.mxu0
      %9469 = vmatprep.mubr.bf16.mxu0 %v9149
      %9470 = vmatmul.mubr.bf16.gmra.mxu0 %v9148
      %v9471 = vpop.f32.mrf.mxu0
      %v9472 = vadd.f32 %v9208, %v9471
      %v9473 = vpop.f32.mrf.mxu0
      %v9474 = vpop.f32.mrf.mxu0
      %v9475 = vadd.f32 %v9208, %v9474
      %v9476 = vpop.f32.mrf.mxu0
      %9477 = vmatprep.mubr.bf16.mxu0 %v9152
      %9478 = vmatmul.mubr.bf16.gmra.mxu0 %v9151
      %v9479 = vpop.f32.mrf.mxu0
      %v9480 = vadd.f32 %v9208, %v9479
      %v9481 = vpop.f32.mrf.mxu0
      %v9482 = vpop.f32.mrf.mxu0
      %v9483 = vadd.f32 %v9208, %v9482
      %v9484 = vpop.f32.mrf.mxu0
      %9485 = vmatprep.mubr.bf16.mxu0 %v9155
      %9486 = vmatmul.mubr.bf16.gmra.mxu0 %v9154
      %v9487 = vpop.f32.mrf.mxu0
      %v9488 = vadd.f32 %v9208, %v9487
      %v9489 = vpop.f32.mrf.mxu0
      %v9490 = vpop.f32.mrf.mxu0
      %v9491 = vadd.f32 %v9208, %v9490
      %v9492 = vpop.f32.mrf.mxu0
      %9493 = vmatprep.mubr.bf16.mxu0 %v9158
      %9494 = vmatmul.mubr.bf16.gmra.mxu0 %v9157
      %v9495 = vpop.f32.mrf.mxu0
      %v9496 = vadd.f32 %v9208, %v9495
      %v9497 = vpop.f32.mrf.mxu0
      %v9498 = vpop.f32.mrf.mxu0
      %v9499 = vadd.f32 %v9208, %v9498
      %v9500 = vpop.f32.mrf.mxu0
      %9501 = vmatprep.mubr.bf16.mxu0 %v9161
      %9502 = vmatmul.mubr.bf16.gmra.mxu0 %v9160
      %v9503 = vpop.f32.mrf.mxu0
      %v9504 = vadd.f32 %v9208, %v9503
      %v9505 = vpop.f32.mrf.mxu0
      %v9506 = vpop.f32.mrf.mxu0
      %v9507 = vadd.f32 %v9208, %v9506
      %v9508 = vpop.f32.mrf.mxu0
      %9509 = vmatprep.mubr.bf16.mxu0 %v9164
      %9510 = vmatmul.mubr.bf16.gmra.mxu0 %v9163
      %v9511 = vpop.f32.mrf.mxu0
      %v9512 = vadd.f32 %v9208, %v9511
      %v9513 = vpop.f32.mrf.mxu0
      %v9514 = vpop.f32.mrf.mxu0
      %v9515 = vadd.f32 %v9208, %v9514
      %v9516 = vpop.f32.mrf.mxu0
      %9517 = vmatprep.mubr.bf16.mxu0 %v9167
      %9518 = vmatmul.mubr.bf16.gmra.mxu0 %v9166
      %v9519 = vpop.f32.mrf.mxu0
      %v9520 = vadd.f32 %v9208, %v9519
      %v9521 = vpop.f32.mrf.mxu0
      %v9522 = vpop.f32.mrf.mxu0
      %v9523 = vadd.f32 %v9208, %v9522
      %v9524 = vpop.f32.mrf.mxu0
      %9525 = vdwg.mxu0
      %9526 = vmatprep.subr.bf16.mxu0 0
      %9527 = vmatpush1.bf16.msra.mxu0 0
      %9528 = vmatprep.subr.bf16.mxu0 0
      %9529 = vmatpush1.bf16.msra.mxu0 0
      %9530 = vmatprep.subr.bf16.mxu0 0
      %9531 = vmatpush1.bf16.msra.mxu0 0
      %9532 = vmatprep.subr.bf16.mxu0 0
      %9533 = vmatpush1.bf16.msra.mxu0 0
      %9534 = vmatprep.subr.bf16.mxu0 0
      %9535 = vmatpush1.bf16.msra.mxu0 0
      %9536 = vmatprep.subr.bf16.mxu0 0
      %9537 = vmatpush1.bf16.msra.mxu0 0
      %9538 = vmatprep.subr.bf16.mxu0 0
      %9539 = vmatpush1.bf16.msra.mxu0 %v9298
      %9540 = vmatprep.subr.bf16.mxu0 0
      %9541 = vmatpush1.bf16.msra.mxu0 %v9297
      %9542 = vmatprep.subr.bf16.mxu0 0
      %9543 = vmatpush2.bf16.msra.mxu0 0
      %9544 = vmatprep.subr.bf16.mxu0 0
      %9545 = vmatpush2.bf16.msra.mxu0 0
      %9546 = vmatprep.subr.bf16.mxu0 0
      %9547 = vmatpush2.bf16.msra.mxu0 0
      %9548 = vmatprep.subr.bf16.mxu0 0
      %9549 = vmatpush2.bf16.msra.mxu0 0
      %9550 = vmatprep.subr.bf16.mxu0 0
      %9551 = vmatpush2.bf16.msra.mxu0 0
      %9552 = vmatprep.subr.bf16.mxu0 0
      %9553 = vmatpush2.bf16.msra.mxu0 0
      %9554 = vmatprep.subr.bf16.mxu0 0
      %9555 = vmatpush2.bf16.msra.mxu0 0
      %9556 = vmatprep.subr.bf16.mxu0 0
      %9557 = vmatpush2.bf16.msra.mxu0 0
      %9558 = vmatprep.mubr.bf16.mxu0 0
      %9559 = vmatmul.mubr.bf16.gmra.mxu0 %v9318
      %v9560 = vpop.f32.mrf.mxu0
      %v9561 = vadd.f32 %v9400, %v9560
      %v9562 = vpop.f32.mrf.mxu0
      %v9563 = vpop.f32.mrf.mxu0
      %v9564 = vadd.f32 %v9403, %v9563
      %v9565 = vpop.f32.mrf.mxu0
      %9566 = vmatprep.mubr.bf16.mxu0 0
      %9567 = vmatmul.mubr.bf16.gmra.mxu0 %v9321
      %v9568 = vpop.f32.mrf.mxu0
      %v9569 = vadd.f32 %v9408, %v9568
      %v9570 = vpop.f32.mrf.mxu0
      %v9571 = vpop.f32.mrf.mxu0
      %v9572 = vadd.f32 %v9411, %v9571
      %v9573 = vpop.f32.mrf.mxu0
      %9574 = vmatprep.mubr.bf16.mxu0 0
      %9575 = vmatmul.mubr.bf16.gmra.mxu0 %v9324
      %v9576 = vpop.f32.mrf.mxu0
      %v9577 = vadd.f32 %v9416, %v9576
      %v9578 = vpop.f32.mrf.mxu0
      %v9579 = vpop.f32.mrf.mxu0
      %v9580 = vadd.f32 %v9419, %v9579
      %v9581 = vpop.f32.mrf.mxu0
      %9582 = vmatprep.mubr.bf16.mxu0 0
      %9583 = vmatmul.mubr.bf16.gmra.mxu0 %v9327
      %v9584 = vpop.f32.mrf.mxu0
      %v9585 = vadd.f32 %v9424, %v9584
      %v9586 = vpop.f32.mrf.mxu0
      %v9587 = vpop.f32.mrf.mxu0
      %v9588 = vadd.f32 %v9427, %v9587
      %v9589 = vpop.f32.mrf.mxu0
      %9590 = vmatprep.mubr.bf16.mxu0 0
      %9591 = vmatmul.mubr.bf16.gmra.mxu0 %v9330
      %v9592 = vpop.f32.mrf.mxu0
      %v9593 = vadd.f32 %v9432, %v9592
      %v9594 = vpop.f32.mrf.mxu0
      %v9595 = vpop.f32.mrf.mxu0
      %v9596 = vadd.f32 %v9435, %v9595
      %v9597 = vpop.f32.mrf.mxu0
      %9598 = vmatprep.mubr.bf16.mxu0 0
      %9599 = vmatmul.mubr.bf16.gmra.mxu0 %v9333
      %v9600 = vpop.f32.mrf.mxu0
      %v9601 = vadd.f32 %v9440, %v9600
      %v9602 = vpop.f32.mrf.mxu0
      %v9603 = vpop.f32.mrf.mxu0
      %v9604 = vadd.f32 %v9443, %v9603
      %v9605 = vpop.f32.mrf.mxu0
      %9606 = vmatprep.mubr.bf16.mxu0 0
      %9607 = vmatmul.mubr.bf16.gmra.mxu0 %v9336
      %v9608 = vpop.f32.mrf.mxu0
      %v9609 = vadd.f32 %v9448, %v9608
      %v9610 = vpop.f32.mrf.mxu0
      %v9611 = vpop.f32.mrf.mxu0
      %v9612 = vadd.f32 %v9451, %v9611
      %v9613 = vpop.f32.mrf.mxu0
      %9614 = vmatprep.mubr.bf16.mxu0 0
      %9615 = vmatmul.mubr.bf16.gmra.mxu0 %v9339
      %v9616 = vpop.f32.mrf.mxu0
      %v9617 = vadd.f32 %v9456, %v9616
      %v9618 = vpop.f32.mrf.mxu0
      %v9619 = vpop.f32.mrf.mxu0
      %v9620 = vadd.f32 %v9459, %v9619
      %v9621 = vpop.f32.mrf.mxu0
      %9622 = vmatprep.mubr.bf16.mxu0 0
      %9623 = vmatmul.mubr.bf16.gmra.mxu0 %v9342
      %v9624 = vpop.f32.mrf.mxu0
      %v9625 = vadd.f32 %v9464, %v9624
      %v9626 = vpop.f32.mrf.mxu0
      %v9627 = vpop.f32.mrf.mxu0
      %v9628 = vadd.f32 %v9467, %v9627
      %v9629 = vpop.f32.mrf.mxu0
      %9630 = vmatprep.mubr.bf16.mxu0 0
      %9631 = vmatmul.mubr.bf16.gmra.mxu0 %v9345
      %v9632 = vpop.f32.mrf.mxu0
      %v9633 = vadd.f32 %v9472, %v9632
      %v9634 = vpop.f32.mrf.mxu0
      %v9635 = vpop.f32.mrf.mxu0
      %v9636 = vadd.f32 %v9475, %v9635
      %v9637 = vpop.f32.mrf.mxu0
      %9638 = vmatprep.mubr.bf16.mxu0 0
      %9639 = vmatmul.mubr.bf16.gmra.mxu0 %v9348
      %v9640 = vpop.f32.mrf.mxu0
      %v9641 = vadd.f32 %v9480, %v9640
      %v9642 = vpop.f32.mrf.mxu0
      %v9643 = vpop.f32.mrf.mxu0
      %v9644 = vadd.f32 %v9483, %v9643
      %v9645 = vpop.f32.mrf.mxu0
      %9646 = vmatprep.mubr.bf16.mxu0 0
      %9647 = vmatmul.mubr.bf16.gmra.mxu0 %v9351
      %v9648 = vpop.f32.mrf.mxu0
      %v9649 = vadd.f32 %v9488, %v9648
      %v9650 = vpop.f32.mrf.mxu0
      %v9651 = vpop.f32.mrf.mxu0
      %v9652 = vadd.f32 %v9491, %v9651
      %v9653 = vpop.f32.mrf.mxu0
      %9654 = vmatprep.mubr.bf16.mxu0 0
      %9655 = vmatmul.mubr.bf16.gmra.mxu0 %v9354
      %v9656 = vpop.f32.mrf.mxu0
      %v9657 = vadd.f32 %v9496, %v9656
      %v9658 = vpop.f32.mrf.mxu0
      %v9659 = vpop.f32.mrf.mxu0
      %v9660 = vadd.f32 %v9499, %v9659
      %v9661 = vpop.f32.mrf.mxu0
      %9662 = vmatprep.mubr.bf16.mxu0 0
      %9663 = vmatmul.mubr.bf16.gmra.mxu0 %v9357
      %v9664 = vpop.f32.mrf.mxu0
      %v9665 = vadd.f32 %v9504, %v9664
      %v9666 = vpop.f32.mrf.mxu0
      %v9667 = vpop.f32.mrf.mxu0
      %v9668 = vadd.f32 %v9507, %v9667
      %v9669 = vpop.f32.mrf.mxu0
      %9670 = vmatprep.mubr.bf16.mxu0 0
      %9671 = vmatmul.mubr.bf16.gmra.mxu0 %v9360
      %v9672 = vpop.f32.mrf.mxu0
      %v9673 = vadd.f32 %v9512, %v9672
      %v9674 = vpop.f32.mrf.mxu0
      %v9675 = vpop.f32.mrf.mxu0
      %v9676 = vadd.f32 %v9515, %v9675
      %v9677 = vpop.f32.mrf.mxu0
      %9678 = vmatprep.mubr.bf16.mxu0 0
      %9679 = vmatmul.mubr.bf16.gmra.mxu0 %v9363
      %v9680 = vpop.f32.mrf.mxu0
      %v9681 = vadd.f32 %v9520, %v9680
      %v9682 = vpop.f32.mrf.mxu0
      %v9683 = vpop.f32.mrf.mxu0
      %v9684 = vadd.f32 %v9523, %v9683
      %v9685 = vpop.f32.mrf.mxu0
      %9686 = vdwg.mxu0
      %v9687 = vld [vmem:[#allocation3] sm:$0xff]
      %v9688 = vld [vmem:[#allocation3 + $0x8] sm:$0xff]
      %v9689 = vld [vmem:[#allocation3 + $0x10] sm:$0xff]
      %v9690 = vld [vmem:[#allocation3 + $0x18] sm:$0xff]
      %v9691 = vld [vmem:[#allocation3 + $0x20] sm:$0xff]
      %v9692 = vld [vmem:[#allocation3 + $0x28] sm:$0xff]
      %v9693 = vld [vmem:[#allocation3 + $0x30] sm:$0xff]
      %v9694 = vld [vmem:[#allocation3 + $0x38] sm:$0xff]
      %v9695 = vld [vmem:[#allocation3 + $0x40] sm:$0xff]
      %v9696 = vld [vmem:[#allocation3 + $0x48] sm:$0xff]
      %v9697 = vld [vmem:[#allocation3 + $0x50] sm:$0xff]
      %v9698 = vld [vmem:[#allocation3 + $0x58] sm:$0xff]
      %v9699 = vld [vmem:[#allocation3 + $0x60] sm:$0xff]
      %v9700 = vld [vmem:[#allocation3 + $0x68] sm:$0xff]
      %v9701 = vld [vmem:[#allocation3 + $0x70] sm:$0xff]
      %v9702 = vld [vmem:[#allocation3 + $0x78] sm:$0xff]
      %v9703 = vld [vmem:[#allocation3 + $0x80] sm:$0xff]
      %v9704 = vld [vmem:[#allocation3 + $0x88] sm:$0xff]
      %v9705 = vld [vmem:[#allocation3 + $0x90] sm:$0xff]
      %v9706 = vld [vmem:[#allocation3 + $0x98] sm:$0xff]
      %v9707 = vld [vmem:[#allocation3 + $0xa0] sm:$0xff]
      %v9708 = vld [vmem:[#allocation3 + $0xa8] sm:$0xff]
      %v9709 = vld [vmem:[#allocation3 + $0xb0] sm:$0xff]
      %v9710 = vld [vmem:[#allocation3 + $0xb8] sm:$0xff]
      %v9711 = vld [vmem:[#allocation3 + $0xc0] sm:$0xff]
      %v9712 = vld [vmem:[#allocation3 + $0xc8] sm:$0xff]
      %v9713 = vld [vmem:[#allocation3 + $0xd0] sm:$0xff]
      %v9714 = vld [vmem:[#allocation3 + $0xd8] sm:$0xff]
      %v9715 = vld [vmem:[#allocation3 + $0xe0] sm:$0xff]
      %v9716 = vld [vmem:[#allocation3 + $0xe8] sm:$0xff]
      %v9717 = vld [vmem:[#allocation3 + $0xf0] sm:$0xff]
      %v9718 = vld [vmem:[#allocation3 + $0xf8] sm:$0xff]
      %v9719 = vadd.f32 %v9561, %v9687
      %v9720 = vadd.f32 %v9564, %v9688
      %v9721 = vadd.f32 %v9569, %v9689
      %v9722 = vadd.f32 %v9572, %v9690
      %v9723 = vadd.f32 %v9577, %v9691
      %v9724 = vadd.f32 %v9580, %v9692
      %v9725 = vadd.f32 %v9585, %v9693
      %v9726 = vadd.f32 %v9588, %v9694
      %v9727 = vadd.f32 %v9593, %v9695
      %v9728 = vadd.f32 %v9596, %v9696
      %v9729 = vadd.f32 %v9601, %v9697
      %v9730 = vadd.f32 %v9604, %v9698
      %v9731 = vadd.f32 %v9609, %v9699
      %v9732 = vadd.f32 %v9612, %v9700
      %v9733 = vadd.f32 %v9617, %v9701
      %v9734 = vadd.f32 %v9620, %v9702
      %v9735 = vadd.f32 %v9625, %v9703
      %v9736 = vadd.f32 %v9628, %v9704
      %v9737 = vadd.f32 %v9633, %v9705
      %v9738 = vadd.f32 %v9636, %v9706
      %v9739 = vadd.f32 %v9641, %v9707
      %v9740 = vadd.f32 %v9644, %v9708
      %v9741 = vadd.f32 %v9649, %v9709
      %v9742 = vadd.f32 %v9652, %v9710
      %v9743 = vadd.f32 %v9657, %v9711
      %v9744 = vadd.f32 %v9660, %v9712
      %v9745 = vadd.f32 %v9665, %v9713
      %v9746 = vadd.f32 %v9668, %v9714
      %v9747 = vadd.f32 %v9673, %v9715
      %v9748 = vadd.f32 %v9676, %v9716
      %v9749 = vadd.f32 %v9681, %v9717
      %v9750 = vadd.f32 %v9684, %v9718
      %v9751 = vxor.u32 %v9719, 2147483648
      %v9752 = vxor.u32 %v9720, 2147483648
      %v9753 = vxor.u32 %v9721, 2147483648
      %v9754 = vxor.u32 %v9722, 2147483648
      %v9755 = vxor.u32 %v9723, 2147483648
      %v9756 = vxor.u32 %v9724, 2147483648
      %v9757 = vxor.u32 %v9725, 2147483648
      %v9758 = vxor.u32 %v9726, 2147483648
      %v9759 = vxor.u32 %v9727, 2147483648
      %v9760 = vxor.u32 %v9728, 2147483648
      %v9761 = vxor.u32 %v9729, 2147483648
      %v9762 = vxor.u32 %v9730, 2147483648
      %v9763 = vxor.u32 %v9731, 2147483648
      %v9764 = vxor.u32 %v9732, 2147483648
      %v9765 = vxor.u32 %v9733, 2147483648
      %v9766 = vxor.u32 %v9734, 2147483648
      %v9767 = vxor.u32 %v9735, 2147483648
      %v9768 = vxor.u32 %v9736, 2147483648
      %v9769 = vxor.u32 %v9737, 2147483648
      %v9770 = vxor.u32 %v9738, 2147483648
      %v9771 = vxor.u32 %v9739, 2147483648
      %v9772 = vxor.u32 %v9740, 2147483648
      %v9773 = vxor.u32 %v9741, 2147483648
      %v9774 = vxor.u32 %v9742, 2147483648
      %v9775 = vxor.u32 %v9743, 2147483648
      %v9776 = vxor.u32 %v9744, 2147483648
      %v9777 = vxor.u32 %v9745, 2147483648
      %v9778 = vxor.u32 %v9746, 2147483648
      %v9779 = vxor.u32 %v9747, 2147483648
      %v9780 = vxor.u32 %v9748, 2147483648
      %v9781 = vxor.u32 %v9749, 2147483648
      %v9782 = vxor.u32 %v9750, 2147483648
      %v9783 = vmul.f32 %v9751, 1.442695
      %v9784 = vpow.pop %v9783
      %v9785 = vmul.f32 %v9752, 1.442695
      %v9786 = vpow.pop %v9785
      %v9787 = vmul.f32 %v9753, 1.442695
      %v9788 = vpow.pop %v9787
      %v9789 = vmul.f32 %v9754, 1.442695
      %v9790 = vpow.pop %v9789
      %v9791 = vmul.f32 %v9755, 1.442695
      %v9792 = vpow.pop %v9791
      %v9793 = vmul.f32 %v9756, 1.442695
      %v9794 = vpow.pop %v9793
      %v9795 = vmul.f32 %v9757, 1.442695
      %v9796 = vpow.pop %v9795
      %v9797 = vmul.f32 %v9758, 1.442695
      %v9798 = vpow.pop %v9797
      %v9799 = vmul.f32 %v9759, 1.442695
      %v9800 = vpow.pop %v9799
      %v9801 = vmul.f32 %v9760, 1.442695
      %v9802 = vpow.pop %v9801
      %v9803 = vmul.f32 %v9761, 1.442695
      %v9804 = vpow.pop %v9803
      %v9805 = vmul.f32 %v9762, 1.442695
      %v9806 = vpow.pop %v9805
      %v9807 = vmul.f32 %v9763, 1.442695
      %v9808 = vpow.pop %v9807
      %v9809 = vmul.f32 %v9764, 1.442695
      %v9810 = vpow.pop %v9809
      %v9811 = vmul.f32 %v9765, 1.442695
      %v9812 = vpow.pop %v9811
      %v9813 = vmul.f32 %v9766, 1.442695
      %v9814 = vpow.pop %v9813
      %v9815 = vmul.f32 %v9767, 1.442695
      %v9816 = vpow.pop %v9815
      %v9817 = vmul.f32 %v9768, 1.442695
      %v9818 = vpow.pop %v9817
      %v9819 = vmul.f32 %v9769, 1.442695
      %v9820 = vpow.pop %v9819
      %v9821 = vmul.f32 %v9770, 1.442695
      %v9822 = vpow.pop %v9821
      %v9823 = vmul.f32 %v9771, 1.442695
      %v9824 = vpow.pop %v9823
      %v9825 = vmul.f32 %v9772, 1.442695
      %v9826 = vpow.pop %v9825
      %v9827 = vmul.f32 %v9773, 1.442695
      %v9828 = vpow.pop %v9827
      %v9829 = vmul.f32 %v9774, 1.442695
      %v9830 = vpow.pop %v9829
      %v9831 = vmul.f32 %v9775, 1.442695
      %v9832 = vpow.pop %v9831
      %v9833 = vmul.f32 %v9776, 1.442695
      %v9834 = vpow.pop %v9833
      %v9835 = vmul.f32 %v9777, 1.442695
      %v9836 = vpow.pop %v9835
      %v9837 = vmul.f32 %v9778, 1.442695
      %v9838 = vpow.pop %v9837
      %v9839 = vmul.f32 %v9779, 1.442695
      %v9840 = vpow.pop %v9839
      %v9841 = vmul.f32 %v9780, 1.442695
      %v9842 = vpow.pop %v9841
      %v9843 = vmul.f32 %v9781, 1.442695
      %v9844 = vpow.pop %v9843
      %v9845 = vmul.f32 %v9782, 1.442695
      %v9846 = vpow.pop %v9845
      %v9847 = vadd.f32 %v9784, 1.0
      %v9848 = vadd.f32 %v9786, 1.0
      %v9849 = vadd.f32 %v9788, 1.0
      %v9850 = vadd.f32 %v9790, 1.0
      %v9851 = vadd.f32 %v9792, 1.0
      %v9852 = vadd.f32 %v9794, 1.0
      %v9853 = vadd.f32 %v9796, 1.0
      %v9854 = vadd.f32 %v9798, 1.0
      %v9855 = vadd.f32 %v9800, 1.0
      %v9856 = vadd.f32 %v9802, 1.0
      %v9857 = vadd.f32 %v9804, 1.0
      %v9858 = vadd.f32 %v9806, 1.0
      %v9859 = vadd.f32 %v9808, 1.0
      %v9860 = vadd.f32 %v9810, 1.0
      %v9861 = vadd.f32 %v9812, 1.0
      %v9862 = vadd.f32 %v9814, 1.0
      %v9863 = vadd.f32 %v9816, 1.0
      %v9864 = vadd.f32 %v9818, 1.0
      %v9865 = vadd.f32 %v9820, 1.0
      %v9866 = vadd.f32 %v9822, 1.0
      %v9867 = vadd.f32 %v9824, 1.0
      %v9868 = vadd.f32 %v9826, 1.0
      %v9869 = vadd.f32 %v9828, 1.0
      %v9870 = vadd.f32 %v9830, 1.0
      %v9871 = vadd.f32 %v9832, 1.0
      %v9872 = vadd.f32 %v9834, 1.0
      %v9873 = vadd.f32 %v9836, 1.0
      %v9874 = vadd.f32 %v9838, 1.0
      %v9875 = vadd.f32 %v9840, 1.0
      %v9876 = vadd.f32 %v9842, 1.0
      %v9877 = vadd.f32 %v9844, 1.0
      %v9878 = vadd.f32 %v9846, 1.0
      %v9879 = vrcp.pop %v9847
      %v9880 = vmul.f32 1.0, %v9879
      %v9881 = vrcp.pop %v9848
      %v9882 = vmul.f32 1.0, %v9881
      %v9883 = vrcp.pop %v9849
      %v9884 = vmul.f32 1.0, %v9883
      %v9885 = vrcp.pop %v9850
      %v9886 = vmul.f32 1.0, %v9885
      %v9887 = vrcp.pop %v9851
      %v9888 = vmul.f32 1.0, %v9887
      %v9889 = vrcp.pop %v9852
      %v9890 = vmul.f32 1.0, %v9889
      %v9891 = vrcp.pop %v9853
      %v9892 = vmul.f32 1.0, %v9891
      %v9893 = vrcp.pop %v9854
      %v9894 = vmul.f32 1.0, %v9893
      %v9895 = vrcp.pop %v9855
      %v9896 = vmul.f32 1.0, %v9895
      %v9897 = vrcp.pop %v9856
      %v9898 = vmul.f32 1.0, %v9897
      %v9899 = vrcp.pop %v9857
      %v9900 = vmul.f32 1.0, %v9899
      %v9901 = vrcp.pop %v9858
      %v9902 = vmul.f32 1.0, %v9901
      %v9903 = vrcp.pop %v9859
      %v9904 = vmul.f32 1.0, %v9903
      %v9905 = vrcp.pop %v9860
      %v9906 = vmul.f32 1.0, %v9905
      %v9907 = vrcp.pop %v9861
      %v9908 = vmul.f32 1.0, %v9907
      %v9909 = vrcp.pop %v9862
      %v9910 = vmul.f32 1.0, %v9909
      %v9911 = vrcp.pop %v9863
      %v9912 = vmul.f32 1.0, %v9911
      %v9913 = vrcp.pop %v9864
      %v9914 = vmul.f32 1.0, %v9913
      %v9915 = vrcp.pop %v9865
      %v9916 = vmul.f32 1.0, %v9915
      %v9917 = vrcp.pop %v9866
      %v9918 = vmul.f32 1.0, %v9917
      %v9919 = vrcp.pop %v9867
      %v9920 = vmul.f32 1.0, %v9919
      %v9921 = vrcp.pop %v9868
      %v9922 = vmul.f32 1.0, %v9921
      %v9923 = vrcp.pop %v9869
      %v9924 = vmul.f32 1.0, %v9923
      %v9925 = vrcp.pop %v9870
      %v9926 = vmul.f32 1.0, %v9925
      %v9927 = vrcp.pop %v9871
      %v9928 = vmul.f32 1.0, %v9927
      %v9929 = vrcp.pop %v9872
      %v9930 = vmul.f32 1.0, %v9929
      %v9931 = vrcp.pop %v9873
      %v9932 = vmul.f32 1.0, %v9931
      %v9933 = vrcp.pop %v9874
      %v9934 = vmul.f32 1.0, %v9933
      %v9935 = vrcp.pop %v9875
      %v9936 = vmul.f32 1.0, %v9935
      %v9937 = vrcp.pop %v9876
      %v9938 = vmul.f32 1.0, %v9937
      %v9939 = vrcp.pop %v9877
      %v9940 = vmul.f32 1.0, %v9939
      %v9941 = vrcp.pop %v9878
      %v9942 = vmul.f32 1.0, %v9941
      %v9943 = vmul.f32 %v9719, %v9880
      %v9944 = vmul.f32 %v9720, %v9882
      %v9945 = vmul.f32 %v9721, %v9884
      %v9946 = vmul.f32 %v9722, %v9886
      %v9947 = vmul.f32 %v9723, %v9888
      %v9948 = vmul.f32 %v9724, %v9890
      %v9949 = vmul.f32 %v9725, %v9892
      %v9950 = vmul.f32 %v9726, %v9894
      %v9951 = vmul.f32 %v9727, %v9896
      %v9952 = vmul.f32 %v9728, %v9898
      %v9953 = vmul.f32 %v9729, %v9900
      %v9954 = vmul.f32 %v9730, %v9902
      %v9955 = vmul.f32 %v9731, %v9904
      %v9956 = vmul.f32 %v9732, %v9906
      %v9957 = vmul.f32 %v9733, %v9908
      %v9958 = vmul.f32 %v9734, %v9910
      %v9959 = vmul.f32 %v9735, %v9912
      %v9960 = vmul.f32 %v9736, %v9914
      %v9961 = vmul.f32 %v9737, %v9916
      %v9962 = vmul.f32 %v9738, %v9918
      %v9963 = vmul.f32 %v9739, %v9920
      %v9964 = vmul.f32 %v9740, %v9922
      %v9965 = vmul.f32 %v9741, %v9924
      %v9966 = vmul.f32 %v9742, %v9926
      %v9967 = vmul.f32 %v9743, %v9928
      %v9968 = vmul.f32 %v9744, %v9930
      %v9969 = vmul.f32 %v9745, %v9932
      %v9970 = vmul.f32 %v9746, %v9934
      %v9971 = vmul.f32 %v9747, %v9936
      %v9972 = vmul.f32 %v9748, %v9938
      %v9973 = vmul.f32 %v9749, %v9940
      %v9974 = vmul.f32 %v9750, %v9942
      %9975 = vst.msk [vmem:[#allocation2 + $0x18] sm:$0xff] %vm899, %v9943
      %9976 = vst.msk [vmem:[#allocation2 + $0x20] sm:$0xff] %vm899, %v9944
      %9977 = vst.msk [vmem:[#allocation2 + $0x28] sm:$0xff] %vm899, %v9945
      %9978 = vst.msk [vmem:[#allocation2 + $0x30] sm:$0xff] %vm899, %v9946
      %9979 = vst.msk [vmem:[#allocation2 + $0x38] sm:$0xff] %vm899, %v9947
      %9980 = vst.msk [vmem:[#allocation2 + $0x40] sm:$0xff] %vm899, %v9948
      %9981 = vst.msk [vmem:[#allocation2 + $0x48] sm:$0xff] %vm899, %v9949
      %9982 = vst.msk [vmem:[#allocation2 + $0x50] sm:$0xff] %vm899, %v9950
      %9983 = vst.msk [vmem:[#allocation2 + $0x58] sm:$0xff] %vm899, %v9951
      %9984 = vst.msk [vmem:[#allocation2 + $0x60] sm:$0xff] %vm899, %v9952
      %9985 = vst.msk [vmem:[#allocation2 + $0x68] sm:$0xff] %vm899, %v9953
      %9986 = vst.msk [vmem:[#allocation2 + $0x70] sm:$0xff] %vm899, %v9954
      %9987 = vst.msk [vmem:[#allocation2 + $0x78] sm:$0xff] %vm899, %v9955
      %9988 = vst.msk [vmem:[#allocation2 + $0x80] sm:$0xff] %vm899, %v9956
      %9989 = vst.msk [vmem:[#allocation2 + $0x88] sm:$0xff] %vm899, %v9957
      %9990 = vst.msk [vmem:[#allocation2 + $0x90] sm:$0xff] %vm899, %v9958
      %9991 = vst.msk [vmem:[#allocation2 + $0x98] sm:$0xff] %vm899, %v9959
      %9992 = vst.msk [vmem:[#allocation2 + $0xa0] sm:$0xff] %vm899, %v9960
      %9993 = vst.msk [vmem:[#allocation2 + $0xa8] sm:$0xff] %vm899, %v9961
      %9994 = vst.msk [vmem:[#allocation2 + $0xb0] sm:$0xff] %vm899, %v9962
      %9995 = vst.msk [vmem:[#allocation2 + $0xb8] sm:$0xff] %vm899, %v9963
      %9996 = vst.msk [vmem:[#allocation2 + $0xc0] sm:$0xff] %vm899, %v9964
      %9997 = vst.msk [vmem:[#allocation2 + $0xc8] sm:$0xff] %vm899, %v9965
      %9998 = vst.msk [vmem:[#allocation2 + $0xd0] sm:$0xff] %vm899, %v9966
      %9999 = vst.msk [vmem:[#allocation2 + $0xd8] sm:$0xff] %vm899, %v9967
      %10000 = vst.msk [vmem:[#allocation2 + $0xe0] sm:$0xff] %vm899, %v9968
      %10001 = vst.msk [vmem:[#allocation2 + $0xe8] sm:$0xff] %vm899, %v9969
      %10002 = vst.msk [vmem:[#allocation2 + $0xf0] sm:$0xff] %vm899, %v9970
      %10003 = vst.msk [vmem:[#allocation2 + $0xf8] sm:$0xff] %vm899, %v9971
      %10004 = vst.msk [vmem:[#allocation2 + $0x100] sm:$0xff] %vm899, %v9972
      %10005 = vst.msk [vmem:[#allocation2 + $0x108] sm:$0xff] %vm899, %v9973
      %10006 = vst.msk [vmem:[#allocation2 + $0x110] sm:$0xff] %vm899, %v9974
      %v10007 = vld [vmem:[#allocation2 + $0x7] sm:$0xff]
      %v10008 = vld [vmem:[#allocation2 + $0xf] sm:$0xff]
      %v10009 = vld [vmem:[#allocation2 + $0x17] sm:$0xff]
      %v10010 = vld [vmem:[#allocation2 + $0x1f] sm:$0xff]
      %v10011 = vld [vmem:[#allocation2 + $0x27] sm:$0xff]
      %v10012 = vld [vmem:[#allocation2 + $0x2f] sm:$0xff]
      %v10013 = vld [vmem:[#allocation2 + $0x37] sm:$0xff]
      %v10014 = vld [vmem:[#allocation2 + $0x3f] sm:$0xff]
      %v10015 = vld [vmem:[#allocation2 + $0x47] sm:$0xff]
      %v10016 = vld [vmem:[#allocation2 + $0x4f] sm:$0xff]
      %v10017 = vld [vmem:[#allocation2 + $0x57] sm:$0xff]
      %v10018 = vld [vmem:[#allocation2 + $0x5f] sm:$0xff]
      %v10019 = vld [vmem:[#allocation2 + $0x67] sm:$0xff]
      %v10020 = vld [vmem:[#allocation2 + $0x6f] sm:$0xff]
      %v10021 = vld [vmem:[#allocation2 + $0x77] sm:$0xff]
      %v10022 = vld [vmem:[#allocation2 + $0x7f] sm:$0xff]
      %v10023 = vld [vmem:[#allocation2 + $0x87] sm:$0xff]
      %v10024 = vld [vmem:[#allocation2 + $0x8f] sm:$0xff]
      %v10025 = vld [vmem:[#allocation2 + $0x97] sm:$0xff]
      %v10026 = vld [vmem:[#allocation2 + $0x9f] sm:$0xff]
      %v10027 = vld [vmem:[#allocation2 + $0xa7] sm:$0xff]
      %v10028 = vld [vmem:[#allocation2 + $0xaf] sm:$0xff]
      %v10029 = vld [vmem:[#allocation2 + $0xb7] sm:$0xff]
      %v10030 = vld [vmem:[#allocation2 + $0xbf] sm:$0xff]
      %v10031 = vld [vmem:[#allocation2 + $0xc7] sm:$0xff]
      %v10032 = vld [vmem:[#allocation2 + $0xcf] sm:$0xff]
      %v10033 = vld [vmem:[#allocation2 + $0xd7] sm:$0xff]
      %v10034 = vld [vmem:[#allocation2 + $0xdf] sm:$0xff]
      %v10035 = vld [vmem:[#allocation2 + $0xe7] sm:$0xff]
      %v10036 = vld [vmem:[#allocation2 + $0xef] sm:$0xff]
      %v10037 = vld [vmem:[#allocation2 + $0xf7] sm:$0xff]
      %v10038 = vld [vmem:[#allocation2 + $0xff] sm:$0xff]
      %v10039 = vsel %vm971, %v10007, 0.0
      %v10040 = vsel %vm972, %v10008, 0.0
      %v10041 = vsel %vm973, %v10009, 0.0
      %v10042 = vsel %vm974, %v10010, 0.0
      %v10043 = vsel %vm975, %v10011, 0.0
      %v10044 = vsel %vm976, %v10012, 0.0
      %v10045 = vsel %vm977, %v10013, 0.0
      %v10046 = vsel %vm978, %v10014, 0.0
      %v10047 = vsel %vm979, %v10015, 0.0
      %v10048 = vsel %vm980, %v10016, 0.0
      %v10049 = vsel %vm981, %v10017, 0.0
      %v10050 = vsel %vm982, %v10018, 0.0
      %v10051 = vsel %vm983, %v10019, 0.0
      %v10052 = vsel %vm984, %v10020, 0.0
      %v10053 = vsel %vm985, %v10021, 0.0
      %v10054 = vsel %vm986, %v10022, 0.0
      %v10055 = vsel %vm987, %v10023, 0.0
      %v10056 = vsel %vm988, %v10024, 0.0
      %v10057 = vsel %vm989, %v10025, 0.0
      %v10058 = vsel %vm990, %v10026, 0.0
      %v10059 = vsel %vm991, %v10027, 0.0
      %v10060 = vsel %vm992, %v10028, 0.0
      %v10061 = vsel %vm993, %v10029, 0.0
      %v10062 = vsel %vm994, %v10030, 0.0
      %v10063 = vsel %vm995, %v10031, 0.0
      %v10064 = vsel %vm996, %v10032, 0.0
      %v10065 = vsel %vm997, %v10033, 0.0
      %v10066 = vsel %vm998, %v10034, 0.0
      %v10067 = vsel %vm999, %v10035, 0.0
      %v10068 = vsel %vm1000, %v10036, 0.0
      %v10069 = vsel %vm1001, %v10037, 0.0
      %v10070 = vsel %vm1002, %v10038, 0.0
      %v10071 = vld [vmem:[#allocation2 + $0x8] sm:$0xff]
      %v10072 = vld [vmem:[#allocation2 + $0x10] sm:$0xff]
      %v10073 = vld [vmem:[#allocation2 + $0x18] sm:$0xff]
      %v10074 = vld [vmem:[#allocation2 + $0x20] sm:$0xff]
      %v10075 = vld [vmem:[#allocation2 + $0x28] sm:$0xff]
      %v10076 = vld [vmem:[#allocation2 + $0x30] sm:$0xff]
      %v10077 = vld [vmem:[#allocation2 + $0x38] sm:$0xff]
      %v10078 = vld [vmem:[#allocation2 + $0x40] sm:$0xff]
      %v10079 = vld [vmem:[#allocation2 + $0x48] sm:$0xff]
      %v10080 = vld [vmem:[#allocation2 + $0x50] sm:$0xff]
      %v10081 = vld [vmem:[#allocation2 + $0x58] sm:$0xff]
      %v10082 = vld [vmem:[#allocation2 + $0x60] sm:$0xff]
      %v10083 = vld [vmem:[#allocation2 + $0x68] sm:$0xff]
      %v10084 = vld [vmem:[#allocation2 + $0x70] sm:$0xff]
      %v10085 = vld [vmem:[#allocation2 + $0x78] sm:$0xff]
      %v10086 = vld [vmem:[#allocation2 + $0x80] sm:$0xff]
      %v10087 = vld [vmem:[#allocation2 + $0x88] sm:$0xff]
      %v10088 = vld [vmem:[#allocation2 + $0x90] sm:$0xff]
      %v10089 = vld [vmem:[#allocation2 + $0x98] sm:$0xff]
      %v10090 = vld [vmem:[#allocation2 + $0xa0] sm:$0xff]
      %v10091 = vld [vmem:[#allocation2 + $0xa8] sm:$0xff]
      %v10092 = vld [vmem:[#allocation2 + $0xb0] sm:$0xff]
      %v10093 = vld [vmem:[#allocation2 + $0xb8] sm:$0xff]
      %v10094 = vld [vmem:[#allocation2 + $0xc0] sm:$0xff]
      %v10095 = vld [vmem:[#allocation2 + $0xc8] sm:$0xff]
      %v10096 = vld [vmem:[#allocation2 + $0xd0] sm:$0xff]
      %v10097 = vld [vmem:[#allocation2 + $0xd8] sm:$0xff]
      %v10098 = vld [vmem:[#allocation2 + $0xe0] sm:$0xff]
      %v10099 = vld [vmem:[#allocation2 + $0xe8] sm:$0xff]
      %v10100 = vld [vmem:[#allocation2 + $0xf0] sm:$0xff]
      %v10101 = vld [vmem:[#allocation2 + $0xf8] sm:$0xff]
      %v10102 = vld [vmem:[#allocation2 + $0x100] sm:$0xff]
      %v10103 = vld [vmem:[#allocation2 + $0x9] sm:$0xff]
      %v10104 = vld [vmem:[#allocation2 + $0x11] sm:$0xff]
      %v10105 = vld [vmem:[#allocation2 + $0x19] sm:$0xff]
      %v10106 = vld [vmem:[#allocation2 + $0x21] sm:$0xff]
      %v10107 = vld [vmem:[#allocation2 + $0x29] sm:$0xff]
      %v10108 = vld [vmem:[#allocation2 + $0x31] sm:$0xff]
      %v10109 = vld [vmem:[#allocation2 + $0x39] sm:$0xff]
      %v10110 = vld [vmem:[#allocation2 + $0x41] sm:$0xff]
      %v10111 = vld [vmem:[#allocation2 + $0x49] sm:$0xff]
      %v10112 = vld [vmem:[#allocation2 + $0x51] sm:$0xff]
      %v10113 = vld [vmem:[#allocation2 + $0x59] sm:$0xff]
      %v10114 = vld [vmem:[#allocation2 + $0x61] sm:$0xff]
      %v10115 = vld [vmem:[#allocation2 + $0x69] sm:$0xff]
      %v10116 = vld [vmem:[#allocation2 + $0x71] sm:$0xff]
      %v10117 = vld [vmem:[#allocation2 + $0x79] sm:$0xff]
      %v10118 = vld [vmem:[#allocation2 + $0x81] sm:$0xff]
      %v10119 = vld [vmem:[#allocation2 + $0x89] sm:$0xff]
      %v10120 = vld [vmem:[#allocation2 + $0x91] sm:$0xff]
      %v10121 = vld [vmem:[#allocation2 + $0x99] sm:$0xff]
      %v10122 = vld [vmem:[#allocation2 + $0xa1] sm:$0xff]
      %v10123 = vld [vmem:[#allocation2 + $0xa9] sm:$0xff]
      %v10124 = vld [vmem:[#allocation2 + $0xb1] sm:$0xff]
      %v10125 = vld [vmem:[#allocation2 + $0xb9] sm:$0xff]
      %v10126 = vld [vmem:[#allocation2 + $0xc1] sm:$0xff]
      %v10127 = vld [vmem:[#allocation2 + $0xc9] sm:$0xff]
      %v10128 = vld [vmem:[#allocation2 + $0xd1] sm:$0xff]
      %v10129 = vld [vmem:[#allocation2 + $0xd9] sm:$0xff]
      %v10130 = vld [vmem:[#allocation2 + $0xe1] sm:$0xff]
      %v10131 = vld [vmem:[#allocation2 + $0xe9] sm:$0xff]
      %v10132 = vld [vmem:[#allocation2 + $0xf1] sm:$0xff]
      %v10133 = vld [vmem:[#allocation2 + $0xf9] sm:$0xff]
      %v10134 = vld [vmem:[#allocation2 + $0x101] sm:$0xff]
      %v10135 = vsel %vm1131, %v10103, 0.0
      %v10136 = vsel %vm1132, %v10104, 0.0
      %v10137 = vsel %vm1133, %v10105, 0.0
      %v10138 = vsel %vm1134, %v10106, 0.0
      %v10139 = vsel %vm1135, %v10107, 0.0
      %v10140 = vsel %vm1136, %v10108, 0.0
      %v10141 = vsel %vm1137, %v10109, 0.0
      %v10142 = vsel %vm1138, %v10110, 0.0
      %v10143 = vsel %vm1139, %v10111, 0.0
      %v10144 = vsel %vm1140, %v10112, 0.0
      %v10145 = vsel %vm1141, %v10113, 0.0
      %v10146 = vsel %vm1142, %v10114, 0.0
      %v10147 = vsel %vm1143, %v10115, 0.0
      %v10148 = vsel %vm1144, %v10116, 0.0
      %v10149 = vsel %vm1145, %v10117, 0.0
      %v10150 = vsel %vm1146, %v10118, 0.0
      %v10151 = vsel %vm1147, %v10119, 0.0
      %v10152 = vsel %vm1148, %v10120, 0.0
      %v10153 = vsel %vm1149, %v10121, 0.0
      %v10154 = vsel %vm1150, %v10122, 0.0
      %v10155 = vsel %vm1151, %v10123, 0.0
      %v10156 = vsel %vm1152, %v10124, 0.0
      %v10157 = vsel %vm1153, %v10125, 0.0
      %v10158 = vsel %vm1154, %v10126, 0.0
      %v10159 = vsel %vm1155, %v10127, 0.0
      %v10160 = vsel %vm1156, %v10128, 0.0
      %v10161 = vsel %vm1157, %v10129, 0.0
      %v10162 = vsel %vm1158, %v10130, 0.0
      %v10163 = vsel %vm1159, %v10131, 0.0
      %v10164 = vsel %vm1160, %v10132, 0.0
      %v10165 = vsel %vm1161, %v10133, 0.0
      %v10166 = vsel %vm1162, %v10134, 0.0
      %v10167 = vld [vmem:[#allocation2 + $0x107] sm:$0xff]
      %v10168 = vld [vmem:[#allocation2 + $0x10f] sm:$0xff]
      %v10169 = vsel %vm971, %v10009, 0.0
      %v10170 = vsel %vm972, %v10010, 0.0
      %v10171 = vsel %vm973, %v10011, 0.0
      %v10172 = vsel %vm974, %v10012, 0.0
      %v10173 = vsel %vm975, %v10013, 0.0
      %v10174 = vsel %vm976, %v10014, 0.0
      %v10175 = vsel %vm977, %v10015, 0.0
      %v10176 = vsel %vm978, %v10016, 0.0
      %v10177 = vsel %vm979, %v10017, 0.0
      %v10178 = vsel %vm980, %v10018, 0.0
      %v10179 = vsel %vm981, %v10019, 0.0
      %v10180 = vsel %vm982, %v10020, 0.0
      %v10181 = vsel %vm983, %v10021, 0.0
      %v10182 = vsel %vm984, %v10022, 0.0
      %v10183 = vsel %vm985, %v10023, 0.0
      %v10184 = vsel %vm986, %v10024, 0.0
      %v10185 = vsel %vm987, %v10025, 0.0
      %v10186 = vsel %vm988, %v10026, 0.0
      %v10187 = vsel %vm989, %v10027, 0.0
      %v10188 = vsel %vm990, %v10028, 0.0
      %v10189 = vsel %vm991, %v10029, 0.0
      %v10190 = vsel %vm992, %v10030, 0.0
      %v10191 = vsel %vm993, %v10031, 0.0
      %v10192 = vsel %vm994, %v10032, 0.0
      %v10193 = vsel %vm995, %v10033, 0.0
      %v10194 = vsel %vm996, %v10034, 0.0
      %v10195 = vsel %vm997, %v10035, 0.0
      %v10196 = vsel %vm998, %v10036, 0.0
      %v10197 = vsel %vm999, %v10037, 0.0
      %v10198 = vsel %vm1000, %v10038, 0.0
      %v10199 = vsel %vm1001, %v10167, 0.0
      %v10200 = vsel %vm1002, %v10168, 0.0
      %v10201 = vld [vmem:[#allocation2 + $0x108] sm:$0xff]
      %v10202 = vld [vmem:[#allocation2 + $0x110] sm:$0xff]
      %v10203 = vld [vmem:[#allocation2 + $0x109] sm:$0xff]
      %v10204 = vld [vmem:[#allocation2 + $0x111] sm:$0xff]
      %v10205 = vsel %vm1131, %v10105, 0.0
      %v10206 = vsel %vm1132, %v10106, 0.0
      %v10207 = vsel %vm1133, %v10107, 0.0
      %v10208 = vsel %vm1134, %v10108, 0.0
      %v10209 = vsel %vm1135, %v10109, 0.0
      %v10210 = vsel %vm1136, %v10110, 0.0
      %v10211 = vsel %vm1137, %v10111, 0.0
      %v10212 = vsel %vm1138, %v10112, 0.0
      %v10213 = vsel %vm1139, %v10113, 0.0
      %v10214 = vsel %vm1140, %v10114, 0.0
      %v10215 = vsel %vm1141, %v10115, 0.0
      %v10216 = vsel %vm1142, %v10116, 0.0
      %v10217 = vsel %vm1143, %v10117, 0.0
      %v10218 = vsel %vm1144, %v10118, 0.0
      %v10219 = vsel %vm1145, %v10119, 0.0
      %v10220 = vsel %vm1146, %v10120, 0.0
      %v10221 = vsel %vm1147, %v10121, 0.0
      %v10222 = vsel %vm1148, %v10122, 0.0
      %v10223 = vsel %vm1149, %v10123, 0.0
      %v10224 = vsel %vm1150, %v10124, 0.0
      %v10225 = vsel %vm1151, %v10125, 0.0
      %v10226 = vsel %vm1152, %v10126, 0.0
      %v10227 = vsel %vm1153, %v10127, 0.0
      %v10228 = vsel %vm1154, %v10128, 0.0
      %v10229 = vsel %vm1155, %v10129, 0.0
      %v10230 = vsel %vm1156, %v10130, 0.0
      %v10231 = vsel %vm1157, %v10131, 0.0
      %v10232 = vsel %vm1158, %v10132, 0.0
      %v10233 = vsel %vm1159, %v10133, 0.0
      %v10234 = vsel %vm1160, %v10134, 0.0
      %v10235 = vsel %vm1161, %v10203, 0.0
      %v10236 = vsel %vm1162, %v10204, 0.0
      %v10237 = vld [vmem:[#allocation2 + $0x117] sm:$0xff]
      %v10238 = vld [vmem:[#allocation2 + $0x11f] sm:$0xff]
      %v10239 = vsel %vm971, %v10011, 0.0
      %v10240 = vsel %vm972, %v10012, 0.0
      %v10241 = vsel %vm973, %v10013, 0.0
      %v10242 = vsel %vm974, %v10014, 0.0
      %v10243 = vsel %vm975, %v10015, 0.0
      %v10244 = vsel %vm976, %v10016, 0.0
      %v10245 = vsel %vm977, %v10017, 0.0
      %v10246 = vsel %vm978, %v10018, 0.0
      %v10247 = vsel %vm979, %v10019, 0.0
      %v10248 = vsel %vm980, %v10020, 0.0
      %v10249 = vsel %vm981, %v10021, 0.0
      %v10250 = vsel %vm982, %v10022, 0.0
      %v10251 = vsel %vm983, %v10023, 0.0
      %v10252 = vsel %vm984, %v10024, 0.0
      %v10253 = vsel %vm985, %v10025, 0.0
      %v10254 = vsel %vm986, %v10026, 0.0
      %v10255 = vsel %vm987, %v10027, 0.0
      %v10256 = vsel %vm988, %v10028, 0.0
      %v10257 = vsel %vm989, %v10029, 0.0
      %v10258 = vsel %vm990, %v10030, 0.0
      %v10259 = vsel %vm991, %v10031, 0.0
      %v10260 = vsel %vm992, %v10032, 0.0
      %v10261 = vsel %vm993, %v10033, 0.0
      %v10262 = vsel %vm994, %v10034, 0.0
      %v10263 = vsel %vm995, %v10035, 0.0
      %v10264 = vsel %vm996, %v10036, 0.0
      %v10265 = vsel %vm997, %v10037, 0.0
      %v10266 = vsel %vm998, %v10038, 0.0
      %v10267 = vsel %vm999, %v10167, 0.0
      %v10268 = vsel %vm1000, %v10168, 0.0
      %v10269 = vsel %vm1001, %v10237, 0.0
      %v10270 = vsel %vm1002, %v10238, 0.0
      %v10271 = vld [vmem:[#allocation2 + $0x118] sm:$0xff]
      %v10272 = vld [vmem:[#allocation2 + $0x120] sm:$0xff]
      %v10273 = vld [vmem:[#allocation2 + $0x119] sm:$0xff]
      %v10274 = vld [vmem:[#allocation2 + $0x121] sm:$0xff]
      %v10275 = vsel %vm1131, %v10107, 0.0
      %v10276 = vsel %vm1132, %v10108, 0.0
      %v10277 = vsel %vm1133, %v10109, 0.0
      %v10278 = vsel %vm1134, %v10110, 0.0
      %v10279 = vsel %vm1135, %v10111, 0.0
      %v10280 = vsel %vm1136, %v10112, 0.0
      %v10281 = vsel %vm1137, %v10113, 0.0
      %v10282 = vsel %vm1138, %v10114, 0.0
      %v10283 = vsel %vm1139, %v10115, 0.0
      %v10284 = vsel %vm1140, %v10116, 0.0
      %v10285 = vsel %vm1141, %v10117, 0.0
      %v10286 = vsel %vm1142, %v10118, 0.0
      %v10287 = vsel %vm1143, %v10119, 0.0
      %v10288 = vsel %vm1144, %v10120, 0.0
      %v10289 = vsel %vm1145, %v10121, 0.0
      %v10290 = vsel %vm1146, %v10122, 0.0
      %v10291 = vsel %vm1147, %v10123, 0.0
      %v10292 = vsel %vm1148, %v10124, 0.0
      %v10293 = vsel %vm1149, %v10125, 0.0
      %v10294 = vsel %vm1150, %v10126, 0.0
      %v10295 = vsel %vm1151, %v10127, 0.0
      %v10296 = vsel %vm1152, %v10128, 0.0
      %v10297 = vsel %vm1153, %v10129, 0.0
      %v10298 = vsel %vm1154, %v10130, 0.0
      %v10299 = vsel %vm1155, %v10131, 0.0
      %v10300 = vsel %vm1156, %v10132, 0.0
      %v10301 = vsel %vm1157, %v10133, 0.0
      %v10302 = vsel %vm1158, %v10134, 0.0
      %v10303 = vsel %vm1159, %v10203, 0.0
      %v10304 = vsel %vm1160, %v10204, 0.0
      %v10305 = vsel %vm1161, %v10273, 0.0
      %v10306 = vsel %vm1162, %v10274, 0.0
      %10339 = vrot.lane.b32.xlu0 %v10071, 32
      %v10340 = vpop.permute.xlu0 %10339
      %10341 = vrot.lane.b32.xlu0 %v10072, 32
      %v10342 = vpop.permute.xlu0 %10341
      %10343 = vrot.lane.b32.xlu0 %v10073, 32
      %v10344 = vpop.permute.xlu0 %10343
      %10345 = vrot.lane.b32.xlu0 %v10074, 32
      %v10346 = vpop.permute.xlu0 %10345
      %10347 = vrot.lane.b32.xlu0 %v10075, 32
      %v10348 = vpop.permute.xlu0 %10347
      %10349 = vrot.lane.b32.xlu0 %v10076, 32
      %v10350 = vpop.permute.xlu0 %10349
      %10351 = vrot.lane.b32.xlu0 %v10077, 32
      %v10352 = vpop.permute.xlu0 %10351
      %10353 = vrot.lane.b32.xlu0 %v10078, 32
      %v10354 = vpop.permute.xlu0 %10353
      %10355 = vrot.lane.b32.xlu0 %v10079, 32
      %v10356 = vpop.permute.xlu0 %10355
      %10357 = vrot.lane.b32.xlu0 %v10080, 32
      %v10358 = vpop.permute.xlu0 %10357
      %10359 = vrot.lane.b32.xlu0 %v10081, 32
      %v10360 = vpop.permute.xlu0 %10359
      %10361 = vrot.lane.b32.xlu0 %v10082, 32
      %v10362 = vpop.permute.xlu0 %10361
      %10363 = vrot.lane.b32.xlu0 %v10083, 32
      %v10364 = vpop.permute.xlu0 %10363
      %10365 = vrot.lane.b32.xlu0 %v10084, 32
      %v10366 = vpop.permute.xlu0 %10365
      %10367 = vrot.lane.b32.xlu0 %v10085, 32
      %v10368 = vpop.permute.xlu0 %10367
      %10369 = vrot.lane.b32.xlu0 %v10086, 32
      %v10370 = vpop.permute.xlu0 %10369
      %10371 = vrot.lane.b32.xlu0 %v10087, 32
      %v10372 = vpop.permute.xlu0 %10371
      %10373 = vrot.lane.b32.xlu0 %v10088, 32
      %v10374 = vpop.permute.xlu0 %10373
      %10375 = vrot.lane.b32.xlu0 %v10089, 32
      %v10376 = vpop.permute.xlu0 %10375
      %10377 = vrot.lane.b32.xlu0 %v10090, 32
      %v10378 = vpop.permute.xlu0 %10377
      %10379 = vrot.lane.b32.xlu0 %v10091, 32
      %v10380 = vpop.permute.xlu0 %10379
      %10381 = vrot.lane.b32.xlu0 %v10092, 32
      %v10382 = vpop.permute.xlu0 %10381
      %10383 = vrot.lane.b32.xlu0 %v10093, 32
      %v10384 = vpop.permute.xlu0 %10383
      %10385 = vrot.lane.b32.xlu0 %v10094, 32
      %v10386 = vpop.permute.xlu0 %10385
      %10387 = vrot.lane.b32.xlu0 %v10095, 32
      %v10388 = vpop.permute.xlu0 %10387
      %10389 = vrot.lane.b32.xlu0 %v10096, 32
      %v10390 = vpop.permute.xlu0 %10389
      %10391 = vrot.lane.b32.xlu0 %v10097, 32
      %v10392 = vpop.permute.xlu0 %10391
      %10393 = vrot.lane.b32.xlu0 %v10098, 32
      %v10394 = vpop.permute.xlu0 %10393
      %10395 = vrot.lane.b32.xlu0 %v10099, 32
      %v10396 = vpop.permute.xlu0 %10395
      %10397 = vrot.lane.b32.xlu0 %v10100, 32
      %v10398 = vpop.permute.xlu0 %10397
      %10399 = vrot.lane.b32.xlu0 %v10101, 32
      %v10400 = vpop.permute.xlu0 %10399
      %10401 = vrot.lane.b32.xlu0 %v10102, 32
      %v10402 = vpop.permute.xlu0 %10401
      %10467 = vrot.lane.b32.xlu0 %v10135, 64
      %v10468 = vpop.permute.xlu0 %10467
      %10469 = vrot.lane.b32.xlu0 %v10136, 64
      %v10470 = vpop.permute.xlu0 %10469
      %10471 = vrot.lane.b32.xlu0 %v10137, 64
      %v10472 = vpop.permute.xlu0 %10471
      %10473 = vrot.lane.b32.xlu0 %v10138, 64
      %v10474 = vpop.permute.xlu0 %10473
      %10475 = vrot.lane.b32.xlu0 %v10139, 64
      %v10476 = vpop.permute.xlu0 %10475
      %10477 = vrot.lane.b32.xlu0 %v10140, 64
      %v10478 = vpop.permute.xlu0 %10477
      %10479 = vrot.lane.b32.xlu0 %v10141, 64
      %v10480 = vpop.permute.xlu0 %10479
      %10481 = vrot.lane.b32.xlu0 %v10142, 64
      %v10482 = vpop.permute.xlu0 %10481
      %10483 = vrot.lane.b32.xlu0 %v10143, 64
      %v10484 = vpop.permute.xlu0 %10483
      %10485 = vrot.lane.b32.xlu0 %v10144, 64
      %v10486 = vpop.permute.xlu0 %10485
      %10487 = vrot.lane.b32.xlu0 %v10145, 64
      %v10488 = vpop.permute.xlu0 %10487
      %10489 = vrot.lane.b32.xlu0 %v10146, 64
      %v10490 = vpop.permute.xlu0 %10489
      %10491 = vrot.lane.b32.xlu0 %v10147, 64
      %v10492 = vpop.permute.xlu0 %10491
      %10493 = vrot.lane.b32.xlu0 %v10148, 64
      %v10494 = vpop.permute.xlu0 %10493
      %10495 = vrot.lane.b32.xlu0 %v10149, 64
      %v10496 = vpop.permute.xlu0 %10495
      %10497 = vrot.lane.b32.xlu0 %v10150, 64
      %v10498 = vpop.permute.xlu0 %10497
      %10499 = vrot.lane.b32.xlu0 %v10151, 64
      %v10500 = vpop.permute.xlu0 %10499
      %10501 = vrot.lane.b32.xlu0 %v10152, 64
      %v10502 = vpop.permute.xlu0 %10501
      %10503 = vrot.lane.b32.xlu0 %v10153, 64
      %v10504 = vpop.permute.xlu0 %10503
      %10505 = vrot.lane.b32.xlu0 %v10154, 64
      %v10506 = vpop.permute.xlu0 %10505
      %10507 = vrot.lane.b32.xlu0 %v10155, 64
      %v10508 = vpop.permute.xlu0 %10507
      %10509 = vrot.lane.b32.xlu0 %v10156, 64
      %v10510 = vpop.permute.xlu0 %10509
      %10511 = vrot.lane.b32.xlu0 %v10157, 64
      %v10512 = vpop.permute.xlu0 %10511
      %10513 = vrot.lane.b32.xlu0 %v10158, 64
      %v10514 = vpop.permute.xlu0 %10513
      %10515 = vrot.lane.b32.xlu0 %v10159, 64
      %v10516 = vpop.permute.xlu0 %10515
      %10517 = vrot.lane.b32.xlu0 %v10160, 64
      %v10518 = vpop.permute.xlu0 %10517
      %10519 = vrot.lane.b32.xlu0 %v10161, 64
      %v10520 = vpop.permute.xlu0 %10519
      %10521 = vrot.lane.b32.xlu0 %v10162, 64
      %v10522 = vpop.permute.xlu0 %10521
      %10523 = vrot.lane.b32.xlu0 %v10163, 64
      %v10524 = vpop.permute.xlu0 %10523
      %10525 = vrot.lane.b32.xlu0 %v10164, 64
      %v10526 = vpop.permute.xlu0 %10525
      %10527 = vrot.lane.b32.xlu0 %v10165, 64
      %v10528 = vpop.permute.xlu0 %10527
      %10529 = vrot.lane.b32.xlu0 %v10166, 64
      %v10530 = vpop.permute.xlu0 %10529
      %10595 = vrot.lane.b32.xlu0 %v10169, 96
      %v10596 = vpop.permute.xlu0 %10595
      %10597 = vrot.lane.b32.xlu0 %v10170, 96
      %v10598 = vpop.permute.xlu0 %10597
      %10599 = vrot.lane.b32.xlu0 %v10171, 96
      %v10600 = vpop.permute.xlu0 %10599
      %10601 = vrot.lane.b32.xlu0 %v10172, 96
      %v10602 = vpop.permute.xlu0 %10601
      %10603 = vrot.lane.b32.xlu0 %v10173, 96
      %v10604 = vpop.permute.xlu0 %10603
      %10605 = vrot.lane.b32.xlu0 %v10174, 96
      %v10606 = vpop.permute.xlu0 %10605
      %10607 = vrot.lane.b32.xlu0 %v10175, 96
      %v10608 = vpop.permute.xlu0 %10607
      %10609 = vrot.lane.b32.xlu0 %v10176, 96
      %v10610 = vpop.permute.xlu0 %10609
      %10611 = vrot.lane.b32.xlu0 %v10177, 96
      %v10612 = vpop.permute.xlu0 %10611
      %10613 = vrot.lane.b32.xlu0 %v10178, 96
      %v10614 = vpop.permute.xlu0 %10613
      %10615 = vrot.lane.b32.xlu0 %v10179, 96
      %v10616 = vpop.permute.xlu0 %10615
      %10617 = vrot.lane.b32.xlu0 %v10180, 96
      %v10618 = vpop.permute.xlu0 %10617
      %10619 = vrot.lane.b32.xlu0 %v10181, 96
      %v10620 = vpop.permute.xlu0 %10619
      %10621 = vrot.lane.b32.xlu0 %v10182, 96
      %v10622 = vpop.permute.xlu0 %10621
      %10623 = vrot.lane.b32.xlu0 %v10183, 96
      %v10624 = vpop.permute.xlu0 %10623
      %10625 = vrot.lane.b32.xlu0 %v10184, 96
      %v10626 = vpop.permute.xlu0 %10625
      %10627 = vrot.lane.b32.xlu0 %v10185, 96
      %v10628 = vpop.permute.xlu0 %10627
      %10629 = vrot.lane.b32.xlu0 %v10186, 96
      %v10630 = vpop.permute.xlu0 %10629
      %10631 = vrot.lane.b32.xlu0 %v10187, 96
      %v10632 = vpop.permute.xlu0 %10631
      %10633 = vrot.lane.b32.xlu0 %v10188, 96
      %v10634 = vpop.permute.xlu0 %10633
      %10635 = vrot.lane.b32.xlu0 %v10189, 96
      %v10636 = vpop.permute.xlu0 %10635
      %10637 = vrot.lane.b32.xlu0 %v10190, 96
      %v10638 = vpop.permute.xlu0 %10637
      %10639 = vrot.lane.b32.xlu0 %v10191, 96
      %v10640 = vpop.permute.xlu0 %10639
      %10641 = vrot.lane.b32.xlu0 %v10192, 96
      %v10642 = vpop.permute.xlu0 %10641
      %10643 = vrot.lane.b32.xlu0 %v10193, 96
      %v10644 = vpop.permute.xlu0 %10643
      %10645 = vrot.lane.b32.xlu0 %v10194, 96
      %v10646 = vpop.permute.xlu0 %10645
      %10647 = vrot.lane.b32.xlu0 %v10195, 96
      %v10648 = vpop.permute.xlu0 %10647
      %10649 = vrot.lane.b32.xlu0 %v10196, 96
      %v10650 = vpop.permute.xlu0 %10649
      %10651 = vrot.lane.b32.xlu0 %v10197, 96
      %v10652 = vpop.permute.xlu0 %10651
      %10653 = vrot.lane.b32.xlu0 %v10198, 96
      %v10654 = vpop.permute.xlu0 %10653
      %10655 = vrot.lane.b32.xlu0 %v10199, 96
      %v10656 = vpop.permute.xlu0 %10655
      %10657 = vrot.lane.b32.xlu0 %v10200, 96
      %v10658 = vpop.permute.xlu0 %10657
      %10723 = vrot.lane.b32.xlu0 %v10205, 32
      %v10724 = vpop.permute.xlu0 %10723
      %10725 = vrot.lane.b32.xlu0 %v10206, 32
      %v10726 = vpop.permute.xlu0 %10725
      %10727 = vrot.lane.b32.xlu0 %v10207, 32
      %v10728 = vpop.permute.xlu0 %10727
      %10729 = vrot.lane.b32.xlu0 %v10208, 32
      %v10730 = vpop.permute.xlu0 %10729
      %10731 = vrot.lane.b32.xlu0 %v10209, 32
      %v10732 = vpop.permute.xlu0 %10731
      %10733 = vrot.lane.b32.xlu0 %v10210, 32
      %v10734 = vpop.permute.xlu0 %10733
      %10735 = vrot.lane.b32.xlu0 %v10211, 32
      %v10736 = vpop.permute.xlu0 %10735
      %10737 = vrot.lane.b32.xlu0 %v10212, 32
      %v10738 = vpop.permute.xlu0 %10737
      %10739 = vrot.lane.b32.xlu0 %v10213, 32
      %v10740 = vpop.permute.xlu0 %10739
      %10741 = vrot.lane.b32.xlu0 %v10214, 32
      %v10742 = vpop.permute.xlu0 %10741
      %10743 = vrot.lane.b32.xlu0 %v10215, 32
      %v10744 = vpop.permute.xlu0 %10743
      %10745 = vrot.lane.b32.xlu0 %v10216, 32
      %v10746 = vpop.permute.xlu0 %10745
      %10747 = vrot.lane.b32.xlu0 %v10217, 32
      %v10748 = vpop.permute.xlu0 %10747
      %10749 = vrot.lane.b32.xlu0 %v10218, 32
      %v10750 = vpop.permute.xlu0 %10749
      %10751 = vrot.lane.b32.xlu0 %v10219, 32
      %v10752 = vpop.permute.xlu0 %10751
      %10753 = vrot.lane.b32.xlu0 %v10220, 32
      %v10754 = vpop.permute.xlu0 %10753
      %10755 = vrot.lane.b32.xlu0 %v10221, 32
      %v10756 = vpop.permute.xlu0 %10755
      %10757 = vrot.lane.b32.xlu0 %v10222, 32
      %v10758 = vpop.permute.xlu0 %10757
      %10759 = vrot.lane.b32.xlu0 %v10223, 32
      %v10760 = vpop.permute.xlu0 %10759
      %10761 = vrot.lane.b32.xlu0 %v10224, 32
      %v10762 = vpop.permute.xlu0 %10761
      %10763 = vrot.lane.b32.xlu0 %v10225, 32
      %v10764 = vpop.permute.xlu0 %10763
      %10765 = vrot.lane.b32.xlu0 %v10226, 32
      %v10766 = vpop.permute.xlu0 %10765
      %10767 = vrot.lane.b32.xlu0 %v10227, 32
      %v10768 = vpop.permute.xlu0 %10767
      %10769 = vrot.lane.b32.xlu0 %v10228, 32
      %v10770 = vpop.permute.xlu0 %10769
      %10771 = vrot.lane.b32.xlu0 %v10229, 32
      %v10772 = vpop.permute.xlu0 %10771
      %10773 = vrot.lane.b32.xlu0 %v10230, 32
      %v10774 = vpop.permute.xlu0 %10773
      %10775 = vrot.lane.b32.xlu0 %v10231, 32
      %v10776 = vpop.permute.xlu0 %10775
      %10777 = vrot.lane.b32.xlu0 %v10232, 32
      %v10778 = vpop.permute.xlu0 %10777
      %10779 = vrot.lane.b32.xlu0 %v10233, 32
      %v10780 = vpop.permute.xlu0 %10779
      %10781 = vrot.lane.b32.xlu0 %v10234, 32
      %v10782 = vpop.permute.xlu0 %10781
      %10783 = vrot.lane.b32.xlu0 %v10235, 32
      %v10784 = vpop.permute.xlu0 %10783
      %10785 = vrot.lane.b32.xlu0 %v10236, 32
      %v10786 = vpop.permute.xlu0 %10785
      %10851 = vrot.lane.b32.xlu0 %v10239, 64
      %v10852 = vpop.permute.xlu0 %10851
      %10853 = vrot.lane.b32.xlu0 %v10240, 64
      %v10854 = vpop.permute.xlu0 %10853
      %10855 = vrot.lane.b32.xlu0 %v10241, 64
      %v10856 = vpop.permute.xlu0 %10855
      %10857 = vrot.lane.b32.xlu0 %v10242, 64
      %v10858 = vpop.permute.xlu0 %10857
      %10859 = vrot.lane.b32.xlu0 %v10243, 64
      %v10860 = vpop.permute.xlu0 %10859
      %10861 = vrot.lane.b32.xlu0 %v10244, 64
      %v10862 = vpop.permute.xlu0 %10861
      %10863 = vrot.lane.b32.xlu0 %v10245, 64
      %v10864 = vpop.permute.xlu0 %10863
      %10865 = vrot.lane.b32.xlu0 %v10246, 64
      %v10866 = vpop.permute.xlu0 %10865
      %10867 = vrot.lane.b32.xlu0 %v10247, 64
      %v10868 = vpop.permute.xlu0 %10867
      %10869 = vrot.lane.b32.xlu0 %v10248, 64
      %v10870 = vpop.permute.xlu0 %10869
      %10871 = vrot.lane.b32.xlu0 %v10249, 64
      %v10872 = vpop.permute.xlu0 %10871
      %10873 = vrot.lane.b32.xlu0 %v10250, 64
      %v10874 = vpop.permute.xlu0 %10873
      %10875 = vrot.lane.b32.xlu0 %v10251, 64
      %v10876 = vpop.permute.xlu0 %10875
      %10877 = vrot.lane.b32.xlu0 %v10252, 64
      %v10878 = vpop.permute.xlu0 %10877
      %10879 = vrot.lane.b32.xlu0 %v10253, 64
      %v10880 = vpop.permute.xlu0 %10879
      %10881 = vrot.lane.b32.xlu0 %v10254, 64
      %v10882 = vpop.permute.xlu0 %10881
      %10883 = vrot.lane.b32.xlu0 %v10255, 64
      %v10884 = vpop.permute.xlu0 %10883
      %10885 = vrot.lane.b32.xlu0 %v10256, 64
      %v10886 = vpop.permute.xlu0 %10885
      %10887 = vrot.lane.b32.xlu0 %v10257, 64
      %v10888 = vpop.permute.xlu0 %10887
      %10889 = vrot.lane.b32.xlu0 %v10258, 64
      %v10890 = vpop.permute.xlu0 %10889
      %10891 = vrot.lane.b32.xlu0 %v10259, 64
      %v10892 = vpop.permute.xlu0 %10891
      %10893 = vrot.lane.b32.xlu0 %v10260, 64
      %v10894 = vpop.permute.xlu0 %10893
      %10895 = vrot.lane.b32.xlu0 %v10261, 64
      %v10896 = vpop.permute.xlu0 %10895
      %10897 = vrot.lane.b32.xlu0 %v10262, 64
      %v10898 = vpop.permute.xlu0 %10897
      %10899 = vrot.lane.b32.xlu0 %v10263, 64
      %v10900 = vpop.permute.xlu0 %10899
      %10901 = vrot.lane.b32.xlu0 %v10264, 64
      %v10902 = vpop.permute.xlu0 %10901
      %10903 = vrot.lane.b32.xlu0 %v10265, 64
      %v10904 = vpop.permute.xlu0 %10903
      %10905 = vrot.lane.b32.xlu0 %v10266, 64
      %v10906 = vpop.permute.xlu0 %10905
      %10907 = vrot.lane.b32.xlu0 %v10267, 64
      %v10908 = vpop.permute.xlu0 %10907
      %10909 = vrot.lane.b32.xlu0 %v10268, 64
      %v10910 = vpop.permute.xlu0 %10909
      %10911 = vrot.lane.b32.xlu0 %v10269, 64
      %v10912 = vpop.permute.xlu0 %10911
      %10913 = vrot.lane.b32.xlu0 %v10270, 64
      %v10914 = vpop.permute.xlu0 %10913
      %10951 = vrot.lane.b32.xlu0 %v10075, 96
      %v10952 = vpop.permute.xlu0 %10951
      %10953 = vrot.lane.b32.xlu0 %v10076, 96
      %v10954 = vpop.permute.xlu0 %10953
      %10955 = vrot.lane.b32.xlu0 %v10077, 96
      %v10956 = vpop.permute.xlu0 %10955
      %10957 = vrot.lane.b32.xlu0 %v10078, 96
      %v10958 = vpop.permute.xlu0 %10957
      %10959 = vrot.lane.b32.xlu0 %v10079, 96
      %v10960 = vpop.permute.xlu0 %10959
      %10961 = vrot.lane.b32.xlu0 %v10080, 96
      %v10962 = vpop.permute.xlu0 %10961
      %10963 = vrot.lane.b32.xlu0 %v10081, 96
      %v10964 = vpop.permute.xlu0 %10963
      %10965 = vrot.lane.b32.xlu0 %v10082, 96
      %v10966 = vpop.permute.xlu0 %10965
      %10967 = vrot.lane.b32.xlu0 %v10083, 96
      %v10968 = vpop.permute.xlu0 %10967
      %10969 = vrot.lane.b32.xlu0 %v10084, 96
      %v10970 = vpop.permute.xlu0 %10969
      %10971 = vrot.lane.b32.xlu0 %v10085, 96
      %v10972 = vpop.permute.xlu0 %10971
      %10973 = vrot.lane.b32.xlu0 %v10086, 96
      %v10974 = vpop.permute.xlu0 %10973
      %10975 = vrot.lane.b32.xlu0 %v10087, 96
      %v10976 = vpop.permute.xlu0 %10975
      %10977 = vrot.lane.b32.xlu0 %v10088, 96
      %v10978 = vpop.permute.xlu0 %10977
      %10979 = vrot.lane.b32.xlu0 %v10089, 96
      %v10980 = vpop.permute.xlu0 %10979
      %10981 = vrot.lane.b32.xlu0 %v10090, 96
      %v10982 = vpop.permute.xlu0 %10981
      %10983 = vrot.lane.b32.xlu0 %v10091, 96
      %v10984 = vpop.permute.xlu0 %10983
      %10985 = vrot.lane.b32.xlu0 %v10092, 96
      %v10986 = vpop.permute.xlu0 %10985
      %10987 = vrot.lane.b32.xlu0 %v10093, 96
      %v10988 = vpop.permute.xlu0 %10987
      %10989 = vrot.lane.b32.xlu0 %v10094, 96
      %v10990 = vpop.permute.xlu0 %10989
      %10991 = vrot.lane.b32.xlu0 %v10095, 96
      %v10992 = vpop.permute.xlu0 %10991
      %10993 = vrot.lane.b32.xlu0 %v10096, 96
      %v10994 = vpop.permute.xlu0 %10993
      %10995 = vrot.lane.b32.xlu0 %v10097, 96
      %v10996 = vpop.permute.xlu0 %10995
      %10997 = vrot.lane.b32.xlu0 %v10098, 96
      %v10998 = vpop.permute.xlu0 %10997
      %10999 = vrot.lane.b32.xlu0 %v10099, 96
      %v11000 = vpop.permute.xlu0 %10999
      %11001 = vrot.lane.b32.xlu0 %v10100, 96
      %v11002 = vpop.permute.xlu0 %11001
      %11003 = vrot.lane.b32.xlu0 %v10101, 96
      %v11004 = vpop.permute.xlu0 %11003
      %11005 = vrot.lane.b32.xlu0 %v10102, 96
      %v11006 = vpop.permute.xlu0 %11005
      %11007 = vrot.lane.b32.xlu0 %v10201, 96
      %v11008 = vpop.permute.xlu0 %11007
      %11009 = vrot.lane.b32.xlu0 %v10202, 96
      %v11010 = vpop.permute.xlu0 %11009
      %11011 = vrot.lane.b32.xlu0 %v10271, 96
      %v11012 = vpop.permute.xlu0 %11011
      %11013 = vrot.lane.b32.xlu0 %v10272, 96
      %v11014 = vpop.permute.xlu0 %11013
      %v11047 = vsel %vm899, %v10039, %v10340
      %v11048 = vsel %vm899, %v10040, %v10342
      %v11049 = vsel %vm899, %v10041, %v10344
      %v11050 = vsel %vm899, %v10042, %v10346
      %v11051 = vsel %vm899, %v10043, %v10348
      %v11052 = vsel %vm899, %v10044, %v10350
      %v11053 = vsel %vm899, %v10045, %v10352
      %v11054 = vsel %vm899, %v10046, %v10354
      %v11055 = vsel %vm899, %v10047, %v10356
      %v11056 = vsel %vm899, %v10048, %v10358
      %v11057 = vsel %vm899, %v10049, %v10360
      %v11058 = vsel %vm899, %v10050, %v10362
      %v11059 = vsel %vm899, %v10051, %v10364
      %v11060 = vsel %vm899, %v10052, %v10366
      %v11061 = vsel %vm899, %v10053, %v10368
      %v11062 = vsel %vm899, %v10054, %v10370
      %v11063 = vsel %vm899, %v10055, %v10372
      %v11064 = vsel %vm899, %v10056, %v10374
      %v11065 = vsel %vm899, %v10057, %v10376
      %v11066 = vsel %vm899, %v10058, %v10378
      %v11067 = vsel %vm899, %v10059, %v10380
      %v11068 = vsel %vm899, %v10060, %v10382
      %v11069 = vsel %vm899, %v10061, %v10384
      %v11070 = vsel %vm899, %v10062, %v10386
      %v11071 = vsel %vm899, %v10063, %v10388
      %v11072 = vsel %vm899, %v10064, %v10390
      %v11073 = vsel %vm899, %v10065, %v10392
      %v11074 = vsel %vm899, %v10066, %v10394
      %v11075 = vsel %vm899, %v10067, %v10396
      %v11076 = vsel %vm899, %v10068, %v10398
      %v11077 = vsel %vm899, %v10069, %v10400
      %v11078 = vsel %vm899, %v10070, %v10402
      %v11079 = vsel %vm4144, %v11047, %v10468
      %v11080 = vsel %vm4144, %v11048, %v10470
      %v11081 = vsel %vm4144, %v11049, %v10472
      %v11082 = vsel %vm4144, %v11050, %v10474
      %v11083 = vsel %vm4144, %v11051, %v10476
      %v11084 = vsel %vm4144, %v11052, %v10478
      %v11085 = vsel %vm4144, %v11053, %v10480
      %v11086 = vsel %vm4144, %v11054, %v10482
      %v11087 = vsel %vm4144, %v11055, %v10484
      %v11088 = vsel %vm4144, %v11056, %v10486
      %v11089 = vsel %vm4144, %v11057, %v10488
      %v11090 = vsel %vm4144, %v11058, %v10490
      %v11091 = vsel %vm4144, %v11059, %v10492
      %v11092 = vsel %vm4144, %v11060, %v10494
      %v11093 = vsel %vm4144, %v11061, %v10496
      %v11094 = vsel %vm4144, %v11062, %v10498
      %v11095 = vsel %vm4144, %v11063, %v10500
      %v11096 = vsel %vm4144, %v11064, %v10502
      %v11097 = vsel %vm4144, %v11065, %v10504
      %v11098 = vsel %vm4144, %v11066, %v10506
      %v11099 = vsel %vm4144, %v11067, %v10508
      %v11100 = vsel %vm4144, %v11068, %v10510
      %v11101 = vsel %vm4144, %v11069, %v10512
      %v11102 = vsel %vm4144, %v11070, %v10514
      %v11103 = vsel %vm4144, %v11071, %v10516
      %v11104 = vsel %vm4144, %v11072, %v10518
      %v11105 = vsel %vm4144, %v11073, %v10520
      %v11106 = vsel %vm4144, %v11074, %v10522
      %v11107 = vsel %vm4144, %v11075, %v10524
      %v11108 = vsel %vm4144, %v11076, %v10526
      %v11109 = vsel %vm4144, %v11077, %v10528
      %v11110 = vsel %vm4144, %v11078, %v10530
      %v11111 = vsel %vm4177, %v11079, %v10596
      %v11112 = vsel %vm4177, %v11080, %v10598
      %v11113 = vsel %vm4177, %v11081, %v10600
      %v11114 = vsel %vm4177, %v11082, %v10602
      %v11115 = vsel %vm4177, %v11083, %v10604
      %v11116 = vsel %vm4177, %v11084, %v10606
      %v11117 = vsel %vm4177, %v11085, %v10608
      %v11118 = vsel %vm4177, %v11086, %v10610
      %v11119 = vsel %vm4177, %v11087, %v10612
      %v11120 = vsel %vm4177, %v11088, %v10614
      %v11121 = vsel %vm4177, %v11089, %v10616
      %v11122 = vsel %vm4177, %v11090, %v10618
      %v11123 = vsel %vm4177, %v11091, %v10620
      %v11124 = vsel %vm4177, %v11092, %v10622
      %v11125 = vsel %vm4177, %v11093, %v10624
      %v11126 = vsel %vm4177, %v11094, %v10626
      %v11127 = vsel %vm4177, %v11095, %v10628
      %v11128 = vsel %vm4177, %v11096, %v10630
      %v11129 = vsel %vm4177, %v11097, %v10632
      %v11130 = vsel %vm4177, %v11098, %v10634
      %v11131 = vsel %vm4177, %v11099, %v10636
      %v11132 = vsel %vm4177, %v11100, %v10638
      %v11133 = vsel %vm4177, %v11101, %v10640
      %v11134 = vsel %vm4177, %v11102, %v10642
      %v11135 = vsel %vm4177, %v11103, %v10644
      %v11136 = vsel %vm4177, %v11104, %v10646
      %v11137 = vsel %vm4177, %v11105, %v10648
      %v11138 = vsel %vm4177, %v11106, %v10650
      %v11139 = vsel %vm4177, %v11107, %v10652
      %v11140 = vsel %vm4177, %v11108, %v10654
      %v11141 = vsel %vm4177, %v11109, %v10656
      %v11142 = vsel %vm4177, %v11110, %v10658
      %v11143 = vsel %vm899, %v10073, %v10724
      %v11144 = vsel %vm899, %v10074, %v10726
      %v11145 = vsel %vm899, %v10075, %v10728
      %v11146 = vsel %vm899, %v10076, %v10730
      %v11147 = vsel %vm899, %v10077, %v10732
      %v11148 = vsel %vm899, %v10078, %v10734
      %v11149 = vsel %vm899, %v10079, %v10736
      %v11150 = vsel %vm899, %v10080, %v10738
      %v11151 = vsel %vm899, %v10081, %v10740
      %v11152 = vsel %vm899, %v10082, %v10742
      %v11153 = vsel %vm899, %v10083, %v10744
      %v11154 = vsel %vm899, %v10084, %v10746
      %v11155 = vsel %vm899, %v10085, %v10748
      %v11156 = vsel %vm899, %v10086, %v10750
      %v11157 = vsel %vm899, %v10087, %v10752
      %v11158 = vsel %vm899, %v10088, %v10754
      %v11159 = vsel %vm899, %v10089, %v10756
      %v11160 = vsel %vm899, %v10090, %v10758
      %v11161 = vsel %vm899, %v10091, %v10760
      %v11162 = vsel %vm899, %v10092, %v10762
      %v11163 = vsel %vm899, %v10093, %v10764
      %v11164 = vsel %vm899, %v10094, %v10766
      %v11165 = vsel %vm899, %v10095, %v10768
      %v11166 = vsel %vm899, %v10096, %v10770
      %v11167 = vsel %vm899, %v10097, %v10772
      %v11168 = vsel %vm899, %v10098, %v10774
      %v11169 = vsel %vm899, %v10099, %v10776
      %v11170 = vsel %vm899, %v10100, %v10778
      %v11171 = vsel %vm899, %v10101, %v10780
      %v11172 = vsel %vm899, %v10102, %v10782
      %v11173 = vsel %vm899, %v10201, %v10784
      %v11174 = vsel %vm899, %v10202, %v10786
      %v11175 = vsel %vm4144, %v11143, %v10852
      %v11176 = vsel %vm4144, %v11144, %v10854
      %v11177 = vsel %vm4144, %v11145, %v10856
      %v11178 = vsel %vm4144, %v11146, %v10858
      %v11179 = vsel %vm4144, %v11147, %v10860
      %v11180 = vsel %vm4144, %v11148, %v10862
      %v11181 = vsel %vm4144, %v11149, %v10864
      %v11182 = vsel %vm4144, %v11150, %v10866
      %v11183 = vsel %vm4144, %v11151, %v10868
      %v11184 = vsel %vm4144, %v11152, %v10870
      %v11185 = vsel %vm4144, %v11153, %v10872
      %v11186 = vsel %vm4144, %v11154, %v10874
      %v11187 = vsel %vm4144, %v11155, %v10876
      %v11188 = vsel %vm4144, %v11156, %v10878
      %v11189 = vsel %vm4144, %v11157, %v10880
      %v11190 = vsel %vm4144, %v11158, %v10882
      %v11191 = vsel %vm4144, %v11159, %v10884
      %v11192 = vsel %vm4144, %v11160, %v10886
      %v11193 = vsel %vm4144, %v11161, %v10888
      %v11194 = vsel %vm4144, %v11162, %v10890
      %v11195 = vsel %vm4144, %v11163, %v10892
      %v11196 = vsel %vm4144, %v11164, %v10894
      %v11197 = vsel %vm4144, %v11165, %v10896
      %v11198 = vsel %vm4144, %v11166, %v10898
      %v11199 = vsel %vm4144, %v11167, %v10900
      %v11200 = vsel %vm4144, %v11168, %v10902
      %v11201 = vsel %vm4144, %v11169, %v10904
      %v11202 = vsel %vm4144, %v11170, %v10906
      %v11203 = vsel %vm4144, %v11171, %v10908
      %v11204 = vsel %vm4144, %v11172, %v10910
      %v11205 = vsel %vm4144, %v11173, %v10912
      %v11206 = vsel %vm4144, %v11174, %v10914
      %v11207 = vsel %vm4177, %v11175, %v10952
      %v11208 = vsel %vm4177, %v11176, %v10954
      %v11209 = vsel %vm4177, %v11177, %v10956
      %v11210 = vsel %vm4177, %v11178, %v10958
      %v11211 = vsel %vm4177, %v11179, %v10960
      %v11212 = vsel %vm4177, %v11180, %v10962
      %v11213 = vsel %vm4177, %v11181, %v10964
      %v11214 = vsel %vm4177, %v11182, %v10966
      %v11215 = vsel %vm4177, %v11183, %v10968
      %v11216 = vsel %vm4177, %v11184, %v10970
      %v11217 = vsel %vm4177, %v11185, %v10972
      %v11218 = vsel %vm4177, %v11186, %v10974
      %v11219 = vsel %vm4177, %v11187, %v10976
      %v11220 = vsel %vm4177, %v11188, %v10978
      %v11221 = vsel %vm4177, %v11189, %v10980
      %v11222 = vsel %vm4177, %v11190, %v10982
      %v11223 = vsel %vm4177, %v11191, %v10984
      %v11224 = vsel %vm4177, %v11192, %v10986
      %v11225 = vsel %vm4177, %v11193, %v10988
      %v11226 = vsel %vm4177, %v11194, %v10990
      %v11227 = vsel %vm4177, %v11195, %v10992
      %v11228 = vsel %vm4177, %v11196, %v10994
      %v11229 = vsel %vm4177, %v11197, %v10996
      %v11230 = vsel %vm4177, %v11198, %v10998
      %v11231 = vsel %vm4177, %v11199, %v11000
      %v11232 = vsel %vm4177, %v11200, %v11002
      %v11233 = vsel %vm4177, %v11201, %v11004
      %v11234 = vsel %vm4177, %v11202, %v11006
      %v11235 = vsel %vm4177, %v11203, %v11008
      %v11236 = vsel %vm4177, %v11204, %v11010
      %v11237 = vsel %vm4177, %v11205, %v11012
      %v11238 = vsel %vm4177, %v11206, %v11014
      %v11239 = vpack.c.bf16 %v11112, %v11111
      %v11240 = vpack.c.bf16 %v11208, %v11207
      %v11241 = vpack.c.bf16 %v10276, %v10275
      %v11242 = vpack.c.bf16 %v11114, %v11113
      %v11243 = vpack.c.bf16 %v11210, %v11209
      %v11244 = vpack.c.bf16 %v10278, %v10277
      %v11245 = vpack.c.bf16 %v11116, %v11115
      %v11246 = vpack.c.bf16 %v11212, %v11211
      %v11247 = vpack.c.bf16 %v10280, %v10279
      %v11248 = vpack.c.bf16 %v11118, %v11117
      %v11249 = vpack.c.bf16 %v11214, %v11213
      %v11250 = vpack.c.bf16 %v10282, %v10281
      %v11251 = vpack.c.bf16 %v11120, %v11119
      %v11252 = vpack.c.bf16 %v11216, %v11215
      %v11253 = vpack.c.bf16 %v10284, %v10283
      %v11254 = vpack.c.bf16 %v11122, %v11121
      %v11255 = vpack.c.bf16 %v11218, %v11217
      %v11256 = vpack.c.bf16 %v10286, %v10285
      %v11257 = vpack.c.bf16 %v11124, %v11123
      %v11258 = vpack.c.bf16 %v11220, %v11219
      %v11259 = vpack.c.bf16 %v10288, %v10287
      %v11260 = vpack.c.bf16 %v11126, %v11125
      %v11261 = vpack.c.bf16 %v11222, %v11221
      %v11262 = vpack.c.bf16 %v10290, %v10289
      %v11263 = vpack.c.bf16 %v11128, %v11127
      %v11264 = vpack.c.bf16 %v11224, %v11223
      %v11265 = vpack.c.bf16 %v10292, %v10291
      %v11266 = vpack.c.bf16 %v11130, %v11129
      %v11267 = vpack.c.bf16 %v11226, %v11225
      %v11268 = vpack.c.bf16 %v10294, %v10293
      %v11269 = vpack.c.bf16 %v11132, %v11131
      %v11270 = vpack.c.bf16 %v11228, %v11227
      %v11271 = vpack.c.bf16 %v10296, %v10295
      %v11272 = vpack.c.bf16 %v11134, %v11133
      %v11273 = vpack.c.bf16 %v11230, %v11229
      %v11274 = vpack.c.bf16 %v10298, %v10297
      %v11275 = vpack.c.bf16 %v11136, %v11135
      %v11276 = vpack.c.bf16 %v11232, %v11231
      %v11277 = vpack.c.bf16 %v10300, %v10299
      %v11278 = vpack.c.bf16 %v11138, %v11137
      %v11279 = vpack.c.bf16 %v11234, %v11233
      %v11280 = vpack.c.bf16 %v10302, %v10301
      %v11281 = vpack.c.bf16 %v11140, %v11139
      %v11282 = vpack.c.bf16 %v11236, %v11235
      %v11283 = vpack.c.bf16 %v10304, %v10303
      %v11284 = vpack.c.bf16 %v11142, %v11141
      %v11285 = vpack.c.bf16 %v11238, %v11237
      %v11286 = vpack.c.bf16 %v10306, %v10305
      %v11287 = vld [vmem:[%s8] sm:$0x3f]
      %v11288 = vld [vmem:[%s9] sm:$0xf]
      %11290 = vset.pattern.permute.xlu0 0
      %11291 = vperm.xlu0 %11290, %v11288
      %v11292 = vpop.permute.xlu0 %11291
      %v11295 = vcombine.high %v11287, %v11287
      %v11297 = vunpack.c.l.s4 1983009808
      %v11298 = vunpack.c.0.s8 %v11297
      %v11299 = vlaneseq
      %v11300 = vshrl.u32 %v11299, 7
      %v11301 = vsub.s32 %v11298, %v11300
      %v11302 = vrot.slane %v11287, %v11301
      %v11304 = vunpack.c.l.s4 1983009808
      %v11305 = vunpack.c.0.s8 %v11304
      %v11306 = vlaneseq
      %v11307 = vshrl.u32 %v11306, 7
      %v11308 = vsub.s32 %v11305, %v11307
      %v11309 = vrot.slane %v11295, %v11308
      %v11310 = vcombine.high %v11302, %v11302
      %v11314 = vsel %vm899, %v11309, 0
      %v11317 = vsel %vm899, %v11241, 0
      %v11320 = vsel %vm899, %v11244, 0
      %v11323 = vsel %vm899, %v11247, 0
      %v11326 = vsel %vm899, %v11250, 0
      %v11329 = vsel %vm899, %v11253, 0
      %v11332 = vsel %vm899, %v11256, 0
      %v11335 = vsel %vm899, %v11259, 0
      %v11338 = vsel %vm899, %v11262, 0
      %v11341 = vsel %vm899, %v11265, 0
      %v11344 = vsel %vm899, %v11268, 0
      %v11347 = vsel %vm899, %v11271, 0
      %v11350 = vsel %vm899, %v11274, 0
      %v11353 = vsel %vm899, %v11277, 0
      %v11356 = vsel %vm899, %v11280, 0
      %v11359 = vsel %vm899, %v11283, 0
      %v11362 = vsel %vm899, %v11286, 0
      %11364 = vmatprep.subr.bf16.mxu0 %v11261
      %11365 = vmatpush1.bf16.xpose.msra.mxu0 %v11260
      %11366 = vmatprep.subr.bf16.mxu0 %v11258
      %11367 = vmatpush1.bf16.xpose.msra.mxu0 %v11257
      %11368 = vmatprep.subr.bf16.mxu0 %v11255
      %11369 = vmatpush1.bf16.xpose.msra.mxu0 %v11254
      %11370 = vmatprep.subr.bf16.mxu0 %v11252
      %11371 = vmatpush1.bf16.xpose.msra.mxu0 %v11251
      %11372 = vmatprep.subr.bf16.mxu0 %v11249
      %11373 = vmatpush1.bf16.xpose.msra.mxu0 %v11248
      %11374 = vmatprep.subr.bf16.mxu0 %v11246
      %11375 = vmatpush1.bf16.xpose.msra.mxu0 %v11245
      %11376 = vmatprep.subr.bf16.mxu0 %v11243
      %11377 = vmatpush1.bf16.xpose.msra.mxu0 %v11242
      %11378 = vmatprep.subr.bf16.mxu0 %v11240
      %11379 = vmatpush1.bf16.xpose.msra.mxu0 %v11239
      %11380 = vmatprep.subr.bf16.mxu0 %v11285
      %11381 = vmatpush2.bf16.xpose.msra.mxu0 %v11284
      %11382 = vmatprep.subr.bf16.mxu0 %v11282
      %11383 = vmatpush2.bf16.xpose.msra.mxu0 %v11281
      %11384 = vmatprep.subr.bf16.mxu0 %v11279
      %11385 = vmatpush2.bf16.xpose.msra.mxu0 %v11278
      %11386 = vmatprep.subr.bf16.mxu0 %v11276
      %11387 = vmatpush2.bf16.xpose.msra.mxu0 %v11275
      %11388 = vmatprep.subr.bf16.mxu0 %v11273
      %11389 = vmatpush2.bf16.xpose.msra.mxu0 %v11272
      %11390 = vmatprep.subr.bf16.mxu0 %v11270
      %11391 = vmatpush2.bf16.xpose.msra.mxu0 %v11269
      %11392 = vmatprep.subr.bf16.mxu0 %v11267
      %11393 = vmatpush2.bf16.xpose.msra.mxu0 %v11266
      %11394 = vmatprep.subr.bf16.mxu0 %v11264
      %11395 = vmatpush2.bf16.xpose.msra.mxu0 %v11263
      %11396 = vmatprep.mubr.bf16.mxu0 %v11310
      %11397 = vmatmul.mubr.bf16.gmra.mxu0 %v11302
      %v11398 = vpop.f32.mrf.mxu0
      %v11399 = vadd.f32 %v11292, %v11398
      %v11400 = vpop.f32.mrf.mxu0
      %v11401 = vadd.f32 %v11292, %v11400
      %v11402 = vpop.f32.mrf.mxu0
      %v11403 = vpop.f32.mrf.mxu0
      %11404 = vdwg.mxu0
      %11405 = vmatprep.subr.bf16.mxu0 0
      %11406 = vmatpush1.bf16.xpose.msra.mxu0 %v11338
      %11407 = vmatprep.subr.bf16.mxu0 0
      %11408 = vmatpush1.bf16.xpose.msra.mxu0 %v11335
      %11409 = vmatprep.subr.bf16.mxu0 0
      %11410 = vmatpush1.bf16.xpose.msra.mxu0 %v11332
      %11411 = vmatprep.subr.bf16.mxu0 0
      %11412 = vmatpush1.bf16.xpose.msra.mxu0 %v11329
      %11413 = vmatprep.subr.bf16.mxu0 0
      %11414 = vmatpush1.bf16.xpose.msra.mxu0 %v11326
      %11415 = vmatprep.subr.bf16.mxu0 0
      %11416 = vmatpush1.bf16.xpose.msra.mxu0 %v11323
      %11417 = vmatprep.subr.bf16.mxu0 0
      %11418 = vmatpush1.bf16.xpose.msra.mxu0 %v11320
      %11419 = vmatprep.subr.bf16.mxu0 0
      %11420 = vmatpush1.bf16.xpose.msra.mxu0 %v11317
      %11421 = vmatprep.subr.bf16.mxu0 0
      %11422 = vmatpush2.bf16.xpose.msra.mxu0 %v11362
      %11423 = vmatprep.subr.bf16.mxu0 0
      %11424 = vmatpush2.bf16.xpose.msra.mxu0 %v11359
      %11425 = vmatprep.subr.bf16.mxu0 0
      %11426 = vmatpush2.bf16.xpose.msra.mxu0 %v11356
      %11427 = vmatprep.subr.bf16.mxu0 0
      %11428 = vmatpush2.bf16.xpose.msra.mxu0 %v11353
      %11429 = vmatprep.subr.bf16.mxu0 0
      %11430 = vmatpush2.bf16.xpose.msra.mxu0 %v11350
      %11431 = vmatprep.subr.bf16.mxu0 0
      %11432 = vmatpush2.bf16.xpose.msra.mxu0 %v11347
      %11433 = vmatprep.subr.bf16.mxu0 0
      %11434 = vmatpush2.bf16.xpose.msra.mxu0 %v11344
      %11435 = vmatprep.subr.bf16.mxu0 0
      %11436 = vmatpush2.bf16.xpose.msra.mxu0 %v11341
      %11437 = vmatprep.mubr.bf16.mxu0 0
      %11438 = vmatmul.mubr.bf16.gmra.mxu0 %v11314
      %v11439 = vpop.f32.mrf.mxu0
      %v11440 = vadd.f32 %v11399, %v11439
      %v11441 = vpop.f32.mrf.mxu0
      %v11442 = vadd.f32 %v11401, %v11441
      %v11443 = vpop.f32.mrf.mxu0
      %v11444 = vpop.f32.mrf.mxu0
      %11445 = vdwg.mxu0
      %v11448 = vcombine.low %v11440, %v11442
      %11450 = vst [vmem:[%s416] sm:$0xff] %v11448
      %p11451 = scmp.lt.s32.totalorder %s21, 1
      %s11452 = scalar_select %p11451, %s21, 1
      %s11453 = smul.addr %s11452, 2
      %s11454 = smul.addr %s11453, 4
      %s11455 = scalar_lea.vmem %s10, %s11454
      // Predicated region
      $region61: #{united_model_forward.1} parent=59 // pred_check
        %p11456 = pneg %p269
      $region62: #{united_model_forward.1} parent=59 // pred_check_branch
        %11458 = sbr.rel (%p11456) target = $region64
      $region63: #{united_model_forward.1} parent=59 // pred_region
        _
      $region64: #{united_model_forward.1} parent=59 // pred_fallthru
        _
    $region60: #{united_model_forward.1} parent=5 // pred_fallthru
      _
    %p11459 = scmp.le.s32.totalorder 2, %s16
    // Predicated region
    $region65: #{united_model_forward.1} parent=5 // pred_check
      %p11460 = pneg %p11459
    $region66: #{united_model_forward.1} parent=5 // pred_check_branch
      %11462 = sbr.rel (%p11460) target = $region68
    $region67: #{united_model_forward.1} parent=5 // pred_region
      %s11463 = ssub.s32 %s16, 2
      // Predicated region
      $region69: #{united_model_forward.1} parent=67 // pred_check
        %p11464 = pneg %p275
      $region70: #{united_model_forward.1} parent=67 // pred_check_branch
        %11466 = sbr.rel (%p11464) target = $region72
      $region71: #{united_model_forward.1} parent=67 // pred_region
        %p11467 = scmp.lt.s32.totalorder %s22, 1
        %s11468 = scalar_select %p11467, %s22, 1
        %s11469 = smul.addr %s11468, 2
        %s11470 = smul.addr %s11469, 4
        %s11471 = scalar_lea.vmem %s10, %s11470
      $region72: #{united_model_forward.1} parent=67 // pred_fallthru
        _
    $region68: #{united_model_forward.1} parent=5 // pred_fallthru
      _
  $region6: #{united_model_forward.1} parent=0 // loop_footer
    %s20 = sadd.s32 1, %s16
  $region7: #{united_model_forward.1} parent=0 // loop_footer_branch
    %15 = sbr.rel target = $region3
  $region8: #{united_model_forward.1} parent=0 // loop_exit
    _

</llo_original>
